<compile_context>
chip_gen: v6e
topology: v6e:2x2x1
jax: 0.10.0
libtpu: 0.0.40
codegen_flags: <defaults>
</compile_context>

<pallas_src>
import jax
import jax.numpy as jnp
from jax import lax
from jax.experimental import pallas as pl
from jax.experimental.pallas import tpu as pltpu

INPUT_SIZE = 28
NUM_CLASSES = 10
TM_CONV2 = 9728  # 76 * 128 lanes -> grid of 4 for M = 785 * 49 = 38465


# ---------------------------------------------------------------------------
# Pallas kernel: lane-dense out(Cout, TM) = W(Cout, K) @ A(K, TM)
# ---------------------------------------------------------------------------
def _zono_matmul_kernel(w_ref, a_ref, o_ref):
    w = w_ref[...]
    a = a_ref[...]
    # Explicit 3-pass bf16 decomposition (~Precision.HIGH): the dropped
    # w_lo @ a_lo term is O(2^-18) relative, far below the 1e-3 parity budget,
    # and MXU work is halved vs the previous HIGHEST/f32 6-pass path.
    w_hi = w.astype(jnp.bfloat16)
    w_lo = (w - w_hi.astype(jnp.float32)).astype(jnp.bfloat16)
    a_hi = a.astype(jnp.bfloat16)
    a_lo = (a - a_hi.astype(jnp.float32)).astype(jnp.bfloat16)
    acc = jnp.dot(w_hi, a_hi, preferred_element_type=jnp.float32)
    acc = acc + jnp.dot(w_hi, a_lo, preferred_element_type=jnp.float32)
    acc = acc + jnp.dot(w_lo, a_hi, preferred_element_type=jnp.float32)
    o_ref[...] = acc


def zono_matmul(w2d, a2d, tile_m):
    """w2d: (Cout, K) f32, a2d: (K, M) f32 -> (Cout, M) f32."""
    Cout, K = w2d.shape
    _, M = a2d.shape
    tile_m = min(tile_m, M)
    if tile_m < M:
        assert tile_m % 128 == 0, tile_m      # keep tiles lane-dense
    n_tiles = pl.cdiv(M, tile_m)              # ragged last tile masked by Pallas
    return pl.pallas_call(
        _zono_matmul_kernel,
        out_shape=jax.ShapeDtypeStruct((Cout, M), jnp.float32),
        grid_spec=pltpu.PrefetchScalarGridSpec(
            num_scalar_prefetch=0,
            grid=(n_tiles,),
            in_specs=[
                pl.BlockSpec((Cout, K), lambda i: (0, 0)),    # weights resident
                pl.BlockSpec((K, tile_m), lambda i: (0, i)),  # A tile, lane-dense
            ],
            out_specs=pl.BlockSpec((Cout, tile_m), lambda i: (0, i)),
        ),
        compiler_params=pltpu.CompilerParams(
            dimension_semantics=("parallel",)),
    )(w2d, a2d)


# ---------------------------------------------------------------------------
# Glue: channel-major im2col, analytic conv1 on the eps-generator terms
# ---------------------------------------------------------------------------
def im2col_cm(z_cm, kh, kw, stride, pad):
    """z_cm: (C, N, H, W) channel-major -> (C*kh*kw, N*Hout*Wout), Hout, Wout."""
    C, N, H, W = z_cm.shape
    zp = jnp.pad(z_cm, ((0, 0), (0, 0), (pad, pad), (pad, pad)))
    Hp, Wp = H + 2 * pad, W + 2 * pad
    Hout = (Hp - kh) // stride + 1
    Wout = (Wp - kw) // stride + 1
    taps = []
    for c in range(C):            # K ordering = (c, i, j), c major, matching
        for i in range(kh):       # weight.reshape(Cout, C*kh*kw) in PyTorch.
            for j in range(kw):
                taps.append(zp[c, :, i:i + stride * Hout:stride,
                                     j:j + stride * Wout:stride])
    a = jnp.stack(taps, axis=0)                       # (K, N, Hout, Wout)
    return a.reshape(C * kh * kw, N * Hout * Wout), Hout, Wout


def conv1_eps_analytic(w1, eps_flat, stride=2, pad=1):
    """conv1 applied to the 784 scaled delta (eps-generator) images, exactly.

    A delta at pixel (y, x) scaled by e gives
        out[o, p, q] = e * w1[o, 0, y + pad - stride*p, x + pad - stride*q]
    whenever the tap index lies in [0, k); otherwise 0 (the one-hot encodes
    validity).  Returned channel-major: (Cout, 784, Hout, Wout)."""
    Cout, _, kh, kw = w1.shape
    Hout = (INPUT_SIZE + 2 * pad - kh) // stride + 1
    Wout = (INPUT_SIZE + 2 * pad - kw) // stride + 1
    tap_y = (jnp.arange(INPUT_SIZE)[:, None] + pad
             - stride * jnp.arange(Hout)[None, :])                 # (28, Hout)
    tap_x = (jnp.arange(INPUT_SIZE)[:, None] + pad
             - stride * jnp.arange(Wout)[None, :])                 # (28, Wout)
    oh_y = (tap_y[:, :, None] == jnp.arange(kh)).astype(w1.dtype)  # (28,Hout,kh)
    oh_x = (tap_x[:, :, None] == jnp.arange(kw)).astype(w1.dtype)  # (28,Wout,kw)
    m = jnp.einsum("ypi,oij,xqj->oyxpq", oh_y, w1[:, 0], oh_x,
                   precision=lax.Precision.HIGHEST)    # (Cout,28,28,Hout,Wout)
    m = m.reshape(Cout, INPUT_SIZE * INPUT_SIZE, Hout, Wout)
    return m * eps_flat[None, :, None, None]


def model_forward(x, eps, params):
    """Model.forward() for the 'Net' branch:
    Sequential(Conv(conv1), Conv(conv2)) on cat([center, eps_terms], dim=0)."""
    w1, b1 = params["w1"], params["b1"]
    w2, b2 = params["w2"], params["b2"]
    C1, C2 = w1.shape[0], w2.shape[0]

    # Zonotope construction (Model.__init__): center + per-pixel eps generators.
    x_max = jnp.minimum(x + eps, 1.0)
    x_min = jnp.maximum(x - eps, 0.0)
    center = (x_max + x_min) * 0.5                      # (1, 1, 28, 28)
    eps_flat = (x_max - center).reshape(-1)             # (784,)

    # ---- conv1 ----
    # Center term: dense Pallas matmul on its tiny (16, 196) im2col (bias on).
    a_c, H1, W1o = im2col_cm(center, 4, 4, stride=2, pad=1)        # (16, 196)
    out_c = zono_matmul(w1.reshape(C1, -1), a_c, tile_m=a_c.shape[1])
    out_c = (out_c + b1[:, None]).reshape(C1, 1, H1, W1o)          # (4,1,14,14)
    # Eps terms: scaled deltas -> exact closed form, no dense matmul, no bias.
    out_e = conv1_eps_analytic(w1, eps_flat)                       # (4,784,14,14)
    z_cm = jnp.concatenate([out_c, out_e], axis=1)                 # (4,785,14,14)

    # ---- conv2 ---- dense over all 785 terms (dominant work, Pallas matmul)
    a2, H2, W2o = im2col_cm(z_cm, 4, 4, stride=2, pad=1)           # (64, 38465)
    out2 = zono_matmul(w2.reshape(C2, -1), a2, tile_m=TM_CONV2)    # (8, 38465)
    p2 = H2 * W2o
    out2 = out2.at[:, :p2].add(b2[:, None])    # bias only on the center term
    out2 = out2.reshape(C2, -1, H2, W2o)                           # (8,785,7,7)
    # TODO(synk): only the 'Net' branch (two zonotope Convs) exists in the
    # provided source; the modLayer/ReLU-slope/FC branch of Model is not
    # implemented (nor the host-side verify()/optimizer logic).
    return jnp.transpose(out2, (1, 0, 2, 3))                       # (785,8,7,7)


# ---------------------------------------------------------------------------
# Pure-JAX reference for correctness check
# ---------------------------------------------------------------------------
def build_zonotope_input(x, eps):
    x_max = jnp.minimum(x + eps, 1.0)
    x_min = jnp.maximum(x - eps, 0.0)
    center = (x_max + x_min) * 0.5
    eps_flat = (x_max - center).reshape(-1)
    eps_terms = jnp.diag(eps_flat).reshape(
        INPUT_SIZE * INPUT_SIZE, 1, INPUT_SIZE, INPUT_SIZE)
    return jnp.concatenate([center, eps_terms], axis=0)            # (785,1,28,28)


def _ref_zono_conv(z, w, b, stride, pad):
    out = lax.conv_general_dilated(
        z, w, window_strides=(stride, stride),
        padding=((pad, pad), (pad, pad)),
        dimension_numbers=("NCHW", "OIHW", "NCHW"),
        precision=lax.Precision.HIGHEST)
    return out.at[0].add(b[:, None, None])


def _ref_forward(x, eps, params):
    z = build_zonotope_input(x, eps)
    z = _ref_zono_conv(z, params["w1"], params["b1"], 2, 1)
    z = _ref_zono_conv(z, params["w2"], params["b2"], 2, 1)
    return z


if __name__ == "__main__":
    key = jax.random.PRNGKey(0)
    kx, k1, k2, k3, k4 = jax.random.split(key, 5)

    # MNIST-like input image (NCHW) and eps, as in Model.__init__
    x = jax.random.uniform(kx, (1, 1, INPUT_SIZE, INPUT_SIZE), jnp.float32)
    eps = 0.1

    # Deterministic synthetic 'Net' conv weights (conv1: 1->4, conv2: 4->8,
    # kernel 4, stride 2, padding 1  =>  28 -> 14 -> 7 spatial).
    params = {
        "w1": 0.2 * jax.random.normal(k1, (4, 1, 4, 4), jnp.float32),
        "b1": 0.2 * jax.random.normal(k2, (4,), jnp.float32),
        "w2": 0.2 * jax.random.normal(k3, (8, 4, 4, 4), jnp.float32),
        "b2": 0.2 * jax.random.normal(k4, (8,), jnp.float32),
    }

    fwd = jax.jit(model_forward)
    out = jax.block_until_ready(fwd(x, eps, params))
    ref = jax.block_until_ready(_ref_forward(x, eps, params))

    assert out.shape == (INPUT_SIZE * INPUT_SIZE + 1, 8, 7, 7), out.shape
    max_err = float(jnp.max(jnp.abs(out - ref)))
    assert jnp.allclose(out, ref, atol=1e-3, rtol=1e-3), max_err

    print("KERNEL_OK")
</pallas_src>

<mosaic_0001>
module attributes {stable_mosaic.version = 11 : i64} {
  func.func @_zono_matmul_kernel(%arg0: i32, %arg1: memref<4x16xf32, #tpu.memory_space<vmem>>, %arg2: memref<16x196xf32, #tpu.memory_space<vmem>>, %arg3: memref<4x196xf32, #tpu.memory_space<vmem>>) attributes {dimension_semantics = [#tpu.dimension_semantics<parallel>], iteration_bounds = array<i64: 1>, scalar_prefetch = 0 : i64, scratch_operands = 0 : i64, tpu.core_type = #tpu.core_type<tc>, window_params = [{pipeline_mode = #tpu.pipeline_mode<synchronous>, transform_indices = @transform_0, window_bounds = array<i64: 4, 16>}, {transform_indices = @transform_1, window_bounds = array<i64: 16, 196>}, {transform_indices = @transform_2, window_bounds = array<i64: 4, 196>}]} {
    %c0 = arith.constant 0 : index
    %c0_0 = arith.constant 0 : index
    %0 = vector.load %arg1[%c0, %c0_0] : memref<4x16xf32, #tpu.memory_space<vmem>>, vector<4x16xf32>
    %c0_1 = arith.constant 0 : index
    %c0_2 = arith.constant 0 : index
    %1 = vector.load %arg2[%c0_1, %c0_2] : memref<16x196xf32, #tpu.memory_space<vmem>>, vector<16x196xf32>
    %2 = arith.truncf %0 : vector<4x16xf32> to vector<4x16xbf16>
    %3 = arith.extf %2 : vector<4x16xbf16> to vector<4x16xf32>
    %4 = arith.subf %0, %3 : vector<4x16xf32>
    %5 = arith.truncf %4 : vector<4x16xf32> to vector<4x16xbf16>
    %6 = arith.truncf %1 : vector<16x196xf32> to vector<16x196xbf16>
    %7 = arith.extf %6 : vector<16x196xbf16> to vector<16x196xf32>
    %8 = arith.subf %1, %7 : vector<16x196xf32>
    %9 = arith.truncf %8 : vector<16x196xf32> to vector<16x196xbf16>
    %cst = arith.constant dense<0.000000e+00> : vector<4x196xf32>
    %10 = tpu.matmul %2, %6, %cst {dimension_numbers = #tpu.dot_dimension_numbers<[1], [0], [0], [1], [0, 0, 1, 1], [], []>} : vector<4x16xbf16>, vector<16x196xbf16>, vector<4x196xf32> -> vector<4x196xf32>
    %cst_3 = arith.constant dense<0.000000e+00> : vector<4x196xf32>
    %11 = tpu.matmul %2, %9, %cst_3 {dimension_numbers = #tpu.dot_dimension_numbers<[1], [0], [0], [1], [0, 0, 1, 1], [], []>} : vector<4x16xbf16>, vector<16x196xbf16>, vector<4x196xf32> -> vector<4x196xf32>
    %12 = arith.addf %10, %11 : vector<4x196xf32>
    %cst_4 = arith.constant dense<0.000000e+00> : vector<4x196xf32>
    %13 = tpu.matmul %5, %6, %cst_4 {dimension_numbers = #tpu.dot_dimension_numbers<[1], [0], [0], [1], [0, 0, 1, 1], [], []>} : vector<4x16xbf16>, vector<16x196xbf16>, vector<4x196xf32> -> vector<4x196xf32>
    %14 = arith.addf %12, %13 : vector<4x196xf32>
    %c0_5 = arith.constant 0 : index
    %c0_6 = arith.constant 0 : index
    %15 = vector.load %arg3[%c0_5, %c0_6] : memref<4x196xf32, #tpu.memory_space<vmem>>, vector<4x196xf32>
    tpu.vector_store %arg3[%c0_5, %c0_6], %14 {strides = array<i32>} : memref<4x196xf32, #tpu.memory_space<vmem>>, vector<4x196xf32>,
    return
  }
  func.func @transform_0(%arg0: i32) -> (i32, i32) {
    %c0_i32 = arith.constant 0 : i32
    %c0_i32_0 = arith.constant 0 : i32
    %c0_i32_1 = arith.constant 0 : i32
    return %c0_i32, %c0_i32_0 : i32, i32
  }
  func.func @transform_1(%arg0: i32) -> (i32, i32) {
    %c0_i32 = arith.constant 0 : i32
    %c0_i32_0 = arith.constant 0 : i32
    return %c0_i32, %arg0 : i32, i32
  }
  func.func @transform_2(%arg0: i32) -> (i32, i32) {
    %c0_i32 = arith.constant 0 : i32
    %c0_i32_0 = arith.constant 0 : i32
    return %c0_i32, %arg0 : i32, i32
  }
}

module attributes {stable_mosaic.version = 11 : i64} {
  func.func @_zono_matmul_kernel(%arg0: i32, %arg1: memref<8x64xf32, #tpu.memory_space<vmem>>, %arg2: memref<64x9728xf32, #tpu.memory_space<vmem>>, %arg3: memref<8x9728xf32, #tpu.memory_space<vmem>>) attributes {dimension_semantics = [#tpu.dimension_semantics<parallel>], iteration_bounds = array<i64: 4>, scalar_prefetch = 0 : i64, scratch_operands = 0 : i64, tpu.core_type = #tpu.core_type<tc>, window_params = [{pipeline_mode = #tpu.pipeline_mode<synchronous>, transform_indices = @transform_0, window_bounds = array<i64: 8, 64>}, {transform_indices = @transform_1, window_bounds = array<i64: 64, 9728>}, {transform_indices = @transform_2, window_bounds = array<i64: 8, 9728>}]} {
    %c0 = arith.constant 0 : index
    %c0_0 = arith.constant 0 : index
    %0 = vector.load %arg1[%c0, %c0_0] : memref<8x64xf32, #tpu.memory_space<vmem>>, vector<8x64xf32>
    %c0_1 = arith.constant 0 : index
    %c0_2 = arith.constant 0 : index
    %1 = vector.load %arg2[%c0_1, %c0_2] : memref<64x9728xf32, #tpu.memory_space<vmem>>, vector<64x9728xf32>
    %2 = arith.truncf %0 : vector<8x64xf32> to vector<8x64xbf16>
    %3 = arith.extf %2 : vector<8x64xbf16> to vector<8x64xf32>
    %4 = arith.subf %0, %3 : vector<8x64xf32>
    %5 = arith.truncf %4 : vector<8x64xf32> to vector<8x64xbf16>
    %6 = arith.truncf %1 : vector<64x9728xf32> to vector<64x9728xbf16>
    %7 = arith.extf %6 : vector<64x9728xbf16> to vector<64x9728xf32>
    %8 = arith.subf %1, %7 : vector<64x9728xf32>
    %9 = arith.truncf %8 : vector<64x9728xf32> to vector<64x9728xbf16>
    %cst = arith.constant dense<0.000000e+00> : vector<8x9728xf32>
    %10 = tpu.matmul %2, %6, %cst {dimension_numbers = #tpu.dot_dimension_numbers<[1], [0], [0], [1], [0, 0, 1, 1], [], []>} : vector<8x64xbf16>, vector<64x9728xbf16>, vector<8x9728xf32> -> vector<8x9728xf32>
    %cst_3 = arith.constant dense<0.000000e+00> : vector<8x9728xf32>
    %11 = tpu.matmul %2, %9, %cst_3 {dimension_numbers = #tpu.dot_dimension_numbers<[1], [0], [0], [1], [0, 0, 1, 1], [], []>} : vector<8x64xbf16>, vector<64x9728xbf16>, vector<8x9728xf32> -> vector<8x9728xf32>
    %12 = arith.addf %10, %11 : vector<8x9728xf32>
    %cst_4 = arith.constant dense<0.000000e+00> : vector<8x9728xf32>
    %13 = tpu.matmul %5, %6, %cst_4 {dimension_numbers = #tpu.dot_dimension_numbers<[1], [0], [0], [1], [0, 0, 1, 1], [], []>} : vector<8x64xbf16>, vector<64x9728xbf16>, vector<8x9728xf32> -> vector<8x9728xf32>
    %14 = arith.addf %12, %13 : vector<8x9728xf32>
    %c0_5 = arith.constant 0 : index
    %c0_6 = arith.constant 0 : index
    %15 = vector.load %arg3[%c0_5, %c0_6] : memref<8x9728xf32, #tpu.memory_space<vmem>>, vector<8x9728xf32>
    tpu.vector_store %arg3[%c0_5, %c0_6], %14 {strides = array<i32>} : memref<8x9728xf32, #tpu.memory_space<vmem>>, vector<8x9728xf32>,
    return
  }
  func.func @transform_0(%arg0: i32) -> (i32, i32) {
    %c0_i32 = arith.constant 0 : i32
    %c0_i32_0 = arith.constant 0 : i32
    %c0_i32_1 = arith.constant 0 : i32
    return %c0_i32, %c0_i32_0 : i32, i32
  }
  func.func @transform_1(%arg0: i32) -> (i32, i32) {
    %c0_i32 = arith.constant 0 : i32
    %c0_i32_0 = arith.constant 0 : i32
    return %c0_i32, %arg0 : i32, i32
  }
  func.func @transform_2(%arg0: i32) -> (i32, i32) {
    %c0_i32 = arith.constant 0 : i32
    %c0_i32_0 = arith.constant 0 : i32
    return %c0_i32, %arg0 : i32, i32
  }
}

</mosaic_0001>

<llo_original>
// kernel: mul.13
$region0: #{mul.13}
  %s0 = inlined_call_operand.vmem [shape: f32[28,28], index: 0, kind: input, shape index: {}]
  %s1 = inlined_call_operand.vmem [shape: f32[784], index: 1, kind: output, shape index: {}]
  %v2 = vld [vmem:[%s0] sm:$0x1]
  %vm3 = vcmask 228352
  %4 = vst.msk [vmem:[%s1] sm:$0x1] %vm3, %v2
  %s5 = scalar_lea.vmem %s0, 9
  %v6 = vld [vmem:[%s5] sm:$0x1]
  %s7 = scalar_lea.vmem %s0, 9
  %v8 = vld [vmem:[%s7] sm:$0x1]
  %vm9 = vcmask 31744
  %v10 = vsel %vm9, %v8, %v6
  %11 = vrot.lane.b32.xlu0 %v10, 124
  %v12 = vpop.permute.xlu0 %11
  %vm13 = vcmask 195584
  %s14 = scalar_lea.vmem %s1, 2
  %15 = vst.msk [vmem:[%s14] sm:$0x1] %vm13, %v12
  %vm16 = vcmask 1048544
  %s17 = scalar_lea.vmem %s1, 1
  %18 = vst.msk [vmem:[%s17] sm:$0x1] %vm16, %v12
  %s19 = scalar_lea.vmem %s0, 18
  %v20 = vld [vmem:[%s19] sm:$0x1]
  %s21 = scalar_lea.vmem %s0, 18
  %v22 = vld [vmem:[%s21] sm:$0x1]
  %vm23 = vcmask 64512
  %v24 = vsel %vm23, %v22, %v20
  %25 = vrot.lane.b32.xlu0 %v24, 120
  %v26 = vpop.permute.xlu0 %25
  %vm27 = vcmask 162816
  %s28 = scalar_lea.vmem %s1, 4
  %29 = vst.msk [vmem:[%s28] sm:$0x1] %vm27, %v26
  %vm30 = vcmask 1048512
  %s31 = scalar_lea.vmem %s1, 3
  %32 = vst.msk [vmem:[%s31] sm:$0x1] %vm30, %v26
  %s33 = scalar_lea.vmem %s0, 27
  %v34 = vld [vmem:[%s33] sm:$0x1]
  %s35 = scalar_lea.vmem %s0, 27
  %v36 = vld [vmem:[%s35] sm:$0x1]
  %vm37 = vcmask 97280
  %v38 = vsel %vm37, %v36, %v34
  %39 = vrot.lane.b32.xlu0 %v38, 116
  %v40 = vpop.permute.xlu0 %39
  %vm41 = vcmask 130048
  %s42 = scalar_lea.vmem %s1, 6
  %43 = vst.msk [vmem:[%s42] sm:$0x1] %vm41, %v40
  %vm44 = vcmask 1048480
  %s45 = scalar_lea.vmem %s1, 5
  %46 = vst.msk [vmem:[%s45] sm:$0x1] %vm44, %v40
  %s47 = scalar_lea.vmem %s0, 4
  %v48 = vld [vmem:[%s47] sm:$0x1]
  %s49 = scalar_lea.vmem %s0, 4
  %v50 = vld [vmem:[%s49] sm:$0x1]
  %vm51 = vcmask 130048
  %v52 = vsel %vm51, %v50, %v48
  %53 = vrot.lane.b32.xlu0 %v52, 112
  %v54 = vpop.permute.xlu0 %53
  %vm55 = vcmask 97280
  %s56 = scalar_lea.vmem %s1, 1
  %57 = vst.msk [vmem:[%s56] sm:$0x1] %vm55, %v54
  %vm58 = vcmask 1048448
  %59 = vst.msk [vmem:[%s1] sm:$0x1] %vm58, %v54
  %s60 = scalar_lea.vmem %s0, 13
  %v61 = vld [vmem:[%s60] sm:$0x1]
  %s62 = scalar_lea.vmem %s0, 13
  %v63 = vld [vmem:[%s62] sm:$0x1]
  %vm64 = vcmask 162816
  %v65 = vsel %vm64, %v63, %v61
  %66 = vrot.lane.b32.xlu0 %v65, 108
  %v67 = vpop.permute.xlu0 %66
  %vm68 = vcmask 64512
  %s69 = scalar_lea.vmem %s1, 3
  %70 = vst.msk [vmem:[%s69] sm:$0x1] %vm68, %v67
  %vm71 = vcmask 1048416
  %s72 = scalar_lea.vmem %s1, 2
  %73 = vst.msk [vmem:[%s72] sm:$0x1] %vm71, %v67
  %s74 = scalar_lea.vmem %s0, 22
  %v75 = vld [vmem:[%s74] sm:$0x1]
  %s76 = scalar_lea.vmem %s0, 22
  %v77 = vld [vmem:[%s76] sm:$0x1]
  %vm78 = vcmask 195584
  %v79 = vsel %vm78, %v77, %v75
  %80 = vrot.lane.b32.xlu0 %v79, 104
  %v81 = vpop.permute.xlu0 %80
  %vm82 = vcmask 31744
  %s83 = scalar_lea.vmem %s1, 5
  %84 = vst.msk [vmem:[%s83] sm:$0x1] %vm82, %v81
  %vm85 = vcmask 1048384
  %s86 = scalar_lea.vmem %s1, 4
  %87 = vst.msk [vmem:[%s86] sm:$0x1] %vm85, %v81
  %s88 = scalar_lea.vmem %s0, 8
  %v89 = vld [vmem:[%s88] sm:$0x1]
  %90 = vrot.lane.b32.xlu0 %v89, 96
  %v91 = vpop.permute.xlu0 %90
  %vm92 = vcmask 1015552
  %s93 = scalar_lea.vmem %s1, 1
  %94 = vst.msk [vmem:[%s93] sm:$0x1] %vm92, %v91
  %s95 = scalar_lea.vmem %s0, 17
  %v96 = vld [vmem:[%s95] sm:$0x1]
  %97 = vrot.lane.b32.xlu0 %v96, 92
  %v98 = vpop.permute.xlu0 %97
  %vm99 = vcmask 982752
  %s100 = scalar_lea.vmem %s1, 3
  %101 = vst.msk [vmem:[%s100] sm:$0x1] %vm99, %v98
  %s102 = scalar_lea.vmem %s0, 26
  %v103 = vld [vmem:[%s102] sm:$0x1]
  %104 = vrot.lane.b32.xlu0 %v103, 88
  %v105 = vpop.permute.xlu0 %104
  %vm106 = vcmask 949952
  %s107 = scalar_lea.vmem %s1, 5
  %108 = vst.msk [vmem:[%s107] sm:$0x1] %vm106, %v105
  %s109 = scalar_lea.vmem %s0, 3
  %v110 = vld [vmem:[%s109] sm:$0x1]
  %111 = vrot.lane.b32.xlu0 %v110, 84
  %v112 = vpop.permute.xlu0 %111
  %vm113 = vcmask 917152
  %114 = vst.msk [vmem:[%s1] sm:$0x1] %vm113, %v112
  %s115 = scalar_lea.vmem %s0, 12
  %v116 = vld [vmem:[%s115] sm:$0x1]
  %117 = vrot.lane.b32.xlu0 %v116, 80
  %v118 = vpop.permute.xlu0 %117
  %vm119 = vcmask 884352
  %s120 = scalar_lea.vmem %s1, 2
  %121 = vst.msk [vmem:[%s120] sm:$0x1] %vm119, %v118
  %s122 = scalar_lea.vmem %s0, 21
  %v123 = vld [vmem:[%s122] sm:$0x1]
  %124 = vrot.lane.b32.xlu0 %v123, 76
  %v125 = vpop.permute.xlu0 %124
  %vm126 = vcmask 851552
  %s127 = scalar_lea.vmem %s1, 4
  %128 = vst.msk [vmem:[%s127] sm:$0x1] %vm126, %v125
  %s129 = scalar_lea.vmem %s0, 7
  %v130 = vld [vmem:[%s129] sm:$0x1]
  %131 = vrot.lane.b32.xlu0 %v130, 68
  %v132 = vpop.permute.xlu0 %131
  %vm133 = vcmask 785952
  %s134 = scalar_lea.vmem %s1, 1
  %135 = vst.msk [vmem:[%s134] sm:$0x1] %vm133, %v132
  %s136 = scalar_lea.vmem %s0, 16
  %v137 = vld [vmem:[%s136] sm:$0x1]
  %138 = vrot.lane.b32.xlu0 %v137, 64
  %v139 = vpop.permute.xlu0 %138
  %vm140 = vcmask 753152
  %s141 = scalar_lea.vmem %s1, 3
  %142 = vst.msk [vmem:[%s141] sm:$0x1] %vm140, %v139
  %s143 = scalar_lea.vmem %s0, 25
  %v144 = vld [vmem:[%s143] sm:$0x1]
  %145 = vrot.lane.b32.xlu0 %v144, 60
  %v146 = vpop.permute.xlu0 %145
  %vm147 = vcmask 720352
  %s148 = scalar_lea.vmem %s1, 5
  %149 = vst.msk [vmem:[%s148] sm:$0x1] %vm147, %v146
  %s150 = scalar_lea.vmem %s0, 2
  %v151 = vld [vmem:[%s150] sm:$0x1]
  %152 = vrot.lane.b32.xlu0 %v151, 56
  %v153 = vpop.permute.xlu0 %152
  %vm154 = vcmask 687552
  %155 = vst.msk [vmem:[%s1] sm:$0x1] %vm154, %v153
  %s156 = scalar_lea.vmem %s0, 11
  %v157 = vld [vmem:[%s156] sm:$0x1]
  %158 = vrot.lane.b32.xlu0 %v157, 52
  %v159 = vpop.permute.xlu0 %158
  %vm160 = vcmask 654752
  %s161 = scalar_lea.vmem %s1, 2
  %162 = vst.msk [vmem:[%s161] sm:$0x1] %vm160, %v159
  %s163 = scalar_lea.vmem %s0, 20
  %v164 = vld [vmem:[%s163] sm:$0x1]
  %165 = vrot.lane.b32.xlu0 %v164, 48
  %v166 = vpop.permute.xlu0 %165
  %vm167 = vcmask 621952
  %s168 = scalar_lea.vmem %s1, 4
  %169 = vst.msk [vmem:[%s168] sm:$0x1] %vm167, %v166
  %s170 = scalar_lea.vmem %s0, 6
  %v171 = vld [vmem:[%s170] sm:$0x1]
  %172 = vrot.lane.b32.xlu0 %v171, 40
  %v173 = vpop.permute.xlu0 %172
  %vm174 = vcmask 556352
  %s175 = scalar_lea.vmem %s1, 1
  %176 = vst.msk [vmem:[%s175] sm:$0x1] %vm174, %v173
  %s177 = scalar_lea.vmem %s0, 15
  %v178 = vld [vmem:[%s177] sm:$0x1]
  %179 = vrot.lane.b32.xlu0 %v178, 36
  %v180 = vpop.permute.xlu0 %179
  %vm181 = vcmask 523552
  %s182 = scalar_lea.vmem %s1, 3
  %183 = vst.msk [vmem:[%s182] sm:$0x1] %vm181, %v180
  %s184 = scalar_lea.vmem %s0, 24
  %v185 = vld [vmem:[%s184] sm:$0x1]
  %186 = vrot.lane.b32.xlu0 %v185, 32
  %v187 = vpop.permute.xlu0 %186
  %vm188 = vcmask 490752
  %s189 = scalar_lea.vmem %s1, 5
  %190 = vst.msk [vmem:[%s189] sm:$0x1] %vm188, %v187
  %s191 = scalar_lea.vmem %s0, 1
  %v192 = vld [vmem:[%s191] sm:$0x1]
  %193 = vrot.lane.b32.xlu0 %v192, 28
  %v194 = vpop.permute.xlu0 %193
  %vm195 = vcmask 457952
  %196 = vst.msk [vmem:[%s1] sm:$0x1] %vm195, %v194
  %s197 = scalar_lea.vmem %s0, 10
  %v198 = vld [vmem:[%s197] sm:$0x1]
  %199 = vrot.lane.b32.xlu0 %v198, 24
  %v200 = vpop.permute.xlu0 %199
  %vm201 = vcmask 425152
  %s202 = scalar_lea.vmem %s1, 2
  %203 = vst.msk [vmem:[%s202] sm:$0x1] %vm201, %v200
  %s204 = scalar_lea.vmem %s0, 19
  %v205 = vld [vmem:[%s204] sm:$0x1]
  %206 = vrot.lane.b32.xlu0 %v205, 20
  %v207 = vpop.permute.xlu0 %206
  %vm208 = vcmask 392352
  %s209 = scalar_lea.vmem %s1, 4
  %210 = vst.msk [vmem:[%s209] sm:$0x1] %vm208, %v207
  %s211 = scalar_lea.vmem %s0, 5
  %v212 = vld [vmem:[%s211] sm:$0x1]
  %213 = vrot.lane.b32.xlu0 %v212, 12
  %v214 = vpop.permute.xlu0 %213
  %vm215 = vcmask 326752
  %s216 = scalar_lea.vmem %s1, 1
  %217 = vst.msk [vmem:[%s216] sm:$0x1] %vm215, %v214
  %s218 = scalar_lea.vmem %s0, 14
  %v219 = vld [vmem:[%s218] sm:$0x1]
  %220 = vrot.lane.b32.xlu0 %v219, 8
  %v221 = vpop.permute.xlu0 %220
  %vm222 = vcmask 293952
  %s223 = scalar_lea.vmem %s1, 3
  %224 = vst.msk [vmem:[%s223] sm:$0x1] %vm222, %v221
  %s225 = scalar_lea.vmem %s0, 23
  %v226 = vld [vmem:[%s225] sm:$0x1]
  %227 = vrot.lane.b32.xlu0 %v226, 4
  %v228 = vpop.permute.xlu0 %227
  %vm229 = vcmask 261152
  %s230 = scalar_lea.vmem %s1, 5
  %231 = vst.msk [vmem:[%s230] sm:$0x1] %vm229, %v228

// kernel: model_forward.2
$region0: #{model_forward.2}
  #allocation0 [shape = 'u32[]', space=smem, size = 0x4, offset = 0x4, fixed_abs, tag = 'smem constant byte address 0x4 - core index']
  #allocation1 [shape = 'u32[144,128]{1,0:T(1,128)}', space=vmem, size = 0x12000, scoped, tag = 'internal scratch']
  %s0 = inlined_call_operand.vmem [shape: f32[4,16], index: 0, kind: input, shape index: {}]
  %s1 = inlined_call_operand.vmem [shape: f32[16,196], index: 1, kind: input, shape index: {}]
  %s2 = inlined_call_operand.vmem [shape: f32[4,196], index: 2, kind: output, shape index: {}]
  %s3 = sld [smem:[#allocation0]]
  $region18: #{model_forward.2} parent=0
    _
  %s5 = ssub.s32 1, %s3
  %s6 = scalar_select 0, %s5, %s3
  // Predicated region
  $region2: #{model_forward.2} parent=0 // pred_check
    _
  $region3: #{model_forward.2} parent=0 // pred_check_branch
    %8 = sbr.rel (0) target = $region5
  $region4: #{model_forward.2} parent=0 // pred_region
    _
  $region5: #{model_forward.2} parent=0 // pred_fallthru
    _
  // Predicated region
  $region6: #{model_forward.2} parent=0 // pred_check
    _
  $region7: #{model_forward.2} parent=0 // pred_check_branch
    %10 = sbr.rel (0) target = $region9
  $region8: #{model_forward.2} parent=0 // pred_region
    _
  $region9: #{model_forward.2} parent=0 // pred_fallthru
    _
  %v12 = vld [vmem:[%s0] sm:$0xf]
  %v13 = vld [vmem:[%s1] sm:$0xff]
  %v14 = vld [vmem:[%s1 + $0x8] sm:$0xff]
  %v15 = vld [vmem:[%s1 + $0x10] sm:$0xff]
  %v16 = vld [vmem:[%s1 + $0x18] sm:$0xff]
  %v17 = vpack.c.bf16 %v12, %v12
  %v18 = vunpack.c.l.bf16 %v17
  %v19 = vsub.f32 %v12, %v18
  %v20 = vpack.c.bf16 %v19, %v19
  %v21 = vpack.c.bf16 %v15, %v13
  %v22 = vpack.c.bf16 %v16, %v14
  %v23 = vunpack.c.l.bf16 %v21
  %v24 = vunpack.c.l.bf16 %v22
  %v25 = vunpack.c.h.bf16 %v21
  %v26 = vunpack.c.h.bf16 %v22
  %v27 = vsub.f32 %v13, %v23
  %v28 = vsub.f32 %v14, %v24
  %v29 = vsub.f32 %v15, %v25
  %v30 = vsub.f32 %v16, %v26
  %v31 = vpack.c.bf16 %v29, %v27
  %v32 = vpack.c.bf16 %v30, %v28
  %vm33 = vcmask 130048
  %v35 = vsel %vm33, %v17, 0
  %37 = vmatprep.subr.bf16.mxu0 0
  %38 = vmatpush1.bf16.msra.mxu0 0
  %39 = vmatprep.subr.bf16.mxu0 0
  %40 = vmatpush1.bf16.msra.mxu0 0
  %41 = vmatprep.subr.bf16.mxu0 0
  %42 = vmatpush1.bf16.msra.mxu0 0
  %43 = vmatprep.subr.bf16.mxu0 0
  %44 = vmatpush1.bf16.msra.mxu0 0
  %45 = vmatprep.subr.bf16.mxu0 0
  %46 = vmatpush1.bf16.msra.mxu0 0
  %47 = vmatprep.subr.bf16.mxu0 0
  %48 = vmatpush1.bf16.msra.mxu0 0
  %49 = vmatprep.subr.bf16.mxu0 0
  %50 = vmatpush1.bf16.msra.mxu0 0
  %51 = vmatprep.subr.bf16.mxu0 %v32
  %52 = vmatpush1.bf16.msra.mxu0 %v31
  %53 = vmatprep.subr.bf16.mxu0 0
  %54 = vmatpush2.bf16.msra.mxu0 0
  %55 = vmatprep.subr.bf16.mxu0 0
  %56 = vmatpush2.bf16.msra.mxu0 0
  %57 = vmatprep.subr.bf16.mxu0 0
  %58 = vmatpush2.bf16.msra.mxu0 0
  %59 = vmatprep.subr.bf16.mxu0 0
  %60 = vmatpush2.bf16.msra.mxu0 0
  %61 = vmatprep.subr.bf16.mxu0 0
  %62 = vmatpush2.bf16.msra.mxu0 0
  %63 = vmatprep.subr.bf16.mxu0 0
  %64 = vmatpush2.bf16.msra.mxu0 0
  %65 = vmatprep.subr.bf16.mxu0 0
  %66 = vmatpush2.bf16.msra.mxu0 0
  %67 = vmatprep.subr.bf16.mxu0 0
  %68 = vmatpush2.bf16.msra.mxu0 0
  %69 = vmatprep.mubr.bf16.mxu0 0
  %70 = vmatmul.mubr.bf16.gmra.mxu0 %v35
  %v71 = vpop.f32.mrf.mxu0
  %v72 = vadd.f32 0.0, %v71
  %v73 = vpop.f32.mrf.mxu0
  %v74 = vadd.f32 0.0, %v73
  %v75 = vpop.f32.mrf.mxu0
  %v76 = vpop.f32.mrf.mxu0
  %77 = vdwg.mxu0
  %78 = vmatprep.subr.bf16.mxu0 0
  %79 = vmatpush1.bf16.msra.mxu0 0
  %80 = vmatprep.subr.bf16.mxu0 0
  %81 = vmatpush1.bf16.msra.mxu0 0
  %82 = vmatprep.subr.bf16.mxu0 0
  %83 = vmatpush1.bf16.msra.mxu0 0
  %84 = vmatprep.subr.bf16.mxu0 0
  %85 = vmatpush1.bf16.msra.mxu0 0
  %86 = vmatprep.subr.bf16.mxu0 0
  %87 = vmatpush1.bf16.msra.mxu0 0
  %88 = vmatprep.subr.bf16.mxu0 0
  %89 = vmatpush1.bf16.msra.mxu0 0
  %90 = vmatprep.subr.bf16.mxu0 0
  %91 = vmatpush1.bf16.msra.mxu0 0
  %92 = vmatprep.subr.bf16.mxu0 %v22
  %93 = vmatpush1.bf16.msra.mxu0 %v21
  %94 = vmatprep.subr.bf16.mxu0 0
  %95 = vmatpush2.bf16.msra.mxu0 0
  %96 = vmatprep.subr.bf16.mxu0 0
  %97 = vmatpush2.bf16.msra.mxu0 0
  %98 = vmatprep.subr.bf16.mxu0 0
  %99 = vmatpush2.bf16.msra.mxu0 0
  %100 = vmatprep.subr.bf16.mxu0 0
  %101 = vmatpush2.bf16.msra.mxu0 0
  %102 = vmatprep.subr.bf16.mxu0 0
  %103 = vmatpush2.bf16.msra.mxu0 0
  %104 = vmatprep.subr.bf16.mxu0 0
  %105 = vmatpush2.bf16.msra.mxu0 0
  %106 = vmatprep.subr.bf16.mxu0 0
  %107 = vmatpush2.bf16.msra.mxu0 0
  %108 = vmatprep.subr.bf16.mxu0 0
  %109 = vmatpush2.bf16.msra.mxu0 0
  %110 = vmatprep.mubr.bf16.mxu0 0
  %111 = vmatmul.mubr.bf16.gmra.mxu0 %v35
  %v112 = vpop.f32.mrf.mxu0
  %v113 = vadd.f32 %v72, %v112
  %v114 = vpop.f32.mrf.mxu0
  %v115 = vadd.f32 %v74, %v114
  %v116 = vpop.f32.mrf.mxu0
  %v117 = vpop.f32.mrf.mxu0
  %118 = vdwg.mxu0
  %v120 = vsel %vm33, %v20, 0
  %122 = vmatprep.subr.bf16.mxu0 0
  %123 = vmatpush1.bf16.msra.mxu0 0
  %124 = vmatprep.subr.bf16.mxu0 0
  %125 = vmatpush1.bf16.msra.mxu0 0
  %126 = vmatprep.subr.bf16.mxu0 0
  %127 = vmatpush1.bf16.msra.mxu0 0
  %128 = vmatprep.subr.bf16.mxu0 0
  %129 = vmatpush1.bf16.msra.mxu0 0
  %130 = vmatprep.subr.bf16.mxu0 0
  %131 = vmatpush1.bf16.msra.mxu0 0
  %132 = vmatprep.subr.bf16.mxu0 0
  %133 = vmatpush1.bf16.msra.mxu0 0
  %134 = vmatprep.subr.bf16.mxu0 0
  %135 = vmatpush1.bf16.msra.mxu0 0
  %136 = vmatprep.subr.bf16.mxu0 %v22
  %137 = vmatpush1.bf16.msra.mxu0 %v21
  %138 = vmatprep.subr.bf16.mxu0 0
  %139 = vmatpush2.bf16.msra.mxu0 0
  %140 = vmatprep.subr.bf16.mxu0 0
  %141 = vmatpush2.bf16.msra.mxu0 0
  %142 = vmatprep.subr.bf16.mxu0 0
  %143 = vmatpush2.bf16.msra.mxu0 0
  %144 = vmatprep.subr.bf16.mxu0 0
  %145 = vmatpush2.bf16.msra.mxu0 0
  %146 = vmatprep.subr.bf16.mxu0 0
  %147 = vmatpush2.bf16.msra.mxu0 0
  %148 = vmatprep.subr.bf16.mxu0 0
  %149 = vmatpush2.bf16.msra.mxu0 0
  %150 = vmatprep.subr.bf16.mxu0 0
  %151 = vmatpush2.bf16.msra.mxu0 0
  %152 = vmatprep.subr.bf16.mxu0 0
  %153 = vmatpush2.bf16.msra.mxu0 0
  %154 = vmatprep.mubr.bf16.mxu0 0
  %155 = vmatmul.mubr.bf16.gmra.mxu0 %v120
  %v156 = vpop.f32.mrf.mxu0
  %v157 = vadd.f32 0.0, %v156
  %v158 = vpop.f32.mrf.mxu0
  %v159 = vadd.f32 0.0, %v158
  %v160 = vpop.f32.mrf.mxu0
  %v161 = vpop.f32.mrf.mxu0
  %162 = vdwg.mxu0
  %v163 = vadd.f32 %v113, %v157
  %v164 = vadd.f32 %v115, %v159
  %v167 = vcombine.low %v163, %v164
  %vm169 = vcmask 1043456
  %vm170 = vcmask 556036
  %vm171 = vmor %vm170, %vm169
  %172 = vst.msk [vmem:[%s2] sm:$0xff] %vm171, %v167
  // Predicated region
  $region10: #{model_forward.2} parent=0 // pred_check
    _
  $region11: #{model_forward.2} parent=0 // pred_check_branch
    %174 = sbr.rel (0) target = $region13
  $region12: #{model_forward.2} parent=0 // pred_region
    _
  $region13: #{model_forward.2} parent=0 // pred_fallthru
    _
  // Predicated region
  $region14: #{model_forward.2} parent=0 // pred_check
    _
  $region15: #{model_forward.2} parent=0 // pred_check_branch
    %176 = sbr.rel (0) target = $region17
  $region16: #{model_forward.2} parent=0 // pred_region
    _
  $region17: #{model_forward.2} parent=0 // pred_fallthru
    _

// kernel: model_forward.3
$region0: #{model_forward.3}
  #allocation0 [shape = 'u32[]', space=smem, size = 0x4, offset = 0x4, fixed_abs, tag = 'smem constant byte address 0x4 - core index']
  #allocation1 [shape = 'u32[144,128]{1,0:T(1,128)}', space=vmem, size = 0x12000, scoped, tag = 'internal scratch']
  %s0 = inlined_call_operand.vmem [shape: f32[8,64], index: 0, kind: input, shape index: {}]
  %s1 = inlined_call_operand.vmem [shape: f32[64,38465], index: 1, kind: input, shape index: {}]
  %s2 = inlined_call_operand.vmem [shape: f32[8,38465], index: 2, kind: output, shape index: {}]
  %s3 = sld [smem:[#allocation0]]
  $region169: #{model_forward.3} parent=0
    _
  %s5 = ssub.s32 1, %s3
  %s6 = scalar_select 0, %s5, %s3
  $region1: #{model_forward.3} parent=0
    #allocation2 [shape = 'u8[4980736]{0}', space=vmem, size = 0x4c0000, scoped, tag = 'input window, operand 1']
    #allocation3 [shape = 'u8[622592]{0}', space=vmem, size = 0x98000, scoped, tag = 'output window, operand 0']
    loop: start=0, step=1, limit=6
    $region2: #{model_forward.3} parent=1 // loop_pre_header
      _
    $region3: #{model_forward.3} parent=1 // loop_header
      %s8 = sphi 0, %s12
      %p9 = scmp.ge.s32.totalorder %s8, 6
      %s16 = sphi 0, %s16
      %s18 = sphi 0, %s16
      %s19 = sphi 0, %s18
      %s33 = sphi 0, %s19
      %s39 = sphi 0, %s41
      %s42 = sphi 0, %s39
      %s43 = sphi 0, %s42
      %s59 = sphi 0, %s43
      %s65 = sphi 0, %s67
      %s68 = sphi 0, %s65
      %s69 = sphi 0, %s68
      %s85 = sphi 0, %s69
    $region4: #{model_forward.3} parent=1 // loop_header_branch
      %11 = sbr.rel (%p9) target = $region8
    $region5: #{model_forward.3} parent=1 // loop_body
      %s13 = ssub.s32 %s8, 1
      %s14 = ssub.s32 %s8, 2
      %s15 = sadd.s32 %s8, 1
      %s17 = sadd.s32 %s16, 1
      %p20 = scmp.eq.s32.totalorder %s8, 3
      %p21 = scmp.ne.s32.totalorder %s16, %s18
      %p22 = scmp.eq.s32.totalorder %s8, 0
      %p23 = por %p21, %p22
      %p24 = scmp.ne.s32.totalorder %s16, %s18
      %p25 = scmp.eq.s32.totalorder %s13, 3
      %p26 = por %p24, %p25
      %p27 = scmp.ne.s32.totalorder %s18, %s19
      %p28 = scmp.eq.s32.totalorder %s13, 0
      %p29 = por %p27, %p28
      %p30 = scmp.ne.s32.totalorder %s18, %s19
      %p31 = scmp.eq.s32.totalorder %s14, 3
      %p32 = por %p30, %p31
      %p34 = scmp.ne.s32.totalorder %s19, %s33
      %p35 = scmp.eq.s32.totalorder %s14, 0
      %p36 = por %p34, %p35
      %s37 = ssub.s32 %s8, %s15
      %p38 = scmp.eq.s32.totalorder %s37, 0
      %s40 = sadd.s32 %s39, 1
      %s41 = scalar_select %p38, %s39, %s40
      %p44 = pneg %p38
      %p45 = scmp.eq.s32.totalorder %s8, 3
      %p46 = por %p44, %p45
      %p47 = scmp.ne.s32.totalorder %s39, %s42
      %p48 = scmp.eq.s32.totalorder %s8, 0
      %p49 = por %p47, %p48
      %p50 = scmp.ne.s32.totalorder %s39, %s42
      %p51 = scmp.eq.s32.totalorder %s13, 3
      %p52 = por %p50, %p51
      %p53 = scmp.ne.s32.totalorder %s42, %s43
      %p54 = scmp.eq.s32.totalorder %s13, 0
      %p55 = por %p53, %p54
      %p56 = scmp.ne.s32.totalorder %s42, %s43
      %p57 = scmp.eq.s32.totalorder %s14, 3
      %p58 = por %p56, %p57
      %p60 = scmp.ne.s32.totalorder %s43, %s59
      %p61 = scmp.eq.s32.totalorder %s14, 0
      %p62 = por %p60, %p61
      %s63 = ssub.s32 %s8, %s15
      %p64 = scmp.eq.s32.totalorder %s63, 0
      %s66 = sadd.s32 %s65, 1
      %s67 = scalar_select %p64, %s65, %s66
      %p70 = pneg %p64
      %p71 = scmp.eq.s32.totalorder %s8, 3
      %p72 = por %p70, %p71
      %p73 = scmp.ne.s32.totalorder %s65, %s68
      %p74 = scmp.eq.s32.totalorder %s8, 0
      %p75 = por %p73, %p74
      %p76 = scmp.ne.s32.totalorder %s65, %s68
      %p77 = scmp.eq.s32.totalorder %s13, 3
      %p78 = por %p76, %p77
      %p79 = scmp.ne.s32.totalorder %s68, %s69
      %p80 = scmp.eq.s32.totalorder %s13, 0
      %p81 = por %p79, %p80
      %p82 = scmp.ne.s32.totalorder %s68, %s69
      %p83 = scmp.eq.s32.totalorder %s14, 3
      %p84 = por %p82, %p83
      %p86 = scmp.ne.s32.totalorder %s69, %s85
      %p87 = scmp.eq.s32.totalorder %s14, 0
      %p88 = por %p86, %p87
      %p89 = scmp.le.s32.totalorder 1, %s8
      %p90 = scmp.lt.s32.totalorder %s8, 5
      %p91 = pnand %p89, %p90
      %p92 = pneg %p91
      // Predicated region
      $region9: #{model_forward.3} parent=5 // pred_check
        _
      $region10: #{model_forward.3} parent=5 // pred_check_branch
        %94 = sbr.rel (%p91) target = $region12
      $region11: #{model_forward.3} parent=5 // pred_region
        %s95 = ssub.s32 %s8, 1
        // Predicated region
        $region13: #{model_forward.3} parent=11 // pred_check
          %p96 = pneg %p29
        $region14: #{model_forward.3} parent=11 // pred_check_branch
          %98 = sbr.rel (%p96) target = $region16
        $region15: #{model_forward.3} parent=11 // pred_region
          _
        $region16: #{model_forward.3} parent=11 // pred_fallthru
          _
      $region12: #{model_forward.3} parent=5 // pred_fallthru
        _
      %p99 = scmp.lt.s32.totalorder %s8, 4
      // Predicated region
      $region17: #{model_forward.3} parent=5 // pred_check
        %p100 = pneg %p99
      $region18: #{model_forward.3} parent=5 // pred_check_branch
        %102 = sbr.rel (%p100) target = $region20
      $region19: #{model_forward.3} parent=5 // pred_region
        // Predicated region
        $region21: #{model_forward.3} parent=19 // pred_check
          %p103 = pneg %p49
        $region22: #{model_forward.3} parent=19 // pred_check_branch
          %105 = sbr.rel (%p103) target = $region24
        $region23: #{model_forward.3} parent=19 // pred_region
          %s106 = sand.u32 %s39, 1
          %s107 = sand.u32 %s39, 1
          %s108 = smul.addr %s107, 4864
          %s109 = scalar_lea.vmem [#allocation2], %s108
          %s110 = smul.u32 76, %s8
          %s111 = ssub.s32 301, %s110
          %p112 = scmp.lt.s32.totalorder %s111, 76
          %s113 = scalar_select %p112, %s111, 76
          %s114 = smul.u32 1024, %s113
          %p115 = scmp.ne.s32.totalorder 0, %s114
          %s116 = smul.addr %s110, 8
          %s117 = scalar_lea.vmem %s1, %s116
          %s118 = smul.u32 %s113, 8
          // Predicated region
          $region25: #{model_forward.3} parent=23 // pred_check
            %p119 = pneg %p115
          $region26: #{model_forward.3} parent=23 // pred_check_branch
            %121 = sbr.rel (%p119) target = $region28
          $region27: #{model_forward.3} parent=23 // pred_region
            %p122 = scmp.lt.u32.totalorder %s118, 8
            %p123 = pneg %p122
            // Predicated region
            $region29: #{model_forward.3} parent=27 // pred_check
              _
            $region30: #{model_forward.3} parent=27 // pred_check_branch
              %125 = sbr.rel (%p122) target = $region32
            $region31: #{model_forward.3} parent=27 // pred_region
              %s155 = sand.u32 %s118, 7
              %p156 = scmp.eq.s32.totalorder %s155, 0
              // Predicated region
              $region44: #{model_forward.3} parent=31 // pred_check
                %p157 = pneg %p156
              $region45: #{model_forward.3} parent=31 // pred_check_branch
                %159 = sbr.rel (%p157) target = $region47
              $region46: #{model_forward.3} parent=31 // pred_region
                %s160 = sshrl.u32 %s118, 3
                %s161 = sshrl.u32 %s160, 3
                // While loop
                $region48: #{model_forward.3} parent=46 // loop_pre_header
                  _
                $region49: #{model_forward.3} parent=46 // loop_header
                  %s165 = sphi 0, %s167
                  %p166 = scmp.ge.s32.totalorder %s165, %s161
                  %s170 = sphi 0, %s303
                  %s171 = sphi %s117, %s306
                  %s172 = sphi %s109, %s307
                $region50: #{model_forward.3} parent=46 // loop_header_branch
                  %169 = sbr.rel (%p166) target = $region54
                $region51: #{model_forward.3} parent=46 // loop_body
                  %v173 = vld [vmem:[%s171] sm:$0xff]
                  %174 = vst [vmem:[%s172] sm:$0xff] %v173
                  %v175 = vld [vmem:[%s171 + $0x8] sm:$0xff]
                  %176 = vst [vmem:[%s172 + $0x8] sm:$0xff] %v175
                  %v177 = vld [vmem:[%s171 + $0x10] sm:$0xff]
                  %178 = vst [vmem:[%s172 + $0x10] sm:$0xff] %v177
                  %v179 = vld [vmem:[%s171 + $0x18] sm:$0xff]
                  %180 = vst [vmem:[%s172 + $0x18] sm:$0xff] %v179
                  %v181 = vld [vmem:[%s171 + $0x20] sm:$0xff]
                  %182 = vst [vmem:[%s172 + $0x20] sm:$0xff] %v181
                  %v183 = vld [vmem:[%s171 + $0x28] sm:$0xff]
                  %184 = vst [vmem:[%s172 + $0x28] sm:$0xff] %v183
                  %v185 = vld [vmem:[%s171 + $0x30] sm:$0xff]
                  %186 = vst [vmem:[%s172 + $0x30] sm:$0xff] %v185
                  %v187 = vld [vmem:[%s171 + $0x38] sm:$0xff]
                  %188 = vst [vmem:[%s172 + $0x38] sm:$0xff] %v187
                  %v189 = vld [vmem:[%s171 + $0x968] sm:$0xff]
                  %190 = vst [vmem:[%s172 + $0x260] sm:$0xff] %v189
                  %v191 = vld [vmem:[%s171 + $0x970] sm:$0xff]
                  %192 = vst [vmem:[%s172 + $0x268] sm:$0xff] %v191
                  %v193 = vld [vmem:[%s171 + $0x978] sm:$0xff]
                  %194 = vst [vmem:[%s172 + $0x270] sm:$0xff] %v193
                  %v195 = vld [vmem:[%s171 + $0x980] sm:$0xff]
                  %196 = vst [vmem:[%s172 + $0x278] sm:$0xff] %v195
                  %v197 = vld [vmem:[%s171 + $0x988] sm:$0xff]
                  %198 = vst [vmem:[%s172 + $0x280] sm:$0xff] %v197
                  %v199 = vld [vmem:[%s171 + $0x990] sm:$0xff]
                  %200 = vst [vmem:[%s172 + $0x288] sm:$0xff] %v199
                  %v201 = vld [vmem:[%s171 + $0x998] sm:$0xff]
                  %202 = vst [vmem:[%s172 + $0x290] sm:$0xff] %v201
                  %v203 = vld [vmem:[%s171 + $0x9a0] sm:$0xff]
                  %204 = vst [vmem:[%s172 + $0x298] sm:$0xff] %v203
                  %v205 = vld [vmem:[%s171 + $0x12d0] sm:$0xff]
                  %206 = vst [vmem:[%s172 + $0x4c0] sm:$0xff] %v205
                  %v207 = vld [vmem:[%s171 + $0x12d8] sm:$0xff]
                  %208 = vst [vmem:[%s172 + $0x4c8] sm:$0xff] %v207
                  %v209 = vld [vmem:[%s171 + $0x12e0] sm:$0xff]
                  %210 = vst [vmem:[%s172 + $0x4d0] sm:$0xff] %v209
                  %v211 = vld [vmem:[%s171 + $0x12e8] sm:$0xff]
                  %212 = vst [vmem:[%s172 + $0x4d8] sm:$0xff] %v211
                  %v213 = vld [vmem:[%s171 + $0x12f0] sm:$0xff]
                  %214 = vst [vmem:[%s172 + $0x4e0] sm:$0xff] %v213
                  %v215 = vld [vmem:[%s171 + $0x12f8] sm:$0xff]
                  %216 = vst [vmem:[%s172 + $0x4e8] sm:$0xff] %v215
                  %v217 = vld [vmem:[%s171 + $0x1300] sm:$0xff]
                  %218 = vst [vmem:[%s172 + $0x4f0] sm:$0xff] %v217
                  %v219 = vld [vmem:[%s171 + $0x1308] sm:$0xff]
                  %220 = vst [vmem:[%s172 + $0x4f8] sm:$0xff] %v219
                  %v221 = vld [vmem:[%s171 + $0x1c38] sm:$0xff]
                  %222 = vst [vmem:[%s172 + $0x720] sm:$0xff] %v221
                  %v223 = vld [vmem:[%s171 + $0x1c40] sm:$0xff]
                  %224 = vst [vmem:[%s172 + $0x728] sm:$0xff] %v223
                  %v225 = vld [vmem:[%s171 + $0x1c48] sm:$0xff]
                  %226 = vst [vmem:[%s172 + $0x730] sm:$0xff] %v225
                  %v227 = vld [vmem:[%s171 + $0x1c50] sm:$0xff]
                  %228 = vst [vmem:[%s172 + $0x738] sm:$0xff] %v227
                  %v229 = vld [vmem:[%s171 + $0x1c58] sm:$0xff]
                  %230 = vst [vmem:[%s172 + $0x740] sm:$0xff] %v229
                  %v231 = vld [vmem:[%s171 + $0x1c60] sm:$0xff]
                  %232 = vst [vmem:[%s172 + $0x748] sm:$0xff] %v231
                  %v233 = vld [vmem:[%s171 + $0x1c68] sm:$0xff]
                  %234 = vst [vmem:[%s172 + $0x750] sm:$0xff] %v233
                  %v235 = vld [vmem:[%s171 + $0x1c70] sm:$0xff]
                  %236 = vst [vmem:[%s172 + $0x758] sm:$0xff] %v235
                  %v237 = vld [vmem:[%s171 + $0x25a0] sm:$0xff]
                  %238 = vst [vmem:[%s172 + $0x980] sm:$0xff] %v237
                  %v239 = vld [vmem:[%s171 + $0x25a8] sm:$0xff]
                  %240 = vst [vmem:[%s172 + $0x988] sm:$0xff] %v239
                  %v241 = vld [vmem:[%s171 + $0x25b0] sm:$0xff]
                  %242 = vst [vmem:[%s172 + $0x990] sm:$0xff] %v241
                  %v243 = vld [vmem:[%s171 + $0x25b8] sm:$0xff]
                  %244 = vst [vmem:[%s172 + $0x998] sm:$0xff] %v243
                  %v245 = vld [vmem:[%s171 + $0x25c0] sm:$0xff]
                  %246 = vst [vmem:[%s172 + $0x9a0] sm:$0xff] %v245
                  %v247 = vld [vmem:[%s171 + $0x25c8] sm:$0xff]
                  %248 = vst [vmem:[%s172 + $0x9a8] sm:$0xff] %v247
                  %v249 = vld [vmem:[%s171 + $0x25d0] sm:$0xff]
                  %250 = vst [vmem:[%s172 + $0x9b0] sm:$0xff] %v249
                  %v251 = vld [vmem:[%s171 + $0x25d8] sm:$0xff]
                  %252 = vst [vmem:[%s172 + $0x9b8] sm:$0xff] %v251
                  %v253 = vld [vmem:[%s171 + $0x2f08] sm:$0xff]
                  %254 = vst [vmem:[%s172 + $0xbe0] sm:$0xff] %v253
                  %v255 = vld [vmem:[%s171 + $0x2f10] sm:$0xff]
                  %256 = vst [vmem:[%s172 + $0xbe8] sm:$0xff] %v255
                  %v257 = vld [vmem:[%s171 + $0x2f18] sm:$0xff]
                  %258 = vst [vmem:[%s172 + $0xbf0] sm:$0xff] %v257
                  %v259 = vld [vmem:[%s171 + $0x2f20] sm:$0xff]
                  %260 = vst [vmem:[%s172 + $0xbf8] sm:$0xff] %v259
                  %v261 = vld [vmem:[%s171 + $0x2f28] sm:$0xff]
                  %262 = vst [vmem:[%s172 + $0xc00] sm:$0xff] %v261
                  %v263 = vld [vmem:[%s171 + $0x2f30] sm:$0xff]
                  %264 = vst [vmem:[%s172 + $0xc08] sm:$0xff] %v263
                  %v265 = vld [vmem:[%s171 + $0x2f38] sm:$0xff]
                  %266 = vst [vmem:[%s172 + $0xc10] sm:$0xff] %v265
                  %v267 = vld [vmem:[%s171 + $0x2f40] sm:$0xff]
                  %268 = vst [vmem:[%s172 + $0xc18] sm:$0xff] %v267
                  %v269 = vld [vmem:[%s171 + $0x3870] sm:$0xff]
                  %270 = vst [vmem:[%s172 + $0xe40] sm:$0xff] %v269
                  %v271 = vld [vmem:[%s171 + $0x3878] sm:$0xff]
                  %272 = vst [vmem:[%s172 + $0xe48] sm:$0xff] %v271
                  %v273 = vld [vmem:[%s171 + $0x3880] sm:$0xff]
                  %274 = vst [vmem:[%s172 + $0xe50] sm:$0xff] %v273
                  %v275 = vld [vmem:[%s171 + $0x3888] sm:$0xff]
                  %276 = vst [vmem:[%s172 + $0xe58] sm:$0xff] %v275
                  %v277 = vld [vmem:[%s171 + $0x3890] sm:$0xff]
                  %278 = vst [vmem:[%s172 + $0xe60] sm:$0xff] %v277
                  %v279 = vld [vmem:[%s171 + $0x3898] sm:$0xff]
                  %280 = vst [vmem:[%s172 + $0xe68] sm:$0xff] %v279
                  %v281 = vld [vmem:[%s171 + $0x38a0] sm:$0xff]
                  %282 = vst [vmem:[%s172 + $0xe70] sm:$0xff] %v281
                  %v283 = vld [vmem:[%s171 + $0x38a8] sm:$0xff]
                  %284 = vst [vmem:[%s172 + $0xe78] sm:$0xff] %v283
                  %v285 = vld [vmem:[%s171 + $0x41d8] sm:$0xff]
                  %286 = vst [vmem:[%s172 + $0x10a0] sm:$0xff] %v285
                  %v287 = vld [vmem:[%s171 + $0x41e0] sm:$0xff]
                  %288 = vst [vmem:[%s172 + $0x10a8] sm:$0xff] %v287
                  %v289 = vld [vmem:[%s171 + $0x41e8] sm:$0xff]
                  %290 = vst [vmem:[%s172 + $0x10b0] sm:$0xff] %v289
                  %v291 = vld [vmem:[%s171 + $0x41f0] sm:$0xff]
                  %292 = vst [vmem:[%s172 + $0x10b8] sm:$0xff] %v291
                  %v293 = vld [vmem:[%s171 + $0x41f8] sm:$0xff]
                  %294 = vst [vmem:[%s172 + $0x10c0] sm:$0xff] %v293
                  %v295 = vld [vmem:[%s171 + $0x4200] sm:$0xff]
                  %296 = vst [vmem:[%s172 + $0x10c8] sm:$0xff] %v295
                  %v297 = vld [vmem:[%s171 + $0x4208] sm:$0xff]
                  %298 = vst [vmem:[%s172 + $0x10d0] sm:$0xff] %v297
                  %v299 = vld [vmem:[%s171 + $0x4210] sm:$0xff]
                  %300 = vst [vmem:[%s172 + $0x10d8] sm:$0xff] %v299
                  %s301 = sadd.s32 1, %s170
                  %p302 = scmp.ge.s32.totalorder %s301, %s161
                  %s303 = scalar_select %p302, 0, %s301
                  %s304 = smul.u32 %s303, 64
                  %s305 = smul.u32 %s303, 64
                  %s306 = scalar_lea.vmem %s117, %s304
                  %s307 = scalar_lea.vmem %s109, %s305 [#allocation2]
                $region52: #{model_forward.3} parent=46 // loop_footer
                  %s167 = sadd.s32 %s165, 1
                $region53: #{model_forward.3} parent=46 // loop_footer_branch
                  %164 = sbr.rel target = $region49
                $region54: #{model_forward.3} parent=46 // loop_exit
                  _
                %s308 = sshrl.u32 %s160, 3
                %s309 = sand.u32 %s160, 7
                %s310 = smul.u32 %s308, 8
                %s311 = smul.u32 128, %s310
                %s312 = sshra.s32 %s311, 4
                %s313 = scalar_lea.vmem %s117, %s312
                %s314 = smul.u32 128, %s310
                %s315 = sshra.s32 %s314, 4
                %s316 = scalar_lea.vmem %s109, %s315 [#allocation2]
                // While loop
                $region55: #{model_forward.3} parent=46 // loop_pre_header
                  _
                $region56: #{model_forward.3} parent=46 // loop_header
                  %s320 = sphi 0, %s322
                  %p321 = scmp.ge.s32.totalorder %s320, %s309
                  %s325 = sphi 0, %s346
                  %s326 = sphi %s313, %s349
                  %s327 = sphi %s316, %s350
                $region57: #{model_forward.3} parent=46 // loop_header_branch
                  %324 = sbr.rel (%p321) target = $region61
                $region58: #{model_forward.3} parent=46 // loop_body
                  %v328 = vld [vmem:[%s326] sm:$0xff]
                  %329 = vst [vmem:[%s327] sm:$0xff] %v328
                  %v330 = vld [vmem:[%s326 + $0x968] sm:$0xff]
                  %331 = vst [vmem:[%s327 + $0x260] sm:$0xff] %v330
                  %v332 = vld [vmem:[%s326 + $0x12d0] sm:$0xff]
                  %333 = vst [vmem:[%s327 + $0x4c0] sm:$0xff] %v332
                  %v334 = vld [vmem:[%s326 + $0x1c38] sm:$0xff]
                  %335 = vst [vmem:[%s327 + $0x720] sm:$0xff] %v334
                  %v336 = vld [vmem:[%s326 + $0x25a0] sm:$0xff]
                  %337 = vst [vmem:[%s327 + $0x980] sm:$0xff] %v336
                  %v338 = vld [vmem:[%s326 + $0x2f08] sm:$0xff]
                  %339 = vst [vmem:[%s327 + $0xbe0] sm:$0xff] %v338
                  %v340 = vld [vmem:[%s326 + $0x3870] sm:$0xff]
                  %341 = vst [vmem:[%s327 + $0xe40] sm:$0xff] %v340
                  %v342 = vld [vmem:[%s326 + $0x41d8] sm:$0xff]
                  %343 = vst [vmem:[%s327 + $0x10a0] sm:$0xff] %v342
                  %s344 = sadd.s32 1, %s325
                  %p345 = scmp.ge.s32.totalorder %s344, %s309
                  %s346 = scalar_select %p345, 0, %s344
                  %s347 = smul.u32 %s346, 8
                  %s348 = smul.u32 %s346, 8
                  %s349 = scalar_lea.vmem %s313, %s347
                  %s350 = scalar_lea.vmem %s316, %s348 [#allocation2]
                $region59: #{model_forward.3} parent=46 // loop_footer
                  %s322 = sadd.s32 %s320, 1
                $region60: #{model_forward.3} parent=46 // loop_footer_branch
                  %319 = sbr.rel target = $region56
                $region61: #{model_forward.3} parent=46 // loop_exit
                  _
              $region47: #{model_forward.3} parent=31 // pred_fallthru
                _
              %p351 = pneg %p156
              // Predicated region
              $region62: #{model_forward.3} parent=31 // pred_check
                _
              $region63: #{model_forward.3} parent=31 // pred_check_branch
                %353 = sbr.rel (%p156) target = $region65
              $region64: #{model_forward.3} parent=31 // pred_region
                %s354 = sand.u32 %s118, 7
                %s355 = ssub.s32 %s118, %s354
                %s356 = scalar_lea.vmem %s117, %s355
                %s357 = ssub.s32 %s118, %s354
                %s358 = scalar_lea.vmem %s109, %s357 [#allocation2]
                %s359 = sshrl.u32 %s118, 3
                %s360 = sshrl.u32 %s359, 3
                // While loop
                $region66: #{model_forward.3} parent=64 // loop_pre_header
                  _
                $region67: #{model_forward.3} parent=64 // loop_header
                  %s364 = sphi 0, %s366
                  %p365 = scmp.ge.s32.totalorder %s364, %s360
                  %s369 = sphi 0, %s502
                  %s370 = sphi %s117, %s505
                  %s371 = sphi %s109, %s506
                $region68: #{model_forward.3} parent=64 // loop_header_branch
                  %368 = sbr.rel (%p365) target = $region72
                $region69: #{model_forward.3} parent=64 // loop_body
                  %v372 = vld [vmem:[%s370] sm:$0xff]
                  %373 = vst [vmem:[%s371] sm:$0xff] %v372
                  %v374 = vld [vmem:[%s370 + $0x8] sm:$0xff]
                  %375 = vst [vmem:[%s371 + $0x8] sm:$0xff] %v374
                  %v376 = vld [vmem:[%s370 + $0x10] sm:$0xff]
                  %377 = vst [vmem:[%s371 + $0x10] sm:$0xff] %v376
                  %v378 = vld [vmem:[%s370 + $0x18] sm:$0xff]
                  %379 = vst [vmem:[%s371 + $0x18] sm:$0xff] %v378
                  %v380 = vld [vmem:[%s370 + $0x20] sm:$0xff]
                  %381 = vst [vmem:[%s371 + $0x20] sm:$0xff] %v380
                  %v382 = vld [vmem:[%s370 + $0x28] sm:$0xff]
                  %383 = vst [vmem:[%s371 + $0x28] sm:$0xff] %v382
                  %v384 = vld [vmem:[%s370 + $0x30] sm:$0xff]
                  %385 = vst [vmem:[%s371 + $0x30] sm:$0xff] %v384
                  %v386 = vld [vmem:[%s370 + $0x38] sm:$0xff]
                  %387 = vst [vmem:[%s371 + $0x38] sm:$0xff] %v386
                  %v388 = vld [vmem:[%s370 + $0x968] sm:$0xff]
                  %389 = vst [vmem:[%s371 + $0x260] sm:$0xff] %v388
                  %v390 = vld [vmem:[%s370 + $0x970] sm:$0xff]
                  %391 = vst [vmem:[%s371 + $0x268] sm:$0xff] %v390
                  %v392 = vld [vmem:[%s370 + $0x978] sm:$0xff]
                  %393 = vst [vmem:[%s371 + $0x270] sm:$0xff] %v392
                  %v394 = vld [vmem:[%s370 + $0x980] sm:$0xff]
                  %395 = vst [vmem:[%s371 + $0x278] sm:$0xff] %v394
                  %v396 = vld [vmem:[%s370 + $0x988] sm:$0xff]
                  %397 = vst [vmem:[%s371 + $0x280] sm:$0xff] %v396
                  %v398 = vld [vmem:[%s370 + $0x990] sm:$0xff]
                  %399 = vst [vmem:[%s371 + $0x288] sm:$0xff] %v398
                  %v400 = vld [vmem:[%s370 + $0x998] sm:$0xff]
                  %401 = vst [vmem:[%s371 + $0x290] sm:$0xff] %v400
                  %v402 = vld [vmem:[%s370 + $0x9a0] sm:$0xff]
                  %403 = vst [vmem:[%s371 + $0x298] sm:$0xff] %v402
                  %v404 = vld [vmem:[%s370 + $0x12d0] sm:$0xff]
                  %405 = vst [vmem:[%s371 + $0x4c0] sm:$0xff] %v404
                  %v406 = vld [vmem:[%s370 + $0x12d8] sm:$0xff]
                  %407 = vst [vmem:[%s371 + $0x4c8] sm:$0xff] %v406
                  %v408 = vld [vmem:[%s370 + $0x12e0] sm:$0xff]
                  %409 = vst [vmem:[%s371 + $0x4d0] sm:$0xff] %v408
                  %v410 = vld [vmem:[%s370 + $0x12e8] sm:$0xff]
                  %411 = vst [vmem:[%s371 + $0x4d8] sm:$0xff] %v410
                  %v412 = vld [vmem:[%s370 + $0x12f0] sm:$0xff]
                  %413 = vst [vmem:[%s371 + $0x4e0] sm:$0xff] %v412
                  %v414 = vld [vmem:[%s370 + $0x12f8] sm:$0xff]
                  %415 = vst [vmem:[%s371 + $0x4e8] sm:$0xff] %v414
                  %v416 = vld [vmem:[%s370 + $0x1300] sm:$0xff]
                  %417 = vst [vmem:[%s371 + $0x4f0] sm:$0xff] %v416
                  %v418 = vld [vmem:[%s370 + $0x1308] sm:$0xff]
                  %419 = vst [vmem:[%s371 + $0x4f8] sm:$0xff] %v418
                  %v420 = vld [vmem:[%s370 + $0x1c38] sm:$0xff]
                  %421 = vst [vmem:[%s371 + $0x720] sm:$0xff] %v420
                  %v422 = vld [vmem:[%s370 + $0x1c40] sm:$0xff]
                  %423 = vst [vmem:[%s371 + $0x728] sm:$0xff] %v422
                  %v424 = vld [vmem:[%s370 + $0x1c48] sm:$0xff]
                  %425 = vst [vmem:[%s371 + $0x730] sm:$0xff] %v424
                  %v426 = vld [vmem:[%s370 + $0x1c50] sm:$0xff]
                  %427 = vst [vmem:[%s371 + $0x738] sm:$0xff] %v426
                  %v428 = vld [vmem:[%s370 + $0x1c58] sm:$0xff]
                  %429 = vst [vmem:[%s371 + $0x740] sm:$0xff] %v428
                  %v430 = vld [vmem:[%s370 + $0x1c60] sm:$0xff]
                  %431 = vst [vmem:[%s371 + $0x748] sm:$0xff] %v430
                  %v432 = vld [vmem:[%s370 + $0x1c68] sm:$0xff]
                  %433 = vst [vmem:[%s371 + $0x750] sm:$0xff] %v432
                  %v434 = vld [vmem:[%s370 + $0x1c70] sm:$0xff]
                  %435 = vst [vmem:[%s371 + $0x758] sm:$0xff] %v434
                  %v436 = vld [vmem:[%s370 + $0x25a0] sm:$0xff]
                  %437 = vst [vmem:[%s371 + $0x980] sm:$0xff] %v436
                  %v438 = vld [vmem:[%s370 + $0x25a8] sm:$0xff]
                  %439 = vst [vmem:[%s371 + $0x988] sm:$0xff] %v438
                  %v440 = vld [vmem:[%s370 + $0x25b0] sm:$0xff]
                  %441 = vst [vmem:[%s371 + $0x990] sm:$0xff] %v440
                  %v442 = vld [vmem:[%s370 + $0x25b8] sm:$0xff]
                  %443 = vst [vmem:[%s371 + $0x998] sm:$0xff] %v442
                  %v444 = vld [vmem:[%s370 + $0x25c0] sm:$0xff]
                  %445 = vst [vmem:[%s371 + $0x9a0] sm:$0xff] %v444
                  %v446 = vld [vmem:[%s370 + $0x25c8] sm:$0xff]
                  %447 = vst [vmem:[%s371 + $0x9a8] sm:$0xff] %v446
                  %v448 = vld [vmem:[%s370 + $0x25d0] sm:$0xff]
                  %449 = vst [vmem:[%s371 + $0x9b0] sm:$0xff] %v448
                  %v450 = vld [vmem:[%s370 + $0x25d8] sm:$0xff]
                  %451 = vst [vmem:[%s371 + $0x9b8] sm:$0xff] %v450
                  %v452 = vld [vmem:[%s370 + $0x2f08] sm:$0xff]
                  %453 = vst [vmem:[%s371 + $0xbe0] sm:$0xff] %v452
                  %v454 = vld [vmem:[%s370 + $0x2f10] sm:$0xff]
                  %455 = vst [vmem:[%s371 + $0xbe8] sm:$0xff] %v454
                  %v456 = vld [vmem:[%s370 + $0x2f18] sm:$0xff]
                  %457 = vst [vmem:[%s371 + $0xbf0] sm:$0xff] %v456
                  %v458 = vld [vmem:[%s370 + $0x2f20] sm:$0xff]
                  %459 = vst [vmem:[%s371 + $0xbf8] sm:$0xff] %v458
                  %v460 = vld [vmem:[%s370 + $0x2f28] sm:$0xff]
                  %461 = vst [vmem:[%s371 + $0xc00] sm:$0xff] %v460
                  %v462 = vld [vmem:[%s370 + $0x2f30] sm:$0xff]
                  %463 = vst [vmem:[%s371 + $0xc08] sm:$0xff] %v462
                  %v464 = vld [vmem:[%s370 + $0x2f38] sm:$0xff]
                  %465 = vst [vmem:[%s371 + $0xc10] sm:$0xff] %v464
                  %v466 = vld [vmem:[%s370 + $0x2f40] sm:$0xff]
                  %467 = vst [vmem:[%s371 + $0xc18] sm:$0xff] %v466
                  %v468 = vld [vmem:[%s370 + $0x3870] sm:$0xff]
                  %469 = vst [vmem:[%s371 + $0xe40] sm:$0xff] %v468
                  %v470 = vld [vmem:[%s370 + $0x3878] sm:$0xff]
                  %471 = vst [vmem:[%s371 + $0xe48] sm:$0xff] %v470
                  %v472 = vld [vmem:[%s370 + $0x3880] sm:$0xff]
                  %473 = vst [vmem:[%s371 + $0xe50] sm:$0xff] %v472
                  %v474 = vld [vmem:[%s370 + $0x3888] sm:$0xff]
                  %475 = vst [vmem:[%s371 + $0xe58] sm:$0xff] %v474
                  %v476 = vld [vmem:[%s370 + $0x3890] sm:$0xff]
                  %477 = vst [vmem:[%s371 + $0xe60] sm:$0xff] %v476
                  %v478 = vld [vmem:[%s370 + $0x3898] sm:$0xff]
                  %479 = vst [vmem:[%s371 + $0xe68] sm:$0xff] %v478
                  %v480 = vld [vmem:[%s370 + $0x38a0] sm:$0xff]
                  %481 = vst [vmem:[%s371 + $0xe70] sm:$0xff] %v480
                  %v482 = vld [vmem:[%s370 + $0x38a8] sm:$0xff]
                  %483 = vst [vmem:[%s371 + $0xe78] sm:$0xff] %v482
                  %v484 = vld [vmem:[%s370 + $0x41d8] sm:$0xff]
                  %485 = vst [vmem:[%s371 + $0x10a0] sm:$0xff] %v484
                  %v486 = vld [vmem:[%s370 + $0x41e0] sm:$0xff]
                  %487 = vst [vmem:[%s371 + $0x10a8] sm:$0xff] %v486
                  %v488 = vld [vmem:[%s370 + $0x41e8] sm:$0xff]
                  %489 = vst [vmem:[%s371 + $0x10b0] sm:$0xff] %v488
                  %v490 = vld [vmem:[%s370 + $0x41f0] sm:$0xff]
                  %491 = vst [vmem:[%s371 + $0x10b8] sm:$0xff] %v490
                  %v492 = vld [vmem:[%s370 + $0x41f8] sm:$0xff]
                  %493 = vst [vmem:[%s371 + $0x10c0] sm:$0xff] %v492
                  %v494 = vld [vmem:[%s370 + $0x4200] sm:$0xff]
                  %495 = vst [vmem:[%s371 + $0x10c8] sm:$0xff] %v494
                  %v496 = vld [vmem:[%s370 + $0x4208] sm:$0xff]
                  %497 = vst [vmem:[%s371 + $0x10d0] sm:$0xff] %v496
                  %v498 = vld [vmem:[%s370 + $0x4210] sm:$0xff]
                  %499 = vst [vmem:[%s371 + $0x10d8] sm:$0xff] %v498
                  %s500 = sadd.s32 1, %s369
                  %p501 = scmp.ge.s32.totalorder %s500, %s360
                  %s502 = scalar_select %p501, 0, %s500
                  %s503 = smul.u32 %s502, 64
                  %s504 = smul.u32 %s502, 64
                  %s505 = scalar_lea.vmem %s117, %s503
                  %s506 = scalar_lea.vmem %s109, %s504 [#allocation2]
                $region70: #{model_forward.3} parent=64 // loop_footer
                  %s366 = sadd.s32 %s364, 1
                $region71: #{model_forward.3} parent=64 // loop_footer_branch
                  %363 = sbr.rel target = $region67
                $region72: #{model_forward.3} parent=64 // loop_exit
                  _
                %s507 = sshrl.u32 %s359, 3
                %s508 = sand.u32 %s359, 7
                %s509 = smul.u32 %s507, 8
                %s510 = smul.u32 128, %s509
                %s511 = sshra.s32 %s510, 4
                %s512 = scalar_lea.vmem %s117, %s511
                %s513 = smul.u32 128, %s509
                %s514 = sshra.s32 %s513, 4
                %s515 = scalar_lea.vmem %s109, %s514 [#allocation2]
                // While loop
                $region73: #{model_forward.3} parent=64 // loop_pre_header
                  _
                $region74: #{model_forward.3} parent=64 // loop_header
                  %s519 = sphi 0, %s521
                  %p520 = scmp.ge.s32.totalorder %s519, %s508
                  %s524 = sphi 0, %s545
                  %s525 = sphi %s512, %s548
                  %s526 = sphi %s515, %s549
                $region75: #{model_forward.3} parent=64 // loop_header_branch
                  %523 = sbr.rel (%p520) target = $region79
                $region76: #{model_forward.3} parent=64 // loop_body
                  %v527 = vld [vmem:[%s525] sm:$0xff]
                  %528 = vst [vmem:[%s526] sm:$0xff] %v527
                  %v529 = vld [vmem:[%s525 + $0x968] sm:$0xff]
                  %530 = vst [vmem:[%s526 + $0x260] sm:$0xff] %v529
                  %v531 = vld [vmem:[%s525 + $0x12d0] sm:$0xff]
                  %532 = vst [vmem:[%s526 + $0x4c0] sm:$0xff] %v531
                  %v533 = vld [vmem:[%s525 + $0x1c38] sm:$0xff]
                  %534 = vst [vmem:[%s526 + $0x720] sm:$0xff] %v533
                  %v535 = vld [vmem:[%s525 + $0x25a0] sm:$0xff]
                  %536 = vst [vmem:[%s526 + $0x980] sm:$0xff] %v535
                  %v537 = vld [vmem:[%s525 + $0x2f08] sm:$0xff]
                  %538 = vst [vmem:[%s526 + $0xbe0] sm:$0xff] %v537
                  %v539 = vld [vmem:[%s525 + $0x3870] sm:$0xff]
                  %540 = vst [vmem:[%s526 + $0xe40] sm:$0xff] %v539
                  %v541 = vld [vmem:[%s525 + $0x41d8] sm:$0xff]
                  %542 = vst [vmem:[%s526 + $0x10a0] sm:$0xff] %v541
                  %s543 = sadd.s32 1, %s524
                  %p544 = scmp.ge.s32.totalorder %s543, %s508
                  %s545 = scalar_select %p544, 0, %s543
                  %s546 = smul.u32 %s545, 8
                  %s547 = smul.u32 %s545, 8
                  %s548 = scalar_lea.vmem %s512, %s546
                  %s549 = scalar_lea.vmem %s515, %s547 [#allocation2]
                $region77: #{model_forward.3} parent=64 // loop_footer
                  %s521 = sadd.s32 %s519, 1
                $region78: #{model_forward.3} parent=64 // loop_footer_branch
                  %518 = sbr.rel target = $region74
                $region79: #{model_forward.3} parent=64 // loop_exit
                  _
                %s550 = sshll.u32 1, %s354
                %s551 = ssub.s32 %s550, 1
                loop: start=0, step=1, limit=1
                $region80: #{model_forward.3} parent=64 // loop_pre_header
                  _
                $region81: #{model_forward.3} parent=64 // loop_header
                  %s553 = sphi 0, %s557
                  %p554 = scmp.ge.s32.totalorder %s553, 1
                  %s558 = sphi %s356, %s356
                  %s559 = sphi %s358, %s358
                $region82: #{model_forward.3} parent=64 // loop_header_branch
                  %556 = sbr.rel (%p554) target = $region86
                $region83: #{model_forward.3} parent=64 // loop_body
                  %v560 = vld [vmem:[%s558] sm:%s551]
                  %561 = vst [vmem:[%s559] sm:%s551] %v560
                  %v562 = vld [vmem:[%s558 + $0x968] sm:%s551]
                  %563 = vst [vmem:[%s559 + $0x260] sm:%s551] %v562
                  %v564 = vld [vmem:[%s558 + $0x12d0] sm:%s551]
                  %565 = vst [vmem:[%s559 + $0x4c0] sm:%s551] %v564
                  %v566 = vld [vmem:[%s558 + $0x1c38] sm:%s551]
                  %567 = vst [vmem:[%s559 + $0x720] sm:%s551] %v566
                  %v568 = vld [vmem:[%s558 + $0x25a0] sm:%s551]
                  %569 = vst [vmem:[%s559 + $0x980] sm:%s551] %v568
                  %v570 = vld [vmem:[%s558 + $0x2f08] sm:%s551]
                  %571 = vst [vmem:[%s559 + $0xbe0] sm:%s551] %v570
                  %v572 = vld [vmem:[%s558 + $0x3870] sm:%s551]
                  %573 = vst [vmem:[%s559 + $0xe40] sm:%s551] %v572
                  %v574 = vld [vmem:[%s558 + $0x41d8] sm:%s551]
                  %575 = vst [vmem:[%s559 + $0x10a0] sm:%s551] %v574
                $region84: #{model_forward.3} parent=64 // loop_footer
                  %s557 = sadd.s32 1, %s553
                $region85: #{model_forward.3} parent=64 // loop_footer_branch
                  %552 = sbr.rel target = $region81
                $region86: #{model_forward.3} parent=64 // loop_exit
                  _
              $region65: #{model_forward.3} parent=31 // pred_fallthru
                _
            $region32: #{model_forward.3} parent=27 // pred_fallthru
              _
            // Predicated region
            $region33: #{model_forward.3} parent=27 // pred_check
              %p126 = pneg %p122
            $region34: #{model_forward.3} parent=27 // pred_check_branch
              %128 = sbr.rel (%p126) target = $region36
            $region35: #{model_forward.3} parent=27 // pred_region
              %s129 = sshll.u32 1, %s118
              %s130 = ssub.s32 %s129, 1
              loop: start=0, step=1, limit=1
              $region37: #{model_forward.3} parent=35 // loop_pre_header
                _
              $region38: #{model_forward.3} parent=35 // loop_header
                %s132 = sphi 0, %s136
                %p133 = scmp.ge.s32.totalorder %s132, 1
                %s137 = sphi %s117, %s117
                %s138 = sphi %s109, %s109
              $region39: #{model_forward.3} parent=35 // loop_header_branch
                %135 = sbr.rel (%p133) target = $region43
              $region40: #{model_forward.3} parent=35 // loop_body
                %v139 = vld [vmem:[%s137] sm:%s130]
                %140 = vst [vmem:[%s138] sm:%s130] %v139
                %v141 = vld [vmem:[%s137 + $0x968] sm:%s130]
                %142 = vst [vmem:[%s138 + $0x260] sm:%s130] %v141
                %v143 = vld [vmem:[%s137 + $0x12d0] sm:%s130]
                %144 = vst [vmem:[%s138 + $0x4c0] sm:%s130] %v143
                %v145 = vld [vmem:[%s137 + $0x1c38] sm:%s130]
                %146 = vst [vmem:[%s138 + $0x720] sm:%s130] %v145
                %v147 = vld [vmem:[%s137 + $0x25a0] sm:%s130]
                %148 = vst [vmem:[%s138 + $0x980] sm:%s130] %v147
                %v149 = vld [vmem:[%s137 + $0x2f08] sm:%s130]
                %150 = vst [vmem:[%s138 + $0xbe0] sm:%s130] %v149
                %v151 = vld [vmem:[%s137 + $0x3870] sm:%s130]
                %152 = vst [vmem:[%s138 + $0xe40] sm:%s130] %v151
                %v153 = vld [vmem:[%s137 + $0x41d8] sm:%s130]
                %154 = vst [vmem:[%s138 + $0x10a0] sm:%s130] %v153
              $region41: #{model_forward.3} parent=35 // loop_footer
                %s136 = sadd.s32 1, %s132
              $region42: #{model_forward.3} parent=35 // loop_footer_branch
                %131 = sbr.rel target = $region38
              $region43: #{model_forward.3} parent=35 // loop_exit
                _
            $region36: #{model_forward.3} parent=27 // pred_fallthru
              _
          $region28: #{model_forward.3} parent=23 // pred_fallthru
            _
          %576 = vnop
        $region24: #{model_forward.3} parent=19 // pred_fallthru
          _
      $region20: #{model_forward.3} parent=5 // pred_fallthru
        _
      %p577 = scmp.le.s32.totalorder 1, %s8
      %p578 = scmp.lt.s32.totalorder %s8, 5
      %p579 = pnand %p577, %p578
      %p580 = pneg %p579
      // Predicated region
      $region87: #{model_forward.3} parent=5 // pred_check
        _
      $region88: #{model_forward.3} parent=5 // pred_check_branch
        %582 = sbr.rel (%p579) target = $region90
      $region89: #{model_forward.3} parent=5 // pred_region
        %s583 = ssub.s32 %s8, 1
        %s584 = sand.u32 %s42, 1
        %s585 = sand.u32 %s42, 1
        %s586 = smul.addr %s585, 4864
        %s587 = scalar_lea.vmem [#allocation2], %s586
        // Predicated region
        $region91: #{model_forward.3} parent=89 // pred_check
          %p588 = pneg %p55
        $region92: #{model_forward.3} parent=89 // pred_check_branch
          %590 = sbr.rel (%p588) target = $region94
        $region93: #{model_forward.3} parent=89 // pred_region
          _
        $region94: #{model_forward.3} parent=89 // pred_fallthru
          _
        %p591 = pneg %p29
        %p592 = pneg %p26
        %s593 = sand.u32 %s42, 1
        %s594 = sand.u32 %s42, 1
        %s595 = smul.addr %s594, 4864
        %s596 = scalar_lea.vmem [#allocation2], %s595
        %p597 = pneg %p55
        %p598 = pneg %p52
        %p599 = pneg %p81
        %p600 = pneg %p78
        %s601 = sand.u32 %s68, 1
        %s602 = sand.u32 %s68, 1
        %s603 = smul.addr %s602, 608
        %s604 = scalar_lea.vmem [#allocation3], %s603
        %s605 = smul.u32 76, %s13
        %s606 = ssub.s32 301, %s605
        %p607 = scmp.lt.s32.totalorder %s606, 76
        %s608 = scalar_select %p607, %s606, 76
        %s609 = smul.u32 1024, %s608
        %s610 = smul.u32 76, %s13
        %s611 = ssub.s32 301, %s610
        %p612 = scmp.lt.s32.totalorder %s611, 76
        %s613 = scalar_select %p612, %s611, 76
        %s614 = smul.u32 128, %s613
        %v616 = vld [vmem:[%s0] sm:$0xff]
        %v617 = vld [vmem:[%s587] sm:$0xff]
        %v618 = vld [vmem:[%s587 + $0x8] sm:$0xff]
        %v619 = vld [vmem:[%s587 + $0x10] sm:$0xff]
        %v620 = vld [vmem:[%s587 + $0x18] sm:$0xff]
        %v621 = vld [vmem:[%s587 + $0x20] sm:$0xff]
        %v622 = vld [vmem:[%s587 + $0x28] sm:$0xff]
        %v623 = vld [vmem:[%s587 + $0x30] sm:$0xff]
        %v624 = vld [vmem:[%s587 + $0x38] sm:$0xff]
        %v625 = vld [vmem:[%s587 + $0x40] sm:$0xff]
        %v626 = vld [vmem:[%s587 + $0x48] sm:$0xff]
        %v627 = vld [vmem:[%s587 + $0x50] sm:$0xff]
        %v628 = vld [vmem:[%s587 + $0x58] sm:$0xff]
        %v629 = vld [vmem:[%s587 + $0x60] sm:$0xff]
        %v630 = vld [vmem:[%s587 + $0x68] sm:$0xff]
        %v631 = vld [vmem:[%s587 + $0x70] sm:$0xff]
        %v632 = vld [vmem:[%s587 + $0x78] sm:$0xff]
        %v633 = vld [vmem:[%s587 + $0x80] sm:$0xff]
        %v634 = vld [vmem:[%s587 + $0x88] sm:$0xff]
        %v635 = vld [vmem:[%s587 + $0x90] sm:$0xff]
        %v636 = vld [vmem:[%s587 + $0x98] sm:$0xff]
        %v637 = vld [vmem:[%s587 + $0xa0] sm:$0xff]
        %v638 = vld [vmem:[%s587 + $0xa8] sm:$0xff]
        %v639 = vld [vmem:[%s587 + $0xb0] sm:$0xff]
        %v640 = vld [vmem:[%s587 + $0xb8] sm:$0xff]
        %v641 = vld [vmem:[%s587 + $0xc0] sm:$0xff]
        %v642 = vld [vmem:[%s587 + $0xc8] sm:$0xff]
        %v643 = vld [vmem:[%s587 + $0xd0] sm:$0xff]
        %v644 = vld [vmem:[%s587 + $0xd8] sm:$0xff]
        %v645 = vld [vmem:[%s587 + $0xe0] sm:$0xff]
        %v646 = vld [vmem:[%s587 + $0xe8] sm:$0xff]
        %v647 = vld [vmem:[%s587 + $0xf0] sm:$0xff]
        %v648 = vld [vmem:[%s587 + $0xf8] sm:$0xff]
        %v649 = vld [vmem:[%s587 + $0x100] sm:$0xff]
        %v650 = vld [vmem:[%s587 + $0x108] sm:$0xff]
        %v651 = vld [vmem:[%s587 + $0x110] sm:$0xff]
        %v652 = vld [vmem:[%s587 + $0x118] sm:$0xff]
        %v653 = vld [vmem:[%s587 + $0x120] sm:$0xff]
        %v654 = vld [vmem:[%s587 + $0x128] sm:$0xff]
        %v655 = vld [vmem:[%s587 + $0x130] sm:$0xff]
        %v656 = vld [vmem:[%s587 + $0x138] sm:$0xff]
        %v657 = vld [vmem:[%s587 + $0x140] sm:$0xff]
        %v658 = vld [vmem:[%s587 + $0x148] sm:$0xff]
        %v659 = vld [vmem:[%s587 + $0x150] sm:$0xff]
        %v660 = vld [vmem:[%s587 + $0x158] sm:$0xff]
        %v661 = vld [vmem:[%s587 + $0x160] sm:$0xff]
        %v662 = vld [vmem:[%s587 + $0x168] sm:$0xff]
        %v663 = vld [vmem:[%s587 + $0x170] sm:$0xff]
        %v664 = vld [vmem:[%s587 + $0x178] sm:$0xff]
        %v665 = vld [vmem:[%s587 + $0x180] sm:$0xff]
        %v666 = vld [vmem:[%s587 + $0x188] sm:$0xff]
        %v667 = vld [vmem:[%s587 + $0x190] sm:$0xff]
        %v668 = vld [vmem:[%s587 + $0x198] sm:$0xff]
        %v669 = vld [vmem:[%s587 + $0x1a0] sm:$0xff]
        %v670 = vld [vmem:[%s587 + $0x1a8] sm:$0xff]
        %v671 = vld [vmem:[%s587 + $0x1b0] sm:$0xff]
        %v672 = vld [vmem:[%s587 + $0x1b8] sm:$0xff]
        %v673 = vld [vmem:[%s587 + $0x1c0] sm:$0xff]
        %v674 = vld [vmem:[%s587 + $0x1c8] sm:$0xff]
        %v675 = vld [vmem:[%s587 + $0x1d0] sm:$0xff]
        %v676 = vld [vmem:[%s587 + $0x1d8] sm:$0xff]
        %v677 = vld [vmem:[%s587 + $0x1e0] sm:$0xff]
        %v678 = vld [vmem:[%s587 + $0x1e8] sm:$0xff]
        %v679 = vld [vmem:[%s587 + $0x1f0] sm:$0xff]
        %v680 = vld [vmem:[%s587 + $0x1f8] sm:$0xff]
        %v681 = vld [vmem:[%s587 + $0x200] sm:$0xff]
        %v682 = vld [vmem:[%s587 + $0x208] sm:$0xff]
        %v683 = vld [vmem:[%s587 + $0x210] sm:$0xff]
        %v684 = vld [vmem:[%s587 + $0x218] sm:$0xff]
        %v685 = vld [vmem:[%s587 + $0x220] sm:$0xff]
        %v686 = vld [vmem:[%s587 + $0x228] sm:$0xff]
        %v687 = vld [vmem:[%s587 + $0x230] sm:$0xff]
        %v688 = vld [vmem:[%s587 + $0x238] sm:$0xff]
        %v689 = vld [vmem:[%s587 + $0x240] sm:$0xff]
        %v690 = vld [vmem:[%s587 + $0x248] sm:$0xff]
        %v691 = vld [vmem:[%s587 + $0x250] sm:$0xff]
        %v692 = vld [vmem:[%s587 + $0x258] sm:$0xff]
        %v693 = vld [vmem:[%s587 + $0x260] sm:$0xff]
        %v694 = vld [vmem:[%s587 + $0x268] sm:$0xff]
        %v695 = vld [vmem:[%s587 + $0x270] sm:$0xff]
        %v696 = vld [vmem:[%s587 + $0x278] sm:$0xff]
        %v697 = vld [vmem:[%s587 + $0x280] sm:$0xff]
        %v698 = vld [vmem:[%s587 + $0x288] sm:$0xff]
        %v699 = vld [vmem:[%s587 + $0x290] sm:$0xff]
        %v700 = vld [vmem:[%s587 + $0x298] sm:$0xff]
        %v701 = vld [vmem:[%s587 + $0x2a0] sm:$0xff]
        %v702 = vld [vmem:[%s587 + $0x2a8] sm:$0xff]
        %v703 = vld [vmem:[%s587 + $0x2b0] sm:$0xff]
        %v704 = vld [vmem:[%s587 + $0x2b8] sm:$0xff]
        %v705 = vld [vmem:[%s587 + $0x2c0] sm:$0xff]
        %v706 = vld [vmem:[%s587 + $0x2c8] sm:$0xff]
        %v707 = vld [vmem:[%s587 + $0x2d0] sm:$0xff]
        %v708 = vld [vmem:[%s587 + $0x2d8] sm:$0xff]
        %v709 = vld [vmem:[%s587 + $0x2e0] sm:$0xff]
        %v710 = vld [vmem:[%s587 + $0x2e8] sm:$0xff]
        %v711 = vld [vmem:[%s587 + $0x2f0] sm:$0xff]
        %v712 = vld [vmem:[%s587 + $0x2f8] sm:$0xff]
        %v713 = vld [vmem:[%s587 + $0x300] sm:$0xff]
        %v714 = vld [vmem:[%s587 + $0x308] sm:$0xff]
        %v715 = vld [vmem:[%s587 + $0x310] sm:$0xff]
        %v716 = vld [vmem:[%s587 + $0x318] sm:$0xff]
        %v717 = vld [vmem:[%s587 + $0x320] sm:$0xff]
        %v718 = vld [vmem:[%s587 + $0x328] sm:$0xff]
        %v719 = vld [vmem:[%s587 + $0x330] sm:$0xff]
        %v720 = vld [vmem:[%s587 + $0x338] sm:$0xff]
        %v721 = vld [vmem:[%s587 + $0x340] sm:$0xff]
        %v722 = vld [vmem:[%s587 + $0x348] sm:$0xff]
        %v723 = vld [vmem:[%s587 + $0x350] sm:$0xff]
        %v724 = vld [vmem:[%s587 + $0x358] sm:$0xff]
        %v725 = vld [vmem:[%s587 + $0x360] sm:$0xff]
        %v726 = vld [vmem:[%s587 + $0x368] sm:$0xff]
        %v727 = vld [vmem:[%s587 + $0x370] sm:$0xff]
        %v728 = vld [vmem:[%s587 + $0x378] sm:$0xff]
        %v729 = vld [vmem:[%s587 + $0x380] sm:$0xff]
        %v730 = vld [vmem:[%s587 + $0x388] sm:$0xff]
        %v731 = vld [vmem:[%s587 + $0x390] sm:$0xff]
        %v732 = vld [vmem:[%s587 + $0x398] sm:$0xff]
        %v733 = vld [vmem:[%s587 + $0x3a0] sm:$0xff]
        %v734 = vld [vmem:[%s587 + $0x3a8] sm:$0xff]
        %v735 = vld [vmem:[%s587 + $0x3b0] sm:$0xff]
        %v736 = vld [vmem:[%s587 + $0x3b8] sm:$0xff]
        %v737 = vld [vmem:[%s587 + $0x3c0] sm:$0xff]
        %v738 = vld [vmem:[%s587 + $0x3c8] sm:$0xff]
        %v739 = vld [vmem:[%s587 + $0x3d0] sm:$0xff]
        %v740 = vld [vmem:[%s587 + $0x3d8] sm:$0xff]
        %v741 = vld [vmem:[%s587 + $0x3e0] sm:$0xff]
        %v742 = vld [vmem:[%s587 + $0x3e8] sm:$0xff]
        %v743 = vld [vmem:[%s587 + $0x3f0] sm:$0xff]
        %v744 = vld [vmem:[%s587 + $0x3f8] sm:$0xff]
        %v745 = vld [vmem:[%s587 + $0x400] sm:$0xff]
        %v746 = vld [vmem:[%s587 + $0x408] sm:$0xff]
        %v747 = vld [vmem:[%s587 + $0x410] sm:$0xff]
        %v748 = vld [vmem:[%s587 + $0x418] sm:$0xff]
        %v749 = vld [vmem:[%s587 + $0x420] sm:$0xff]
        %v750 = vld [vmem:[%s587 + $0x428] sm:$0xff]
        %v751 = vld [vmem:[%s587 + $0x430] sm:$0xff]
        %v752 = vld [vmem:[%s587 + $0x438] sm:$0xff]
        %v753 = vld [vmem:[%s587 + $0x440] sm:$0xff]
        %v754 = vld [vmem:[%s587 + $0x448] sm:$0xff]
        %v755 = vld [vmem:[%s587 + $0x450] sm:$0xff]
        %v756 = vld [vmem:[%s587 + $0x458] sm:$0xff]
        %v757 = vld [vmem:[%s587 + $0x460] sm:$0xff]
        %v758 = vld [vmem:[%s587 + $0x468] sm:$0xff]
        %v759 = vld [vmem:[%s587 + $0x470] sm:$0xff]
        %v760 = vld [vmem:[%s587 + $0x478] sm:$0xff]
        %v761 = vld [vmem:[%s587 + $0x480] sm:$0xff]
        %v762 = vld [vmem:[%s587 + $0x488] sm:$0xff]
        %v763 = vld [vmem:[%s587 + $0x490] sm:$0xff]
        %v764 = vld [vmem:[%s587 + $0x498] sm:$0xff]
        %v765 = vld [vmem:[%s587 + $0x4a0] sm:$0xff]
        %v766 = vld [vmem:[%s587 + $0x4a8] sm:$0xff]
        %v767 = vld [vmem:[%s587 + $0x4b0] sm:$0xff]
        %v768 = vld [vmem:[%s587 + $0x4b8] sm:$0xff]
        %v769 = vld [vmem:[%s587 + $0x4c0] sm:$0xff]
        %v770 = vld [vmem:[%s587 + $0x4c8] sm:$0xff]
        %v771 = vld [vmem:[%s587 + $0x4d0] sm:$0xff]
        %v772 = vld [vmem:[%s587 + $0x4d8] sm:$0xff]
        %v773 = vld [vmem:[%s587 + $0x4e0] sm:$0xff]
        %v774 = vld [vmem:[%s587 + $0x4e8] sm:$0xff]
        %v775 = vld [vmem:[%s587 + $0x4f0] sm:$0xff]
        %v776 = vld [vmem:[%s587 + $0x4f8] sm:$0xff]
        %v777 = vld [vmem:[%s587 + $0x500] sm:$0xff]
        %v778 = vld [vmem:[%s587 + $0x508] sm:$0xff]
        %v779 = vld [vmem:[%s587 + $0x510] sm:$0xff]
        %v780 = vld [vmem:[%s587 + $0x518] sm:$0xff]
        %v781 = vld [vmem:[%s587 + $0x520] sm:$0xff]
        %v782 = vld [vmem:[%s587 + $0x528] sm:$0xff]
        %v783 = vld [vmem:[%s587 + $0x530] sm:$0xff]
        %v784 = vld [vmem:[%s587 + $0x538] sm:$0xff]
        %v785 = vld [vmem:[%s587 + $0x540] sm:$0xff]
        %v786 = vld [vmem:[%s587 + $0x548] sm:$0xff]
        %v787 = vld [vmem:[%s587 + $0x550] sm:$0xff]
        %v788 = vld [vmem:[%s587 + $0x558] sm:$0xff]
        %v789 = vld [vmem:[%s587 + $0x560] sm:$0xff]
        %v790 = vld [vmem:[%s587 + $0x568] sm:$0xff]
        %v791 = vld [vmem:[%s587 + $0x570] sm:$0xff]
        %v792 = vld [vmem:[%s587 + $0x578] sm:$0xff]
        %v793 = vld [vmem:[%s587 + $0x580] sm:$0xff]
        %v794 = vld [vmem:[%s587 + $0x588] sm:$0xff]
        %v795 = vld [vmem:[%s587 + $0x590] sm:$0xff]
        %v796 = vld [vmem:[%s587 + $0x598] sm:$0xff]
        %v797 = vld [vmem:[%s587 + $0x5a0] sm:$0xff]
        %v798 = vld [vmem:[%s587 + $0x5a8] sm:$0xff]
        %v799 = vld [vmem:[%s587 + $0x5b0] sm:$0xff]
        %v800 = vld [vmem:[%s587 + $0x5b8] sm:$0xff]
        %v801 = vld [vmem:[%s587 + $0x5c0] sm:$0xff]
        %v802 = vld [vmem:[%s587 + $0x5c8] sm:$0xff]
        %v803 = vld [vmem:[%s587 + $0x5d0] sm:$0xff]
        %v804 = vld [vmem:[%s587 + $0x5d8] sm:$0xff]
        %v805 = vld [vmem:[%s587 + $0x5e0] sm:$0xff]
        %v806 = vld [vmem:[%s587 + $0x5e8] sm:$0xff]
        %v807 = vld [vmem:[%s587 + $0x5f0] sm:$0xff]
        %v808 = vld [vmem:[%s587 + $0x5f8] sm:$0xff]
        %v809 = vld [vmem:[%s587 + $0x600] sm:$0xff]
        %v810 = vld [vmem:[%s587 + $0x608] sm:$0xff]
        %v811 = vld [vmem:[%s587 + $0x610] sm:$0xff]
        %v812 = vld [vmem:[%s587 + $0x618] sm:$0xff]
        %v813 = vld [vmem:[%s587 + $0x620] sm:$0xff]
        %v814 = vld [vmem:[%s587 + $0x628] sm:$0xff]
        %v815 = vld [vmem:[%s587 + $0x630] sm:$0xff]
        %v816 = vld [vmem:[%s587 + $0x638] sm:$0xff]
        %v817 = vld [vmem:[%s587 + $0x640] sm:$0xff]
        %v818 = vld [vmem:[%s587 + $0x648] sm:$0xff]
        %v819 = vld [vmem:[%s587 + $0x650] sm:$0xff]
        %v820 = vld [vmem:[%s587 + $0x658] sm:$0xff]
        %v821 = vld [vmem:[%s587 + $0x660] sm:$0xff]
        %v822 = vld [vmem:[%s587 + $0x668] sm:$0xff]
        %v823 = vld [vmem:[%s587 + $0x670] sm:$0xff]
        %v824 = vld [vmem:[%s587 + $0x678] sm:$0xff]
        %v825 = vld [vmem:[%s587 + $0x680] sm:$0xff]
        %v826 = vld [vmem:[%s587 + $0x688] sm:$0xff]
        %v827 = vld [vmem:[%s587 + $0x690] sm:$0xff]
        %v828 = vld [vmem:[%s587 + $0x698] sm:$0xff]
        %v829 = vld [vmem:[%s587 + $0x6a0] sm:$0xff]
        %v830 = vld [vmem:[%s587 + $0x6a8] sm:$0xff]
        %v831 = vld [vmem:[%s587 + $0x6b0] sm:$0xff]
        %v832 = vld [vmem:[%s587 + $0x6b8] sm:$0xff]
        %v833 = vld [vmem:[%s587 + $0x6c0] sm:$0xff]
        %v834 = vld [vmem:[%s587 + $0x6c8] sm:$0xff]
        %v835 = vld [vmem:[%s587 + $0x6d0] sm:$0xff]
        %v836 = vld [vmem:[%s587 + $0x6d8] sm:$0xff]
        %v837 = vld [vmem:[%s587 + $0x6e0] sm:$0xff]
        %v838 = vld [vmem:[%s587 + $0x6e8] sm:$0xff]
        %v839 = vld [vmem:[%s587 + $0x6f0] sm:$0xff]
        %v840 = vld [vmem:[%s587 + $0x6f8] sm:$0xff]
        %v841 = vld [vmem:[%s587 + $0x700] sm:$0xff]
        %v842 = vld [vmem:[%s587 + $0x708] sm:$0xff]
        %v843 = vld [vmem:[%s587 + $0x710] sm:$0xff]
        %v844 = vld [vmem:[%s587 + $0x718] sm:$0xff]
        %v845 = vld [vmem:[%s587 + $0x720] sm:$0xff]
        %v846 = vld [vmem:[%s587 + $0x728] sm:$0xff]
        %v847 = vld [vmem:[%s587 + $0x730] sm:$0xff]
        %v848 = vld [vmem:[%s587 + $0x738] sm:$0xff]
        %v849 = vld [vmem:[%s587 + $0x740] sm:$0xff]
        %v850 = vld [vmem:[%s587 + $0x748] sm:$0xff]
        %v851 = vld [vmem:[%s587 + $0x750] sm:$0xff]
        %v852 = vld [vmem:[%s587 + $0x758] sm:$0xff]
        %v853 = vld [vmem:[%s587 + $0x760] sm:$0xff]
        %v854 = vld [vmem:[%s587 + $0x768] sm:$0xff]
        %v855 = vld [vmem:[%s587 + $0x770] sm:$0xff]
        %v856 = vld [vmem:[%s587 + $0x778] sm:$0xff]
        %v857 = vld [vmem:[%s587 + $0x780] sm:$0xff]
        %v858 = vld [vmem:[%s587 + $0x788] sm:$0xff]
        %v859 = vld [vmem:[%s587 + $0x790] sm:$0xff]
        %v860 = vld [vmem:[%s587 + $0x798] sm:$0xff]
        %v861 = vld [vmem:[%s587 + $0x7a0] sm:$0xff]
        %v862 = vld [vmem:[%s587 + $0x7a8] sm:$0xff]
        %v863 = vld [vmem:[%s587 + $0x7b0] sm:$0xff]
        %v864 = vld [vmem:[%s587 + $0x7b8] sm:$0xff]
        %v865 = vld [vmem:[%s587 + $0x7c0] sm:$0xff]
        %v866 = vld [vmem:[%s587 + $0x7c8] sm:$0xff]
        %v867 = vld [vmem:[%s587 + $0x7d0] sm:$0xff]
        %v868 = vld [vmem:[%s587 + $0x7d8] sm:$0xff]
        %v869 = vld [vmem:[%s587 + $0x7e0] sm:$0xff]
        %v870 = vld [vmem:[%s587 + $0x7e8] sm:$0xff]
        %v871 = vld [vmem:[%s587 + $0x7f0] sm:$0xff]
        %v872 = vld [vmem:[%s587 + $0x7f8] sm:$0xff]
        %v873 = vld [vmem:[%s587 + $0x800] sm:$0xff]
        %v874 = vld [vmem:[%s587 + $0x808] sm:$0xff]
        %v875 = vld [vmem:[%s587 + $0x810] sm:$0xff]
        %v876 = vld [vmem:[%s587 + $0x818] sm:$0xff]
        %v877 = vld [vmem:[%s587 + $0x820] sm:$0xff]
        %v878 = vld [vmem:[%s587 + $0x828] sm:$0xff]
        %v879 = vld [vmem:[%s587 + $0x830] sm:$0xff]
        %v880 = vld [vmem:[%s587 + $0x838] sm:$0xff]
        %v881 = vld [vmem:[%s587 + $0x840] sm:$0xff]
        %v882 = vld [vmem:[%s587 + $0x848] sm:$0xff]
        %v883 = vld [vmem:[%s587 + $0x850] sm:$0xff]
        %v884 = vld [vmem:[%s587 + $0x858] sm:$0xff]
        %v885 = vld [vmem:[%s587 + $0x860] sm:$0xff]
        %v886 = vld [vmem:[%s587 + $0x868] sm:$0xff]
        %v887 = vld [vmem:[%s587 + $0x870] sm:$0xff]
        %v888 = vld [vmem:[%s587 + $0x878] sm:$0xff]
        %v889 = vld [vmem:[%s587 + $0x880] sm:$0xff]
        %v890 = vld [vmem:[%s587 + $0x888] sm:$0xff]
        %v891 = vld [vmem:[%s587 + $0x890] sm:$0xff]
        %v892 = vld [vmem:[%s587 + $0x898] sm:$0xff]
        %v893 = vld [vmem:[%s587 + $0x8a0] sm:$0xff]
        %v894 = vld [vmem:[%s587 + $0x8a8] sm:$0xff]
        %v895 = vld [vmem:[%s587 + $0x8b0] sm:$0xff]
        %v896 = vld [vmem:[%s587 + $0x8b8] sm:$0xff]
        %v897 = vld [vmem:[%s587 + $0x8c0] sm:$0xff]
        %v898 = vld [vmem:[%s587 + $0x8c8] sm:$0xff]
        %v899 = vld [vmem:[%s587 + $0x8d0] sm:$0xff]
        %v900 = vld [vmem:[%s587 + $0x8d8] sm:$0xff]
        %v901 = vld [vmem:[%s587 + $0x8e0] sm:$0xff]
        %v902 = vld [vmem:[%s587 + $0x8e8] sm:$0xff]
        %v903 = vld [vmem:[%s587 + $0x8f0] sm:$0xff]
        %v904 = vld [vmem:[%s587 + $0x8f8] sm:$0xff]
        %v905 = vld [vmem:[%s587 + $0x900] sm:$0xff]
        %v906 = vld [vmem:[%s587 + $0x908] sm:$0xff]
        %v907 = vld [vmem:[%s587 + $0x910] sm:$0xff]
        %v908 = vld [vmem:[%s587 + $0x918] sm:$0xff]
        %v909 = vld [vmem:[%s587 + $0x920] sm:$0xff]
        %v910 = vld [vmem:[%s587 + $0x928] sm:$0xff]
        %v911 = vld [vmem:[%s587 + $0x930] sm:$0xff]
        %v912 = vld [vmem:[%s587 + $0x938] sm:$0xff]
        %v913 = vld [vmem:[%s587 + $0x940] sm:$0xff]
        %v914 = vld [vmem:[%s587 + $0x948] sm:$0xff]
        %v915 = vld [vmem:[%s587 + $0x950] sm:$0xff]
        %v916 = vld [vmem:[%s587 + $0x958] sm:$0xff]
        %v917 = vld [vmem:[%s587 + $0x960] sm:$0xff]
        %v918 = vld [vmem:[%s587 + $0x968] sm:$0xff]
        %v919 = vld [vmem:[%s587 + $0x970] sm:$0xff]
        %v920 = vld [vmem:[%s587 + $0x978] sm:$0xff]
        %v921 = vld [vmem:[%s587 + $0x980] sm:$0xff]
        %v922 = vld [vmem:[%s587 + $0x988] sm:$0xff]
        %v923 = vld [vmem:[%s587 + $0x990] sm:$0xff]
        %v924 = vld [vmem:[%s587 + $0x998] sm:$0xff]
        %v925 = vld [vmem:[%s587 + $0x9a0] sm:$0xff]
        %v926 = vld [vmem:[%s587 + $0x9a8] sm:$0xff]
        %v927 = vld [vmem:[%s587 + $0x9b0] sm:$0xff]
        %v928 = vld [vmem:[%s587 + $0x9b8] sm:$0xff]
        %v929 = vld [vmem:[%s587 + $0x9c0] sm:$0xff]
        %v930 = vld [vmem:[%s587 + $0x9c8] sm:$0xff]
        %v931 = vld [vmem:[%s587 + $0x9d0] sm:$0xff]
        %v932 = vld [vmem:[%s587 + $0x9d8] sm:$0xff]
        %v933 = vld [vmem:[%s587 + $0x9e0] sm:$0xff]
        %v934 = vld [vmem:[%s587 + $0x9e8] sm:$0xff]
        %v935 = vld [vmem:[%s587 + $0x9f0] sm:$0xff]
        %v936 = vld [vmem:[%s587 + $0x9f8] sm:$0xff]
        %v937 = vld [vmem:[%s587 + $0xa00] sm:$0xff]
        %v938 = vld [vmem:[%s587 + $0xa08] sm:$0xff]
        %v939 = vld [vmem:[%s587 + $0xa10] sm:$0xff]
        %v940 = vld [vmem:[%s587 + $0xa18] sm:$0xff]
        %v941 = vld [vmem:[%s587 + $0xa20] sm:$0xff]
        %v942 = vld [vmem:[%s587 + $0xa28] sm:$0xff]
        %v943 = vld [vmem:[%s587 + $0xa30] sm:$0xff]
        %v944 = vld [vmem:[%s587 + $0xa38] sm:$0xff]
        %v945 = vld [vmem:[%s587 + $0xa40] sm:$0xff]
        %v946 = vld [vmem:[%s587 + $0xa48] sm:$0xff]
        %v947 = vld [vmem:[%s587 + $0xa50] sm:$0xff]
        %v948 = vld [vmem:[%s587 + $0xa58] sm:$0xff]
        %v949 = vld [vmem:[%s587 + $0xa60] sm:$0xff]
        %v950 = vld [vmem:[%s587 + $0xa68] sm:$0xff]
        %v951 = vld [vmem:[%s587 + $0xa70] sm:$0xff]
        %v952 = vld [vmem:[%s587 + $0xa78] sm:$0xff]
        %v953 = vld [vmem:[%s587 + $0xa80] sm:$0xff]
        %v954 = vld [vmem:[%s587 + $0xa88] sm:$0xff]
        %v955 = vld [vmem:[%s587 + $0xa90] sm:$0xff]
        %v956 = vld [vmem:[%s587 + $0xa98] sm:$0xff]
        %v957 = vld [vmem:[%s587 + $0xaa0] sm:$0xff]
        %v958 = vld [vmem:[%s587 + $0xaa8] sm:$0xff]
        %v959 = vld [vmem:[%s587 + $0xab0] sm:$0xff]
        %v960 = vld [vmem:[%s587 + $0xab8] sm:$0xff]
        %v961 = vld [vmem:[%s587 + $0xac0] sm:$0xff]
        %v962 = vld [vmem:[%s587 + $0xac8] sm:$0xff]
        %v963 = vld [vmem:[%s587 + $0xad0] sm:$0xff]
        %v964 = vld [vmem:[%s587 + $0xad8] sm:$0xff]
        %v965 = vld [vmem:[%s587 + $0xae0] sm:$0xff]
        %v966 = vld [vmem:[%s587 + $0xae8] sm:$0xff]
        %v967 = vld [vmem:[%s587 + $0xaf0] sm:$0xff]
        %v968 = vld [vmem:[%s587 + $0xaf8] sm:$0xff]
        %v969 = vld [vmem:[%s587 + $0xb00] sm:$0xff]
        %v970 = vld [vmem:[%s587 + $0xb08] sm:$0xff]
        %v971 = vld [vmem:[%s587 + $0xb10] sm:$0xff]
        %v972 = vld [vmem:[%s587 + $0xb18] sm:$0xff]
        %v973 = vld [vmem:[%s587 + $0xb20] sm:$0xff]
        %v974 = vld [vmem:[%s587 + $0xb28] sm:$0xff]
        %v975 = vld [vmem:[%s587 + $0xb30] sm:$0xff]
        %v976 = vld [vmem:[%s587 + $0xb38] sm:$0xff]
        %v977 = vld [vmem:[%s587 + $0xb40] sm:$0xff]
        %v978 = vld [vmem:[%s587 + $0xb48] sm:$0xff]
        %v979 = vld [vmem:[%s587 + $0xb50] sm:$0xff]
        %v980 = vld [vmem:[%s587 + $0xb58] sm:$0xff]
        %v981 = vld [vmem:[%s587 + $0xb60] sm:$0xff]
        %v982 = vld [vmem:[%s587 + $0xb68] sm:$0xff]
        %v983 = vld [vmem:[%s587 + $0xb70] sm:$0xff]
        %v984 = vld [vmem:[%s587 + $0xb78] sm:$0xff]
        %v985 = vld [vmem:[%s587 + $0xb80] sm:$0xff]
        %v986 = vld [vmem:[%s587 + $0xb88] sm:$0xff]
        %v987 = vld [vmem:[%s587 + $0xb90] sm:$0xff]
        %v988 = vld [vmem:[%s587 + $0xb98] sm:$0xff]
        %v989 = vld [vmem:[%s587 + $0xba0] sm:$0xff]
        %v990 = vld [vmem:[%s587 + $0xba8] sm:$0xff]
        %v991 = vld [vmem:[%s587 + $0xbb0] sm:$0xff]
        %v992 = vld [vmem:[%s587 + $0xbb8] sm:$0xff]
        %v993 = vld [vmem:[%s587 + $0xbc0] sm:$0xff]
        %v994 = vld [vmem:[%s587 + $0xbc8] sm:$0xff]
        %v995 = vld [vmem:[%s587 + $0xbd0] sm:$0xff]
        %v996 = vld [vmem:[%s587 + $0xbd8] sm:$0xff]
        %v997 = vld [vmem:[%s587 + $0xbe0] sm:$0xff]
        %v998 = vld [vmem:[%s587 + $0xbe8] sm:$0xff]
        %v999 = vld [vmem:[%s587 + $0xbf0] sm:$0xff]
        %v1000 = vld [vmem:[%s587 + $0xbf8] sm:$0xff]
        %v1001 = vld [vmem:[%s587 + $0xc00] sm:$0xff]
        %v1002 = vld [vmem:[%s587 + $0xc08] sm:$0xff]
        %v1003 = vld [vmem:[%s587 + $0xc10] sm:$0xff]
        %v1004 = vld [vmem:[%s587 + $0xc18] sm:$0xff]
        %v1005 = vld [vmem:[%s587 + $0xc20] sm:$0xff]
        %v1006 = vld [vmem:[%s587 + $0xc28] sm:$0xff]
        %v1007 = vld [vmem:[%s587 + $0xc30] sm:$0xff]
        %v1008 = vld [vmem:[%s587 + $0xc38] sm:$0xff]
        %v1009 = vld [vmem:[%s587 + $0xc40] sm:$0xff]
        %v1010 = vld [vmem:[%s587 + $0xc48] sm:$0xff]
        %v1011 = vld [vmem:[%s587 + $0xc50] sm:$0xff]
        %v1012 = vld [vmem:[%s587 + $0xc58] sm:$0xff]
        %v1013 = vld [vmem:[%s587 + $0xc60] sm:$0xff]
        %v1014 = vld [vmem:[%s587 + $0xc68] sm:$0xff]
        %v1015 = vld [vmem:[%s587 + $0xc70] sm:$0xff]
        %v1016 = vld [vmem:[%s587 + $0xc78] sm:$0xff]
        %v1017 = vld [vmem:[%s587 + $0xc80] sm:$0xff]
        %v1018 = vld [vmem:[%s587 + $0xc88] sm:$0xff]
        %v1019 = vld [vmem:[%s587 + $0xc90] sm:$0xff]
        %v1020 = vld [vmem:[%s587 + $0xc98] sm:$0xff]
        %v1021 = vld [vmem:[%s587 + $0xca0] sm:$0xff]
        %v1022 = vld [vmem:[%s587 + $0xca8] sm:$0xff]
        %v1023 = vld [vmem:[%s587 + $0xcb0] sm:$0xff]
        %v1024 = vld [vmem:[%s587 + $0xcb8] sm:$0xff]
        %v1025 = vld [vmem:[%s587 + $0xcc0] sm:$0xff]
        %v1026 = vld [vmem:[%s587 + $0xcc8] sm:$0xff]
        %v1027 = vld [vmem:[%s587 + $0xcd0] sm:$0xff]
        %v1028 = vld [vmem:[%s587 + $0xcd8] sm:$0xff]
        %v1029 = vld [vmem:[%s587 + $0xce0] sm:$0xff]
        %v1030 = vld [vmem:[%s587 + $0xce8] sm:$0xff]
        %v1031 = vld [vmem:[%s587 + $0xcf0] sm:$0xff]
        %v1032 = vld [vmem:[%s587 + $0xcf8] sm:$0xff]
        %v1033 = vld [vmem:[%s587 + $0xd00] sm:$0xff]
        %v1034 = vld [vmem:[%s587 + $0xd08] sm:$0xff]
        %v1035 = vld [vmem:[%s587 + $0xd10] sm:$0xff]
        %v1036 = vld [vmem:[%s587 + $0xd18] sm:$0xff]
        %v1037 = vld [vmem:[%s587 + $0xd20] sm:$0xff]
        %v1038 = vld [vmem:[%s587 + $0xd28] sm:$0xff]
        %v1039 = vld [vmem:[%s587 + $0xd30] sm:$0xff]
        %v1040 = vld [vmem:[%s587 + $0xd38] sm:$0xff]
        %v1041 = vld [vmem:[%s587 + $0xd40] sm:$0xff]
        %v1042 = vld [vmem:[%s587 + $0xd48] sm:$0xff]
        %v1043 = vld [vmem:[%s587 + $0xd50] sm:$0xff]
        %v1044 = vld [vmem:[%s587 + $0xd58] sm:$0xff]
        %v1045 = vld [vmem:[%s587 + $0xd60] sm:$0xff]
        %v1046 = vld [vmem:[%s587 + $0xd68] sm:$0xff]
        %v1047 = vld [vmem:[%s587 + $0xd70] sm:$0xff]
        %v1048 = vld [vmem:[%s587 + $0xd78] sm:$0xff]
        %v1049 = vld [vmem:[%s587 + $0xd80] sm:$0xff]
        %v1050 = vld [vmem:[%s587 + $0xd88] sm:$0xff]
        %v1051 = vld [vmem:[%s587 + $0xd90] sm:$0xff]
        %v1052 = vld [vmem:[%s587 + $0xd98] sm:$0xff]
        %v1053 = vld [vmem:[%s587 + $0xda0] sm:$0xff]
        %v1054 = vld [vmem:[%s587 + $0xda8] sm:$0xff]
        %v1055 = vld [vmem:[%s587 + $0xdb0] sm:$0xff]
        %v1056 = vld [vmem:[%s587 + $0xdb8] sm:$0xff]
        %v1057 = vld [vmem:[%s587 + $0xdc0] sm:$0xff]
        %v1058 = vld [vmem:[%s587 + $0xdc8] sm:$0xff]
        %v1059 = vld [vmem:[%s587 + $0xdd0] sm:$0xff]
        %v1060 = vld [vmem:[%s587 + $0xdd8] sm:$0xff]
        %v1061 = vld [vmem:[%s587 + $0xde0] sm:$0xff]
        %v1062 = vld [vmem:[%s587 + $0xde8] sm:$0xff]
        %v1063 = vld [vmem:[%s587 + $0xdf0] sm:$0xff]
        %v1064 = vld [vmem:[%s587 + $0xdf8] sm:$0xff]
        %v1065 = vld [vmem:[%s587 + $0xe00] sm:$0xff]
        %v1066 = vld [vmem:[%s587 + $0xe08] sm:$0xff]
        %v1067 = vld [vmem:[%s587 + $0xe10] sm:$0xff]
        %v1068 = vld [vmem:[%s587 + $0xe18] sm:$0xff]
        %v1069 = vld [vmem:[%s587 + $0xe20] sm:$0xff]
        %v1070 = vld [vmem:[%s587 + $0xe28] sm:$0xff]
        %v1071 = vld [vmem:[%s587 + $0xe30] sm:$0xff]
        %v1072 = vld [vmem:[%s587 + $0xe38] sm:$0xff]
        %v1073 = vld [vmem:[%s587 + $0xe40] sm:$0xff]
        %v1074 = vld [vmem:[%s587 + $0xe48] sm:$0xff]
        %v1075 = vld [vmem:[%s587 + $0xe50] sm:$0xff]
        %v1076 = vld [vmem:[%s587 + $0xe58] sm:$0xff]
        %v1077 = vld [vmem:[%s587 + $0xe60] sm:$0xff]
        %v1078 = vld [vmem:[%s587 + $0xe68] sm:$0xff]
        %v1079 = vld [vmem:[%s587 + $0xe70] sm:$0xff]
        %v1080 = vld [vmem:[%s587 + $0xe78] sm:$0xff]
        %v1081 = vld [vmem:[%s587 + $0xe80] sm:$0xff]
        %v1082 = vld [vmem:[%s587 + $0xe88] sm:$0xff]
        %v1083 = vld [vmem:[%s587 + $0xe90] sm:$0xff]
        %v1084 = vld [vmem:[%s587 + $0xe98] sm:$0xff]
        %v1085 = vld [vmem:[%s587 + $0xea0] sm:$0xff]
        %v1086 = vld [vmem:[%s587 + $0xea8] sm:$0xff]
        %v1087 = vld [vmem:[%s587 + $0xeb0] sm:$0xff]
        %v1088 = vld [vmem:[%s587 + $0xeb8] sm:$0xff]
        %v1089 = vld [vmem:[%s587 + $0xec0] sm:$0xff]
        %v1090 = vld [vmem:[%s587 + $0xec8] sm:$0xff]
        %v1091 = vld [vmem:[%s587 + $0xed0] sm:$0xff]
        %v1092 = vld [vmem:[%s587 + $0xed8] sm:$0xff]
        %v1093 = vld [vmem:[%s587 + $0xee0] sm:$0xff]
        %v1094 = vld [vmem:[%s587 + $0xee8] sm:$0xff]
        %v1095 = vld [vmem:[%s587 + $0xef0] sm:$0xff]
        %v1096 = vld [vmem:[%s587 + $0xef8] sm:$0xff]
        %v1097 = vld [vmem:[%s587 + $0xf00] sm:$0xff]
        %v1098 = vld [vmem:[%s587 + $0xf08] sm:$0xff]
        %v1099 = vld [vmem:[%s587 + $0xf10] sm:$0xff]
        %v1100 = vld [vmem:[%s587 + $0xf18] sm:$0xff]
        %v1101 = vld [vmem:[%s587 + $0xf20] sm:$0xff]
        %v1102 = vld [vmem:[%s587 + $0xf28] sm:$0xff]
        %v1103 = vld [vmem:[%s587 + $0xf30] sm:$0xff]
        %v1104 = vld [vmem:[%s587 + $0xf38] sm:$0xff]
        %v1105 = vld [vmem:[%s587 + $0xf40] sm:$0xff]
        %v1106 = vld [vmem:[%s587 + $0xf48] sm:$0xff]
        %v1107 = vld [vmem:[%s587 + $0xf50] sm:$0xff]
        %v1108 = vld [vmem:[%s587 + $0xf58] sm:$0xff]
        %v1109 = vld [vmem:[%s587 + $0xf60] sm:$0xff]
        %v1110 = vld [vmem:[%s587 + $0xf68] sm:$0xff]
        %v1111 = vld [vmem:[%s587 + $0xf70] sm:$0xff]
        %v1112 = vld [vmem:[%s587 + $0xf78] sm:$0xff]
        %v1113 = vld [vmem:[%s587 + $0xf80] sm:$0xff]
        %v1114 = vld [vmem:[%s587 + $0xf88] sm:$0xff]
        %v1115 = vld [vmem:[%s587 + $0xf90] sm:$0xff]
        %v1116 = vld [vmem:[%s587 + $0xf98] sm:$0xff]
        %v1117 = vld [vmem:[%s587 + $0xfa0] sm:$0xff]
        %v1118 = vld [vmem:[%s587 + $0xfa8] sm:$0xff]
        %v1119 = vld [vmem:[%s587 + $0xfb0] sm:$0xff]
        %v1120 = vld [vmem:[%s587 + $0xfb8] sm:$0xff]
        %v1121 = vld [vmem:[%s587 + $0xfc0] sm:$0xff]
        %v1122 = vld [vmem:[%s587 + $0xfc8] sm:$0xff]
        %v1123 = vld [vmem:[%s587 + $0xfd0] sm:$0xff]
        %v1124 = vld [vmem:[%s587 + $0xfd8] sm:$0xff]
        %v1125 = vld [vmem:[%s587 + $0xfe0] sm:$0xff]
        %v1126 = vld [vmem:[%s587 + $0xfe8] sm:$0xff]
        %v1127 = vld [vmem:[%s587 + $0xff0] sm:$0xff]
        %v1128 = vld [vmem:[%s587 + $0xff8] sm:$0xff]
        %v1129 = vld [vmem:[%s587 + $0x1000] sm:$0xff]
        %v1130 = vld [vmem:[%s587 + $0x1008] sm:$0xff]
        %v1131 = vld [vmem:[%s587 + $0x1010] sm:$0xff]
        %v1132 = vld [vmem:[%s587 + $0x1018] sm:$0xff]
        %v1133 = vld [vmem:[%s587 + $0x1020] sm:$0xff]
        %v1134 = vld [vmem:[%s587 + $0x1028] sm:$0xff]
        %v1135 = vld [vmem:[%s587 + $0x1030] sm:$0xff]
        %v1136 = vld [vmem:[%s587 + $0x1038] sm:$0xff]
        %v1137 = vld [vmem:[%s587 + $0x1040] sm:$0xff]
        %v1138 = vld [vmem:[%s587 + $0x1048] sm:$0xff]
        %v1139 = vld [vmem:[%s587 + $0x1050] sm:$0xff]
        %v1140 = vld [vmem:[%s587 + $0x1058] sm:$0xff]
        %v1141 = vld [vmem:[%s587 + $0x1060] sm:$0xff]
        %v1142 = vld [vmem:[%s587 + $0x1068] sm:$0xff]
        %v1143 = vld [vmem:[%s587 + $0x1070] sm:$0xff]
        %v1144 = vld [vmem:[%s587 + $0x1078] sm:$0xff]
        %v1145 = vld [vmem:[%s587 + $0x1080] sm:$0xff]
        %v1146 = vld [vmem:[%s587 + $0x1088] sm:$0xff]
        %v1147 = vld [vmem:[%s587 + $0x1090] sm:$0xff]
        %v1148 = vld [vmem:[%s587 + $0x1098] sm:$0xff]
        %v1149 = vld [vmem:[%s587 + $0x10a0] sm:$0xff]
        %v1150 = vld [vmem:[%s587 + $0x10a8] sm:$0xff]
        %v1151 = vld [vmem:[%s587 + $0x10b0] sm:$0xff]
        %v1152 = vld [vmem:[%s587 + $0x10b8] sm:$0xff]
        %v1153 = vld [vmem:[%s587 + $0x10c0] sm:$0xff]
        %v1154 = vld [vmem:[%s587 + $0x10c8] sm:$0xff]
        %v1155 = vld [vmem:[%s587 + $0x10d0] sm:$0xff]
        %v1156 = vld [vmem:[%s587 + $0x10d8] sm:$0xff]
        %v1157 = vld [vmem:[%s587 + $0x10e0] sm:$0xff]
        %v1158 = vld [vmem:[%s587 + $0x10e8] sm:$0xff]
        %v1159 = vld [vmem:[%s587 + $0x10f0] sm:$0xff]
        %v1160 = vld [vmem:[%s587 + $0x10f8] sm:$0xff]
        %v1161 = vld [vmem:[%s587 + $0x1100] sm:$0xff]
        %v1162 = vld [vmem:[%s587 + $0x1108] sm:$0xff]
        %v1163 = vld [vmem:[%s587 + $0x1110] sm:$0xff]
        %v1164 = vld [vmem:[%s587 + $0x1118] sm:$0xff]
        %v1165 = vld [vmem:[%s587 + $0x1120] sm:$0xff]
        %v1166 = vld [vmem:[%s587 + $0x1128] sm:$0xff]
        %v1167 = vld [vmem:[%s587 + $0x1130] sm:$0xff]
        %v1168 = vld [vmem:[%s587 + $0x1138] sm:$0xff]
        %v1169 = vld [vmem:[%s587 + $0x1140] sm:$0xff]
        %v1170 = vld [vmem:[%s587 + $0x1148] sm:$0xff]
        %v1171 = vld [vmem:[%s587 + $0x1150] sm:$0xff]
        %v1172 = vld [vmem:[%s587 + $0x1158] sm:$0xff]
        %v1173 = vld [vmem:[%s587 + $0x1160] sm:$0xff]
        %v1174 = vld [vmem:[%s587 + $0x1168] sm:$0xff]
        %v1175 = vld [vmem:[%s587 + $0x1170] sm:$0xff]
        %v1176 = vld [vmem:[%s587 + $0x1178] sm:$0xff]
        %v1177 = vld [vmem:[%s587 + $0x1180] sm:$0xff]
        %v1178 = vld [vmem:[%s587 + $0x1188] sm:$0xff]
        %v1179 = vld [vmem:[%s587 + $0x1190] sm:$0xff]
        %v1180 = vld [vmem:[%s587 + $0x1198] sm:$0xff]
        %v1181 = vld [vmem:[%s587 + $0x11a0] sm:$0xff]
        %v1182 = vld [vmem:[%s587 + $0x11a8] sm:$0xff]
        %v1183 = vld [vmem:[%s587 + $0x11b0] sm:$0xff]
        %v1184 = vld [vmem:[%s587 + $0x11b8] sm:$0xff]
        %v1185 = vld [vmem:[%s587 + $0x11c0] sm:$0xff]
        %v1186 = vld [vmem:[%s587 + $0x11c8] sm:$0xff]
        %v1187 = vld [vmem:[%s587 + $0x11d0] sm:$0xff]
        %v1188 = vld [vmem:[%s587 + $0x11d8] sm:$0xff]
        %v1189 = vld [vmem:[%s587 + $0x11e0] sm:$0xff]
        %v1190 = vld [vmem:[%s587 + $0x11e8] sm:$0xff]
        %v1191 = vld [vmem:[%s587 + $0x11f0] sm:$0xff]
        %v1192 = vld [vmem:[%s587 + $0x11f8] sm:$0xff]
        %v1193 = vld [vmem:[%s587 + $0x1200] sm:$0xff]
        %v1194 = vld [vmem:[%s587 + $0x1208] sm:$0xff]
        %v1195 = vld [vmem:[%s587 + $0x1210] sm:$0xff]
        %v1196 = vld [vmem:[%s587 + $0x1218] sm:$0xff]
        %v1197 = vld [vmem:[%s587 + $0x1220] sm:$0xff]
        %v1198 = vld [vmem:[%s587 + $0x1228] sm:$0xff]
        %v1199 = vld [vmem:[%s587 + $0x1230] sm:$0xff]
        %v1200 = vld [vmem:[%s587 + $0x1238] sm:$0xff]
        %v1201 = vld [vmem:[%s587 + $0x1240] sm:$0xff]
        %v1202 = vld [vmem:[%s587 + $0x1248] sm:$0xff]
        %v1203 = vld [vmem:[%s587 + $0x1250] sm:$0xff]
        %v1204 = vld [vmem:[%s587 + $0x1258] sm:$0xff]
        %v1205 = vld [vmem:[%s587 + $0x1260] sm:$0xff]
        %v1206 = vld [vmem:[%s587 + $0x1268] sm:$0xff]
        %v1207 = vld [vmem:[%s587 + $0x1270] sm:$0xff]
        %v1208 = vld [vmem:[%s587 + $0x1278] sm:$0xff]
        %v1209 = vld [vmem:[%s587 + $0x1280] sm:$0xff]
        %v1210 = vld [vmem:[%s587 + $0x1288] sm:$0xff]
        %v1211 = vld [vmem:[%s587 + $0x1290] sm:$0xff]
        %v1212 = vld [vmem:[%s587 + $0x1298] sm:$0xff]
        %v1213 = vld [vmem:[%s587 + $0x12a0] sm:$0xff]
        %v1214 = vld [vmem:[%s587 + $0x12a8] sm:$0xff]
        %v1215 = vld [vmem:[%s587 + $0x12b0] sm:$0xff]
        %v1216 = vld [vmem:[%s587 + $0x12b8] sm:$0xff]
        %v1217 = vld [vmem:[%s587 + $0x12c0] sm:$0xff]
        %v1218 = vld [vmem:[%s587 + $0x12c8] sm:$0xff]
        %v1219 = vld [vmem:[%s587 + $0x12d0] sm:$0xff]
        %v1220 = vld [vmem:[%s587 + $0x12d8] sm:$0xff]
        %v1221 = vld [vmem:[%s587 + $0x12e0] sm:$0xff]
        %v1222 = vld [vmem:[%s587 + $0x12e8] sm:$0xff]
        %v1223 = vld [vmem:[%s587 + $0x12f0] sm:$0xff]
        %v1224 = vld [vmem:[%s587 + $0x12f8] sm:$0xff]
        %v1225 = vpack.c.bf16 %v616, %v616
        %v1226 = vunpack.c.l.bf16 %v1225
        %v1227 = vsub.f32 %v616, %v1226
        %v1228 = vpack.c.bf16 %v1227, %v1227
        %v1229 = vpack.c.bf16 %v693, %v617
        %v1230 = vpack.c.bf16 %v694, %v618
        %v1231 = vpack.c.bf16 %v695, %v619
        %v1232 = vpack.c.bf16 %v696, %v620
        %v1233 = vpack.c.bf16 %v697, %v621
        %v1234 = vpack.c.bf16 %v698, %v622
        %v1235 = vpack.c.bf16 %v699, %v623
        %v1236 = vpack.c.bf16 %v700, %v624
        %v1237 = vpack.c.bf16 %v701, %v625
        %v1238 = vpack.c.bf16 %v702, %v626
        %v1239 = vpack.c.bf16 %v703, %v627
        %v1240 = vpack.c.bf16 %v704, %v628
        %v1241 = vpack.c.bf16 %v705, %v629
        %v1242 = vpack.c.bf16 %v706, %v630
        %v1243 = vpack.c.bf16 %v707, %v631
        %v1244 = vpack.c.bf16 %v708, %v632
        %v1245 = vpack.c.bf16 %v709, %v633
        %v1246 = vpack.c.bf16 %v710, %v634
        %v1247 = vpack.c.bf16 %v711, %v635
        %v1248 = vpack.c.bf16 %v712, %v636
        %v1249 = vpack.c.bf16 %v713, %v637
        %v1250 = vpack.c.bf16 %v714, %v638
        %v1251 = vpack.c.bf16 %v715, %v639
        %v1252 = vpack.c.bf16 %v716, %v640
        %v1253 = vpack.c.bf16 %v717, %v641
        %v1254 = vpack.c.bf16 %v718, %v642
        %v1255 = vpack.c.bf16 %v719, %v643
        %v1256 = vpack.c.bf16 %v720, %v644
        %v1257 = vpack.c.bf16 %v721, %v645
        %v1258 = vpack.c.bf16 %v722, %v646
        %v1259 = vpack.c.bf16 %v723, %v647
        %v1260 = vpack.c.bf16 %v724, %v648
        %v1261 = vpack.c.bf16 %v725, %v649
        %v1262 = vpack.c.bf16 %v726, %v650
        %v1263 = vpack.c.bf16 %v727, %v651
        %v1264 = vpack.c.bf16 %v728, %v652
        %v1265 = vpack.c.bf16 %v729, %v653
        %v1266 = vpack.c.bf16 %v730, %v654
        %v1267 = vpack.c.bf16 %v731, %v655
        %v1268 = vpack.c.bf16 %v732, %v656
        %v1269 = vpack.c.bf16 %v733, %v657
        %v1270 = vpack.c.bf16 %v734, %v658
        %v1271 = vpack.c.bf16 %v735, %v659
        %v1272 = vpack.c.bf16 %v736, %v660
        %v1273 = vpack.c.bf16 %v737, %v661
        %v1274 = vpack.c.bf16 %v738, %v662
        %v1275 = vpack.c.bf16 %v739, %v663
        %v1276 = vpack.c.bf16 %v740, %v664
        %v1277 = vpack.c.bf16 %v741, %v665
        %v1278 = vpack.c.bf16 %v742, %v666
        %v1279 = vpack.c.bf16 %v743, %v667
        %v1280 = vpack.c.bf16 %v744, %v668
        %v1281 = vpack.c.bf16 %v745, %v669
        %v1282 = vpack.c.bf16 %v746, %v670
        %v1283 = vpack.c.bf16 %v747, %v671
        %v1284 = vpack.c.bf16 %v748, %v672
        %v1285 = vpack.c.bf16 %v749, %v673
        %v1286 = vpack.c.bf16 %v750, %v674
        %v1287 = vpack.c.bf16 %v751, %v675
        %v1288 = vpack.c.bf16 %v752, %v676
        %v1289 = vpack.c.bf16 %v753, %v677
        %v1290 = vpack.c.bf16 %v754, %v678
        %v1291 = vpack.c.bf16 %v755, %v679
        %v1292 = vpack.c.bf16 %v756, %v680
        %v1293 = vpack.c.bf16 %v757, %v681
        %v1294 = vpack.c.bf16 %v758, %v682
        %v1295 = vpack.c.bf16 %v759, %v683
        %v1296 = vpack.c.bf16 %v760, %v684
        %v1297 = vpack.c.bf16 %v761, %v685
        %v1298 = vpack.c.bf16 %v762, %v686
        %v1299 = vpack.c.bf16 %v763, %v687
        %v1300 = vpack.c.bf16 %v764, %v688
        %v1301 = vpack.c.bf16 %v765, %v689
        %v1302 = vpack.c.bf16 %v766, %v690
        %v1303 = vpack.c.bf16 %v767, %v691
        %v1304 = vpack.c.bf16 %v768, %v692
        %v1305 = vpack.c.bf16 %v845, %v769
        %v1306 = vpack.c.bf16 %v846, %v770
        %v1307 = vpack.c.bf16 %v847, %v771
        %v1308 = vpack.c.bf16 %v848, %v772
        %v1309 = vpack.c.bf16 %v849, %v773
        %v1310 = vpack.c.bf16 %v850, %v774
        %v1311 = vpack.c.bf16 %v851, %v775
        %v1312 = vpack.c.bf16 %v852, %v776
        %v1313 = vpack.c.bf16 %v853, %v777
        %v1314 = vpack.c.bf16 %v854, %v778
        %v1315 = vpack.c.bf16 %v855, %v779
        %v1316 = vpack.c.bf16 %v856, %v780
        %v1317 = vpack.c.bf16 %v857, %v781
        %v1318 = vpack.c.bf16 %v858, %v782
        %v1319 = vpack.c.bf16 %v859, %v783
        %v1320 = vpack.c.bf16 %v860, %v784
        %v1321 = vpack.c.bf16 %v861, %v785
        %v1322 = vpack.c.bf16 %v862, %v786
        %v1323 = vpack.c.bf16 %v863, %v787
        %v1324 = vpack.c.bf16 %v864, %v788
        %v1325 = vpack.c.bf16 %v865, %v789
        %v1326 = vpack.c.bf16 %v866, %v790
        %v1327 = vpack.c.bf16 %v867, %v791
        %v1328 = vpack.c.bf16 %v868, %v792
        %v1329 = vpack.c.bf16 %v869, %v793
        %v1330 = vpack.c.bf16 %v870, %v794
        %v1331 = vpack.c.bf16 %v871, %v795
        %v1332 = vpack.c.bf16 %v872, %v796
        %v1333 = vpack.c.bf16 %v873, %v797
        %v1334 = vpack.c.bf16 %v874, %v798
        %v1335 = vpack.c.bf16 %v875, %v799
        %v1336 = vpack.c.bf16 %v876, %v800
        %v1337 = vpack.c.bf16 %v877, %v801
        %v1338 = vpack.c.bf16 %v878, %v802
        %v1339 = vpack.c.bf16 %v879, %v803
        %v1340 = vpack.c.bf16 %v880, %v804
        %v1341 = vpack.c.bf16 %v881, %v805
        %v1342 = vpack.c.bf16 %v882, %v806
        %v1343 = vpack.c.bf16 %v883, %v807
        %v1344 = vpack.c.bf16 %v884, %v808
        %v1345 = vpack.c.bf16 %v885, %v809
        %v1346 = vpack.c.bf16 %v886, %v810
        %v1347 = vpack.c.bf16 %v887, %v811
        %v1348 = vpack.c.bf16 %v888, %v812
        %v1349 = vpack.c.bf16 %v889, %v813
        %v1350 = vpack.c.bf16 %v890, %v814
        %v1351 = vpack.c.bf16 %v891, %v815
        %v1352 = vpack.c.bf16 %v892, %v816
        %v1353 = vpack.c.bf16 %v893, %v817
        %v1354 = vpack.c.bf16 %v894, %v818
        %v1355 = vpack.c.bf16 %v895, %v819
        %v1356 = vpack.c.bf16 %v896, %v820
        %v1357 = vpack.c.bf16 %v897, %v821
        %v1358 = vpack.c.bf16 %v898, %v822
        %v1359 = vpack.c.bf16 %v899, %v823
        %v1360 = vpack.c.bf16 %v900, %v824
        %v1361 = vpack.c.bf16 %v901, %v825
        %v1362 = vpack.c.bf16 %v902, %v826
        %v1363 = vpack.c.bf16 %v903, %v827
        %v1364 = vpack.c.bf16 %v904, %v828
        %v1365 = vpack.c.bf16 %v905, %v829
        %v1366 = vpack.c.bf16 %v906, %v830
        %v1367 = vpack.c.bf16 %v907, %v831
        %v1368 = vpack.c.bf16 %v908, %v832
        %v1369 = vpack.c.bf16 %v909, %v833
        %v1370 = vpack.c.bf16 %v910, %v834
        %v1371 = vpack.c.bf16 %v911, %v835
        %v1372 = vpack.c.bf16 %v912, %v836
        %v1373 = vpack.c.bf16 %v913, %v837
        %v1374 = vpack.c.bf16 %v914, %v838
        %v1375 = vpack.c.bf16 %v915, %v839
        %v1376 = vpack.c.bf16 %v916, %v840
        %v1377 = vpack.c.bf16 %v917, %v841
        %v1378 = vpack.c.bf16 %v918, %v842
        %v1379 = vpack.c.bf16 %v919, %v843
        %v1380 = vpack.c.bf16 %v920, %v844
        %v1381 = vpack.c.bf16 %v997, %v921
        %v1382 = vpack.c.bf16 %v998, %v922
        %v1383 = vpack.c.bf16 %v999, %v923
        %v1384 = vpack.c.bf16 %v1000, %v924
        %v1385 = vpack.c.bf16 %v1001, %v925
        %v1386 = vpack.c.bf16 %v1002, %v926
        %v1387 = vpack.c.bf16 %v1003, %v927
        %v1388 = vpack.c.bf16 %v1004, %v928
        %v1389 = vpack.c.bf16 %v1005, %v929
        %v1390 = vpack.c.bf16 %v1006, %v930
        %v1391 = vpack.c.bf16 %v1007, %v931
        %v1392 = vpack.c.bf16 %v1008, %v932
        %v1393 = vpack.c.bf16 %v1009, %v933
        %v1394 = vpack.c.bf16 %v1010, %v934
        %v1395 = vpack.c.bf16 %v1011, %v935
        %v1396 = vpack.c.bf16 %v1012, %v936
        %v1397 = vpack.c.bf16 %v1013, %v937
        %v1398 = vpack.c.bf16 %v1014, %v938
        %v1399 = vpack.c.bf16 %v1015, %v939
        %v1400 = vpack.c.bf16 %v1016, %v940
        %v1401 = vpack.c.bf16 %v1017, %v941
        %v1402 = vpack.c.bf16 %v1018, %v942
        %v1403 = vpack.c.bf16 %v1019, %v943
        %v1404 = vpack.c.bf16 %v1020, %v944
        %v1405 = vpack.c.bf16 %v1021, %v945
        %v1406 = vpack.c.bf16 %v1022, %v946
        %v1407 = vpack.c.bf16 %v1023, %v947
        %v1408 = vpack.c.bf16 %v1024, %v948
        %v1409 = vpack.c.bf16 %v1025, %v949
        %v1410 = vpack.c.bf16 %v1026, %v950
        %v1411 = vpack.c.bf16 %v1027, %v951
        %v1412 = vpack.c.bf16 %v1028, %v952
        %v1413 = vpack.c.bf16 %v1029, %v953
        %v1414 = vpack.c.bf16 %v1030, %v954
        %v1415 = vpack.c.bf16 %v1031, %v955
        %v1416 = vpack.c.bf16 %v1032, %v956
        %v1417 = vpack.c.bf16 %v1033, %v957
        %v1418 = vpack.c.bf16 %v1034, %v958
        %v1419 = vpack.c.bf16 %v1035, %v959
        %v1420 = vpack.c.bf16 %v1036, %v960
        %v1421 = vpack.c.bf16 %v1037, %v961
        %v1422 = vpack.c.bf16 %v1038, %v962
        %v1423 = vpack.c.bf16 %v1039, %v963
        %v1424 = vpack.c.bf16 %v1040, %v964
        %v1425 = vpack.c.bf16 %v1041, %v965
        %v1426 = vpack.c.bf16 %v1042, %v966
        %v1427 = vpack.c.bf16 %v1043, %v967
        %v1428 = vpack.c.bf16 %v1044, %v968
        %v1429 = vpack.c.bf16 %v1045, %v969
        %v1430 = vpack.c.bf16 %v1046, %v970
        %v1431 = vpack.c.bf16 %v1047, %v971
        %v1432 = vpack.c.bf16 %v1048, %v972
        %v1433 = vpack.c.bf16 %v1049, %v973
        %v1434 = vpack.c.bf16 %v1050, %v974
        %v1435 = vpack.c.bf16 %v1051, %v975
        %v1436 = vpack.c.bf16 %v1052, %v976
        %v1437 = vpack.c.bf16 %v1053, %v977
        %v1438 = vpack.c.bf16 %v1054, %v978
        %v1439 = vpack.c.bf16 %v1055, %v979
        %v1440 = vpack.c.bf16 %v1056, %v980
        %v1441 = vpack.c.bf16 %v1057, %v981
        %v1442 = vpack.c.bf16 %v1058, %v982
        %v1443 = vpack.c.bf16 %v1059, %v983
        %v1444 = vpack.c.bf16 %v1060, %v984
        %v1445 = vpack.c.bf16 %v1061, %v985
        %v1446 = vpack.c.bf16 %v1062, %v986
        %v1447 = vpack.c.bf16 %v1063, %v987
        %v1448 = vpack.c.bf16 %v1064, %v988
        %v1449 = vpack.c.bf16 %v1065, %v989
        %v1450 = vpack.c.bf16 %v1066, %v990
        %v1451 = vpack.c.bf16 %v1067, %v991
        %v1452 = vpack.c.bf16 %v1068, %v992
        %v1453 = vpack.c.bf16 %v1069, %v993
        %v1454 = vpack.c.bf16 %v1070, %v994
        %v1455 = vpack.c.bf16 %v1071, %v995
        %v1456 = vpack.c.bf16 %v1072, %v996
        %v1457 = vpack.c.bf16 %v1149, %v1073
        %v1458 = vpack.c.bf16 %v1150, %v1074
        %v1459 = vpack.c.bf16 %v1151, %v1075
        %v1460 = vpack.c.bf16 %v1152, %v1076
        %v1461 = vpack.c.bf16 %v1153, %v1077
        %v1462 = vpack.c.bf16 %v1154, %v1078
        %v1463 = vpack.c.bf16 %v1155, %v1079
        %v1464 = vpack.c.bf16 %v1156, %v1080
        %v1465 = vpack.c.bf16 %v1157, %v1081
        %v1466 = vpack.c.bf16 %v1158, %v1082
        %v1467 = vpack.c.bf16 %v1159, %v1083
        %v1468 = vpack.c.bf16 %v1160, %v1084
        %v1469 = vpack.c.bf16 %v1161, %v1085
        %v1470 = vpack.c.bf16 %v1162, %v1086
        %v1471 = vpack.c.bf16 %v1163, %v1087
        %v1472 = vpack.c.bf16 %v1164, %v1088
        %v1473 = vpack.c.bf16 %v1165, %v1089
        %v1474 = vpack.c.bf16 %v1166, %v1090
        %v1475 = vpack.c.bf16 %v1167, %v1091
        %v1476 = vpack.c.bf16 %v1168, %v1092
        %v1477 = vpack.c.bf16 %v1169, %v1093
        %v1478 = vpack.c.bf16 %v1170, %v1094
        %v1479 = vpack.c.bf16 %v1171, %v1095
        %v1480 = vpack.c.bf16 %v1172, %v1096
        %v1481 = vpack.c.bf16 %v1173, %v1097
        %v1482 = vpack.c.bf16 %v1174, %v1098
        %v1483 = vpack.c.bf16 %v1175, %v1099
        %v1484 = vpack.c.bf16 %v1176, %v1100
        %v1485 = vpack.c.bf16 %v1177, %v1101
        %v1486 = vpack.c.bf16 %v1178, %v1102
        %v1487 = vpack.c.bf16 %v1179, %v1103
        %v1488 = vpack.c.bf16 %v1180, %v1104
        %v1489 = vpack.c.bf16 %v1181, %v1105
        %v1490 = vpack.c.bf16 %v1182, %v1106
        %v1491 = vpack.c.bf16 %v1183, %v1107
        %v1492 = vpack.c.bf16 %v1184, %v1108
        %v1493 = vpack.c.bf16 %v1185, %v1109
        %v1494 = vpack.c.bf16 %v1186, %v1110
        %v1495 = vpack.c.bf16 %v1187, %v1111
        %v1496 = vpack.c.bf16 %v1188, %v1112
        %v1497 = vpack.c.bf16 %v1189, %v1113
        %v1498 = vpack.c.bf16 %v1190, %v1114
        %v1499 = vpack.c.bf16 %v1191, %v1115
        %v1500 = vpack.c.bf16 %v1192, %v1116
        %v1501 = vpack.c.bf16 %v1193, %v1117
        %v1502 = vpack.c.bf16 %v1194, %v1118
        %v1503 = vpack.c.bf16 %v1195, %v1119
        %v1504 = vpack.c.bf16 %v1196, %v1120
        %v1505 = vpack.c.bf16 %v1197, %v1121
        %v1506 = vpack.c.bf16 %v1198, %v1122
        %v1507 = vpack.c.bf16 %v1199, %v1123
        %v1508 = vpack.c.bf16 %v1200, %v1124
        %v1509 = vpack.c.bf16 %v1201, %v1125
        %v1510 = vpack.c.bf16 %v1202, %v1126
        %v1511 = vpack.c.bf16 %v1203, %v1127
        %v1512 = vpack.c.bf16 %v1204, %v1128
        %v1513 = vpack.c.bf16 %v1205, %v1129
        %v1514 = vpack.c.bf16 %v1206, %v1130
        %v1515 = vpack.c.bf16 %v1207, %v1131
        %v1516 = vpack.c.bf16 %v1208, %v1132
        %v1517 = vpack.c.bf16 %v1209, %v1133
        %v1518 = vpack.c.bf16 %v1210, %v1134
        %v1519 = vpack.c.bf16 %v1211, %v1135
        %v1520 = vpack.c.bf16 %v1212, %v1136
        %v1521 = vpack.c.bf16 %v1213, %v1137
        %v1522 = vpack.c.bf16 %v1214, %v1138
        %v1523 = vpack.c.bf16 %v1215, %v1139
        %v1524 = vpack.c.bf16 %v1216, %v1140
        %v1525 = vpack.c.bf16 %v1217, %v1141
        %v1526 = vpack.c.bf16 %v1218, %v1142
        %v1527 = vpack.c.bf16 %v1219, %v1143
        %v1528 = vpack.c.bf16 %v1220, %v1144
        %v1529 = vpack.c.bf16 %v1221, %v1145
        %v1530 = vpack.c.bf16 %v1222, %v1146
        %v1531 = vpack.c.bf16 %v1223, %v1147
        %v1532 = vpack.c.bf16 %v1224, %v1148
        %v1533 = vunpack.c.l.bf16 %v1229
        %v1534 = vunpack.c.l.bf16 %v1230
        %v1535 = vunpack.c.l.bf16 %v1231
        %v1536 = vunpack.c.l.bf16 %v1232
        %v1537 = vunpack.c.l.bf16 %v1233
        %v1538 = vunpack.c.l.bf16 %v1234
        %v1539 = vunpack.c.l.bf16 %v1235
        %v1540 = vunpack.c.l.bf16 %v1236
        %v1541 = vunpack.c.l.bf16 %v1237
        %v1542 = vunpack.c.l.bf16 %v1238
        %v1543 = vunpack.c.l.bf16 %v1239
        %v1544 = vunpack.c.l.bf16 %v1240
        %v1545 = vunpack.c.l.bf16 %v1241
        %v1546 = vunpack.c.l.bf16 %v1242
        %v1547 = vunpack.c.l.bf16 %v1243
        %v1548 = vunpack.c.l.bf16 %v1244
        %v1549 = vunpack.c.l.bf16 %v1245
        %v1550 = vunpack.c.l.bf16 %v1246
        %v1551 = vunpack.c.l.bf16 %v1247
        %v1552 = vunpack.c.l.bf16 %v1248
        %v1553 = vunpack.c.l.bf16 %v1249
        %v1554 = vunpack.c.l.bf16 %v1250
        %v1555 = vunpack.c.l.bf16 %v1251
        %v1556 = vunpack.c.l.bf16 %v1252
        %v1557 = vunpack.c.l.bf16 %v1253
        %v1558 = vunpack.c.l.bf16 %v1254
        %v1559 = vunpack.c.l.bf16 %v1255
        %v1560 = vunpack.c.l.bf16 %v1256
        %v1561 = vunpack.c.l.bf16 %v1257
        %v1562 = vunpack.c.l.bf16 %v1258
        %v1563 = vunpack.c.l.bf16 %v1259
        %v1564 = vunpack.c.l.bf16 %v1260
        %v1565 = vunpack.c.l.bf16 %v1261
        %v1566 = vunpack.c.l.bf16 %v1262
        %v1567 = vunpack.c.l.bf16 %v1263
        %v1568 = vunpack.c.l.bf16 %v1264
        %v1569 = vunpack.c.l.bf16 %v1265
        %v1570 = vunpack.c.l.bf16 %v1266
        %v1571 = vunpack.c.l.bf16 %v1267
        %v1572 = vunpack.c.l.bf16 %v1268
        %v1573 = vunpack.c.l.bf16 %v1269
        %v1574 = vunpack.c.l.bf16 %v1270
        %v1575 = vunpack.c.l.bf16 %v1271
        %v1576 = vunpack.c.l.bf16 %v1272
        %v1577 = vunpack.c.l.bf16 %v1273
        %v1578 = vunpack.c.l.bf16 %v1274
        %v1579 = vunpack.c.l.bf16 %v1275
        %v1580 = vunpack.c.l.bf16 %v1276
        %v1581 = vunpack.c.l.bf16 %v1277
        %v1582 = vunpack.c.l.bf16 %v1278
        %v1583 = vunpack.c.l.bf16 %v1279
        %v1584 = vunpack.c.l.bf16 %v1280
        %v1585 = vunpack.c.l.bf16 %v1281
        %v1586 = vunpack.c.l.bf16 %v1282
        %v1587 = vunpack.c.l.bf16 %v1283
        %v1588 = vunpack.c.l.bf16 %v1284
        %v1589 = vunpack.c.l.bf16 %v1285
        %v1590 = vunpack.c.l.bf16 %v1286
        %v1591 = vunpack.c.l.bf16 %v1287
        %v1592 = vunpack.c.l.bf16 %v1288
        %v1593 = vunpack.c.l.bf16 %v1289
        %v1594 = vunpack.c.l.bf16 %v1290
        %v1595 = vunpack.c.l.bf16 %v1291
        %v1596 = vunpack.c.l.bf16 %v1292
        %v1597 = vunpack.c.l.bf16 %v1293
        %v1598 = vunpack.c.l.bf16 %v1294
        %v1599 = vunpack.c.l.bf16 %v1295
        %v1600 = vunpack.c.l.bf16 %v1296
        %v1601 = vunpack.c.l.bf16 %v1297
        %v1602 = vunpack.c.l.bf16 %v1298
        %v1603 = vunpack.c.l.bf16 %v1299
        %v1604 = vunpack.c.l.bf16 %v1300
        %v1605 = vunpack.c.l.bf16 %v1301
        %v1606 = vunpack.c.l.bf16 %v1302
        %v1607 = vunpack.c.l.bf16 %v1303
        %v1608 = vunpack.c.l.bf16 %v1304
        %v1609 = vunpack.c.h.bf16 %v1229
        %v1610 = vunpack.c.h.bf16 %v1230
        %v1611 = vunpack.c.h.bf16 %v1231
        %v1612 = vunpack.c.h.bf16 %v1232
        %v1613 = vunpack.c.h.bf16 %v1233
        %v1614 = vunpack.c.h.bf16 %v1234
        %v1615 = vunpack.c.h.bf16 %v1235
        %v1616 = vunpack.c.h.bf16 %v1236
        %v1617 = vunpack.c.h.bf16 %v1237
        %v1618 = vunpack.c.h.bf16 %v1238
        %v1619 = vunpack.c.h.bf16 %v1239
        %v1620 = vunpack.c.h.bf16 %v1240
        %v1621 = vunpack.c.h.bf16 %v1241
        %v1622 = vunpack.c.h.bf16 %v1242
        %v1623 = vunpack.c.h.bf16 %v1243
        %v1624 = vunpack.c.h.bf16 %v1244
        %v1625 = vunpack.c.h.bf16 %v1245
        %v1626 = vunpack.c.h.bf16 %v1246
        %v1627 = vunpack.c.h.bf16 %v1247
        %v1628 = vunpack.c.h.bf16 %v1248
        %v1629 = vunpack.c.h.bf16 %v1249
        %v1630 = vunpack.c.h.bf16 %v1250
        %v1631 = vunpack.c.h.bf16 %v1251
        %v1632 = vunpack.c.h.bf16 %v1252
        %v1633 = vunpack.c.h.bf16 %v1253
        %v1634 = vunpack.c.h.bf16 %v1254
        %v1635 = vunpack.c.h.bf16 %v1255
        %v1636 = vunpack.c.h.bf16 %v1256
        %v1637 = vunpack.c.h.bf16 %v1257
        %v1638 = vunpack.c.h.bf16 %v1258
        %v1639 = vunpack.c.h.bf16 %v1259
        %v1640 = vunpack.c.h.bf16 %v1260
        %v1641 = vunpack.c.h.bf16 %v1261
        %v1642 = vunpack.c.h.bf16 %v1262
        %v1643 = vunpack.c.h.bf16 %v1263
        %v1644 = vunpack.c.h.bf16 %v1264
        %v1645 = vunpack.c.h.bf16 %v1265
        %v1646 = vunpack.c.h.bf16 %v1266
        %v1647 = vunpack.c.h.bf16 %v1267
        %v1648 = vunpack.c.h.bf16 %v1268
        %v1649 = vunpack.c.h.bf16 %v1269
        %v1650 = vunpack.c.h.bf16 %v1270
        %v1651 = vunpack.c.h.bf16 %v1271
        %v1652 = vunpack.c.h.bf16 %v1272
        %v1653 = vunpack.c.h.bf16 %v1273
        %v1654 = vunpack.c.h.bf16 %v1274
        %v1655 = vunpack.c.h.bf16 %v1275
        %v1656 = vunpack.c.h.bf16 %v1276
        %v1657 = vunpack.c.h.bf16 %v1277
        %v1658 = vunpack.c.h.bf16 %v1278
        %v1659 = vunpack.c.h.bf16 %v1279
        %v1660 = vunpack.c.h.bf16 %v1280
        %v1661 = vunpack.c.h.bf16 %v1281
        %v1662 = vunpack.c.h.bf16 %v1282
        %v1663 = vunpack.c.h.bf16 %v1283
        %v1664 = vunpack.c.h.bf16 %v1284
        %v1665 = vunpack.c.h.bf16 %v1285
        %v1666 = vunpack.c.h.bf16 %v1286
        %v1667 = vunpack.c.h.bf16 %v1287
        %v1668 = vunpack.c.h.bf16 %v1288
        %v1669 = vunpack.c.h.bf16 %v1289
        %v1670 = vunpack.c.h.bf16 %v1290
        %v1671 = vunpack.c.h.bf16 %v1291
        %v1672 = vunpack.c.h.bf16 %v1292
        %v1673 = vunpack.c.h.bf16 %v1293
        %v1674 = vunpack.c.h.bf16 %v1294
        %v1675 = vunpack.c.h.bf16 %v1295
        %v1676 = vunpack.c.h.bf16 %v1296
        %v1677 = vunpack.c.h.bf16 %v1297
        %v1678 = vunpack.c.h.bf16 %v1298
        %v1679 = vunpack.c.h.bf16 %v1299
        %v1680 = vunpack.c.h.bf16 %v1300
        %v1681 = vunpack.c.h.bf16 %v1301
        %v1682 = vunpack.c.h.bf16 %v1302
        %v1683 = vunpack.c.h.bf16 %v1303
        %v1684 = vunpack.c.h.bf16 %v1304
        %v1685 = vunpack.c.l.bf16 %v1305
        %v1686 = vunpack.c.l.bf16 %v1306
        %v1687 = vunpack.c.l.bf16 %v1307
        %v1688 = vunpack.c.l.bf16 %v1308
        %v1689 = vunpack.c.l.bf16 %v1309
        %v1690 = vunpack.c.l.bf16 %v1310
        %v1691 = vunpack.c.l.bf16 %v1311
        %v1692 = vunpack.c.l.bf16 %v1312
        %v1693 = vunpack.c.l.bf16 %v1313
        %v1694 = vunpack.c.l.bf16 %v1314
        %v1695 = vunpack.c.l.bf16 %v1315
        %v1696 = vunpack.c.l.bf16 %v1316
        %v1697 = vunpack.c.l.bf16 %v1317
        %v1698 = vunpack.c.l.bf16 %v1318
        %v1699 = vunpack.c.l.bf16 %v1319
        %v1700 = vunpack.c.l.bf16 %v1320
        %v1701 = vunpack.c.l.bf16 %v1321
        %v1702 = vunpack.c.l.bf16 %v1322
        %v1703 = vunpack.c.l.bf16 %v1323
        %v1704 = vunpack.c.l.bf16 %v1324
        %v1705 = vunpack.c.l.bf16 %v1325
        %v1706 = vunpack.c.l.bf16 %v1326
        %v1707 = vunpack.c.l.bf16 %v1327
        %v1708 = vunpack.c.l.bf16 %v1328
        %v1709 = vunpack.c.l.bf16 %v1329
        %v1710 = vunpack.c.l.bf16 %v1330
        %v1711 = vunpack.c.l.bf16 %v1331
        %v1712 = vunpack.c.l.bf16 %v1332
        %v1713 = vunpack.c.l.bf16 %v1333
        %v1714 = vunpack.c.l.bf16 %v1334
        %v1715 = vunpack.c.l.bf16 %v1335
        %v1716 = vunpack.c.l.bf16 %v1336
        %v1717 = vunpack.c.l.bf16 %v1337
        %v1718 = vunpack.c.l.bf16 %v1338
        %v1719 = vunpack.c.l.bf16 %v1339
        %v1720 = vunpack.c.l.bf16 %v1340
        %v1721 = vunpack.c.l.bf16 %v1341
        %v1722 = vunpack.c.l.bf16 %v1342
        %v1723 = vunpack.c.l.bf16 %v1343
        %v1724 = vunpack.c.l.bf16 %v1344
        %v1725 = vunpack.c.l.bf16 %v1345
        %v1726 = vunpack.c.l.bf16 %v1346
        %v1727 = vunpack.c.l.bf16 %v1347
        %v1728 = vunpack.c.l.bf16 %v1348
        %v1729 = vunpack.c.l.bf16 %v1349
        %v1730 = vunpack.c.l.bf16 %v1350
        %v1731 = vunpack.c.l.bf16 %v1351
        %v1732 = vunpack.c.l.bf16 %v1352
        %v1733 = vunpack.c.l.bf16 %v1353
        %v1734 = vunpack.c.l.bf16 %v1354
        %v1735 = vunpack.c.l.bf16 %v1355
        %v1736 = vunpack.c.l.bf16 %v1356
        %v1737 = vunpack.c.l.bf16 %v1357
        %v1738 = vunpack.c.l.bf16 %v1358
        %v1739 = vunpack.c.l.bf16 %v1359
        %v1740 = vunpack.c.l.bf16 %v1360
        %v1741 = vunpack.c.l.bf16 %v1361
        %v1742 = vunpack.c.l.bf16 %v1362
        %v1743 = vunpack.c.l.bf16 %v1363
        %v1744 = vunpack.c.l.bf16 %v1364
        %v1745 = vunpack.c.l.bf16 %v1365
        %v1746 = vunpack.c.l.bf16 %v1366
        %v1747 = vunpack.c.l.bf16 %v1367
        %v1748 = vunpack.c.l.bf16 %v1368
        %v1749 = vunpack.c.l.bf16 %v1369
        %v1750 = vunpack.c.l.bf16 %v1370
        %v1751 = vunpack.c.l.bf16 %v1371
        %v1752 = vunpack.c.l.bf16 %v1372
        %v1753 = vunpack.c.l.bf16 %v1373
        %v1754 = vunpack.c.l.bf16 %v1374
        %v1755 = vunpack.c.l.bf16 %v1375
        %v1756 = vunpack.c.l.bf16 %v1376
        %v1757 = vunpack.c.l.bf16 %v1377
        %v1758 = vunpack.c.l.bf16 %v1378
        %v1759 = vunpack.c.l.bf16 %v1379
        %v1760 = vunpack.c.l.bf16 %v1380
        %v1761 = vunpack.c.h.bf16 %v1305
        %v1762 = vunpack.c.h.bf16 %v1306
        %v1763 = vunpack.c.h.bf16 %v1307
        %v1764 = vunpack.c.h.bf16 %v1308
        %v1765 = vunpack.c.h.bf16 %v1309
        %v1766 = vunpack.c.h.bf16 %v1310
        %v1767 = vunpack.c.h.bf16 %v1311
        %v1768 = vunpack.c.h.bf16 %v1312
        %v1769 = vunpack.c.h.bf16 %v1313
        %v1770 = vunpack.c.h.bf16 %v1314
        %v1771 = vunpack.c.h.bf16 %v1315
        %v1772 = vunpack.c.h.bf16 %v1316
        %v1773 = vunpack.c.h.bf16 %v1317
        %v1774 = vunpack.c.h.bf16 %v1318
        %v1775 = vunpack.c.h.bf16 %v1319
        %v1776 = vunpack.c.h.bf16 %v1320
        %v1777 = vunpack.c.h.bf16 %v1321
        %v1778 = vunpack.c.h.bf16 %v1322
        %v1779 = vunpack.c.h.bf16 %v1323
        %v1780 = vunpack.c.h.bf16 %v1324
        %v1781 = vunpack.c.h.bf16 %v1325
        %v1782 = vunpack.c.h.bf16 %v1326
        %v1783 = vunpack.c.h.bf16 %v1327
        %v1784 = vunpack.c.h.bf16 %v1328
        %v1785 = vunpack.c.h.bf16 %v1329
        %v1786 = vunpack.c.h.bf16 %v1330
        %v1787 = vunpack.c.h.bf16 %v1331
        %v1788 = vunpack.c.h.bf16 %v1332
        %v1789 = vunpack.c.h.bf16 %v1333
        %v1790 = vunpack.c.h.bf16 %v1334
        %v1791 = vunpack.c.h.bf16 %v1335
        %v1792 = vunpack.c.h.bf16 %v1336
        %v1793 = vunpack.c.h.bf16 %v1337
        %v1794 = vunpack.c.h.bf16 %v1338
        %v1795 = vunpack.c.h.bf16 %v1339
        %v1796 = vunpack.c.h.bf16 %v1340
        %v1797 = vunpack.c.h.bf16 %v1341
        %v1798 = vunpack.c.h.bf16 %v1342
        %v1799 = vunpack.c.h.bf16 %v1343
        %v1800 = vunpack.c.h.bf16 %v1344
        %v1801 = vunpack.c.h.bf16 %v1345
        %v1802 = vunpack.c.h.bf16 %v1346
        %v1803 = vunpack.c.h.bf16 %v1347
        %v1804 = vunpack.c.h.bf16 %v1348
        %v1805 = vunpack.c.h.bf16 %v1349
        %v1806 = vunpack.c.h.bf16 %v1350
        %v1807 = vunpack.c.h.bf16 %v1351
        %v1808 = vunpack.c.h.bf16 %v1352
        %v1809 = vunpack.c.h.bf16 %v1353
        %v1810 = vunpack.c.h.bf16 %v1354
        %v1811 = vunpack.c.h.bf16 %v1355
        %v1812 = vunpack.c.h.bf16 %v1356
        %v1813 = vunpack.c.h.bf16 %v1357
        %v1814 = vunpack.c.h.bf16 %v1358
        %v1815 = vunpack.c.h.bf16 %v1359
        %v1816 = vunpack.c.h.bf16 %v1360
        %v1817 = vunpack.c.h.bf16 %v1361
        %v1818 = vunpack.c.h.bf16 %v1362
        %v1819 = vunpack.c.h.bf16 %v1363
        %v1820 = vunpack.c.h.bf16 %v1364
        %v1821 = vunpack.c.h.bf16 %v1365
        %v1822 = vunpack.c.h.bf16 %v1366
        %v1823 = vunpack.c.h.bf16 %v1367
        %v1824 = vunpack.c.h.bf16 %v1368
        %v1825 = vunpack.c.h.bf16 %v1369
        %v1826 = vunpack.c.h.bf16 %v1370
        %v1827 = vunpack.c.h.bf16 %v1371
        %v1828 = vunpack.c.h.bf16 %v1372
        %v1829 = vunpack.c.h.bf16 %v1373
        %v1830 = vunpack.c.h.bf16 %v1374
        %v1831 = vunpack.c.h.bf16 %v1375
        %v1832 = vunpack.c.h.bf16 %v1376
        %v1833 = vunpack.c.h.bf16 %v1377
        %v1834 = vunpack.c.h.bf16 %v1378
        %v1835 = vunpack.c.h.bf16 %v1379
        %v1836 = vunpack.c.h.bf16 %v1380
        %v1837 = vunpack.c.l.bf16 %v1381
        %v1838 = vunpack.c.l.bf16 %v1382
        %v1839 = vunpack.c.l.bf16 %v1383
        %v1840 = vunpack.c.l.bf16 %v1384
        %v1841 = vunpack.c.l.bf16 %v1385
        %v1842 = vunpack.c.l.bf16 %v1386
        %v1843 = vunpack.c.l.bf16 %v1387
        %v1844 = vunpack.c.l.bf16 %v1388
        %v1845 = vunpack.c.l.bf16 %v1389
        %v1846 = vunpack.c.l.bf16 %v1390
        %v1847 = vunpack.c.l.bf16 %v1391
        %v1848 = vunpack.c.l.bf16 %v1392
        %v1849 = vunpack.c.l.bf16 %v1393
        %v1850 = vunpack.c.l.bf16 %v1394
        %v1851 = vunpack.c.l.bf16 %v1395
        %v1852 = vunpack.c.l.bf16 %v1396
        %v1853 = vunpack.c.l.bf16 %v1397
        %v1854 = vunpack.c.l.bf16 %v1398
        %v1855 = vunpack.c.l.bf16 %v1399
        %v1856 = vunpack.c.l.bf16 %v1400
        %v1857 = vunpack.c.l.bf16 %v1401
        %v1858 = vunpack.c.l.bf16 %v1402
        %v1859 = vunpack.c.l.bf16 %v1403
        %v1860 = vunpack.c.l.bf16 %v1404
        %v1861 = vunpack.c.l.bf16 %v1405
        %v1862 = vunpack.c.l.bf16 %v1406
        %v1863 = vunpack.c.l.bf16 %v1407
        %v1864 = vunpack.c.l.bf16 %v1408
        %v1865 = vunpack.c.l.bf16 %v1409
        %v1866 = vunpack.c.l.bf16 %v1410
        %v1867 = vunpack.c.l.bf16 %v1411
        %v1868 = vunpack.c.l.bf16 %v1412
        %v1869 = vunpack.c.l.bf16 %v1413
        %v1870 = vunpack.c.l.bf16 %v1414
        %v1871 = vunpack.c.l.bf16 %v1415
        %v1872 = vunpack.c.l.bf16 %v1416
        %v1873 = vunpack.c.l.bf16 %v1417
        %v1874 = vunpack.c.l.bf16 %v1418
        %v1875 = vunpack.c.l.bf16 %v1419
        %v1876 = vunpack.c.l.bf16 %v1420
        %v1877 = vunpack.c.l.bf16 %v1421
        %v1878 = vunpack.c.l.bf16 %v1422
        %v1879 = vunpack.c.l.bf16 %v1423
        %v1880 = vunpack.c.l.bf16 %v1424
        %v1881 = vunpack.c.l.bf16 %v1425
        %v1882 = vunpack.c.l.bf16 %v1426
        %v1883 = vunpack.c.l.bf16 %v1427
        %v1884 = vunpack.c.l.bf16 %v1428
        %v1885 = vunpack.c.l.bf16 %v1429
        %v1886 = vunpack.c.l.bf16 %v1430
        %v1887 = vunpack.c.l.bf16 %v1431
        %v1888 = vunpack.c.l.bf16 %v1432
        %v1889 = vunpack.c.l.bf16 %v1433
        %v1890 = vunpack.c.l.bf16 %v1434
        %v1891 = vunpack.c.l.bf16 %v1435
        %v1892 = vunpack.c.l.bf16 %v1436
        %v1893 = vunpack.c.l.bf16 %v1437
        %v1894 = vunpack.c.l.bf16 %v1438
        %v1895 = vunpack.c.l.bf16 %v1439
        %v1896 = vunpack.c.l.bf16 %v1440
        %v1897 = vunpack.c.l.bf16 %v1441
        %v1898 = vunpack.c.l.bf16 %v1442
        %v1899 = vunpack.c.l.bf16 %v1443
        %v1900 = vunpack.c.l.bf16 %v1444
        %v1901 = vunpack.c.l.bf16 %v1445
        %v1902 = vunpack.c.l.bf16 %v1446
        %v1903 = vunpack.c.l.bf16 %v1447
        %v1904 = vunpack.c.l.bf16 %v1448
        %v1905 = vunpack.c.l.bf16 %v1449
        %v1906 = vunpack.c.l.bf16 %v1450
        %v1907 = vunpack.c.l.bf16 %v1451
        %v1908 = vunpack.c.l.bf16 %v1452
        %v1909 = vunpack.c.l.bf16 %v1453
        %v1910 = vunpack.c.l.bf16 %v1454
        %v1911 = vunpack.c.l.bf16 %v1455
        %v1912 = vunpack.c.l.bf16 %v1456
        %v1913 = vunpack.c.h.bf16 %v1381
        %v1914 = vunpack.c.h.bf16 %v1382
        %v1915 = vunpack.c.h.bf16 %v1383
        %v1916 = vunpack.c.h.bf16 %v1384
        %v1917 = vunpack.c.h.bf16 %v1385
        %v1918 = vunpack.c.h.bf16 %v1386
        %v1919 = vunpack.c.h.bf16 %v1387
        %v1920 = vunpack.c.h.bf16 %v1388
        %v1921 = vunpack.c.h.bf16 %v1389
        %v1922 = vunpack.c.h.bf16 %v1390
        %v1923 = vunpack.c.h.bf16 %v1391
        %v1924 = vunpack.c.h.bf16 %v1392
        %v1925 = vunpack.c.h.bf16 %v1393
        %v1926 = vunpack.c.h.bf16 %v1394
        %v1927 = vunpack.c.h.bf16 %v1395
        %v1928 = vunpack.c.h.bf16 %v1396
        %v1929 = vunpack.c.h.bf16 %v1397
        %v1930 = vunpack.c.h.bf16 %v1398
        %v1931 = vunpack.c.h.bf16 %v1399
        %v1932 = vunpack.c.h.bf16 %v1400
        %v1933 = vunpack.c.h.bf16 %v1401
        %v1934 = vunpack.c.h.bf16 %v1402
        %v1935 = vunpack.c.h.bf16 %v1403
        %v1936 = vunpack.c.h.bf16 %v1404
        %v1937 = vunpack.c.h.bf16 %v1405
        %v1938 = vunpack.c.h.bf16 %v1406
        %v1939 = vunpack.c.h.bf16 %v1407
        %v1940 = vunpack.c.h.bf16 %v1408
        %v1941 = vunpack.c.h.bf16 %v1409
        %v1942 = vunpack.c.h.bf16 %v1410
        %v1943 = vunpack.c.h.bf16 %v1411
        %v1944 = vunpack.c.h.bf16 %v1412
        %v1945 = vunpack.c.h.bf16 %v1413
        %v1946 = vunpack.c.h.bf16 %v1414
        %v1947 = vunpack.c.h.bf16 %v1415
        %v1948 = vunpack.c.h.bf16 %v1416
        %v1949 = vunpack.c.h.bf16 %v1417
        %v1950 = vunpack.c.h.bf16 %v1418
        %v1951 = vunpack.c.h.bf16 %v1419
        %v1952 = vunpack.c.h.bf16 %v1420
        %v1953 = vunpack.c.h.bf16 %v1421
        %v1954 = vunpack.c.h.bf16 %v1422
        %v1955 = vunpack.c.h.bf16 %v1423
        %v1956 = vunpack.c.h.bf16 %v1424
        %v1957 = vunpack.c.h.bf16 %v1425
        %v1958 = vunpack.c.h.bf16 %v1426
        %v1959 = vunpack.c.h.bf16 %v1427
        %v1960 = vunpack.c.h.bf16 %v1428
        %v1961 = vunpack.c.h.bf16 %v1429
        %v1962 = vunpack.c.h.bf16 %v1430
        %v1963 = vunpack.c.h.bf16 %v1431
        %v1964 = vunpack.c.h.bf16 %v1432
        %v1965 = vunpack.c.h.bf16 %v1433
        %v1966 = vunpack.c.h.bf16 %v1434
        %v1967 = vunpack.c.h.bf16 %v1435
        %v1968 = vunpack.c.h.bf16 %v1436
        %v1969 = vunpack.c.h.bf16 %v1437
        %v1970 = vunpack.c.h.bf16 %v1438
        %v1971 = vunpack.c.h.bf16 %v1439
        %v1972 = vunpack.c.h.bf16 %v1440
        %v1973 = vunpack.c.h.bf16 %v1441
        %v1974 = vunpack.c.h.bf16 %v1442
        %v1975 = vunpack.c.h.bf16 %v1443
        %v1976 = vunpack.c.h.bf16 %v1444
        %v1977 = vunpack.c.h.bf16 %v1445
        %v1978 = vunpack.c.h.bf16 %v1446
        %v1979 = vunpack.c.h.bf16 %v1447
        %v1980 = vunpack.c.h.bf16 %v1448
        %v1981 = vunpack.c.h.bf16 %v1449
        %v1982 = vunpack.c.h.bf16 %v1450
        %v1983 = vunpack.c.h.bf16 %v1451
        %v1984 = vunpack.c.h.bf16 %v1452
        %v1985 = vunpack.c.h.bf16 %v1453
        %v1986 = vunpack.c.h.bf16 %v1454
        %v1987 = vunpack.c.h.bf16 %v1455
        %v1988 = vunpack.c.h.bf16 %v1456
        %v1989 = vunpack.c.l.bf16 %v1457
        %v1990 = vunpack.c.l.bf16 %v1458
        %v1991 = vunpack.c.l.bf16 %v1459
        %v1992 = vunpack.c.l.bf16 %v1460
        %v1993 = vunpack.c.l.bf16 %v1461
        %v1994 = vunpack.c.l.bf16 %v1462
        %v1995 = vunpack.c.l.bf16 %v1463
        %v1996 = vunpack.c.l.bf16 %v1464
        %v1997 = vunpack.c.l.bf16 %v1465
        %v1998 = vunpack.c.l.bf16 %v1466
        %v1999 = vunpack.c.l.bf16 %v1467
        %v2000 = vunpack.c.l.bf16 %v1468
        %v2001 = vunpack.c.l.bf16 %v1469
        %v2002 = vunpack.c.l.bf16 %v1470
        %v2003 = vunpack.c.l.bf16 %v1471
        %v2004 = vunpack.c.l.bf16 %v1472
        %v2005 = vunpack.c.l.bf16 %v1473
        %v2006 = vunpack.c.l.bf16 %v1474
        %v2007 = vunpack.c.l.bf16 %v1475
        %v2008 = vunpack.c.l.bf16 %v1476
        %v2009 = vunpack.c.l.bf16 %v1477
        %v2010 = vunpack.c.l.bf16 %v1478
        %v2011 = vunpack.c.l.bf16 %v1479
        %v2012 = vunpack.c.l.bf16 %v1480
        %v2013 = vunpack.c.l.bf16 %v1481
        %v2014 = vunpack.c.l.bf16 %v1482
        %v2015 = vunpack.c.l.bf16 %v1483
        %v2016 = vunpack.c.l.bf16 %v1484
        %v2017 = vunpack.c.l.bf16 %v1485
        %v2018 = vunpack.c.l.bf16 %v1486
        %v2019 = vunpack.c.l.bf16 %v1487
        %v2020 = vunpack.c.l.bf16 %v1488
        %v2021 = vunpack.c.l.bf16 %v1489
        %v2022 = vunpack.c.l.bf16 %v1490
        %v2023 = vunpack.c.l.bf16 %v1491
        %v2024 = vunpack.c.l.bf16 %v1492
        %v2025 = vunpack.c.l.bf16 %v1493
        %v2026 = vunpack.c.l.bf16 %v1494
        %v2027 = vunpack.c.l.bf16 %v1495
        %v2028 = vunpack.c.l.bf16 %v1496
        %v2029 = vunpack.c.l.bf16 %v1497
        %v2030 = vunpack.c.l.bf16 %v1498
        %v2031 = vunpack.c.l.bf16 %v1499
        %v2032 = vunpack.c.l.bf16 %v1500
        %v2033 = vunpack.c.l.bf16 %v1501
        %v2034 = vunpack.c.l.bf16 %v1502
        %v2035 = vunpack.c.l.bf16 %v1503
        %v2036 = vunpack.c.l.bf16 %v1504
        %v2037 = vunpack.c.l.bf16 %v1505
        %v2038 = vunpack.c.l.bf16 %v1506
        %v2039 = vunpack.c.l.bf16 %v1507
        %v2040 = vunpack.c.l.bf16 %v1508
        %v2041 = vunpack.c.l.bf16 %v1509
        %v2042 = vunpack.c.l.bf16 %v1510
        %v2043 = vunpack.c.l.bf16 %v1511
        %v2044 = vunpack.c.l.bf16 %v1512
        %v2045 = vunpack.c.l.bf16 %v1513
        %v2046 = vunpack.c.l.bf16 %v1514
        %v2047 = vunpack.c.l.bf16 %v1515
        %v2048 = vunpack.c.l.bf16 %v1516
        %v2049 = vunpack.c.l.bf16 %v1517
        %v2050 = vunpack.c.l.bf16 %v1518
        %v2051 = vunpack.c.l.bf16 %v1519
        %v2052 = vunpack.c.l.bf16 %v1520
        %v2053 = vunpack.c.l.bf16 %v1521
        %v2054 = vunpack.c.l.bf16 %v1522
        %v2055 = vunpack.c.l.bf16 %v1523
        %v2056 = vunpack.c.l.bf16 %v1524
        %v2057 = vunpack.c.l.bf16 %v1525
        %v2058 = vunpack.c.l.bf16 %v1526
        %v2059 = vunpack.c.l.bf16 %v1527
        %v2060 = vunpack.c.l.bf16 %v1528
        %v2061 = vunpack.c.l.bf16 %v1529
        %v2062 = vunpack.c.l.bf16 %v1530
        %v2063 = vunpack.c.l.bf16 %v1531
        %v2064 = vunpack.c.l.bf16 %v1532
        %v2065 = vunpack.c.h.bf16 %v1457
        %v2066 = vunpack.c.h.bf16 %v1458
        %v2067 = vunpack.c.h.bf16 %v1459
        %v2068 = vunpack.c.h.bf16 %v1460
        %v2069 = vunpack.c.h.bf16 %v1461
        %v2070 = vunpack.c.h.bf16 %v1462
        %v2071 = vunpack.c.h.bf16 %v1463
        %v2072 = vunpack.c.h.bf16 %v1464
        %v2073 = vunpack.c.h.bf16 %v1465
        %v2074 = vunpack.c.h.bf16 %v1466
        %v2075 = vunpack.c.h.bf16 %v1467
        %v2076 = vunpack.c.h.bf16 %v1468
        %v2077 = vunpack.c.h.bf16 %v1469
        %v2078 = vunpack.c.h.bf16 %v1470
        %v2079 = vunpack.c.h.bf16 %v1471
        %v2080 = vunpack.c.h.bf16 %v1472
        %v2081 = vunpack.c.h.bf16 %v1473
        %v2082 = vunpack.c.h.bf16 %v1474
        %v2083 = vunpack.c.h.bf16 %v1475
        %v2084 = vunpack.c.h.bf16 %v1476
        %v2085 = vunpack.c.h.bf16 %v1477
        %v2086 = vunpack.c.h.bf16 %v1478
        %v2087 = vunpack.c.h.bf16 %v1479
        %v2088 = vunpack.c.h.bf16 %v1480
        %v2089 = vunpack.c.h.bf16 %v1481
        %v2090 = vunpack.c.h.bf16 %v1482
        %v2091 = vunpack.c.h.bf16 %v1483
        %v2092 = vunpack.c.h.bf16 %v1484
        %v2093 = vunpack.c.h.bf16 %v1485
        %v2094 = vunpack.c.h.bf16 %v1486
        %v2095 = vunpack.c.h.bf16 %v1487
        %v2096 = vunpack.c.h.bf16 %v1488
        %v2097 = vunpack.c.h.bf16 %v1489
        %v2098 = vunpack.c.h.bf16 %v1490
        %v2099 = vunpack.c.h.bf16 %v1491
        %v2100 = vunpack.c.h.bf16 %v1492
        %v2101 = vunpack.c.h.bf16 %v1493
        %v2102 = vunpack.c.h.bf16 %v1494
        %v2103 = vunpack.c.h.bf16 %v1495
        %v2104 = vunpack.c.h.bf16 %v1496
        %v2105 = vunpack.c.h.bf16 %v1497
        %v2106 = vunpack.c.h.bf16 %v1498
        %v2107 = vunpack.c.h.bf16 %v1499
        %v2108 = vunpack.c.h.bf16 %v1500
        %v2109 = vunpack.c.h.bf16 %v1501
        %v2110 = vunpack.c.h.bf16 %v1502
        %v2111 = vunpack.c.h.bf16 %v1503
        %v2112 = vunpack.c.h.bf16 %v1504
        %v2113 = vunpack.c.h.bf16 %v1505
        %v2114 = vunpack.c.h.bf16 %v1506
        %v2115 = vunpack.c.h.bf16 %v1507
        %v2116 = vunpack.c.h.bf16 %v1508
        %v2117 = vunpack.c.h.bf16 %v1509
        %v2118 = vunpack.c.h.bf16 %v1510
        %v2119 = vunpack.c.h.bf16 %v1511
        %v2120 = vunpack.c.h.bf16 %v1512
        %v2121 = vunpack.c.h.bf16 %v1513
        %v2122 = vunpack.c.h.bf16 %v1514
        %v2123 = vunpack.c.h.bf16 %v1515
        %v2124 = vunpack.c.h.bf16 %v1516
        %v2125 = vunpack.c.h.bf16 %v1517
        %v2126 = vunpack.c.h.bf16 %v1518
        %v2127 = vunpack.c.h.bf16 %v1519
        %v2128 = vunpack.c.h.bf16 %v1520
        %v2129 = vunpack.c.h.bf16 %v1521
        %v2130 = vunpack.c.h.bf16 %v1522
        %v2131 = vunpack.c.h.bf16 %v1523
        %v2132 = vunpack.c.h.bf16 %v1524
        %v2133 = vunpack.c.h.bf16 %v1525
        %v2134 = vunpack.c.h.bf16 %v1526
        %v2135 = vunpack.c.h.bf16 %v1527
        %v2136 = vunpack.c.h.bf16 %v1528
        %v2137 = vunpack.c.h.bf16 %v1529
        %v2138 = vunpack.c.h.bf16 %v1530
        %v2139 = vunpack.c.h.bf16 %v1531
        %v2140 = vunpack.c.h.bf16 %v1532
        %v2141 = vsub.f32 %v617, %v1533
        %v2142 = vsub.f32 %v618, %v1534
        %v2143 = vsub.f32 %v619, %v1535
        %v2144 = vsub.f32 %v620, %v1536
        %v2145 = vsub.f32 %v621, %v1537
        %v2146 = vsub.f32 %v622, %v1538
        %v2147 = vsub.f32 %v623, %v1539
        %v2148 = vsub.f32 %v624, %v1540
        %v2149 = vsub.f32 %v625, %v1541
        %v2150 = vsub.f32 %v626, %v1542
        %v2151 = vsub.f32 %v627, %v1543
        %v2152 = vsub.f32 %v628, %v1544
        %v2153 = vsub.f32 %v629, %v1545
        %v2154 = vsub.f32 %v630, %v1546
        %v2155 = vsub.f32 %v631, %v1547
        %v2156 = vsub.f32 %v632, %v1548
        %v2157 = vsub.f32 %v633, %v1549
        %v2158 = vsub.f32 %v634, %v1550
        %v2159 = vsub.f32 %v635, %v1551
        %v2160 = vsub.f32 %v636, %v1552
        %v2161 = vsub.f32 %v637, %v1553
        %v2162 = vsub.f32 %v638, %v1554
        %v2163 = vsub.f32 %v639, %v1555
        %v2164 = vsub.f32 %v640, %v1556
        %v2165 = vsub.f32 %v641, %v1557
        %v2166 = vsub.f32 %v642, %v1558
        %v2167 = vsub.f32 %v643, %v1559
        %v2168 = vsub.f32 %v644, %v1560
        %v2169 = vsub.f32 %v645, %v1561
        %v2170 = vsub.f32 %v646, %v1562
        %v2171 = vsub.f32 %v647, %v1563
        %v2172 = vsub.f32 %v648, %v1564
        %v2173 = vsub.f32 %v649, %v1565
        %v2174 = vsub.f32 %v650, %v1566
        %v2175 = vsub.f32 %v651, %v1567
        %v2176 = vsub.f32 %v652, %v1568
        %v2177 = vsub.f32 %v653, %v1569
        %v2178 = vsub.f32 %v654, %v1570
        %v2179 = vsub.f32 %v655, %v1571
        %v2180 = vsub.f32 %v656, %v1572
        %v2181 = vsub.f32 %v657, %v1573
        %v2182 = vsub.f32 %v658, %v1574
        %v2183 = vsub.f32 %v659, %v1575
        %v2184 = vsub.f32 %v660, %v1576
        %v2185 = vsub.f32 %v661, %v1577
        %v2186 = vsub.f32 %v662, %v1578
        %v2187 = vsub.f32 %v663, %v1579
        %v2188 = vsub.f32 %v664, %v1580
        %v2189 = vsub.f32 %v665, %v1581
        %v2190 = vsub.f32 %v666, %v1582
        %v2191 = vsub.f32 %v667, %v1583
        %v2192 = vsub.f32 %v668, %v1584
        %v2193 = vsub.f32 %v669, %v1585
        %v2194 = vsub.f32 %v670, %v1586
        %v2195 = vsub.f32 %v671, %v1587
        %v2196 = vsub.f32 %v672, %v1588
        %v2197 = vsub.f32 %v673, %v1589
        %v2198 = vsub.f32 %v674, %v1590
        %v2199 = vsub.f32 %v675, %v1591
        %v2200 = vsub.f32 %v676, %v1592
        %v2201 = vsub.f32 %v677, %v1593
        %v2202 = vsub.f32 %v678, %v1594
        %v2203 = vsub.f32 %v679, %v1595
        %v2204 = vsub.f32 %v680, %v1596
        %v2205 = vsub.f32 %v681, %v1597
        %v2206 = vsub.f32 %v682, %v1598
        %v2207 = vsub.f32 %v683, %v1599
        %v2208 = vsub.f32 %v684, %v1600
        %v2209 = vsub.f32 %v685, %v1601
        %v2210 = vsub.f32 %v686, %v1602
        %v2211 = vsub.f32 %v687, %v1603
        %v2212 = vsub.f32 %v688, %v1604
        %v2213 = vsub.f32 %v689, %v1605
        %v2214 = vsub.f32 %v690, %v1606
        %v2215 = vsub.f32 %v691, %v1607
        %v2216 = vsub.f32 %v692, %v1608
        %v2217 = vsub.f32 %v693, %v1609
        %v2218 = vsub.f32 %v694, %v1610
        %v2219 = vsub.f32 %v695, %v1611
        %v2220 = vsub.f32 %v696, %v1612
        %v2221 = vsub.f32 %v697, %v1613
        %v2222 = vsub.f32 %v698, %v1614
        %v2223 = vsub.f32 %v699, %v1615
        %v2224 = vsub.f32 %v700, %v1616
        %v2225 = vsub.f32 %v701, %v1617
        %v2226 = vsub.f32 %v702, %v1618
        %v2227 = vsub.f32 %v703, %v1619
        %v2228 = vsub.f32 %v704, %v1620
        %v2229 = vsub.f32 %v705, %v1621
        %v2230 = vsub.f32 %v706, %v1622
        %v2231 = vsub.f32 %v707, %v1623
        %v2232 = vsub.f32 %v708, %v1624
        %v2233 = vsub.f32 %v709, %v1625
        %v2234 = vsub.f32 %v710, %v1626
        %v2235 = vsub.f32 %v711, %v1627
        %v2236 = vsub.f32 %v712, %v1628
        %v2237 = vsub.f32 %v713, %v1629
        %v2238 = vsub.f32 %v714, %v1630
        %v2239 = vsub.f32 %v715, %v1631
        %v2240 = vsub.f32 %v716, %v1632
        %v2241 = vsub.f32 %v717, %v1633
        %v2242 = vsub.f32 %v718, %v1634
        %v2243 = vsub.f32 %v719, %v1635
        %v2244 = vsub.f32 %v720, %v1636
        %v2245 = vsub.f32 %v721, %v1637
        %v2246 = vsub.f32 %v722, %v1638
        %v2247 = vsub.f32 %v723, %v1639
        %v2248 = vsub.f32 %v724, %v1640
        %v2249 = vsub.f32 %v725, %v1641
        %v2250 = vsub.f32 %v726, %v1642
        %v2251 = vsub.f32 %v727, %v1643
        %v2252 = vsub.f32 %v728, %v1644
        %v2253 = vsub.f32 %v729, %v1645
        %v2254 = vsub.f32 %v730, %v1646
        %v2255 = vsub.f32 %v731, %v1647
        %v2256 = vsub.f32 %v732, %v1648
        %v2257 = vsub.f32 %v733, %v1649
        %v2258 = vsub.f32 %v734, %v1650
        %v2259 = vsub.f32 %v735, %v1651
        %v2260 = vsub.f32 %v736, %v1652
        %v2261 = vsub.f32 %v737, %v1653
        %v2262 = vsub.f32 %v738, %v1654
        %v2263 = vsub.f32 %v739, %v1655
        %v2264 = vsub.f32 %v740, %v1656
        %v2265 = vsub.f32 %v741, %v1657
        %v2266 = vsub.f32 %v742, %v1658
        %v2267 = vsub.f32 %v743, %v1659
        %v2268 = vsub.f32 %v744, %v1660
        %v2269 = vsub.f32 %v745, %v1661
        %v2270 = vsub.f32 %v746, %v1662
        %v2271 = vsub.f32 %v747, %v1663
        %v2272 = vsub.f32 %v748, %v1664
        %v2273 = vsub.f32 %v749, %v1665
        %v2274 = vsub.f32 %v750, %v1666
        %v2275 = vsub.f32 %v751, %v1667
        %v2276 = vsub.f32 %v752, %v1668
        %v2277 = vsub.f32 %v753, %v1669
        %v2278 = vsub.f32 %v754, %v1670
        %v2279 = vsub.f32 %v755, %v1671
        %v2280 = vsub.f32 %v756, %v1672
        %v2281 = vsub.f32 %v757, %v1673
        %v2282 = vsub.f32 %v758, %v1674
        %v2283 = vsub.f32 %v759, %v1675
        %v2284 = vsub.f32 %v760, %v1676
        %v2285 = vsub.f32 %v761, %v1677
        %v2286 = vsub.f32 %v762, %v1678
        %v2287 = vsub.f32 %v763, %v1679
        %v2288 = vsub.f32 %v764, %v1680
        %v2289 = vsub.f32 %v765, %v1681
        %v2290 = vsub.f32 %v766, %v1682
        %v2291 = vsub.f32 %v767, %v1683
        %v2292 = vsub.f32 %v768, %v1684
        %v2293 = vsub.f32 %v769, %v1685
        %v2294 = vsub.f32 %v770, %v1686
        %v2295 = vsub.f32 %v771, %v1687
        %v2296 = vsub.f32 %v772, %v1688
        %v2297 = vsub.f32 %v773, %v1689
        %v2298 = vsub.f32 %v774, %v1690
        %v2299 = vsub.f32 %v775, %v1691
        %v2300 = vsub.f32 %v776, %v1692
        %v2301 = vsub.f32 %v777, %v1693
        %v2302 = vsub.f32 %v778, %v1694
        %v2303 = vsub.f32 %v779, %v1695
        %v2304 = vsub.f32 %v780, %v1696
        %v2305 = vsub.f32 %v781, %v1697
        %v2306 = vsub.f32 %v782, %v1698
        %v2307 = vsub.f32 %v783, %v1699
        %v2308 = vsub.f32 %v784, %v1700
        %v2309 = vsub.f32 %v785, %v1701
        %v2310 = vsub.f32 %v786, %v1702
        %v2311 = vsub.f32 %v787, %v1703
        %v2312 = vsub.f32 %v788, %v1704
        %v2313 = vsub.f32 %v789, %v1705
        %v2314 = vsub.f32 %v790, %v1706
        %v2315 = vsub.f32 %v791, %v1707
        %v2316 = vsub.f32 %v792, %v1708
        %v2317 = vsub.f32 %v793, %v1709
        %v2318 = vsub.f32 %v794, %v1710
        %v2319 = vsub.f32 %v795, %v1711
        %v2320 = vsub.f32 %v796, %v1712
        %v2321 = vsub.f32 %v797, %v1713
        %v2322 = vsub.f32 %v798, %v1714
        %v2323 = vsub.f32 %v799, %v1715
        %v2324 = vsub.f32 %v800, %v1716
        %v2325 = vsub.f32 %v801, %v1717
        %v2326 = vsub.f32 %v802, %v1718
        %v2327 = vsub.f32 %v803, %v1719
        %v2328 = vsub.f32 %v804, %v1720
        %v2329 = vsub.f32 %v805, %v1721
        %v2330 = vsub.f32 %v806, %v1722
        %v2331 = vsub.f32 %v807, %v1723
        %v2332 = vsub.f32 %v808, %v1724
        %v2333 = vsub.f32 %v809, %v1725
        %v2334 = vsub.f32 %v810, %v1726
        %v2335 = vsub.f32 %v811, %v1727
        %v2336 = vsub.f32 %v812, %v1728
        %v2337 = vsub.f32 %v813, %v1729
        %v2338 = vsub.f32 %v814, %v1730
        %v2339 = vsub.f32 %v815, %v1731
        %v2340 = vsub.f32 %v816, %v1732
        %v2341 = vsub.f32 %v817, %v1733
        %v2342 = vsub.f32 %v818, %v1734
        %v2343 = vsub.f32 %v819, %v1735
        %v2344 = vsub.f32 %v820, %v1736
        %v2345 = vsub.f32 %v821, %v1737
        %v2346 = vsub.f32 %v822, %v1738
        %v2347 = vsub.f32 %v823, %v1739
        %v2348 = vsub.f32 %v824, %v1740
        %v2349 = vsub.f32 %v825, %v1741
        %v2350 = vsub.f32 %v826, %v1742
        %v2351 = vsub.f32 %v827, %v1743
        %v2352 = vsub.f32 %v828, %v1744
        %v2353 = vsub.f32 %v829, %v1745
        %v2354 = vsub.f32 %v830, %v1746
        %v2355 = vsub.f32 %v831, %v1747
        %v2356 = vsub.f32 %v832, %v1748
        %v2357 = vsub.f32 %v833, %v1749
        %v2358 = vsub.f32 %v834, %v1750
        %v2359 = vsub.f32 %v835, %v1751
        %v2360 = vsub.f32 %v836, %v1752
        %v2361 = vsub.f32 %v837, %v1753
        %v2362 = vsub.f32 %v838, %v1754
        %v2363 = vsub.f32 %v839, %v1755
        %v2364 = vsub.f32 %v840, %v1756
        %v2365 = vsub.f32 %v841, %v1757
        %v2366 = vsub.f32 %v842, %v1758
        %v2367 = vsub.f32 %v843, %v1759
        %v2368 = vsub.f32 %v844, %v1760
        %v2369 = vsub.f32 %v845, %v1761
        %v2370 = vsub.f32 %v846, %v1762
        %v2371 = vsub.f32 %v847, %v1763
        %v2372 = vsub.f32 %v848, %v1764
        %v2373 = vsub.f32 %v849, %v1765
        %v2374 = vsub.f32 %v850, %v1766
        %v2375 = vsub.f32 %v851, %v1767
        %v2376 = vsub.f32 %v852, %v1768
        %v2377 = vsub.f32 %v853, %v1769
        %v2378 = vsub.f32 %v854, %v1770
        %v2379 = vsub.f32 %v855, %v1771
        %v2380 = vsub.f32 %v856, %v1772
        %v2381 = vsub.f32 %v857, %v1773
        %v2382 = vsub.f32 %v858, %v1774
        %v2383 = vsub.f32 %v859, %v1775
        %v2384 = vsub.f32 %v860, %v1776
        %v2385 = vsub.f32 %v861, %v1777
        %v2386 = vsub.f32 %v862, %v1778
        %v2387 = vsub.f32 %v863, %v1779
        %v2388 = vsub.f32 %v864, %v1780
        %v2389 = vsub.f32 %v865, %v1781
        %v2390 = vsub.f32 %v866, %v1782
        %v2391 = vsub.f32 %v867, %v1783
        %v2392 = vsub.f32 %v868, %v1784
        %v2393 = vsub.f32 %v869, %v1785
        %v2394 = vsub.f32 %v870, %v1786
        %v2395 = vsub.f32 %v871, %v1787
        %v2396 = vsub.f32 %v872, %v1788
        %v2397 = vsub.f32 %v873, %v1789
        %v2398 = vsub.f32 %v874, %v1790
        %v2399 = vsub.f32 %v875, %v1791
        %v2400 = vsub.f32 %v876, %v1792
        %v2401 = vsub.f32 %v877, %v1793
        %v2402 = vsub.f32 %v878, %v1794
        %v2403 = vsub.f32 %v879, %v1795
        %v2404 = vsub.f32 %v880, %v1796
        %v2405 = vsub.f32 %v881, %v1797
        %v2406 = vsub.f32 %v882, %v1798
        %v2407 = vsub.f32 %v883, %v1799
        %v2408 = vsub.f32 %v884, %v1800
        %v2409 = vsub.f32 %v885, %v1801
        %v2410 = vsub.f32 %v886, %v1802
        %v2411 = vsub.f32 %v887, %v1803
        %v2412 = vsub.f32 %v888, %v1804
        %v2413 = vsub.f32 %v889, %v1805
        %v2414 = vsub.f32 %v890, %v1806
        %v2415 = vsub.f32 %v891, %v1807
        %v2416 = vsub.f32 %v892, %v1808
        %v2417 = vsub.f32 %v893, %v1809
        %v2418 = vsub.f32 %v894, %v1810
        %v2419 = vsub.f32 %v895, %v1811
        %v2420 = vsub.f32 %v896, %v1812
        %v2421 = vsub.f32 %v897, %v1813
        %v2422 = vsub.f32 %v898, %v1814
        %v2423 = vsub.f32 %v899, %v1815
        %v2424 = vsub.f32 %v900, %v1816
        %v2425 = vsub.f32 %v901, %v1817
        %v2426 = vsub.f32 %v902, %v1818
        %v2427 = vsub.f32 %v903, %v1819
        %v2428 = vsub.f32 %v904, %v1820
        %v2429 = vsub.f32 %v905, %v1821
        %v2430 = vsub.f32 %v906, %v1822
        %v2431 = vsub.f32 %v907, %v1823
        %v2432 = vsub.f32 %v908, %v1824
        %v2433 = vsub.f32 %v909, %v1825
        %v2434 = vsub.f32 %v910, %v1826
        %v2435 = vsub.f32 %v911, %v1827
        %v2436 = vsub.f32 %v912, %v1828
        %v2437 = vsub.f32 %v913, %v1829
        %v2438 = vsub.f32 %v914, %v1830
        %v2439 = vsub.f32 %v915, %v1831
        %v2440 = vsub.f32 %v916, %v1832
        %v2441 = vsub.f32 %v917, %v1833
        %v2442 = vsub.f32 %v918, %v1834
        %v2443 = vsub.f32 %v919, %v1835
        %v2444 = vsub.f32 %v920, %v1836
        %v2445 = vsub.f32 %v921, %v1837
        %v2446 = vsub.f32 %v922, %v1838
        %v2447 = vsub.f32 %v923, %v1839
        %v2448 = vsub.f32 %v924, %v1840
        %v2449 = vsub.f32 %v925, %v1841
        %v2450 = vsub.f32 %v926, %v1842
        %v2451 = vsub.f32 %v927, %v1843
        %v2452 = vsub.f32 %v928, %v1844
        %v2453 = vsub.f32 %v929, %v1845
        %v2454 = vsub.f32 %v930, %v1846
        %v2455 = vsub.f32 %v931, %v1847
        %v2456 = vsub.f32 %v932, %v1848
        %v2457 = vsub.f32 %v933, %v1849
        %v2458 = vsub.f32 %v934, %v1850
        %v2459 = vsub.f32 %v935, %v1851
        %v2460 = vsub.f32 %v936, %v1852
        %v2461 = vsub.f32 %v937, %v1853
        %v2462 = vsub.f32 %v938, %v1854
        %v2463 = vsub.f32 %v939, %v1855
        %v2464 = vsub.f32 %v940, %v1856
        %v2465 = vsub.f32 %v941, %v1857
        %v2466 = vsub.f32 %v942, %v1858
        %v2467 = vsub.f32 %v943, %v1859
        %v2468 = vsub.f32 %v944, %v1860
        %v2469 = vsub.f32 %v945, %v1861
        %v2470 = vsub.f32 %v946, %v1862
        %v2471 = vsub.f32 %v947, %v1863
        %v2472 = vsub.f32 %v948, %v1864
        %v2473 = vsub.f32 %v949, %v1865
        %v2474 = vsub.f32 %v950, %v1866
        %v2475 = vsub.f32 %v951, %v1867
        %v2476 = vsub.f32 %v952, %v1868
        %v2477 = vsub.f32 %v953, %v1869
        %v2478 = vsub.f32 %v954, %v1870
        %v2479 = vsub.f32 %v955, %v1871
        %v2480 = vsub.f32 %v956, %v1872
        %v2481 = vsub.f32 %v957, %v1873
        %v2482 = vsub.f32 %v958, %v1874
        %v2483 = vsub.f32 %v959, %v1875
        %v2484 = vsub.f32 %v960, %v1876
        %v2485 = vsub.f32 %v961, %v1877
        %v2486 = vsub.f32 %v962, %v1878
        %v2487 = vsub.f32 %v963, %v1879
        %v2488 = vsub.f32 %v964, %v1880
        %v2489 = vsub.f32 %v965, %v1881
        %v2490 = vsub.f32 %v966, %v1882
        %v2491 = vsub.f32 %v967, %v1883
        %v2492 = vsub.f32 %v968, %v1884
        %v2493 = vsub.f32 %v969, %v1885
        %v2494 = vsub.f32 %v970, %v1886
        %v2495 = vsub.f32 %v971, %v1887
        %v2496 = vsub.f32 %v972, %v1888
        %v2497 = vsub.f32 %v973, %v1889
        %v2498 = vsub.f32 %v974, %v1890
        %v2499 = vsub.f32 %v975, %v1891
        %v2500 = vsub.f32 %v976, %v1892
        %v2501 = vsub.f32 %v977, %v1893
        %v2502 = vsub.f32 %v978, %v1894
        %v2503 = vsub.f32 %v979, %v1895
        %v2504 = vsub.f32 %v980, %v1896
        %v2505 = vsub.f32 %v981, %v1897
        %v2506 = vsub.f32 %v982, %v1898
        %v2507 = vsub.f32 %v983, %v1899
        %v2508 = vsub.f32 %v984, %v1900
        %v2509 = vsub.f32 %v985, %v1901
        %v2510 = vsub.f32 %v986, %v1902
        %v2511 = vsub.f32 %v987, %v1903
        %v2512 = vsub.f32 %v988, %v1904
        %v2513 = vsub.f32 %v989, %v1905
        %v2514 = vsub.f32 %v990, %v1906
        %v2515 = vsub.f32 %v991, %v1907
        %v2516 = vsub.f32 %v992, %v1908
        %v2517 = vsub.f32 %v993, %v1909
        %v2518 = vsub.f32 %v994, %v1910
        %v2519 = vsub.f32 %v995, %v1911
        %v2520 = vsub.f32 %v996, %v1912
        %v2521 = vsub.f32 %v997, %v1913
        %v2522 = vsub.f32 %v998, %v1914
        %v2523 = vsub.f32 %v999, %v1915
        %v2524 = vsub.f32 %v1000, %v1916
        %v2525 = vsub.f32 %v1001, %v1917
        %v2526 = vsub.f32 %v1002, %v1918
        %v2527 = vsub.f32 %v1003, %v1919
        %v2528 = vsub.f32 %v1004, %v1920
        %v2529 = vsub.f32 %v1005, %v1921
        %v2530 = vsub.f32 %v1006, %v1922
        %v2531 = vsub.f32 %v1007, %v1923
        %v2532 = vsub.f32 %v1008, %v1924
        %v2533 = vsub.f32 %v1009, %v1925
        %v2534 = vsub.f32 %v1010, %v1926
        %v2535 = vsub.f32 %v1011, %v1927
        %v2536 = vsub.f32 %v1012, %v1928
        %v2537 = vsub.f32 %v1013, %v1929
        %v2538 = vsub.f32 %v1014, %v1930
        %v2539 = vsub.f32 %v1015, %v1931
        %v2540 = vsub.f32 %v1016, %v1932
        %v2541 = vsub.f32 %v1017, %v1933
        %v2542 = vsub.f32 %v1018, %v1934
        %v2543 = vsub.f32 %v1019, %v1935
        %v2544 = vsub.f32 %v1020, %v1936
        %v2545 = vsub.f32 %v1021, %v1937
        %v2546 = vsub.f32 %v1022, %v1938
        %v2547 = vsub.f32 %v1023, %v1939
        %v2548 = vsub.f32 %v1024, %v1940
        %v2549 = vsub.f32 %v1025, %v1941
        %v2550 = vsub.f32 %v1026, %v1942
        %v2551 = vsub.f32 %v1027, %v1943
        %v2552 = vsub.f32 %v1028, %v1944
        %v2553 = vsub.f32 %v1029, %v1945
        %v2554 = vsub.f32 %v1030, %v1946
        %v2555 = vsub.f32 %v1031, %v1947
        %v2556 = vsub.f32 %v1032, %v1948
        %v2557 = vsub.f32 %v1033, %v1949
        %v2558 = vsub.f32 %v1034, %v1950
        %v2559 = vsub.f32 %v1035, %v1951
        %v2560 = vsub.f32 %v1036, %v1952
        %v2561 = vsub.f32 %v1037, %v1953
        %v2562 = vsub.f32 %v1038, %v1954
        %v2563 = vsub.f32 %v1039, %v1955
        %v2564 = vsub.f32 %v1040, %v1956
        %v2565 = vsub.f32 %v1041, %v1957
        %v2566 = vsub.f32 %v1042, %v1958
        %v2567 = vsub.f32 %v1043, %v1959
        %v2568 = vsub.f32 %v1044, %v1960
        %v2569 = vsub.f32 %v1045, %v1961
        %v2570 = vsub.f32 %v1046, %v1962
        %v2571 = vsub.f32 %v1047, %v1963
        %v2572 = vsub.f32 %v1048, %v1964
        %v2573 = vsub.f32 %v1049, %v1965
        %v2574 = vsub.f32 %v1050, %v1966
        %v2575 = vsub.f32 %v1051, %v1967
        %v2576 = vsub.f32 %v1052, %v1968
        %v2577 = vsub.f32 %v1053, %v1969
        %v2578 = vsub.f32 %v1054, %v1970
        %v2579 = vsub.f32 %v1055, %v1971
        %v2580 = vsub.f32 %v1056, %v1972
        %v2581 = vsub.f32 %v1057, %v1973
        %v2582 = vsub.f32 %v1058, %v1974
        %v2583 = vsub.f32 %v1059, %v1975
        %v2584 = vsub.f32 %v1060, %v1976
        %v2585 = vsub.f32 %v1061, %v1977
        %v2586 = vsub.f32 %v1062, %v1978
        %v2587 = vsub.f32 %v1063, %v1979
        %v2588 = vsub.f32 %v1064, %v1980
        %v2589 = vsub.f32 %v1065, %v1981
        %v2590 = vsub.f32 %v1066, %v1982
        %v2591 = vsub.f32 %v1067, %v1983
        %v2592 = vsub.f32 %v1068, %v1984
        %v2593 = vsub.f32 %v1069, %v1985
        %v2594 = vsub.f32 %v1070, %v1986
        %v2595 = vsub.f32 %v1071, %v1987
        %v2596 = vsub.f32 %v1072, %v1988
        %v2597 = vsub.f32 %v1073, %v1989
        %v2598 = vsub.f32 %v1074, %v1990
        %v2599 = vsub.f32 %v1075, %v1991
        %v2600 = vsub.f32 %v1076, %v1992
        %v2601 = vsub.f32 %v1077, %v1993
        %v2602 = vsub.f32 %v1078, %v1994
        %v2603 = vsub.f32 %v1079, %v1995
        %v2604 = vsub.f32 %v1080, %v1996
        %v2605 = vsub.f32 %v1081, %v1997
        %v2606 = vsub.f32 %v1082, %v1998
        %v2607 = vsub.f32 %v1083, %v1999
        %v2608 = vsub.f32 %v1084, %v2000
        %v2609 = vsub.f32 %v1085, %v2001
        %v2610 = vsub.f32 %v1086, %v2002
        %v2611 = vsub.f32 %v1087, %v2003
        %v2612 = vsub.f32 %v1088, %v2004
        %v2613 = vsub.f32 %v1089, %v2005
        %v2614 = vsub.f32 %v1090, %v2006
        %v2615 = vsub.f32 %v1091, %v2007
        %v2616 = vsub.f32 %v1092, %v2008
        %v2617 = vsub.f32 %v1093, %v2009
        %v2618 = vsub.f32 %v1094, %v2010
        %v2619 = vsub.f32 %v1095, %v2011
        %v2620 = vsub.f32 %v1096, %v2012
        %v2621 = vsub.f32 %v1097, %v2013
        %v2622 = vsub.f32 %v1098, %v2014
        %v2623 = vsub.f32 %v1099, %v2015
        %v2624 = vsub.f32 %v1100, %v2016
        %v2625 = vsub.f32 %v1101, %v2017
        %v2626 = vsub.f32 %v1102, %v2018
        %v2627 = vsub.f32 %v1103, %v2019
        %v2628 = vsub.f32 %v1104, %v2020
        %v2629 = vsub.f32 %v1105, %v2021
        %v2630 = vsub.f32 %v1106, %v2022
        %v2631 = vsub.f32 %v1107, %v2023
        %v2632 = vsub.f32 %v1108, %v2024
        %v2633 = vsub.f32 %v1109, %v2025
        %v2634 = vsub.f32 %v1110, %v2026
        %v2635 = vsub.f32 %v1111, %v2027
        %v2636 = vsub.f32 %v1112, %v2028
        %v2637 = vsub.f32 %v1113, %v2029
        %v2638 = vsub.f32 %v1114, %v2030
        %v2639 = vsub.f32 %v1115, %v2031
        %v2640 = vsub.f32 %v1116, %v2032
        %v2641 = vsub.f32 %v1117, %v2033
        %v2642 = vsub.f32 %v1118, %v2034
        %v2643 = vsub.f32 %v1119, %v2035
        %v2644 = vsub.f32 %v1120, %v2036
        %v2645 = vsub.f32 %v1121, %v2037
        %v2646 = vsub.f32 %v1122, %v2038
        %v2647 = vsub.f32 %v1123, %v2039
        %v2648 = vsub.f32 %v1124, %v2040
        %v2649 = vsub.f32 %v1125, %v2041
        %v2650 = vsub.f32 %v1126, %v2042
        %v2651 = vsub.f32 %v1127, %v2043
        %v2652 = vsub.f32 %v1128, %v2044
        %v2653 = vsub.f32 %v1129, %v2045
        %v2654 = vsub.f32 %v1130, %v2046
        %v2655 = vsub.f32 %v1131, %v2047
        %v2656 = vsub.f32 %v1132, %v2048
        %v2657 = vsub.f32 %v1133, %v2049
        %v2658 = vsub.f32 %v1134, %v2050
        %v2659 = vsub.f32 %v1135, %v2051
        %v2660 = vsub.f32 %v1136, %v2052
        %v2661 = vsub.f32 %v1137, %v2053
        %v2662 = vsub.f32 %v1138, %v2054
        %v2663 = vsub.f32 %v1139, %v2055
        %v2664 = vsub.f32 %v1140, %v2056
        %v2665 = vsub.f32 %v1141, %v2057
        %v2666 = vsub.f32 %v1142, %v2058
        %v2667 = vsub.f32 %v1143, %v2059
        %v2668 = vsub.f32 %v1144, %v2060
        %v2669 = vsub.f32 %v1145, %v2061
        %v2670 = vsub.f32 %v1146, %v2062
        %v2671 = vsub.f32 %v1147, %v2063
        %v2672 = vsub.f32 %v1148, %v2064
        %v2673 = vsub.f32 %v1149, %v2065
        %v2674 = vsub.f32 %v1150, %v2066
        %v2675 = vsub.f32 %v1151, %v2067
        %v2676 = vsub.f32 %v1152, %v2068
        %v2677 = vsub.f32 %v1153, %v2069
        %v2678 = vsub.f32 %v1154, %v2070
        %v2679 = vsub.f32 %v1155, %v2071
        %v2680 = vsub.f32 %v1156, %v2072
        %v2681 = vsub.f32 %v1157, %v2073
        %v2682 = vsub.f32 %v1158, %v2074
        %v2683 = vsub.f32 %v1159, %v2075
        %v2684 = vsub.f32 %v1160, %v2076
        %v2685 = vsub.f32 %v1161, %v2077
        %v2686 = vsub.f32 %v1162, %v2078
        %v2687 = vsub.f32 %v1163, %v2079
        %v2688 = vsub.f32 %v1164, %v2080
        %v2689 = vsub.f32 %v1165, %v2081
        %v2690 = vsub.f32 %v1166, %v2082
        %v2691 = vsub.f32 %v1167, %v2083
        %v2692 = vsub.f32 %v1168, %v2084
        %v2693 = vsub.f32 %v1169, %v2085
        %v2694 = vsub.f32 %v1170, %v2086
        %v2695 = vsub.f32 %v1171, %v2087
        %v2696 = vsub.f32 %v1172, %v2088
        %v2697 = vsub.f32 %v1173, %v2089
        %v2698 = vsub.f32 %v1174, %v2090
        %v2699 = vsub.f32 %v1175, %v2091
        %v2700 = vsub.f32 %v1176, %v2092
        %v2701 = vsub.f32 %v1177, %v2093
        %v2702 = vsub.f32 %v1178, %v2094
        %v2703 = vsub.f32 %v1179, %v2095
        %v2704 = vsub.f32 %v1180, %v2096
        %v2705 = vsub.f32 %v1181, %v2097
        %v2706 = vsub.f32 %v1182, %v2098
        %v2707 = vsub.f32 %v1183, %v2099
        %v2708 = vsub.f32 %v1184, %v2100
        %v2709 = vsub.f32 %v1185, %v2101
        %v2710 = vsub.f32 %v1186, %v2102
        %v2711 = vsub.f32 %v1187, %v2103
        %v2712 = vsub.f32 %v1188, %v2104
        %v2713 = vsub.f32 %v1189, %v2105
        %v2714 = vsub.f32 %v1190, %v2106
        %v2715 = vsub.f32 %v1191, %v2107
        %v2716 = vsub.f32 %v1192, %v2108
        %v2717 = vsub.f32 %v1193, %v2109
        %v2718 = vsub.f32 %v1194, %v2110
        %v2719 = vsub.f32 %v1195, %v2111
        %v2720 = vsub.f32 %v1196, %v2112
        %v2721 = vsub.f32 %v1197, %v2113
        %v2722 = vsub.f32 %v1198, %v2114
        %v2723 = vsub.f32 %v1199, %v2115
        %v2724 = vsub.f32 %v1200, %v2116
        %v2725 = vsub.f32 %v1201, %v2117
        %v2726 = vsub.f32 %v1202, %v2118
        %v2727 = vsub.f32 %v1203, %v2119
        %v2728 = vsub.f32 %v1204, %v2120
        %v2729 = vsub.f32 %v1205, %v2121
        %v2730 = vsub.f32 %v1206, %v2122
        %v2731 = vsub.f32 %v1207, %v2123
        %v2732 = vsub.f32 %v1208, %v2124
        %v2733 = vsub.f32 %v1209, %v2125
        %v2734 = vsub.f32 %v1210, %v2126
        %v2735 = vsub.f32 %v1211, %v2127
        %v2736 = vsub.f32 %v1212, %v2128
        %v2737 = vsub.f32 %v1213, %v2129
        %v2738 = vsub.f32 %v1214, %v2130
        %v2739 = vsub.f32 %v1215, %v2131
        %v2740 = vsub.f32 %v1216, %v2132
        %v2741 = vsub.f32 %v1217, %v2133
        %v2742 = vsub.f32 %v1218, %v2134
        %v2743 = vsub.f32 %v1219, %v2135
        %v2744 = vsub.f32 %v1220, %v2136
        %v2745 = vsub.f32 %v1221, %v2137
        %v2746 = vsub.f32 %v1222, %v2138
        %v2747 = vsub.f32 %v1223, %v2139
        %v2748 = vsub.f32 %v1224, %v2140
        %v2749 = vpack.c.bf16 %v2217, %v2141
        %v2750 = vpack.c.bf16 %v2218, %v2142
        %v2751 = vpack.c.bf16 %v2219, %v2143
        %v2752 = vpack.c.bf16 %v2220, %v2144
        %v2753 = vpack.c.bf16 %v2221, %v2145
        %v2754 = vpack.c.bf16 %v2222, %v2146
        %v2755 = vpack.c.bf16 %v2223, %v2147
        %v2756 = vpack.c.bf16 %v2224, %v2148
        %v2757 = vpack.c.bf16 %v2225, %v2149
        %v2758 = vpack.c.bf16 %v2226, %v2150
        %v2759 = vpack.c.bf16 %v2227, %v2151
        %v2760 = vpack.c.bf16 %v2228, %v2152
        %v2761 = vpack.c.bf16 %v2229, %v2153
        %v2762 = vpack.c.bf16 %v2230, %v2154
        %v2763 = vpack.c.bf16 %v2231, %v2155
        %v2764 = vpack.c.bf16 %v2232, %v2156
        %v2765 = vpack.c.bf16 %v2233, %v2157
        %v2766 = vpack.c.bf16 %v2234, %v2158
        %v2767 = vpack.c.bf16 %v2235, %v2159
        %v2768 = vpack.c.bf16 %v2236, %v2160
        %v2769 = vpack.c.bf16 %v2237, %v2161
        %v2770 = vpack.c.bf16 %v2238, %v2162
        %v2771 = vpack.c.bf16 %v2239, %v2163
        %v2772 = vpack.c.bf16 %v2240, %v2164
        %v2773 = vpack.c.bf16 %v2241, %v2165
        %v2774 = vpack.c.bf16 %v2242, %v2166
        %v2775 = vpack.c.bf16 %v2243, %v2167
        %v2776 = vpack.c.bf16 %v2244, %v2168
        %v2777 = vpack.c.bf16 %v2245, %v2169
        %v2778 = vpack.c.bf16 %v2246, %v2170
        %v2779 = vpack.c.bf16 %v2247, %v2171
        %v2780 = vpack.c.bf16 %v2248, %v2172
        %v2781 = vpack.c.bf16 %v2249, %v2173
        %v2782 = vpack.c.bf16 %v2250, %v2174
        %v2783 = vpack.c.bf16 %v2251, %v2175
        %v2784 = vpack.c.bf16 %v2252, %v2176
        %v2785 = vpack.c.bf16 %v2253, %v2177
        %v2786 = vpack.c.bf16 %v2254, %v2178
        %v2787 = vpack.c.bf16 %v2255, %v2179
        %v2788 = vpack.c.bf16 %v2256, %v2180
        %v2789 = vpack.c.bf16 %v2257, %v2181
        %v2790 = vpack.c.bf16 %v2258, %v2182
        %v2791 = vpack.c.bf16 %v2259, %v2183
        %v2792 = vpack.c.bf16 %v2260, %v2184
        %v2793 = vpack.c.bf16 %v2261, %v2185
        %v2794 = vpack.c.bf16 %v2262, %v2186
        %v2795 = vpack.c.bf16 %v2263, %v2187
        %v2796 = vpack.c.bf16 %v2264, %v2188
        %v2797 = vpack.c.bf16 %v2265, %v2189
        %v2798 = vpack.c.bf16 %v2266, %v2190
        %v2799 = vpack.c.bf16 %v2267, %v2191
        %v2800 = vpack.c.bf16 %v2268, %v2192
        %v2801 = vpack.c.bf16 %v2269, %v2193
        %v2802 = vpack.c.bf16 %v2270, %v2194
        %v2803 = vpack.c.bf16 %v2271, %v2195
        %v2804 = vpack.c.bf16 %v2272, %v2196
        %v2805 = vpack.c.bf16 %v2273, %v2197
        %v2806 = vpack.c.bf16 %v2274, %v2198
        %v2807 = vpack.c.bf16 %v2275, %v2199
        %v2808 = vpack.c.bf16 %v2276, %v2200
        %v2809 = vpack.c.bf16 %v2277, %v2201
        %v2810 = vpack.c.bf16 %v2278, %v2202
        %v2811 = vpack.c.bf16 %v2279, %v2203
        %v2812 = vpack.c.bf16 %v2280, %v2204
        %v2813 = vpack.c.bf16 %v2281, %v2205
        %v2814 = vpack.c.bf16 %v2282, %v2206
        %v2815 = vpack.c.bf16 %v2283, %v2207
        %v2816 = vpack.c.bf16 %v2284, %v2208
        %v2817 = vpack.c.bf16 %v2285, %v2209
        %v2818 = vpack.c.bf16 %v2286, %v2210
        %v2819 = vpack.c.bf16 %v2287, %v2211
        %v2820 = vpack.c.bf16 %v2288, %v2212
        %v2821 = vpack.c.bf16 %v2289, %v2213
        %v2822 = vpack.c.bf16 %v2290, %v2214
        %v2823 = vpack.c.bf16 %v2291, %v2215
        %v2824 = vpack.c.bf16 %v2292, %v2216
        %v2825 = vpack.c.bf16 %v2369, %v2293
        %v2826 = vpack.c.bf16 %v2370, %v2294
        %v2827 = vpack.c.bf16 %v2371, %v2295
        %v2828 = vpack.c.bf16 %v2372, %v2296
        %v2829 = vpack.c.bf16 %v2373, %v2297
        %v2830 = vpack.c.bf16 %v2374, %v2298
        %v2831 = vpack.c.bf16 %v2375, %v2299
        %v2832 = vpack.c.bf16 %v2376, %v2300
        %v2833 = vpack.c.bf16 %v2377, %v2301
        %v2834 = vpack.c.bf16 %v2378, %v2302
        %v2835 = vpack.c.bf16 %v2379, %v2303
        %v2836 = vpack.c.bf16 %v2380, %v2304
        %v2837 = vpack.c.bf16 %v2381, %v2305
        %v2838 = vpack.c.bf16 %v2382, %v2306
        %v2839 = vpack.c.bf16 %v2383, %v2307
        %v2840 = vpack.c.bf16 %v2384, %v2308
        %v2841 = vpack.c.bf16 %v2385, %v2309
        %v2842 = vpack.c.bf16 %v2386, %v2310
        %v2843 = vpack.c.bf16 %v2387, %v2311
        %v2844 = vpack.c.bf16 %v2388, %v2312
        %v2845 = vpack.c.bf16 %v2389, %v2313
        %v2846 = vpack.c.bf16 %v2390, %v2314
        %v2847 = vpack.c.bf16 %v2391, %v2315
        %v2848 = vpack.c.bf16 %v2392, %v2316
        %v2849 = vpack.c.bf16 %v2393, %v2317
        %v2850 = vpack.c.bf16 %v2394, %v2318
        %v2851 = vpack.c.bf16 %v2395, %v2319
        %v2852 = vpack.c.bf16 %v2396, %v2320
        %v2853 = vpack.c.bf16 %v2397, %v2321
        %v2854 = vpack.c.bf16 %v2398, %v2322
        %v2855 = vpack.c.bf16 %v2399, %v2323
        %v2856 = vpack.c.bf16 %v2400, %v2324
        %v2857 = vpack.c.bf16 %v2401, %v2325
        %v2858 = vpack.c.bf16 %v2402, %v2326
        %v2859 = vpack.c.bf16 %v2403, %v2327
        %v2860 = vpack.c.bf16 %v2404, %v2328
        %v2861 = vpack.c.bf16 %v2405, %v2329
        %v2862 = vpack.c.bf16 %v2406, %v2330
        %v2863 = vpack.c.bf16 %v2407, %v2331
        %v2864 = vpack.c.bf16 %v2408, %v2332
        %v2865 = vpack.c.bf16 %v2409, %v2333
        %v2866 = vpack.c.bf16 %v2410, %v2334
        %v2867 = vpack.c.bf16 %v2411, %v2335
        %v2868 = vpack.c.bf16 %v2412, %v2336
        %v2869 = vpack.c.bf16 %v2413, %v2337
        %v2870 = vpack.c.bf16 %v2414, %v2338
        %v2871 = vpack.c.bf16 %v2415, %v2339
        %v2872 = vpack.c.bf16 %v2416, %v2340
        %v2873 = vpack.c.bf16 %v2417, %v2341
        %v2874 = vpack.c.bf16 %v2418, %v2342
        %v2875 = vpack.c.bf16 %v2419, %v2343
        %v2876 = vpack.c.bf16 %v2420, %v2344
        %v2877 = vpack.c.bf16 %v2421, %v2345
        %v2878 = vpack.c.bf16 %v2422, %v2346
        %v2879 = vpack.c.bf16 %v2423, %v2347
        %v2880 = vpack.c.bf16 %v2424, %v2348
        %v2881 = vpack.c.bf16 %v2425, %v2349
        %v2882 = vpack.c.bf16 %v2426, %v2350
        %v2883 = vpack.c.bf16 %v2427, %v2351
        %v2884 = vpack.c.bf16 %v2428, %v2352
        %v2885 = vpack.c.bf16 %v2429, %v2353
        %v2886 = vpack.c.bf16 %v2430, %v2354
        %v2887 = vpack.c.bf16 %v2431, %v2355
        %v2888 = vpack.c.bf16 %v2432, %v2356
        %v2889 = vpack.c.bf16 %v2433, %v2357
        %v2890 = vpack.c.bf16 %v2434, %v2358
        %v2891 = vpack.c.bf16 %v2435, %v2359
        %v2892 = vpack.c.bf16 %v2436, %v2360
        %v2893 = vpack.c.bf16 %v2437, %v2361
        %v2894 = vpack.c.bf16 %v2438, %v2362
        %v2895 = vpack.c.bf16 %v2439, %v2363
        %v2896 = vpack.c.bf16 %v2440, %v2364
        %v2897 = vpack.c.bf16 %v2441, %v2365
        %v2898 = vpack.c.bf16 %v2442, %v2366
        %v2899 = vpack.c.bf16 %v2443, %v2367
        %v2900 = vpack.c.bf16 %v2444, %v2368
        %v2901 = vpack.c.bf16 %v2521, %v2445
        %v2902 = vpack.c.bf16 %v2522, %v2446
        %v2903 = vpack.c.bf16 %v2523, %v2447
        %v2904 = vpack.c.bf16 %v2524, %v2448
        %v2905 = vpack.c.bf16 %v2525, %v2449
        %v2906 = vpack.c.bf16 %v2526, %v2450
        %v2907 = vpack.c.bf16 %v2527, %v2451
        %v2908 = vpack.c.bf16 %v2528, %v2452
        %v2909 = vpack.c.bf16 %v2529, %v2453
        %v2910 = vpack.c.bf16 %v2530, %v2454
        %v2911 = vpack.c.bf16 %v2531, %v2455
        %v2912 = vpack.c.bf16 %v2532, %v2456
        %v2913 = vpack.c.bf16 %v2533, %v2457
        %v2914 = vpack.c.bf16 %v2534, %v2458
        %v2915 = vpack.c.bf16 %v2535, %v2459
        %v2916 = vpack.c.bf16 %v2536, %v2460
        %v2917 = vpack.c.bf16 %v2537, %v2461
        %v2918 = vpack.c.bf16 %v2538, %v2462
        %v2919 = vpack.c.bf16 %v2539, %v2463
        %v2920 = vpack.c.bf16 %v2540, %v2464
        %v2921 = vpack.c.bf16 %v2541, %v2465
        %v2922 = vpack.c.bf16 %v2542, %v2466
        %v2923 = vpack.c.bf16 %v2543, %v2467
        %v2924 = vpack.c.bf16 %v2544, %v2468
        %v2925 = vpack.c.bf16 %v2545, %v2469
        %v2926 = vpack.c.bf16 %v2546, %v2470
        %v2927 = vpack.c.bf16 %v2547, %v2471
        %v2928 = vpack.c.bf16 %v2548, %v2472
        %v2929 = vpack.c.bf16 %v2549, %v2473
        %v2930 = vpack.c.bf16 %v2550, %v2474
        %v2931 = vpack.c.bf16 %v2551, %v2475
        %v2932 = vpack.c.bf16 %v2552, %v2476
        %v2933 = vpack.c.bf16 %v2553, %v2477
        %v2934 = vpack.c.bf16 %v2554, %v2478
        %v2935 = vpack.c.bf16 %v2555, %v2479
        %v2936 = vpack.c.bf16 %v2556, %v2480
        %v2937 = vpack.c.bf16 %v2557, %v2481
        %v2938 = vpack.c.bf16 %v2558, %v2482
        %v2939 = vpack.c.bf16 %v2559, %v2483
        %v2940 = vpack.c.bf16 %v2560, %v2484
        %v2941 = vpack.c.bf16 %v2561, %v2485
        %v2942 = vpack.c.bf16 %v2562, %v2486
        %v2943 = vpack.c.bf16 %v2563, %v2487
        %v2944 = vpack.c.bf16 %v2564, %v2488
        %v2945 = vpack.c.bf16 %v2565, %v2489
        %v2946 = vpack.c.bf16 %v2566, %v2490
        %v2947 = vpack.c.bf16 %v2567, %v2491
        %v2948 = vpack.c.bf16 %v2568, %v2492
        %v2949 = vpack.c.bf16 %v2569, %v2493
        %v2950 = vpack.c.bf16 %v2570, %v2494
        %v2951 = vpack.c.bf16 %v2571, %v2495
        %v2952 = vpack.c.bf16 %v2572, %v2496
        %v2953 = vpack.c.bf16 %v2573, %v2497
        %v2954 = vpack.c.bf16 %v2574, %v2498
        %v2955 = vpack.c.bf16 %v2575, %v2499
        %v2956 = vpack.c.bf16 %v2576, %v2500
        %v2957 = vpack.c.bf16 %v2577, %v2501
        %v2958 = vpack.c.bf16 %v2578, %v2502
        %v2959 = vpack.c.bf16 %v2579, %v2503
        %v2960 = vpack.c.bf16 %v2580, %v2504
        %v2961 = vpack.c.bf16 %v2581, %v2505
        %v2962 = vpack.c.bf16 %v2582, %v2506
        %v2963 = vpack.c.bf16 %v2583, %v2507
        %v2964 = vpack.c.bf16 %v2584, %v2508
        %v2965 = vpack.c.bf16 %v2585, %v2509
        %v2966 = vpack.c.bf16 %v2586, %v2510
        %v2967 = vpack.c.bf16 %v2587, %v2511
        %v2968 = vpack.c.bf16 %v2588, %v2512
        %v2969 = vpack.c.bf16 %v2589, %v2513
        %v2970 = vpack.c.bf16 %v2590, %v2514
        %v2971 = vpack.c.bf16 %v2591, %v2515
        %v2972 = vpack.c.bf16 %v2592, %v2516
        %v2973 = vpack.c.bf16 %v2593, %v2517
        %v2974 = vpack.c.bf16 %v2594, %v2518
        %v2975 = vpack.c.bf16 %v2595, %v2519
        %v2976 = vpack.c.bf16 %v2596, %v2520
        %v2977 = vpack.c.bf16 %v2673, %v2597
        %v2978 = vpack.c.bf16 %v2674, %v2598
        %v2979 = vpack.c.bf16 %v2675, %v2599
        %v2980 = vpack.c.bf16 %v2676, %v2600
        %v2981 = vpack.c.bf16 %v2677, %v2601
        %v2982 = vpack.c.bf16 %v2678, %v2602
        %v2983 = vpack.c.bf16 %v2679, %v2603
        %v2984 = vpack.c.bf16 %v2680, %v2604
        %v2985 = vpack.c.bf16 %v2681, %v2605
        %v2986 = vpack.c.bf16 %v2682, %v2606
        %v2987 = vpack.c.bf16 %v2683, %v2607
        %v2988 = vpack.c.bf16 %v2684, %v2608
        %v2989 = vpack.c.bf16 %v2685, %v2609
        %v2990 = vpack.c.bf16 %v2686, %v2610
        %v2991 = vpack.c.bf16 %v2687, %v2611
        %v2992 = vpack.c.bf16 %v2688, %v2612
        %v2993 = vpack.c.bf16 %v2689, %v2613
        %v2994 = vpack.c.bf16 %v2690, %v2614
        %v2995 = vpack.c.bf16 %v2691, %v2615
        %v2996 = vpack.c.bf16 %v2692, %v2616
        %v2997 = vpack.c.bf16 %v2693, %v2617
        %v2998 = vpack.c.bf16 %v2694, %v2618
        %v2999 = vpack.c.bf16 %v2695, %v2619
        %v3000 = vpack.c.bf16 %v2696, %v2620
        %v3001 = vpack.c.bf16 %v2697, %v2621
        %v3002 = vpack.c.bf16 %v2698, %v2622
        %v3003 = vpack.c.bf16 %v2699, %v2623
        %v3004 = vpack.c.bf16 %v2700, %v2624
        %v3005 = vpack.c.bf16 %v2701, %v2625
        %v3006 = vpack.c.bf16 %v2702, %v2626
        %v3007 = vpack.c.bf16 %v2703, %v2627
        %v3008 = vpack.c.bf16 %v2704, %v2628
        %v3009 = vpack.c.bf16 %v2705, %v2629
        %v3010 = vpack.c.bf16 %v2706, %v2630
        %v3011 = vpack.c.bf16 %v2707, %v2631
        %v3012 = vpack.c.bf16 %v2708, %v2632
        %v3013 = vpack.c.bf16 %v2709, %v2633
        %v3014 = vpack.c.bf16 %v2710, %v2634
        %v3015 = vpack.c.bf16 %v2711, %v2635
        %v3016 = vpack.c.bf16 %v2712, %v2636
        %v3017 = vpack.c.bf16 %v2713, %v2637
        %v3018 = vpack.c.bf16 %v2714, %v2638
        %v3019 = vpack.c.bf16 %v2715, %v2639
        %v3020 = vpack.c.bf16 %v2716, %v2640
        %v3021 = vpack.c.bf16 %v2717, %v2641
        %v3022 = vpack.c.bf16 %v2718, %v2642
        %v3023 = vpack.c.bf16 %v2719, %v2643
        %v3024 = vpack.c.bf16 %v2720, %v2644
        %v3025 = vpack.c.bf16 %v2721, %v2645
        %v3026 = vpack.c.bf16 %v2722, %v2646
        %v3027 = vpack.c.bf16 %v2723, %v2647
        %v3028 = vpack.c.bf16 %v2724, %v2648
        %v3029 = vpack.c.bf16 %v2725, %v2649
        %v3030 = vpack.c.bf16 %v2726, %v2650
        %v3031 = vpack.c.bf16 %v2727, %v2651
        %v3032 = vpack.c.bf16 %v2728, %v2652
        %v3033 = vpack.c.bf16 %v2729, %v2653
        %v3034 = vpack.c.bf16 %v2730, %v2654
        %v3035 = vpack.c.bf16 %v2731, %v2655
        %v3036 = vpack.c.bf16 %v2732, %v2656
        %v3037 = vpack.c.bf16 %v2733, %v2657
        %v3038 = vpack.c.bf16 %v2734, %v2658
        %v3039 = vpack.c.bf16 %v2735, %v2659
        %v3040 = vpack.c.bf16 %v2736, %v2660
        %v3041 = vpack.c.bf16 %v2737, %v2661
        %v3042 = vpack.c.bf16 %v2738, %v2662
        %v3043 = vpack.c.bf16 %v2739, %v2663
        %v3044 = vpack.c.bf16 %v2740, %v2664
        %v3045 = vpack.c.bf16 %v2741, %v2665
        %v3046 = vpack.c.bf16 %v2742, %v2666
        %v3047 = vpack.c.bf16 %v2743, %v2667
        %v3048 = vpack.c.bf16 %v2744, %v2668
        %v3049 = vpack.c.bf16 %v2745, %v2669
        %v3050 = vpack.c.bf16 %v2746, %v2670
        %v3051 = vpack.c.bf16 %v2747, %v2671
        %v3052 = vpack.c.bf16 %v2748, %v2672
        %vm3053 = vcmask 523264
        %v3055 = vsel %vm3053, %v1225, 0
        %3057 = vmatprep.subr.bf16.mxu0 0
        %3058 = vmatpush1.bf16.msra.mxu0 0
        %3059 = vmatprep.subr.bf16.mxu0 0
        %3060 = vmatpush1.bf16.msra.mxu0 0
        %3061 = vmatprep.subr.bf16.mxu0 0
        %3062 = vmatpush1.bf16.msra.mxu0 0
        %3063 = vmatprep.subr.bf16.mxu0 0
        %3064 = vmatpush1.bf16.msra.mxu0 0
        %3065 = vmatprep.subr.bf16.mxu0 %v2978
        %3066 = vmatpush1.bf16.msra.mxu0 %v2977
        %3067 = vmatprep.subr.bf16.mxu0 %v2902
        %3068 = vmatpush1.bf16.msra.mxu0 %v2901
        %3069 = vmatprep.subr.bf16.mxu0 %v2826
        %3070 = vmatpush1.bf16.msra.mxu0 %v2825
        %3071 = vmatprep.subr.bf16.mxu0 %v2750
        %3072 = vmatpush1.bf16.msra.mxu0 %v2749
        %3073 = vmatprep.subr.bf16.mxu0 0
        %3074 = vmatpush2.bf16.msra.mxu0 0
        %3075 = vmatprep.subr.bf16.mxu0 0
        %3076 = vmatpush2.bf16.msra.mxu0 0
        %3077 = vmatprep.subr.bf16.mxu0 0
        %3078 = vmatpush2.bf16.msra.mxu0 0
        %3079 = vmatprep.subr.bf16.mxu0 0
        %3080 = vmatpush2.bf16.msra.mxu0 0
        %3081 = vmatprep.subr.bf16.mxu0 0
        %3082 = vmatpush2.bf16.msra.mxu0 0
        %3083 = vmatprep.subr.bf16.mxu0 0
        %3084 = vmatpush2.bf16.msra.mxu0 0
        %3085 = vmatprep.subr.bf16.mxu0 0
        %3086 = vmatpush2.bf16.msra.mxu0 0
        %3087 = vmatprep.subr.bf16.mxu0 0
        %3088 = vmatpush2.bf16.msra.mxu0 0
        %3089 = vmatprep.mubr.bf16.mxu0 0
        %3090 = vmatmul.mubr.bf16.gmra.mxu0 %v3055
        %v3091 = vpop.f32.mrf.mxu0
        %v3092 = vadd.f32 0.0, %v3091
        %v3093 = vpop.f32.mrf.mxu0
        %v3094 = vadd.f32 0.0, %v3093
        %v3095 = vpop.f32.mrf.mxu0
        %v3096 = vpop.f32.mrf.mxu0
        %3097 = vdwg.mxu0
        %3098 = vmatprep.subr.bf16.mxu0 0
        %3099 = vmatpush1.bf16.msra.mxu0 0
        %3100 = vmatprep.subr.bf16.mxu0 0
        %3101 = vmatpush1.bf16.msra.mxu0 0
        %3102 = vmatprep.subr.bf16.mxu0 0
        %3103 = vmatpush1.bf16.msra.mxu0 0
        %3104 = vmatprep.subr.bf16.mxu0 0
        %3105 = vmatpush1.bf16.msra.mxu0 0
        %3106 = vmatprep.subr.bf16.mxu0 %v2980
        %3107 = vmatpush1.bf16.msra.mxu0 %v2979
        %3108 = vmatprep.subr.bf16.mxu0 %v2904
        %3109 = vmatpush1.bf16.msra.mxu0 %v2903
        %3110 = vmatprep.subr.bf16.mxu0 %v2828
        %3111 = vmatpush1.bf16.msra.mxu0 %v2827
        %3112 = vmatprep.subr.bf16.mxu0 %v2752
        %3113 = vmatpush1.bf16.msra.mxu0 %v2751
        %3114 = vmatprep.subr.bf16.mxu0 0
        %3115 = vmatpush2.bf16.msra.mxu0 0
        %3116 = vmatprep.subr.bf16.mxu0 0
        %3117 = vmatpush2.bf16.msra.mxu0 0
        %3118 = vmatprep.subr.bf16.mxu0 0
        %3119 = vmatpush2.bf16.msra.mxu0 0
        %3120 = vmatprep.subr.bf16.mxu0 0
        %3121 = vmatpush2.bf16.msra.mxu0 0
        %3122 = vmatprep.subr.bf16.mxu0 0
        %3123 = vmatpush2.bf16.msra.mxu0 0
        %3124 = vmatprep.subr.bf16.mxu0 0
        %3125 = vmatpush2.bf16.msra.mxu0 0
        %3126 = vmatprep.subr.bf16.mxu0 0
        %3127 = vmatpush2.bf16.msra.mxu0 0
        %3128 = vmatprep.subr.bf16.mxu0 0
        %3129 = vmatpush2.bf16.msra.mxu0 0
        %3130 = vmatprep.mubr.bf16.mxu0 0
        %3131 = vmatmul.mubr.bf16.gmra.mxu0 %v3055
        %v3132 = vpop.f32.mrf.mxu0
        %v3133 = vadd.f32 0.0, %v3132
        %v3134 = vpop.f32.mrf.mxu0
        %v3135 = vadd.f32 0.0, %v3134
        %v3136 = vpop.f32.mrf.mxu0
        %v3137 = vpop.f32.mrf.mxu0
        %3138 = vdwg.mxu0
        %3139 = vmatprep.subr.bf16.mxu0 0
        %3140 = vmatpush1.bf16.msra.mxu0 0
        %3141 = vmatprep.subr.bf16.mxu0 0
        %3142 = vmatpush1.bf16.msra.mxu0 0
        %3143 = vmatprep.subr.bf16.mxu0 0
        %3144 = vmatpush1.bf16.msra.mxu0 0
        %3145 = vmatprep.subr.bf16.mxu0 0
        %3146 = vmatpush1.bf16.msra.mxu0 0
        %3147 = vmatprep.subr.bf16.mxu0 %v2982
        %3148 = vmatpush1.bf16.msra.mxu0 %v2981
        %3149 = vmatprep.subr.bf16.mxu0 %v2906
        %3150 = vmatpush1.bf16.msra.mxu0 %v2905
        %3151 = vmatprep.subr.bf16.mxu0 %v2830
        %3152 = vmatpush1.bf16.msra.mxu0 %v2829
        %3153 = vmatprep.subr.bf16.mxu0 %v2754
        %3154 = vmatpush1.bf16.msra.mxu0 %v2753
        %3155 = vmatprep.subr.bf16.mxu0 0
        %3156 = vmatpush2.bf16.msra.mxu0 0
        %3157 = vmatprep.subr.bf16.mxu0 0
        %3158 = vmatpush2.bf16.msra.mxu0 0
        %3159 = vmatprep.subr.bf16.mxu0 0
        %3160 = vmatpush2.bf16.msra.mxu0 0
        %3161 = vmatprep.subr.bf16.mxu0 0
        %3162 = vmatpush2.bf16.msra.mxu0 0
        %3163 = vmatprep.subr.bf16.mxu0 0
        %3164 = vmatpush2.bf16.msra.mxu0 0
        %3165 = vmatprep.subr.bf16.mxu0 0
        %3166 = vmatpush2.bf16.msra.mxu0 0
        %3167 = vmatprep.subr.bf16.mxu0 0
        %3168 = vmatpush2.bf16.msra.mxu0 0
        %3169 = vmatprep.subr.bf16.mxu0 0
        %3170 = vmatpush2.bf16.msra.mxu0 0
        %3171 = vmatprep.mubr.bf16.mxu0 0
        %3172 = vmatmul.mubr.bf16.gmra.mxu0 %v3055
        %v3173 = vpop.f32.mrf.mxu0
        %v3174 = vadd.f32 0.0, %v3173
        %v3175 = vpop.f32.mrf.mxu0
        %v3176 = vadd.f32 0.0, %v3175
        %v3177 = vpop.f32.mrf.mxu0
        %v3178 = vpop.f32.mrf.mxu0
        %3179 = vdwg.mxu0
        %3180 = vmatprep.subr.bf16.mxu0 0
        %3181 = vmatpush1.bf16.msra.mxu0 0
        %3182 = vmatprep.subr.bf16.mxu0 0
        %3183 = vmatpush1.bf16.msra.mxu0 0
        %3184 = vmatprep.subr.bf16.mxu0 0
        %3185 = vmatpush1.bf16.msra.mxu0 0
        %3186 = vmatprep.subr.bf16.mxu0 0
        %3187 = vmatpush1.bf16.msra.mxu0 0
        %3188 = vmatprep.subr.bf16.mxu0 %v2984
        %3189 = vmatpush1.bf16.msra.mxu0 %v2983
        %3190 = vmatprep.subr.bf16.mxu0 %v2908
        %3191 = vmatpush1.bf16.msra.mxu0 %v2907
        %3192 = vmatprep.subr.bf16.mxu0 %v2832
        %3193 = vmatpush1.bf16.msra.mxu0 %v2831
        %3194 = vmatprep.subr.bf16.mxu0 %v2756
        %3195 = vmatpush1.bf16.msra.mxu0 %v2755
        %3196 = vmatprep.subr.bf16.mxu0 0
        %3197 = vmatpush2.bf16.msra.mxu0 0
        %3198 = vmatprep.subr.bf16.mxu0 0
        %3199 = vmatpush2.bf16.msra.mxu0 0
        %3200 = vmatprep.subr.bf16.mxu0 0
        %3201 = vmatpush2.bf16.msra.mxu0 0
        %3202 = vmatprep.subr.bf16.mxu0 0
        %3203 = vmatpush2.bf16.msra.mxu0 0
        %3204 = vmatprep.subr.bf16.mxu0 0
        %3205 = vmatpush2.bf16.msra.mxu0 0
        %3206 = vmatprep.subr.bf16.mxu0 0
        %3207 = vmatpush2.bf16.msra.mxu0 0
        %3208 = vmatprep.subr.bf16.mxu0 0
        %3209 = vmatpush2.bf16.msra.mxu0 0
        %3210 = vmatprep.subr.bf16.mxu0 0
        %3211 = vmatpush2.bf16.msra.mxu0 0
        %3212 = vmatprep.mubr.bf16.mxu0 0
        %3213 = vmatmul.mubr.bf16.gmra.mxu0 %v3055
        %v3214 = vpop.f32.mrf.mxu0
        %v3215 = vadd.f32 0.0, %v3214
        %v3216 = vpop.f32.mrf.mxu0
        %v3217 = vadd.f32 0.0, %v3216
        %v3218 = vpop.f32.mrf.mxu0
        %v3219 = vpop.f32.mrf.mxu0
        %3220 = vdwg.mxu0
        %3221 = vmatprep.subr.bf16.mxu0 0
        %3222 = vmatpush1.bf16.msra.mxu0 0
        %3223 = vmatprep.subr.bf16.mxu0 0
        %3224 = vmatpush1.bf16.msra.mxu0 0
        %3225 = vmatprep.subr.bf16.mxu0 0
        %3226 = vmatpush1.bf16.msra.mxu0 0
        %3227 = vmatprep.subr.bf16.mxu0 0
        %3228 = vmatpush1.bf16.msra.mxu0 0
        %3229 = vmatprep.subr.bf16.mxu0 %v2986
        %3230 = vmatpush1.bf16.msra.mxu0 %v2985
        %3231 = vmatprep.subr.bf16.mxu0 %v2910
        %3232 = vmatpush1.bf16.msra.mxu0 %v2909
        %3233 = vmatprep.subr.bf16.mxu0 %v2834
        %3234 = vmatpush1.bf16.msra.mxu0 %v2833
        %3235 = vmatprep.subr.bf16.mxu0 %v2758
        %3236 = vmatpush1.bf16.msra.mxu0 %v2757
        %3237 = vmatprep.subr.bf16.mxu0 0
        %3238 = vmatpush2.bf16.msra.mxu0 0
        %3239 = vmatprep.subr.bf16.mxu0 0
        %3240 = vmatpush2.bf16.msra.mxu0 0
        %3241 = vmatprep.subr.bf16.mxu0 0
        %3242 = vmatpush2.bf16.msra.mxu0 0
        %3243 = vmatprep.subr.bf16.mxu0 0
        %3244 = vmatpush2.bf16.msra.mxu0 0
        %3245 = vmatprep.subr.bf16.mxu0 0
        %3246 = vmatpush2.bf16.msra.mxu0 0
        %3247 = vmatprep.subr.bf16.mxu0 0
        %3248 = vmatpush2.bf16.msra.mxu0 0
        %3249 = vmatprep.subr.bf16.mxu0 0
        %3250 = vmatpush2.bf16.msra.mxu0 0
        %3251 = vmatprep.subr.bf16.mxu0 0
        %3252 = vmatpush2.bf16.msra.mxu0 0
        %3253 = vmatprep.mubr.bf16.mxu0 0
        %3254 = vmatmul.mubr.bf16.gmra.mxu0 %v3055
        %v3255 = vpop.f32.mrf.mxu0
        %v3256 = vadd.f32 0.0, %v3255
        %v3257 = vpop.f32.mrf.mxu0
        %v3258 = vadd.f32 0.0, %v3257
        %v3259 = vpop.f32.mrf.mxu0
        %v3260 = vpop.f32.mrf.mxu0
        %3261 = vdwg.mxu0
        %3262 = vmatprep.subr.bf16.mxu0 0
        %3263 = vmatpush1.bf16.msra.mxu0 0
        %3264 = vmatprep.subr.bf16.mxu0 0
        %3265 = vmatpush1.bf16.msra.mxu0 0
        %3266 = vmatprep.subr.bf16.mxu0 0
        %3267 = vmatpush1.bf16.msra.mxu0 0
        %3268 = vmatprep.subr.bf16.mxu0 0
        %3269 = vmatpush1.bf16.msra.mxu0 0
        %3270 = vmatprep.subr.bf16.mxu0 %v2988
        %3271 = vmatpush1.bf16.msra.mxu0 %v2987
        %3272 = vmatprep.subr.bf16.mxu0 %v2912
        %3273 = vmatpush1.bf16.msra.mxu0 %v2911
        %3274 = vmatprep.subr.bf16.mxu0 %v2836
        %3275 = vmatpush1.bf16.msra.mxu0 %v2835
        %3276 = vmatprep.subr.bf16.mxu0 %v2760
        %3277 = vmatpush1.bf16.msra.mxu0 %v2759
        %3278 = vmatprep.subr.bf16.mxu0 0
        %3279 = vmatpush2.bf16.msra.mxu0 0
        %3280 = vmatprep.subr.bf16.mxu0 0
        %3281 = vmatpush2.bf16.msra.mxu0 0
        %3282 = vmatprep.subr.bf16.mxu0 0
        %3283 = vmatpush2.bf16.msra.mxu0 0
        %3284 = vmatprep.subr.bf16.mxu0 0
        %3285 = vmatpush2.bf16.msra.mxu0 0
        %3286 = vmatprep.subr.bf16.mxu0 0
        %3287 = vmatpush2.bf16.msra.mxu0 0
        %3288 = vmatprep.subr.bf16.mxu0 0
        %3289 = vmatpush2.bf16.msra.mxu0 0
        %3290 = vmatprep.subr.bf16.mxu0 0
        %3291 = vmatpush2.bf16.msra.mxu0 0
        %3292 = vmatprep.subr.bf16.mxu0 0
        %3293 = vmatpush2.bf16.msra.mxu0 0
        %3294 = vmatprep.mubr.bf16.mxu0 0
        %3295 = vmatmul.mubr.bf16.gmra.mxu0 %v3055
        %v3296 = vpop.f32.mrf.mxu0
        %v3297 = vadd.f32 0.0, %v3296
        %v3298 = vpop.f32.mrf.mxu0
        %v3299 = vadd.f32 0.0, %v3298
        %v3300 = vpop.f32.mrf.mxu0
        %v3301 = vpop.f32.mrf.mxu0
        %3302 = vdwg.mxu0
        %3303 = vmatprep.subr.bf16.mxu0 0
        %3304 = vmatpush1.bf16.msra.mxu0 0
        %3305 = vmatprep.subr.bf16.mxu0 0
        %3306 = vmatpush1.bf16.msra.mxu0 0
        %3307 = vmatprep.subr.bf16.mxu0 0
        %3308 = vmatpush1.bf16.msra.mxu0 0
        %3309 = vmatprep.subr.bf16.mxu0 0
        %3310 = vmatpush1.bf16.msra.mxu0 0
        %3311 = vmatprep.subr.bf16.mxu0 %v2990
        %3312 = vmatpush1.bf16.msra.mxu0 %v2989
        %3313 = vmatprep.subr.bf16.mxu0 %v2914
        %3314 = vmatpush1.bf16.msra.mxu0 %v2913
        %3315 = vmatprep.subr.bf16.mxu0 %v2838
        %3316 = vmatpush1.bf16.msra.mxu0 %v2837
        %3317 = vmatprep.subr.bf16.mxu0 %v2762
        %3318 = vmatpush1.bf16.msra.mxu0 %v2761
        %3319 = vmatprep.subr.bf16.mxu0 0
        %3320 = vmatpush2.bf16.msra.mxu0 0
        %3321 = vmatprep.subr.bf16.mxu0 0
        %3322 = vmatpush2.bf16.msra.mxu0 0
        %3323 = vmatprep.subr.bf16.mxu0 0
        %3324 = vmatpush2.bf16.msra.mxu0 0
        %3325 = vmatprep.subr.bf16.mxu0 0
        %3326 = vmatpush2.bf16.msra.mxu0 0
        %3327 = vmatprep.subr.bf16.mxu0 0
        %3328 = vmatpush2.bf16.msra.mxu0 0
        %3329 = vmatprep.subr.bf16.mxu0 0
        %3330 = vmatpush2.bf16.msra.mxu0 0
        %3331 = vmatprep.subr.bf16.mxu0 0
        %3332 = vmatpush2.bf16.msra.mxu0 0
        %3333 = vmatprep.subr.bf16.mxu0 0
        %3334 = vmatpush2.bf16.msra.mxu0 0
        %3335 = vmatprep.mubr.bf16.mxu0 0
        %3336 = vmatmul.mubr.bf16.gmra.mxu0 %v3055
        %v3337 = vpop.f32.mrf.mxu0
        %v3338 = vadd.f32 0.0, %v3337
        %v3339 = vpop.f32.mrf.mxu0
        %v3340 = vadd.f32 0.0, %v3339
        %v3341 = vpop.f32.mrf.mxu0
        %v3342 = vpop.f32.mrf.mxu0
        %3343 = vdwg.mxu0
        %3344 = vmatprep.subr.bf16.mxu0 0
        %3345 = vmatpush1.bf16.msra.mxu0 0
        %3346 = vmatprep.subr.bf16.mxu0 0
        %3347 = vmatpush1.bf16.msra.mxu0 0
        %3348 = vmatprep.subr.bf16.mxu0 0
        %3349 = vmatpush1.bf16.msra.mxu0 0
        %3350 = vmatprep.subr.bf16.mxu0 0
        %3351 = vmatpush1.bf16.msra.mxu0 0
        %3352 = vmatprep.subr.bf16.mxu0 %v2992
        %3353 = vmatpush1.bf16.msra.mxu0 %v2991
        %3354 = vmatprep.subr.bf16.mxu0 %v2916
        %3355 = vmatpush1.bf16.msra.mxu0 %v2915
        %3356 = vmatprep.subr.bf16.mxu0 %v2840
        %3357 = vmatpush1.bf16.msra.mxu0 %v2839
        %3358 = vmatprep.subr.bf16.mxu0 %v2764
        %3359 = vmatpush1.bf16.msra.mxu0 %v2763
        %3360 = vmatprep.subr.bf16.mxu0 0
        %3361 = vmatpush2.bf16.msra.mxu0 0
        %3362 = vmatprep.subr.bf16.mxu0 0
        %3363 = vmatpush2.bf16.msra.mxu0 0
        %3364 = vmatprep.subr.bf16.mxu0 0
        %3365 = vmatpush2.bf16.msra.mxu0 0
        %3366 = vmatprep.subr.bf16.mxu0 0
        %3367 = vmatpush2.bf16.msra.mxu0 0
        %3368 = vmatprep.subr.bf16.mxu0 0
        %3369 = vmatpush2.bf16.msra.mxu0 0
        %3370 = vmatprep.subr.bf16.mxu0 0
        %3371 = vmatpush2.bf16.msra.mxu0 0
        %3372 = vmatprep.subr.bf16.mxu0 0
        %3373 = vmatpush2.bf16.msra.mxu0 0
        %3374 = vmatprep.subr.bf16.mxu0 0
        %3375 = vmatpush2.bf16.msra.mxu0 0
        %3376 = vmatprep.mubr.bf16.mxu0 0
        %3377 = vmatmul.mubr.bf16.gmra.mxu0 %v3055
        %v3378 = vpop.f32.mrf.mxu0
        %v3379 = vadd.f32 0.0, %v3378
        %v3380 = vpop.f32.mrf.mxu0
        %v3381 = vadd.f32 0.0, %v3380
        %v3382 = vpop.f32.mrf.mxu0
        %v3383 = vpop.f32.mrf.mxu0
        %3384 = vdwg.mxu0
        %3385 = vmatprep.subr.bf16.mxu0 0
        %3386 = vmatpush1.bf16.msra.mxu0 0
        %3387 = vmatprep.subr.bf16.mxu0 0
        %3388 = vmatpush1.bf16.msra.mxu0 0
        %3389 = vmatprep.subr.bf16.mxu0 0
        %3390 = vmatpush1.bf16.msra.mxu0 0
        %3391 = vmatprep.subr.bf16.mxu0 0
        %3392 = vmatpush1.bf16.msra.mxu0 0
        %3393 = vmatprep.subr.bf16.mxu0 %v2994
        %3394 = vmatpush1.bf16.msra.mxu0 %v2993
        %3395 = vmatprep.subr.bf16.mxu0 %v2918
        %3396 = vmatpush1.bf16.msra.mxu0 %v2917
        %3397 = vmatprep.subr.bf16.mxu0 %v2842
        %3398 = vmatpush1.bf16.msra.mxu0 %v2841
        %3399 = vmatprep.subr.bf16.mxu0 %v2766
        %3400 = vmatpush1.bf16.msra.mxu0 %v2765
        %3401 = vmatprep.subr.bf16.mxu0 0
        %3402 = vmatpush2.bf16.msra.mxu0 0
        %3403 = vmatprep.subr.bf16.mxu0 0
        %3404 = vmatpush2.bf16.msra.mxu0 0
        %3405 = vmatprep.subr.bf16.mxu0 0
        %3406 = vmatpush2.bf16.msra.mxu0 0
        %3407 = vmatprep.subr.bf16.mxu0 0
        %3408 = vmatpush2.bf16.msra.mxu0 0
        %3409 = vmatprep.subr.bf16.mxu0 0
        %3410 = vmatpush2.bf16.msra.mxu0 0
        %3411 = vmatprep.subr.bf16.mxu0 0
        %3412 = vmatpush2.bf16.msra.mxu0 0
        %3413 = vmatprep.subr.bf16.mxu0 0
        %3414 = vmatpush2.bf16.msra.mxu0 0
        %3415 = vmatprep.subr.bf16.mxu0 0
        %3416 = vmatpush2.bf16.msra.mxu0 0
        %3417 = vmatprep.mubr.bf16.mxu0 0
        %3418 = vmatmul.mubr.bf16.gmra.mxu0 %v3055
        %v3419 = vpop.f32.mrf.mxu0
        %v3420 = vadd.f32 0.0, %v3419
        %v3421 = vpop.f32.mrf.mxu0
        %v3422 = vadd.f32 0.0, %v3421
        %v3423 = vpop.f32.mrf.mxu0
        %v3424 = vpop.f32.mrf.mxu0
        %3425 = vdwg.mxu0
        %3426 = vmatprep.subr.bf16.mxu0 0
        %3427 = vmatpush1.bf16.msra.mxu0 0
        %3428 = vmatprep.subr.bf16.mxu0 0
        %3429 = vmatpush1.bf16.msra.mxu0 0
        %3430 = vmatprep.subr.bf16.mxu0 0
        %3431 = vmatpush1.bf16.msra.mxu0 0
        %3432 = vmatprep.subr.bf16.mxu0 0
        %3433 = vmatpush1.bf16.msra.mxu0 0
        %3434 = vmatprep.subr.bf16.mxu0 %v2996
        %3435 = vmatpush1.bf16.msra.mxu0 %v2995
        %3436 = vmatprep.subr.bf16.mxu0 %v2920
        %3437 = vmatpush1.bf16.msra.mxu0 %v2919
        %3438 = vmatprep.subr.bf16.mxu0 %v2844
        %3439 = vmatpush1.bf16.msra.mxu0 %v2843
        %3440 = vmatprep.subr.bf16.mxu0 %v2768
        %3441 = vmatpush1.bf16.msra.mxu0 %v2767
        %3442 = vmatprep.subr.bf16.mxu0 0
        %3443 = vmatpush2.bf16.msra.mxu0 0
        %3444 = vmatprep.subr.bf16.mxu0 0
        %3445 = vmatpush2.bf16.msra.mxu0 0
        %3446 = vmatprep.subr.bf16.mxu0 0
        %3447 = vmatpush2.bf16.msra.mxu0 0
        %3448 = vmatprep.subr.bf16.mxu0 0
        %3449 = vmatpush2.bf16.msra.mxu0 0
        %3450 = vmatprep.subr.bf16.mxu0 0
        %3451 = vmatpush2.bf16.msra.mxu0 0
        %3452 = vmatprep.subr.bf16.mxu0 0
        %3453 = vmatpush2.bf16.msra.mxu0 0
        %3454 = vmatprep.subr.bf16.mxu0 0
        %3455 = vmatpush2.bf16.msra.mxu0 0
        %3456 = vmatprep.subr.bf16.mxu0 0
        %3457 = vmatpush2.bf16.msra.mxu0 0
        %3458 = vmatprep.mubr.bf16.mxu0 0
        %3459 = vmatmul.mubr.bf16.gmra.mxu0 %v3055
        %v3460 = vpop.f32.mrf.mxu0
        %v3461 = vadd.f32 0.0, %v3460
        %v3462 = vpop.f32.mrf.mxu0
        %v3463 = vadd.f32 0.0, %v3462
        %v3464 = vpop.f32.mrf.mxu0
        %v3465 = vpop.f32.mrf.mxu0
        %3466 = vdwg.mxu0
        %3467 = vmatprep.subr.bf16.mxu0 0
        %3468 = vmatpush1.bf16.msra.mxu0 0
        %3469 = vmatprep.subr.bf16.mxu0 0
        %3470 = vmatpush1.bf16.msra.mxu0 0
        %3471 = vmatprep.subr.bf16.mxu0 0
        %3472 = vmatpush1.bf16.msra.mxu0 0
        %3473 = vmatprep.subr.bf16.mxu0 0
        %3474 = vmatpush1.bf16.msra.mxu0 0
        %3475 = vmatprep.subr.bf16.mxu0 %v2998
        %3476 = vmatpush1.bf16.msra.mxu0 %v2997
        %3477 = vmatprep.subr.bf16.mxu0 %v2922
        %3478 = vmatpush1.bf16.msra.mxu0 %v2921
        %3479 = vmatprep.subr.bf16.mxu0 %v2846
        %3480 = vmatpush1.bf16.msra.mxu0 %v2845
        %3481 = vmatprep.subr.bf16.mxu0 %v2770
        %3482 = vmatpush1.bf16.msra.mxu0 %v2769
        %3483 = vmatprep.subr.bf16.mxu0 0
        %3484 = vmatpush2.bf16.msra.mxu0 0
        %3485 = vmatprep.subr.bf16.mxu0 0
        %3486 = vmatpush2.bf16.msra.mxu0 0
        %3487 = vmatprep.subr.bf16.mxu0 0
        %3488 = vmatpush2.bf16.msra.mxu0 0
        %3489 = vmatprep.subr.bf16.mxu0 0
        %3490 = vmatpush2.bf16.msra.mxu0 0
        %3491 = vmatprep.subr.bf16.mxu0 0
        %3492 = vmatpush2.bf16.msra.mxu0 0
        %3493 = vmatprep.subr.bf16.mxu0 0
        %3494 = vmatpush2.bf16.msra.mxu0 0
        %3495 = vmatprep.subr.bf16.mxu0 0
        %3496 = vmatpush2.bf16.msra.mxu0 0
        %3497 = vmatprep.subr.bf16.mxu0 0
        %3498 = vmatpush2.bf16.msra.mxu0 0
        %3499 = vmatprep.mubr.bf16.mxu0 0
        %3500 = vmatmul.mubr.bf16.gmra.mxu0 %v3055
        %v3501 = vpop.f32.mrf.mxu0
        %v3502 = vadd.f32 0.0, %v3501
        %v3503 = vpop.f32.mrf.mxu0
        %v3504 = vadd.f32 0.0, %v3503
        %v3505 = vpop.f32.mrf.mxu0
        %v3506 = vpop.f32.mrf.mxu0
        %3507 = vdwg.mxu0
        %3508 = vmatprep.subr.bf16.mxu0 0
        %3509 = vmatpush1.bf16.msra.mxu0 0
        %3510 = vmatprep.subr.bf16.mxu0 0
        %3511 = vmatpush1.bf16.msra.mxu0 0
        %3512 = vmatprep.subr.bf16.mxu0 0
        %3513 = vmatpush1.bf16.msra.mxu0 0
        %3514 = vmatprep.subr.bf16.mxu0 0
        %3515 = vmatpush1.bf16.msra.mxu0 0
        %3516 = vmatprep.subr.bf16.mxu0 %v3000
        %3517 = vmatpush1.bf16.msra.mxu0 %v2999
        %3518 = vmatprep.subr.bf16.mxu0 %v2924
        %3519 = vmatpush1.bf16.msra.mxu0 %v2923
        %3520 = vmatprep.subr.bf16.mxu0 %v2848
        %3521 = vmatpush1.bf16.msra.mxu0 %v2847
        %3522 = vmatprep.subr.bf16.mxu0 %v2772
        %3523 = vmatpush1.bf16.msra.mxu0 %v2771
        %3524 = vmatprep.subr.bf16.mxu0 0
        %3525 = vmatpush2.bf16.msra.mxu0 0
        %3526 = vmatprep.subr.bf16.mxu0 0
        %3527 = vmatpush2.bf16.msra.mxu0 0
        %3528 = vmatprep.subr.bf16.mxu0 0
        %3529 = vmatpush2.bf16.msra.mxu0 0
        %3530 = vmatprep.subr.bf16.mxu0 0
        %3531 = vmatpush2.bf16.msra.mxu0 0
        %3532 = vmatprep.subr.bf16.mxu0 0
        %3533 = vmatpush2.bf16.msra.mxu0 0
        %3534 = vmatprep.subr.bf16.mxu0 0
        %3535 = vmatpush2.bf16.msra.mxu0 0
        %3536 = vmatprep.subr.bf16.mxu0 0
        %3537 = vmatpush2.bf16.msra.mxu0 0
        %3538 = vmatprep.subr.bf16.mxu0 0
        %3539 = vmatpush2.bf16.msra.mxu0 0
        %3540 = vmatprep.mubr.bf16.mxu0 0
        %3541 = vmatmul.mubr.bf16.gmra.mxu0 %v3055
        %v3542 = vpop.f32.mrf.mxu0
        %v3543 = vadd.f32 0.0, %v3542
        %v3544 = vpop.f32.mrf.mxu0
        %v3545 = vadd.f32 0.0, %v3544
        %v3546 = vpop.f32.mrf.mxu0
        %v3547 = vpop.f32.mrf.mxu0
        %3548 = vdwg.mxu0
        %3549 = vmatprep.subr.bf16.mxu0 0
        %3550 = vmatpush1.bf16.msra.mxu0 0
        %3551 = vmatprep.subr.bf16.mxu0 0
        %3552 = vmatpush1.bf16.msra.mxu0 0
        %3553 = vmatprep.subr.bf16.mxu0 0
        %3554 = vmatpush1.bf16.msra.mxu0 0
        %3555 = vmatprep.subr.bf16.mxu0 0
        %3556 = vmatpush1.bf16.msra.mxu0 0
        %3557 = vmatprep.subr.bf16.mxu0 %v3002
        %3558 = vmatpush1.bf16.msra.mxu0 %v3001
        %3559 = vmatprep.subr.bf16.mxu0 %v2926
        %3560 = vmatpush1.bf16.msra.mxu0 %v2925
        %3561 = vmatprep.subr.bf16.mxu0 %v2850
        %3562 = vmatpush1.bf16.msra.mxu0 %v2849
        %3563 = vmatprep.subr.bf16.mxu0 %v2774
        %3564 = vmatpush1.bf16.msra.mxu0 %v2773
        %3565 = vmatprep.subr.bf16.mxu0 0
        %3566 = vmatpush2.bf16.msra.mxu0 0
        %3567 = vmatprep.subr.bf16.mxu0 0
        %3568 = vmatpush2.bf16.msra.mxu0 0
        %3569 = vmatprep.subr.bf16.mxu0 0
        %3570 = vmatpush2.bf16.msra.mxu0 0
        %3571 = vmatprep.subr.bf16.mxu0 0
        %3572 = vmatpush2.bf16.msra.mxu0 0
        %3573 = vmatprep.subr.bf16.mxu0 0
        %3574 = vmatpush2.bf16.msra.mxu0 0
        %3575 = vmatprep.subr.bf16.mxu0 0
        %3576 = vmatpush2.bf16.msra.mxu0 0
        %3577 = vmatprep.subr.bf16.mxu0 0
        %3578 = vmatpush2.bf16.msra.mxu0 0
        %3579 = vmatprep.subr.bf16.mxu0 0
        %3580 = vmatpush2.bf16.msra.mxu0 0
        %3581 = vmatprep.mubr.bf16.mxu0 0
        %3582 = vmatmul.mubr.bf16.gmra.mxu0 %v3055
        %v3583 = vpop.f32.mrf.mxu0
        %v3584 = vadd.f32 0.0, %v3583
        %v3585 = vpop.f32.mrf.mxu0
        %v3586 = vadd.f32 0.0, %v3585
        %v3587 = vpop.f32.mrf.mxu0
        %v3588 = vpop.f32.mrf.mxu0
        %3589 = vdwg.mxu0
        %3590 = vmatprep.subr.bf16.mxu0 0
        %3591 = vmatpush1.bf16.msra.mxu0 0
        %3592 = vmatprep.subr.bf16.mxu0 0
        %3593 = vmatpush1.bf16.msra.mxu0 0
        %3594 = vmatprep.subr.bf16.mxu0 0
        %3595 = vmatpush1.bf16.msra.mxu0 0
        %3596 = vmatprep.subr.bf16.mxu0 0
        %3597 = vmatpush1.bf16.msra.mxu0 0
        %3598 = vmatprep.subr.bf16.mxu0 %v3004
        %3599 = vmatpush1.bf16.msra.mxu0 %v3003
        %3600 = vmatprep.subr.bf16.mxu0 %v2928
        %3601 = vmatpush1.bf16.msra.mxu0 %v2927
        %3602 = vmatprep.subr.bf16.mxu0 %v2852
        %3603 = vmatpush1.bf16.msra.mxu0 %v2851
        %3604 = vmatprep.subr.bf16.mxu0 %v2776
        %3605 = vmatpush1.bf16.msra.mxu0 %v2775
        %3606 = vmatprep.subr.bf16.mxu0 0
        %3607 = vmatpush2.bf16.msra.mxu0 0
        %3608 = vmatprep.subr.bf16.mxu0 0
        %3609 = vmatpush2.bf16.msra.mxu0 0
        %3610 = vmatprep.subr.bf16.mxu0 0
        %3611 = vmatpush2.bf16.msra.mxu0 0
        %3612 = vmatprep.subr.bf16.mxu0 0
        %3613 = vmatpush2.bf16.msra.mxu0 0
        %3614 = vmatprep.subr.bf16.mxu0 0
        %3615 = vmatpush2.bf16.msra.mxu0 0
        %3616 = vmatprep.subr.bf16.mxu0 0
        %3617 = vmatpush2.bf16.msra.mxu0 0
        %3618 = vmatprep.subr.bf16.mxu0 0
        %3619 = vmatpush2.bf16.msra.mxu0 0
        %3620 = vmatprep.subr.bf16.mxu0 0
        %3621 = vmatpush2.bf16.msra.mxu0 0
        %3622 = vmatprep.mubr.bf16.mxu0 0
        %3623 = vmatmul.mubr.bf16.gmra.mxu0 %v3055
        %v3624 = vpop.f32.mrf.mxu0
        %v3625 = vadd.f32 0.0, %v3624
        %v3626 = vpop.f32.mrf.mxu0
        %v3627 = vadd.f32 0.0, %v3626
        %v3628 = vpop.f32.mrf.mxu0
        %v3629 = vpop.f32.mrf.mxu0
        %3630 = vdwg.mxu0
        %3631 = vmatprep.subr.bf16.mxu0 0
        %3632 = vmatpush1.bf16.msra.mxu0 0
        %3633 = vmatprep.subr.bf16.mxu0 0
        %3634 = vmatpush1.bf16.msra.mxu0 0
        %3635 = vmatprep.subr.bf16.mxu0 0
        %3636 = vmatpush1.bf16.msra.mxu0 0
        %3637 = vmatprep.subr.bf16.mxu0 0
        %3638 = vmatpush1.bf16.msra.mxu0 0
        %3639 = vmatprep.subr.bf16.mxu0 %v3006
        %3640 = vmatpush1.bf16.msra.mxu0 %v3005
        %3641 = vmatprep.subr.bf16.mxu0 %v2930
        %3642 = vmatpush1.bf16.msra.mxu0 %v2929
        %3643 = vmatprep.subr.bf16.mxu0 %v2854
        %3644 = vmatpush1.bf16.msra.mxu0 %v2853
        %3645 = vmatprep.subr.bf16.mxu0 %v2778
        %3646 = vmatpush1.bf16.msra.mxu0 %v2777
        %3647 = vmatprep.subr.bf16.mxu0 0
        %3648 = vmatpush2.bf16.msra.mxu0 0
        %3649 = vmatprep.subr.bf16.mxu0 0
        %3650 = vmatpush2.bf16.msra.mxu0 0
        %3651 = vmatprep.subr.bf16.mxu0 0
        %3652 = vmatpush2.bf16.msra.mxu0 0
        %3653 = vmatprep.subr.bf16.mxu0 0
        %3654 = vmatpush2.bf16.msra.mxu0 0
        %3655 = vmatprep.subr.bf16.mxu0 0
        %3656 = vmatpush2.bf16.msra.mxu0 0
        %3657 = vmatprep.subr.bf16.mxu0 0
        %3658 = vmatpush2.bf16.msra.mxu0 0
        %3659 = vmatprep.subr.bf16.mxu0 0
        %3660 = vmatpush2.bf16.msra.mxu0 0
        %3661 = vmatprep.subr.bf16.mxu0 0
        %3662 = vmatpush2.bf16.msra.mxu0 0
        %3663 = vmatprep.mubr.bf16.mxu0 0
        %3664 = vmatmul.mubr.bf16.gmra.mxu0 %v3055
        %v3665 = vpop.f32.mrf.mxu0
        %v3666 = vadd.f32 0.0, %v3665
        %v3667 = vpop.f32.mrf.mxu0
        %v3668 = vadd.f32 0.0, %v3667
        %v3669 = vpop.f32.mrf.mxu0
        %v3670 = vpop.f32.mrf.mxu0
        %3671 = vdwg.mxu0
        %3672 = vmatprep.subr.bf16.mxu0 0
        %3673 = vmatpush1.bf16.msra.mxu0 0
        %3674 = vmatprep.subr.bf16.mxu0 0
        %3675 = vmatpush1.bf16.msra.mxu0 0
        %3676 = vmatprep.subr.bf16.mxu0 0
        %3677 = vmatpush1.bf16.msra.mxu0 0
        %3678 = vmatprep.subr.bf16.mxu0 0
        %3679 = vmatpush1.bf16.msra.mxu0 0
        %3680 = vmatprep.subr.bf16.mxu0 %v3008
        %3681 = vmatpush1.bf16.msra.mxu0 %v3007
        %3682 = vmatprep.subr.bf16.mxu0 %v2932
        %3683 = vmatpush1.bf16.msra.mxu0 %v2931
        %3684 = vmatprep.subr.bf16.mxu0 %v2856
        %3685 = vmatpush1.bf16.msra.mxu0 %v2855
        %3686 = vmatprep.subr.bf16.mxu0 %v2780
        %3687 = vmatpush1.bf16.msra.mxu0 %v2779
        %3688 = vmatprep.subr.bf16.mxu0 0
        %3689 = vmatpush2.bf16.msra.mxu0 0
        %3690 = vmatprep.subr.bf16.mxu0 0
        %3691 = vmatpush2.bf16.msra.mxu0 0
        %3692 = vmatprep.subr.bf16.mxu0 0
        %3693 = vmatpush2.bf16.msra.mxu0 0
        %3694 = vmatprep.subr.bf16.mxu0 0
        %3695 = vmatpush2.bf16.msra.mxu0 0
        %3696 = vmatprep.subr.bf16.mxu0 0
        %3697 = vmatpush2.bf16.msra.mxu0 0
        %3698 = vmatprep.subr.bf16.mxu0 0
        %3699 = vmatpush2.bf16.msra.mxu0 0
        %3700 = vmatprep.subr.bf16.mxu0 0
        %3701 = vmatpush2.bf16.msra.mxu0 0
        %3702 = vmatprep.subr.bf16.mxu0 0
        %3703 = vmatpush2.bf16.msra.mxu0 0
        %3704 = vmatprep.mubr.bf16.mxu0 0
        %3705 = vmatmul.mubr.bf16.gmra.mxu0 %v3055
        %v3706 = vpop.f32.mrf.mxu0
        %v3707 = vadd.f32 0.0, %v3706
        %v3708 = vpop.f32.mrf.mxu0
        %v3709 = vadd.f32 0.0, %v3708
        %v3710 = vpop.f32.mrf.mxu0
        %v3711 = vpop.f32.mrf.mxu0
        %3712 = vdwg.mxu0
        %3713 = vmatprep.subr.bf16.mxu0 0
        %3714 = vmatpush1.bf16.msra.mxu0 0
        %3715 = vmatprep.subr.bf16.mxu0 0
        %3716 = vmatpush1.bf16.msra.mxu0 0
        %3717 = vmatprep.subr.bf16.mxu0 0
        %3718 = vmatpush1.bf16.msra.mxu0 0
        %3719 = vmatprep.subr.bf16.mxu0 0
        %3720 = vmatpush1.bf16.msra.mxu0 0
        %3721 = vmatprep.subr.bf16.mxu0 %v3010
        %3722 = vmatpush1.bf16.msra.mxu0 %v3009
        %3723 = vmatprep.subr.bf16.mxu0 %v2934
        %3724 = vmatpush1.bf16.msra.mxu0 %v2933
        %3725 = vmatprep.subr.bf16.mxu0 %v2858
        %3726 = vmatpush1.bf16.msra.mxu0 %v2857
        %3727 = vmatprep.subr.bf16.mxu0 %v2782
        %3728 = vmatpush1.bf16.msra.mxu0 %v2781
        %3729 = vmatprep.subr.bf16.mxu0 0
        %3730 = vmatpush2.bf16.msra.mxu0 0
        %3731 = vmatprep.subr.bf16.mxu0 0
        %3732 = vmatpush2.bf16.msra.mxu0 0
        %3733 = vmatprep.subr.bf16.mxu0 0
        %3734 = vmatpush2.bf16.msra.mxu0 0
        %3735 = vmatprep.subr.bf16.mxu0 0
        %3736 = vmatpush2.bf16.msra.mxu0 0
        %3737 = vmatprep.subr.bf16.mxu0 0
        %3738 = vmatpush2.bf16.msra.mxu0 0
        %3739 = vmatprep.subr.bf16.mxu0 0
        %3740 = vmatpush2.bf16.msra.mxu0 0
        %3741 = vmatprep.subr.bf16.mxu0 0
        %3742 = vmatpush2.bf16.msra.mxu0 0
        %3743 = vmatprep.subr.bf16.mxu0 0
        %3744 = vmatpush2.bf16.msra.mxu0 0
        %3745 = vmatprep.mubr.bf16.mxu0 0
        %3746 = vmatmul.mubr.bf16.gmra.mxu0 %v3055
        %v3747 = vpop.f32.mrf.mxu0
        %v3748 = vadd.f32 0.0, %v3747
        %v3749 = vpop.f32.mrf.mxu0
        %v3750 = vadd.f32 0.0, %v3749
        %v3751 = vpop.f32.mrf.mxu0
        %v3752 = vpop.f32.mrf.mxu0
        %3753 = vdwg.mxu0
        %3754 = vmatprep.subr.bf16.mxu0 0
        %3755 = vmatpush1.bf16.msra.mxu0 0
        %3756 = vmatprep.subr.bf16.mxu0 0
        %3757 = vmatpush1.bf16.msra.mxu0 0
        %3758 = vmatprep.subr.bf16.mxu0 0
        %3759 = vmatpush1.bf16.msra.mxu0 0
        %3760 = vmatprep.subr.bf16.mxu0 0
        %3761 = vmatpush1.bf16.msra.mxu0 0
        %3762 = vmatprep.subr.bf16.mxu0 %v3012
        %3763 = vmatpush1.bf16.msra.mxu0 %v3011
        %3764 = vmatprep.subr.bf16.mxu0 %v2936
        %3765 = vmatpush1.bf16.msra.mxu0 %v2935
        %3766 = vmatprep.subr.bf16.mxu0 %v2860
        %3767 = vmatpush1.bf16.msra.mxu0 %v2859
        %3768 = vmatprep.subr.bf16.mxu0 %v2784
        %3769 = vmatpush1.bf16.msra.mxu0 %v2783
        %3770 = vmatprep.subr.bf16.mxu0 0
        %3771 = vmatpush2.bf16.msra.mxu0 0
        %3772 = vmatprep.subr.bf16.mxu0 0
        %3773 = vmatpush2.bf16.msra.mxu0 0
        %3774 = vmatprep.subr.bf16.mxu0 0
        %3775 = vmatpush2.bf16.msra.mxu0 0
        %3776 = vmatprep.subr.bf16.mxu0 0
        %3777 = vmatpush2.bf16.msra.mxu0 0
        %3778 = vmatprep.subr.bf16.mxu0 0
        %3779 = vmatpush2.bf16.msra.mxu0 0
        %3780 = vmatprep.subr.bf16.mxu0 0
        %3781 = vmatpush2.bf16.msra.mxu0 0
        %3782 = vmatprep.subr.bf16.mxu0 0
        %3783 = vmatpush2.bf16.msra.mxu0 0
        %3784 = vmatprep.subr.bf16.mxu0 0
        %3785 = vmatpush2.bf16.msra.mxu0 0
        %3786 = vmatprep.mubr.bf16.mxu0 0
        %3787 = vmatmul.mubr.bf16.gmra.mxu0 %v3055
        %v3788 = vpop.f32.mrf.mxu0
        %v3789 = vadd.f32 0.0, %v3788
        %v3790 = vpop.f32.mrf.mxu0
        %v3791 = vadd.f32 0.0, %v3790
        %v3792 = vpop.f32.mrf.mxu0
        %v3793 = vpop.f32.mrf.mxu0
        %3794 = vdwg.mxu0
        %3795 = vmatprep.subr.bf16.mxu0 0
        %3796 = vmatpush1.bf16.msra.mxu0 0
        %3797 = vmatprep.subr.bf16.mxu0 0
        %3798 = vmatpush1.bf16.msra.mxu0 0
        %3799 = vmatprep.subr.bf16.mxu0 0
        %3800 = vmatpush1.bf16.msra.mxu0 0
        %3801 = vmatprep.subr.bf16.mxu0 0
        %3802 = vmatpush1.bf16.msra.mxu0 0
        %3803 = vmatprep.subr.bf16.mxu0 %v3014
        %3804 = vmatpush1.bf16.msra.mxu0 %v3013
        %3805 = vmatprep.subr.bf16.mxu0 %v2938
        %3806 = vmatpush1.bf16.msra.mxu0 %v2937
        %3807 = vmatprep.subr.bf16.mxu0 %v2862
        %3808 = vmatpush1.bf16.msra.mxu0 %v2861
        %3809 = vmatprep.subr.bf16.mxu0 %v2786
        %3810 = vmatpush1.bf16.msra.mxu0 %v2785
        %3811 = vmatprep.subr.bf16.mxu0 0
        %3812 = vmatpush2.bf16.msra.mxu0 0
        %3813 = vmatprep.subr.bf16.mxu0 0
        %3814 = vmatpush2.bf16.msra.mxu0 0
        %3815 = vmatprep.subr.bf16.mxu0 0
        %3816 = vmatpush2.bf16.msra.mxu0 0
        %3817 = vmatprep.subr.bf16.mxu0 0
        %3818 = vmatpush2.bf16.msra.mxu0 0
        %3819 = vmatprep.subr.bf16.mxu0 0
        %3820 = vmatpush2.bf16.msra.mxu0 0
        %3821 = vmatprep.subr.bf16.mxu0 0
        %3822 = vmatpush2.bf16.msra.mxu0 0
        %3823 = vmatprep.subr.bf16.mxu0 0
        %3824 = vmatpush2.bf16.msra.mxu0 0
        %3825 = vmatprep.subr.bf16.mxu0 0
        %3826 = vmatpush2.bf16.msra.mxu0 0
        %3827 = vmatprep.mubr.bf16.mxu0 0
        %3828 = vmatmul.mubr.bf16.gmra.mxu0 %v3055
        %v3829 = vpop.f32.mrf.mxu0
        %v3830 = vadd.f32 0.0, %v3829
        %v3831 = vpop.f32.mrf.mxu0
        %v3832 = vadd.f32 0.0, %v3831
        %v3833 = vpop.f32.mrf.mxu0
        %v3834 = vpop.f32.mrf.mxu0
        %3835 = vdwg.mxu0
        %3836 = vmatprep.subr.bf16.mxu0 0
        %3837 = vmatpush1.bf16.msra.mxu0 0
        %3838 = vmatprep.subr.bf16.mxu0 0
        %3839 = vmatpush1.bf16.msra.mxu0 0
        %3840 = vmatprep.subr.bf16.mxu0 0
        %3841 = vmatpush1.bf16.msra.mxu0 0
        %3842 = vmatprep.subr.bf16.mxu0 0
        %3843 = vmatpush1.bf16.msra.mxu0 0
        %3844 = vmatprep.subr.bf16.mxu0 %v3016
        %3845 = vmatpush1.bf16.msra.mxu0 %v3015
        %3846 = vmatprep.subr.bf16.mxu0 %v2940
        %3847 = vmatpush1.bf16.msra.mxu0 %v2939
        %3848 = vmatprep.subr.bf16.mxu0 %v2864
        %3849 = vmatpush1.bf16.msra.mxu0 %v2863
        %3850 = vmatprep.subr.bf16.mxu0 %v2788
        %3851 = vmatpush1.bf16.msra.mxu0 %v2787
        %3852 = vmatprep.subr.bf16.mxu0 0
        %3853 = vmatpush2.bf16.msra.mxu0 0
        %3854 = vmatprep.subr.bf16.mxu0 0
        %3855 = vmatpush2.bf16.msra.mxu0 0
        %3856 = vmatprep.subr.bf16.mxu0 0
        %3857 = vmatpush2.bf16.msra.mxu0 0
        %3858 = vmatprep.subr.bf16.mxu0 0
        %3859 = vmatpush2.bf16.msra.mxu0 0
        %3860 = vmatprep.subr.bf16.mxu0 0
        %3861 = vmatpush2.bf16.msra.mxu0 0
        %3862 = vmatprep.subr.bf16.mxu0 0
        %3863 = vmatpush2.bf16.msra.mxu0 0
        %3864 = vmatprep.subr.bf16.mxu0 0
        %3865 = vmatpush2.bf16.msra.mxu0 0
        %3866 = vmatprep.subr.bf16.mxu0 0
        %3867 = vmatpush2.bf16.msra.mxu0 0
        %3868 = vmatprep.mubr.bf16.mxu0 0
        %3869 = vmatmul.mubr.bf16.gmra.mxu0 %v3055
        %v3870 = vpop.f32.mrf.mxu0
        %v3871 = vadd.f32 0.0, %v3870
        %v3872 = vpop.f32.mrf.mxu0
        %v3873 = vadd.f32 0.0, %v3872
        %v3874 = vpop.f32.mrf.mxu0
        %v3875 = vpop.f32.mrf.mxu0
        %3876 = vdwg.mxu0
        %3877 = vmatprep.subr.bf16.mxu0 0
        %3878 = vmatpush1.bf16.msra.mxu0 0
        %3879 = vmatprep.subr.bf16.mxu0 0
        %3880 = vmatpush1.bf16.msra.mxu0 0
        %3881 = vmatprep.subr.bf16.mxu0 0
        %3882 = vmatpush1.bf16.msra.mxu0 0
        %3883 = vmatprep.subr.bf16.mxu0 0
        %3884 = vmatpush1.bf16.msra.mxu0 0
        %3885 = vmatprep.subr.bf16.mxu0 %v3018
        %3886 = vmatpush1.bf16.msra.mxu0 %v3017
        %3887 = vmatprep.subr.bf16.mxu0 %v2942
        %3888 = vmatpush1.bf16.msra.mxu0 %v2941
        %3889 = vmatprep.subr.bf16.mxu0 %v2866
        %3890 = vmatpush1.bf16.msra.mxu0 %v2865
        %3891 = vmatprep.subr.bf16.mxu0 %v2790
        %3892 = vmatpush1.bf16.msra.mxu0 %v2789
        %3893 = vmatprep.subr.bf16.mxu0 0
        %3894 = vmatpush2.bf16.msra.mxu0 0
        %3895 = vmatprep.subr.bf16.mxu0 0
        %3896 = vmatpush2.bf16.msra.mxu0 0
        %3897 = vmatprep.subr.bf16.mxu0 0
        %3898 = vmatpush2.bf16.msra.mxu0 0
        %3899 = vmatprep.subr.bf16.mxu0 0
        %3900 = vmatpush2.bf16.msra.mxu0 0
        %3901 = vmatprep.subr.bf16.mxu0 0
        %3902 = vmatpush2.bf16.msra.mxu0 0
        %3903 = vmatprep.subr.bf16.mxu0 0
        %3904 = vmatpush2.bf16.msra.mxu0 0
        %3905 = vmatprep.subr.bf16.mxu0 0
        %3906 = vmatpush2.bf16.msra.mxu0 0
        %3907 = vmatprep.subr.bf16.mxu0 0
        %3908 = vmatpush2.bf16.msra.mxu0 0
        %3909 = vmatprep.mubr.bf16.mxu0 0
        %3910 = vmatmul.mubr.bf16.gmra.mxu0 %v3055
        %v3911 = vpop.f32.mrf.mxu0
        %v3912 = vadd.f32 0.0, %v3911
        %v3913 = vpop.f32.mrf.mxu0
        %v3914 = vadd.f32 0.0, %v3913
        %v3915 = vpop.f32.mrf.mxu0
        %v3916 = vpop.f32.mrf.mxu0
        %3917 = vdwg.mxu0
        %3918 = vmatprep.subr.bf16.mxu0 0
        %3919 = vmatpush1.bf16.msra.mxu0 0
        %3920 = vmatprep.subr.bf16.mxu0 0
        %3921 = vmatpush1.bf16.msra.mxu0 0
        %3922 = vmatprep.subr.bf16.mxu0 0
        %3923 = vmatpush1.bf16.msra.mxu0 0
        %3924 = vmatprep.subr.bf16.mxu0 0
        %3925 = vmatpush1.bf16.msra.mxu0 0
        %3926 = vmatprep.subr.bf16.mxu0 %v3020
        %3927 = vmatpush1.bf16.msra.mxu0 %v3019
        %3928 = vmatprep.subr.bf16.mxu0 %v2944
        %3929 = vmatpush1.bf16.msra.mxu0 %v2943
        %3930 = vmatprep.subr.bf16.mxu0 %v2868
        %3931 = vmatpush1.bf16.msra.mxu0 %v2867
        %3932 = vmatprep.subr.bf16.mxu0 %v2792
        %3933 = vmatpush1.bf16.msra.mxu0 %v2791
        %3934 = vmatprep.subr.bf16.mxu0 0
        %3935 = vmatpush2.bf16.msra.mxu0 0
        %3936 = vmatprep.subr.bf16.mxu0 0
        %3937 = vmatpush2.bf16.msra.mxu0 0
        %3938 = vmatprep.subr.bf16.mxu0 0
        %3939 = vmatpush2.bf16.msra.mxu0 0
        %3940 = vmatprep.subr.bf16.mxu0 0
        %3941 = vmatpush2.bf16.msra.mxu0 0
        %3942 = vmatprep.subr.bf16.mxu0 0
        %3943 = vmatpush2.bf16.msra.mxu0 0
        %3944 = vmatprep.subr.bf16.mxu0 0
        %3945 = vmatpush2.bf16.msra.mxu0 0
        %3946 = vmatprep.subr.bf16.mxu0 0
        %3947 = vmatpush2.bf16.msra.mxu0 0
        %3948 = vmatprep.subr.bf16.mxu0 0
        %3949 = vmatpush2.bf16.msra.mxu0 0
        %3950 = vmatprep.mubr.bf16.mxu0 0
        %3951 = vmatmul.mubr.bf16.gmra.mxu0 %v3055
        %v3952 = vpop.f32.mrf.mxu0
        %v3953 = vadd.f32 0.0, %v3952
        %v3954 = vpop.f32.mrf.mxu0
        %v3955 = vadd.f32 0.0, %v3954
        %v3956 = vpop.f32.mrf.mxu0
        %v3957 = vpop.f32.mrf.mxu0
        %3958 = vdwg.mxu0
        %3959 = vmatprep.subr.bf16.mxu0 0
        %3960 = vmatpush1.bf16.msra.mxu0 0
        %3961 = vmatprep.subr.bf16.mxu0 0
        %3962 = vmatpush1.bf16.msra.mxu0 0
        %3963 = vmatprep.subr.bf16.mxu0 0
        %3964 = vmatpush1.bf16.msra.mxu0 0
        %3965 = vmatprep.subr.bf16.mxu0 0
        %3966 = vmatpush1.bf16.msra.mxu0 0
        %3967 = vmatprep.subr.bf16.mxu0 %v3022
        %3968 = vmatpush1.bf16.msra.mxu0 %v3021
        %3969 = vmatprep.subr.bf16.mxu0 %v2946
        %3970 = vmatpush1.bf16.msra.mxu0 %v2945
        %3971 = vmatprep.subr.bf16.mxu0 %v2870
        %3972 = vmatpush1.bf16.msra.mxu0 %v2869
        %3973 = vmatprep.subr.bf16.mxu0 %v2794
        %3974 = vmatpush1.bf16.msra.mxu0 %v2793
        %3975 = vmatprep.subr.bf16.mxu0 0
        %3976 = vmatpush2.bf16.msra.mxu0 0
        %3977 = vmatprep.subr.bf16.mxu0 0
        %3978 = vmatpush2.bf16.msra.mxu0 0
        %3979 = vmatprep.subr.bf16.mxu0 0
        %3980 = vmatpush2.bf16.msra.mxu0 0
        %3981 = vmatprep.subr.bf16.mxu0 0
        %3982 = vmatpush2.bf16.msra.mxu0 0
        %3983 = vmatprep.subr.bf16.mxu0 0
        %3984 = vmatpush2.bf16.msra.mxu0 0
        %3985 = vmatprep.subr.bf16.mxu0 0
        %3986 = vmatpush2.bf16.msra.mxu0 0
        %3987 = vmatprep.subr.bf16.mxu0 0
        %3988 = vmatpush2.bf16.msra.mxu0 0
        %3989 = vmatprep.subr.bf16.mxu0 0
        %3990 = vmatpush2.bf16.msra.mxu0 0
        %3991 = vmatprep.mubr.bf16.mxu0 0
        %3992 = vmatmul.mubr.bf16.gmra.mxu0 %v3055
        %v3993 = vpop.f32.mrf.mxu0
        %v3994 = vadd.f32 0.0, %v3993
        %v3995 = vpop.f32.mrf.mxu0
        %v3996 = vadd.f32 0.0, %v3995
        %v3997 = vpop.f32.mrf.mxu0
        %v3998 = vpop.f32.mrf.mxu0
        %3999 = vdwg.mxu0
        %4000 = vmatprep.subr.bf16.mxu0 0
        %4001 = vmatpush1.bf16.msra.mxu0 0
        %4002 = vmatprep.subr.bf16.mxu0 0
        %4003 = vmatpush1.bf16.msra.mxu0 0
        %4004 = vmatprep.subr.bf16.mxu0 0
        %4005 = vmatpush1.bf16.msra.mxu0 0
        %4006 = vmatprep.subr.bf16.mxu0 0
        %4007 = vmatpush1.bf16.msra.mxu0 0
        %4008 = vmatprep.subr.bf16.mxu0 %v3024
        %4009 = vmatpush1.bf16.msra.mxu0 %v3023
        %4010 = vmatprep.subr.bf16.mxu0 %v2948
        %4011 = vmatpush1.bf16.msra.mxu0 %v2947
        %4012 = vmatprep.subr.bf16.mxu0 %v2872
        %4013 = vmatpush1.bf16.msra.mxu0 %v2871
        %4014 = vmatprep.subr.bf16.mxu0 %v2796
        %4015 = vmatpush1.bf16.msra.mxu0 %v2795
        %4016 = vmatprep.subr.bf16.mxu0 0
        %4017 = vmatpush2.bf16.msra.mxu0 0
        %4018 = vmatprep.subr.bf16.mxu0 0
        %4019 = vmatpush2.bf16.msra.mxu0 0
        %4020 = vmatprep.subr.bf16.mxu0 0
        %4021 = vmatpush2.bf16.msra.mxu0 0
        %4022 = vmatprep.subr.bf16.mxu0 0
        %4023 = vmatpush2.bf16.msra.mxu0 0
        %4024 = vmatprep.subr.bf16.mxu0 0
        %4025 = vmatpush2.bf16.msra.mxu0 0
        %4026 = vmatprep.subr.bf16.mxu0 0
        %4027 = vmatpush2.bf16.msra.mxu0 0
        %4028 = vmatprep.subr.bf16.mxu0 0
        %4029 = vmatpush2.bf16.msra.mxu0 0
        %4030 = vmatprep.subr.bf16.mxu0 0
        %4031 = vmatpush2.bf16.msra.mxu0 0
        %4032 = vmatprep.mubr.bf16.mxu0 0
        %4033 = vmatmul.mubr.bf16.gmra.mxu0 %v3055
        %v4034 = vpop.f32.mrf.mxu0
        %v4035 = vadd.f32 0.0, %v4034
        %v4036 = vpop.f32.mrf.mxu0
        %v4037 = vadd.f32 0.0, %v4036
        %v4038 = vpop.f32.mrf.mxu0
        %v4039 = vpop.f32.mrf.mxu0
        %4040 = vdwg.mxu0
        %4041 = vmatprep.subr.bf16.mxu0 0
        %4042 = vmatpush1.bf16.msra.mxu0 0
        %4043 = vmatprep.subr.bf16.mxu0 0
        %4044 = vmatpush1.bf16.msra.mxu0 0
        %4045 = vmatprep.subr.bf16.mxu0 0
        %4046 = vmatpush1.bf16.msra.mxu0 0
        %4047 = vmatprep.subr.bf16.mxu0 0
        %4048 = vmatpush1.bf16.msra.mxu0 0
        %4049 = vmatprep.subr.bf16.mxu0 %v3026
        %4050 = vmatpush1.bf16.msra.mxu0 %v3025
        %4051 = vmatprep.subr.bf16.mxu0 %v2950
        %4052 = vmatpush1.bf16.msra.mxu0 %v2949
        %4053 = vmatprep.subr.bf16.mxu0 %v2874
        %4054 = vmatpush1.bf16.msra.mxu0 %v2873
        %4055 = vmatprep.subr.bf16.mxu0 %v2798
        %4056 = vmatpush1.bf16.msra.mxu0 %v2797
        %4057 = vmatprep.subr.bf16.mxu0 0
        %4058 = vmatpush2.bf16.msra.mxu0 0
        %4059 = vmatprep.subr.bf16.mxu0 0
        %4060 = vmatpush2.bf16.msra.mxu0 0
        %4061 = vmatprep.subr.bf16.mxu0 0
        %4062 = vmatpush2.bf16.msra.mxu0 0
        %4063 = vmatprep.subr.bf16.mxu0 0
        %4064 = vmatpush2.bf16.msra.mxu0 0
        %4065 = vmatprep.subr.bf16.mxu0 0
        %4066 = vmatpush2.bf16.msra.mxu0 0
        %4067 = vmatprep.subr.bf16.mxu0 0
        %4068 = vmatpush2.bf16.msra.mxu0 0
        %4069 = vmatprep.subr.bf16.mxu0 0
        %4070 = vmatpush2.bf16.msra.mxu0 0
        %4071 = vmatprep.subr.bf16.mxu0 0
        %4072 = vmatpush2.bf16.msra.mxu0 0
        %4073 = vmatprep.mubr.bf16.mxu0 0
        %4074 = vmatmul.mubr.bf16.gmra.mxu0 %v3055
        %v4075 = vpop.f32.mrf.mxu0
        %v4076 = vadd.f32 0.0, %v4075
        %v4077 = vpop.f32.mrf.mxu0
        %v4078 = vadd.f32 0.0, %v4077
        %v4079 = vpop.f32.mrf.mxu0
        %v4080 = vpop.f32.mrf.mxu0
        %4081 = vdwg.mxu0
        %4082 = vmatprep.subr.bf16.mxu0 0
        %4083 = vmatpush1.bf16.msra.mxu0 0
        %4084 = vmatprep.subr.bf16.mxu0 0
        %4085 = vmatpush1.bf16.msra.mxu0 0
        %4086 = vmatprep.subr.bf16.mxu0 0
        %4087 = vmatpush1.bf16.msra.mxu0 0
        %4088 = vmatprep.subr.bf16.mxu0 0
        %4089 = vmatpush1.bf16.msra.mxu0 0
        %4090 = vmatprep.subr.bf16.mxu0 %v3028
        %4091 = vmatpush1.bf16.msra.mxu0 %v3027
        %4092 = vmatprep.subr.bf16.mxu0 %v2952
        %4093 = vmatpush1.bf16.msra.mxu0 %v2951
        %4094 = vmatprep.subr.bf16.mxu0 %v2876
        %4095 = vmatpush1.bf16.msra.mxu0 %v2875
        %4096 = vmatprep.subr.bf16.mxu0 %v2800
        %4097 = vmatpush1.bf16.msra.mxu0 %v2799
        %4098 = vmatprep.subr.bf16.mxu0 0
        %4099 = vmatpush2.bf16.msra.mxu0 0
        %4100 = vmatprep.subr.bf16.mxu0 0
        %4101 = vmatpush2.bf16.msra.mxu0 0
        %4102 = vmatprep.subr.bf16.mxu0 0
        %4103 = vmatpush2.bf16.msra.mxu0 0
        %4104 = vmatprep.subr.bf16.mxu0 0
        %4105 = vmatpush2.bf16.msra.mxu0 0
        %4106 = vmatprep.subr.bf16.mxu0 0
        %4107 = vmatpush2.bf16.msra.mxu0 0
        %4108 = vmatprep.subr.bf16.mxu0 0
        %4109 = vmatpush2.bf16.msra.mxu0 0
        %4110 = vmatprep.subr.bf16.mxu0 0
        %4111 = vmatpush2.bf16.msra.mxu0 0
        %4112 = vmatprep.subr.bf16.mxu0 0
        %4113 = vmatpush2.bf16.msra.mxu0 0
        %4114 = vmatprep.mubr.bf16.mxu0 0
        %4115 = vmatmul.mubr.bf16.gmra.mxu0 %v3055
        %v4116 = vpop.f32.mrf.mxu0
        %v4117 = vadd.f32 0.0, %v4116
        %v4118 = vpop.f32.mrf.mxu0
        %v4119 = vadd.f32 0.0, %v4118
        %v4120 = vpop.f32.mrf.mxu0
        %v4121 = vpop.f32.mrf.mxu0
        %4122 = vdwg.mxu0
        %4123 = vmatprep.subr.bf16.mxu0 0
        %4124 = vmatpush1.bf16.msra.mxu0 0
        %4125 = vmatprep.subr.bf16.mxu0 0
        %4126 = vmatpush1.bf16.msra.mxu0 0
        %4127 = vmatprep.subr.bf16.mxu0 0
        %4128 = vmatpush1.bf16.msra.mxu0 0
        %4129 = vmatprep.subr.bf16.mxu0 0
        %4130 = vmatpush1.bf16.msra.mxu0 0
        %4131 = vmatprep.subr.bf16.mxu0 %v3030
        %4132 = vmatpush1.bf16.msra.mxu0 %v3029
        %4133 = vmatprep.subr.bf16.mxu0 %v2954
        %4134 = vmatpush1.bf16.msra.mxu0 %v2953
        %4135 = vmatprep.subr.bf16.mxu0 %v2878
        %4136 = vmatpush1.bf16.msra.mxu0 %v2877
        %4137 = vmatprep.subr.bf16.mxu0 %v2802
        %4138 = vmatpush1.bf16.msra.mxu0 %v2801
        %4139 = vmatprep.subr.bf16.mxu0 0
        %4140 = vmatpush2.bf16.msra.mxu0 0
        %4141 = vmatprep.subr.bf16.mxu0 0
        %4142 = vmatpush2.bf16.msra.mxu0 0
        %4143 = vmatprep.subr.bf16.mxu0 0
        %4144 = vmatpush2.bf16.msra.mxu0 0
        %4145 = vmatprep.subr.bf16.mxu0 0
        %4146 = vmatpush2.bf16.msra.mxu0 0
        %4147 = vmatprep.subr.bf16.mxu0 0
        %4148 = vmatpush2.bf16.msra.mxu0 0
        %4149 = vmatprep.subr.bf16.mxu0 0
        %4150 = vmatpush2.bf16.msra.mxu0 0
        %4151 = vmatprep.subr.bf16.mxu0 0
        %4152 = vmatpush2.bf16.msra.mxu0 0
        %4153 = vmatprep.subr.bf16.mxu0 0
        %4154 = vmatpush2.bf16.msra.mxu0 0
        %4155 = vmatprep.mubr.bf16.mxu0 0
        %4156 = vmatmul.mubr.bf16.gmra.mxu0 %v3055
        %v4157 = vpop.f32.mrf.mxu0
        %v4158 = vadd.f32 0.0, %v4157
        %v4159 = vpop.f32.mrf.mxu0
        %v4160 = vadd.f32 0.0, %v4159
        %v4161 = vpop.f32.mrf.mxu0
        %v4162 = vpop.f32.mrf.mxu0
        %4163 = vdwg.mxu0
        %4164 = vmatprep.subr.bf16.mxu0 0
        %4165 = vmatpush1.bf16.msra.mxu0 0
        %4166 = vmatprep.subr.bf16.mxu0 0
        %4167 = vmatpush1.bf16.msra.mxu0 0
        %4168 = vmatprep.subr.bf16.mxu0 0
        %4169 = vmatpush1.bf16.msra.mxu0 0
        %4170 = vmatprep.subr.bf16.mxu0 0
        %4171 = vmatpush1.bf16.msra.mxu0 0
        %4172 = vmatprep.subr.bf16.mxu0 %v3032
        %4173 = vmatpush1.bf16.msra.mxu0 %v3031
        %4174 = vmatprep.subr.bf16.mxu0 %v2956
        %4175 = vmatpush1.bf16.msra.mxu0 %v2955
        %4176 = vmatprep.subr.bf16.mxu0 %v2880
        %4177 = vmatpush1.bf16.msra.mxu0 %v2879
        %4178 = vmatprep.subr.bf16.mxu0 %v2804
        %4179 = vmatpush1.bf16.msra.mxu0 %v2803
        %4180 = vmatprep.subr.bf16.mxu0 0
        %4181 = vmatpush2.bf16.msra.mxu0 0
        %4182 = vmatprep.subr.bf16.mxu0 0
        %4183 = vmatpush2.bf16.msra.mxu0 0
        %4184 = vmatprep.subr.bf16.mxu0 0
        %4185 = vmatpush2.bf16.msra.mxu0 0
        %4186 = vmatprep.subr.bf16.mxu0 0
        %4187 = vmatpush2.bf16.msra.mxu0 0
        %4188 = vmatprep.subr.bf16.mxu0 0
        %4189 = vmatpush2.bf16.msra.mxu0 0
        %4190 = vmatprep.subr.bf16.mxu0 0
        %4191 = vmatpush2.bf16.msra.mxu0 0
        %4192 = vmatprep.subr.bf16.mxu0 0
        %4193 = vmatpush2.bf16.msra.mxu0 0
        %4194 = vmatprep.subr.bf16.mxu0 0
        %4195 = vmatpush2.bf16.msra.mxu0 0
        %4196 = vmatprep.mubr.bf16.mxu0 0
        %4197 = vmatmul.mubr.bf16.gmra.mxu0 %v3055
        %v4198 = vpop.f32.mrf.mxu0
        %v4199 = vadd.f32 0.0, %v4198
        %v4200 = vpop.f32.mrf.mxu0
        %v4201 = vadd.f32 0.0, %v4200
        %v4202 = vpop.f32.mrf.mxu0
        %v4203 = vpop.f32.mrf.mxu0
        %4204 = vdwg.mxu0
        %4205 = vmatprep.subr.bf16.mxu0 0
        %4206 = vmatpush1.bf16.msra.mxu0 0
        %4207 = vmatprep.subr.bf16.mxu0 0
        %4208 = vmatpush1.bf16.msra.mxu0 0
        %4209 = vmatprep.subr.bf16.mxu0 0
        %4210 = vmatpush1.bf16.msra.mxu0 0
        %4211 = vmatprep.subr.bf16.mxu0 0
        %4212 = vmatpush1.bf16.msra.mxu0 0
        %4213 = vmatprep.subr.bf16.mxu0 %v3034
        %4214 = vmatpush1.bf16.msra.mxu0 %v3033
        %4215 = vmatprep.subr.bf16.mxu0 %v2958
        %4216 = vmatpush1.bf16.msra.mxu0 %v2957
        %4217 = vmatprep.subr.bf16.mxu0 %v2882
        %4218 = vmatpush1.bf16.msra.mxu0 %v2881
        %4219 = vmatprep.subr.bf16.mxu0 %v2806
        %4220 = vmatpush1.bf16.msra.mxu0 %v2805
        %4221 = vmatprep.subr.bf16.mxu0 0
        %4222 = vmatpush2.bf16.msra.mxu0 0
        %4223 = vmatprep.subr.bf16.mxu0 0
        %4224 = vmatpush2.bf16.msra.mxu0 0
        %4225 = vmatprep.subr.bf16.mxu0 0
        %4226 = vmatpush2.bf16.msra.mxu0 0
        %4227 = vmatprep.subr.bf16.mxu0 0
        %4228 = vmatpush2.bf16.msra.mxu0 0
        %4229 = vmatprep.subr.bf16.mxu0 0
        %4230 = vmatpush2.bf16.msra.mxu0 0
        %4231 = vmatprep.subr.bf16.mxu0 0
        %4232 = vmatpush2.bf16.msra.mxu0 0
        %4233 = vmatprep.subr.bf16.mxu0 0
        %4234 = vmatpush2.bf16.msra.mxu0 0
        %4235 = vmatprep.subr.bf16.mxu0 0
        %4236 = vmatpush2.bf16.msra.mxu0 0
        %4237 = vmatprep.mubr.bf16.mxu0 0
        %4238 = vmatmul.mubr.bf16.gmra.mxu0 %v3055
        %v4239 = vpop.f32.mrf.mxu0
        %v4240 = vadd.f32 0.0, %v4239
        %v4241 = vpop.f32.mrf.mxu0
        %v4242 = vadd.f32 0.0, %v4241
        %v4243 = vpop.f32.mrf.mxu0
        %v4244 = vpop.f32.mrf.mxu0
        %4245 = vdwg.mxu0
        %4246 = vmatprep.subr.bf16.mxu0 0
        %4247 = vmatpush1.bf16.msra.mxu0 0
        %4248 = vmatprep.subr.bf16.mxu0 0
        %4249 = vmatpush1.bf16.msra.mxu0 0
        %4250 = vmatprep.subr.bf16.mxu0 0
        %4251 = vmatpush1.bf16.msra.mxu0 0
        %4252 = vmatprep.subr.bf16.mxu0 0
        %4253 = vmatpush1.bf16.msra.mxu0 0
        %4254 = vmatprep.subr.bf16.mxu0 %v3036
        %4255 = vmatpush1.bf16.msra.mxu0 %v3035
        %4256 = vmatprep.subr.bf16.mxu0 %v2960
        %4257 = vmatpush1.bf16.msra.mxu0 %v2959
        %4258 = vmatprep.subr.bf16.mxu0 %v2884
        %4259 = vmatpush1.bf16.msra.mxu0 %v2883
        %4260 = vmatprep.subr.bf16.mxu0 %v2808
        %4261 = vmatpush1.bf16.msra.mxu0 %v2807
        %4262 = vmatprep.subr.bf16.mxu0 0
        %4263 = vmatpush2.bf16.msra.mxu0 0
        %4264 = vmatprep.subr.bf16.mxu0 0
        %4265 = vmatpush2.bf16.msra.mxu0 0
        %4266 = vmatprep.subr.bf16.mxu0 0
        %4267 = vmatpush2.bf16.msra.mxu0 0
        %4268 = vmatprep.subr.bf16.mxu0 0
        %4269 = vmatpush2.bf16.msra.mxu0 0
        %4270 = vmatprep.subr.bf16.mxu0 0
        %4271 = vmatpush2.bf16.msra.mxu0 0
        %4272 = vmatprep.subr.bf16.mxu0 0
        %4273 = vmatpush2.bf16.msra.mxu0 0
        %4274 = vmatprep.subr.bf16.mxu0 0
        %4275 = vmatpush2.bf16.msra.mxu0 0
        %4276 = vmatprep.subr.bf16.mxu0 0
        %4277 = vmatpush2.bf16.msra.mxu0 0
        %4278 = vmatprep.mubr.bf16.mxu0 0
        %4279 = vmatmul.mubr.bf16.gmra.mxu0 %v3055
        %v4280 = vpop.f32.mrf.mxu0
        %v4281 = vadd.f32 0.0, %v4280
        %v4282 = vpop.f32.mrf.mxu0
        %v4283 = vadd.f32 0.0, %v4282
        %v4284 = vpop.f32.mrf.mxu0
        %v4285 = vpop.f32.mrf.mxu0
        %4286 = vdwg.mxu0
        %4287 = vmatprep.subr.bf16.mxu0 0
        %4288 = vmatpush1.bf16.msra.mxu0 0
        %4289 = vmatprep.subr.bf16.mxu0 0
        %4290 = vmatpush1.bf16.msra.mxu0 0
        %4291 = vmatprep.subr.bf16.mxu0 0
        %4292 = vmatpush1.bf16.msra.mxu0 0
        %4293 = vmatprep.subr.bf16.mxu0 0
        %4294 = vmatpush1.bf16.msra.mxu0 0
        %4295 = vmatprep.subr.bf16.mxu0 %v3038
        %4296 = vmatpush1.bf16.msra.mxu0 %v3037
        %4297 = vmatprep.subr.bf16.mxu0 %v2962
        %4298 = vmatpush1.bf16.msra.mxu0 %v2961
        %4299 = vmatprep.subr.bf16.mxu0 %v2886
        %4300 = vmatpush1.bf16.msra.mxu0 %v2885
        %4301 = vmatprep.subr.bf16.mxu0 %v2810
        %4302 = vmatpush1.bf16.msra.mxu0 %v2809
        %4303 = vmatprep.subr.bf16.mxu0 0
        %4304 = vmatpush2.bf16.msra.mxu0 0
        %4305 = vmatprep.subr.bf16.mxu0 0
        %4306 = vmatpush2.bf16.msra.mxu0 0
        %4307 = vmatprep.subr.bf16.mxu0 0
        %4308 = vmatpush2.bf16.msra.mxu0 0
        %4309 = vmatprep.subr.bf16.mxu0 0
        %4310 = vmatpush2.bf16.msra.mxu0 0
        %4311 = vmatprep.subr.bf16.mxu0 0
        %4312 = vmatpush2.bf16.msra.mxu0 0
        %4313 = vmatprep.subr.bf16.mxu0 0
        %4314 = vmatpush2.bf16.msra.mxu0 0
        %4315 = vmatprep.subr.bf16.mxu0 0
        %4316 = vmatpush2.bf16.msra.mxu0 0
        %4317 = vmatprep.subr.bf16.mxu0 0
        %4318 = vmatpush2.bf16.msra.mxu0 0
        %4319 = vmatprep.mubr.bf16.mxu0 0
        %4320 = vmatmul.mubr.bf16.gmra.mxu0 %v3055
        %v4321 = vpop.f32.mrf.mxu0
        %v4322 = vadd.f32 0.0, %v4321
        %v4323 = vpop.f32.mrf.mxu0
        %v4324 = vadd.f32 0.0, %v4323
        %v4325 = vpop.f32.mrf.mxu0
        %v4326 = vpop.f32.mrf.mxu0
        %4327 = vdwg.mxu0
        %4328 = vmatprep.subr.bf16.mxu0 0
        %4329 = vmatpush1.bf16.msra.mxu0 0
        %4330 = vmatprep.subr.bf16.mxu0 0
        %4331 = vmatpush1.bf16.msra.mxu0 0
        %4332 = vmatprep.subr.bf16.mxu0 0
        %4333 = vmatpush1.bf16.msra.mxu0 0
        %4334 = vmatprep.subr.bf16.mxu0 0
        %4335 = vmatpush1.bf16.msra.mxu0 0
        %4336 = vmatprep.subr.bf16.mxu0 %v3040
        %4337 = vmatpush1.bf16.msra.mxu0 %v3039
        %4338 = vmatprep.subr.bf16.mxu0 %v2964
        %4339 = vmatpush1.bf16.msra.mxu0 %v2963
        %4340 = vmatprep.subr.bf16.mxu0 %v2888
        %4341 = vmatpush1.bf16.msra.mxu0 %v2887
        %4342 = vmatprep.subr.bf16.mxu0 %v2812
        %4343 = vmatpush1.bf16.msra.mxu0 %v2811
        %4344 = vmatprep.subr.bf16.mxu0 0
        %4345 = vmatpush2.bf16.msra.mxu0 0
        %4346 = vmatprep.subr.bf16.mxu0 0
        %4347 = vmatpush2.bf16.msra.mxu0 0
        %4348 = vmatprep.subr.bf16.mxu0 0
        %4349 = vmatpush2.bf16.msra.mxu0 0
        %4350 = vmatprep.subr.bf16.mxu0 0
        %4351 = vmatpush2.bf16.msra.mxu0 0
        %4352 = vmatprep.subr.bf16.mxu0 0
        %4353 = vmatpush2.bf16.msra.mxu0 0
        %4354 = vmatprep.subr.bf16.mxu0 0
        %4355 = vmatpush2.bf16.msra.mxu0 0
        %4356 = vmatprep.subr.bf16.mxu0 0
        %4357 = vmatpush2.bf16.msra.mxu0 0
        %4358 = vmatprep.subr.bf16.mxu0 0
        %4359 = vmatpush2.bf16.msra.mxu0 0
        %4360 = vmatprep.mubr.bf16.mxu0 0
        %4361 = vmatmul.mubr.bf16.gmra.mxu0 %v3055
        %v4362 = vpop.f32.mrf.mxu0
        %v4363 = vadd.f32 0.0, %v4362
        %v4364 = vpop.f32.mrf.mxu0
        %v4365 = vadd.f32 0.0, %v4364
        %v4366 = vpop.f32.mrf.mxu0
        %v4367 = vpop.f32.mrf.mxu0
        %4368 = vdwg.mxu0
        %4369 = vmatprep.subr.bf16.mxu0 0
        %4370 = vmatpush1.bf16.msra.mxu0 0
        %4371 = vmatprep.subr.bf16.mxu0 0
        %4372 = vmatpush1.bf16.msra.mxu0 0
        %4373 = vmatprep.subr.bf16.mxu0 0
        %4374 = vmatpush1.bf16.msra.mxu0 0
        %4375 = vmatprep.subr.bf16.mxu0 0
        %4376 = vmatpush1.bf16.msra.mxu0 0
        %4377 = vmatprep.subr.bf16.mxu0 %v3042
        %4378 = vmatpush1.bf16.msra.mxu0 %v3041
        %4379 = vmatprep.subr.bf16.mxu0 %v2966
        %4380 = vmatpush1.bf16.msra.mxu0 %v2965
        %4381 = vmatprep.subr.bf16.mxu0 %v2890
        %4382 = vmatpush1.bf16.msra.mxu0 %v2889
        %4383 = vmatprep.subr.bf16.mxu0 %v2814
        %4384 = vmatpush1.bf16.msra.mxu0 %v2813
        %4385 = vmatprep.subr.bf16.mxu0 0
        %4386 = vmatpush2.bf16.msra.mxu0 0
        %4387 = vmatprep.subr.bf16.mxu0 0
        %4388 = vmatpush2.bf16.msra.mxu0 0
        %4389 = vmatprep.subr.bf16.mxu0 0
        %4390 = vmatpush2.bf16.msra.mxu0 0
        %4391 = vmatprep.subr.bf16.mxu0 0
        %4392 = vmatpush2.bf16.msra.mxu0 0
        %4393 = vmatprep.subr.bf16.mxu0 0
        %4394 = vmatpush2.bf16.msra.mxu0 0
        %4395 = vmatprep.subr.bf16.mxu0 0
        %4396 = vmatpush2.bf16.msra.mxu0 0
        %4397 = vmatprep.subr.bf16.mxu0 0
        %4398 = vmatpush2.bf16.msra.mxu0 0
        %4399 = vmatprep.subr.bf16.mxu0 0
        %4400 = vmatpush2.bf16.msra.mxu0 0
        %4401 = vmatprep.mubr.bf16.mxu0 0
        %4402 = vmatmul.mubr.bf16.gmra.mxu0 %v3055
        %v4403 = vpop.f32.mrf.mxu0
        %v4404 = vadd.f32 0.0, %v4403
        %v4405 = vpop.f32.mrf.mxu0
        %v4406 = vadd.f32 0.0, %v4405
        %v4407 = vpop.f32.mrf.mxu0
        %v4408 = vpop.f32.mrf.mxu0
        %4409 = vdwg.mxu0
        %4410 = vmatprep.subr.bf16.mxu0 0
        %4411 = vmatpush1.bf16.msra.mxu0 0
        %4412 = vmatprep.subr.bf16.mxu0 0
        %4413 = vmatpush1.bf16.msra.mxu0 0
        %4414 = vmatprep.subr.bf16.mxu0 0
        %4415 = vmatpush1.bf16.msra.mxu0 0
        %4416 = vmatprep.subr.bf16.mxu0 0
        %4417 = vmatpush1.bf16.msra.mxu0 0
        %4418 = vmatprep.subr.bf16.mxu0 %v3044
        %4419 = vmatpush1.bf16.msra.mxu0 %v3043
        %4420 = vmatprep.subr.bf16.mxu0 %v2968
        %4421 = vmatpush1.bf16.msra.mxu0 %v2967
        %4422 = vmatprep.subr.bf16.mxu0 %v2892
        %4423 = vmatpush1.bf16.msra.mxu0 %v2891
        %4424 = vmatprep.subr.bf16.mxu0 %v2816
        %4425 = vmatpush1.bf16.msra.mxu0 %v2815
        %4426 = vmatprep.subr.bf16.mxu0 0
        %4427 = vmatpush2.bf16.msra.mxu0 0
        %4428 = vmatprep.subr.bf16.mxu0 0
        %4429 = vmatpush2.bf16.msra.mxu0 0
        %4430 = vmatprep.subr.bf16.mxu0 0
        %4431 = vmatpush2.bf16.msra.mxu0 0
        %4432 = vmatprep.subr.bf16.mxu0 0
        %4433 = vmatpush2.bf16.msra.mxu0 0
        %4434 = vmatprep.subr.bf16.mxu0 0
        %4435 = vmatpush2.bf16.msra.mxu0 0
        %4436 = vmatprep.subr.bf16.mxu0 0
        %4437 = vmatpush2.bf16.msra.mxu0 0
        %4438 = vmatprep.subr.bf16.mxu0 0
        %4439 = vmatpush2.bf16.msra.mxu0 0
        %4440 = vmatprep.subr.bf16.mxu0 0
        %4441 = vmatpush2.bf16.msra.mxu0 0
        %4442 = vmatprep.mubr.bf16.mxu0 0
        %4443 = vmatmul.mubr.bf16.gmra.mxu0 %v3055
        %v4444 = vpop.f32.mrf.mxu0
        %v4445 = vadd.f32 0.0, %v4444
        %v4446 = vpop.f32.mrf.mxu0
        %v4447 = vadd.f32 0.0, %v4446
        %v4448 = vpop.f32.mrf.mxu0
        %v4449 = vpop.f32.mrf.mxu0
        %4450 = vdwg.mxu0
        %4451 = vmatprep.subr.bf16.mxu0 0
        %4452 = vmatpush1.bf16.msra.mxu0 0
        %4453 = vmatprep.subr.bf16.mxu0 0
        %4454 = vmatpush1.bf16.msra.mxu0 0
        %4455 = vmatprep.subr.bf16.mxu0 0
        %4456 = vmatpush1.bf16.msra.mxu0 0
        %4457 = vmatprep.subr.bf16.mxu0 0
        %4458 = vmatpush1.bf16.msra.mxu0 0
        %4459 = vmatprep.subr.bf16.mxu0 %v3046
        %4460 = vmatpush1.bf16.msra.mxu0 %v3045
        %4461 = vmatprep.subr.bf16.mxu0 %v2970
        %4462 = vmatpush1.bf16.msra.mxu0 %v2969
        %4463 = vmatprep.subr.bf16.mxu0 %v2894
        %4464 = vmatpush1.bf16.msra.mxu0 %v2893
        %4465 = vmatprep.subr.bf16.mxu0 %v2818
        %4466 = vmatpush1.bf16.msra.mxu0 %v2817
        %4467 = vmatprep.subr.bf16.mxu0 0
        %4468 = vmatpush2.bf16.msra.mxu0 0
        %4469 = vmatprep.subr.bf16.mxu0 0
        %4470 = vmatpush2.bf16.msra.mxu0 0
        %4471 = vmatprep.subr.bf16.mxu0 0
        %4472 = vmatpush2.bf16.msra.mxu0 0
        %4473 = vmatprep.subr.bf16.mxu0 0
        %4474 = vmatpush2.bf16.msra.mxu0 0
        %4475 = vmatprep.subr.bf16.mxu0 0
        %4476 = vmatpush2.bf16.msra.mxu0 0
        %4477 = vmatprep.subr.bf16.mxu0 0
        %4478 = vmatpush2.bf16.msra.mxu0 0
        %4479 = vmatprep.subr.bf16.mxu0 0
        %4480 = vmatpush2.bf16.msra.mxu0 0
        %4481 = vmatprep.subr.bf16.mxu0 0
        %4482 = vmatpush2.bf16.msra.mxu0 0
        %4483 = vmatprep.mubr.bf16.mxu0 0
        %4484 = vmatmul.mubr.bf16.gmra.mxu0 %v3055
        %v4485 = vpop.f32.mrf.mxu0
        %v4486 = vadd.f32 0.0, %v4485
        %v4487 = vpop.f32.mrf.mxu0
        %v4488 = vadd.f32 0.0, %v4487
        %v4489 = vpop.f32.mrf.mxu0
        %v4490 = vpop.f32.mrf.mxu0
        %4491 = vdwg.mxu0
        %4492 = vmatprep.subr.bf16.mxu0 0
        %4493 = vmatpush1.bf16.msra.mxu0 0
        %4494 = vmatprep.subr.bf16.mxu0 0
        %4495 = vmatpush1.bf16.msra.mxu0 0
        %4496 = vmatprep.subr.bf16.mxu0 0
        %4497 = vmatpush1.bf16.msra.mxu0 0
        %4498 = vmatprep.subr.bf16.mxu0 0
        %4499 = vmatpush1.bf16.msra.mxu0 0
        %4500 = vmatprep.subr.bf16.mxu0 %v3048
        %4501 = vmatpush1.bf16.msra.mxu0 %v3047
        %4502 = vmatprep.subr.bf16.mxu0 %v2972
        %4503 = vmatpush1.bf16.msra.mxu0 %v2971
        %4504 = vmatprep.subr.bf16.mxu0 %v2896
        %4505 = vmatpush1.bf16.msra.mxu0 %v2895
        %4506 = vmatprep.subr.bf16.mxu0 %v2820
        %4507 = vmatpush1.bf16.msra.mxu0 %v2819
        %4508 = vmatprep.subr.bf16.mxu0 0
        %4509 = vmatpush2.bf16.msra.mxu0 0
        %4510 = vmatprep.subr.bf16.mxu0 0
        %4511 = vmatpush2.bf16.msra.mxu0 0
        %4512 = vmatprep.subr.bf16.mxu0 0
        %4513 = vmatpush2.bf16.msra.mxu0 0
        %4514 = vmatprep.subr.bf16.mxu0 0
        %4515 = vmatpush2.bf16.msra.mxu0 0
        %4516 = vmatprep.subr.bf16.mxu0 0
        %4517 = vmatpush2.bf16.msra.mxu0 0
        %4518 = vmatprep.subr.bf16.mxu0 0
        %4519 = vmatpush2.bf16.msra.mxu0 0
        %4520 = vmatprep.subr.bf16.mxu0 0
        %4521 = vmatpush2.bf16.msra.mxu0 0
        %4522 = vmatprep.subr.bf16.mxu0 0
        %4523 = vmatpush2.bf16.msra.mxu0 0
        %4524 = vmatprep.mubr.bf16.mxu0 0
        %4525 = vmatmul.mubr.bf16.gmra.mxu0 %v3055
        %v4526 = vpop.f32.mrf.mxu0
        %v4527 = vadd.f32 0.0, %v4526
        %v4528 = vpop.f32.mrf.mxu0
        %v4529 = vadd.f32 0.0, %v4528
        %v4530 = vpop.f32.mrf.mxu0
        %v4531 = vpop.f32.mrf.mxu0
        %4532 = vdwg.mxu0
        %4533 = vmatprep.subr.bf16.mxu0 0
        %4534 = vmatpush1.bf16.msra.mxu0 0
        %4535 = vmatprep.subr.bf16.mxu0 0
        %4536 = vmatpush1.bf16.msra.mxu0 0
        %4537 = vmatprep.subr.bf16.mxu0 0
        %4538 = vmatpush1.bf16.msra.mxu0 0
        %4539 = vmatprep.subr.bf16.mxu0 0
        %4540 = vmatpush1.bf16.msra.mxu0 0
        %4541 = vmatprep.subr.bf16.mxu0 %v3050
        %4542 = vmatpush1.bf16.msra.mxu0 %v3049
        %4543 = vmatprep.subr.bf16.mxu0 %v2974
        %4544 = vmatpush1.bf16.msra.mxu0 %v2973
        %4545 = vmatprep.subr.bf16.mxu0 %v2898
        %4546 = vmatpush1.bf16.msra.mxu0 %v2897
        %4547 = vmatprep.subr.bf16.mxu0 %v2822
        %4548 = vmatpush1.bf16.msra.mxu0 %v2821
        %4549 = vmatprep.subr.bf16.mxu0 0
        %4550 = vmatpush2.bf16.msra.mxu0 0
        %4551 = vmatprep.subr.bf16.mxu0 0
        %4552 = vmatpush2.bf16.msra.mxu0 0
        %4553 = vmatprep.subr.bf16.mxu0 0
        %4554 = vmatpush2.bf16.msra.mxu0 0
        %4555 = vmatprep.subr.bf16.mxu0 0
        %4556 = vmatpush2.bf16.msra.mxu0 0
        %4557 = vmatprep.subr.bf16.mxu0 0
        %4558 = vmatpush2.bf16.msra.mxu0 0
        %4559 = vmatprep.subr.bf16.mxu0 0
        %4560 = vmatpush2.bf16.msra.mxu0 0
        %4561 = vmatprep.subr.bf16.mxu0 0
        %4562 = vmatpush2.bf16.msra.mxu0 0
        %4563 = vmatprep.subr.bf16.mxu0 0
        %4564 = vmatpush2.bf16.msra.mxu0 0
        %4565 = vmatprep.mubr.bf16.mxu0 0
        %4566 = vmatmul.mubr.bf16.gmra.mxu0 %v3055
        %v4567 = vpop.f32.mrf.mxu0
        %v4568 = vadd.f32 0.0, %v4567
        %v4569 = vpop.f32.mrf.mxu0
        %v4570 = vadd.f32 0.0, %v4569
        %v4571 = vpop.f32.mrf.mxu0
        %v4572 = vpop.f32.mrf.mxu0
        %4573 = vdwg.mxu0
        %4574 = vmatprep.subr.bf16.mxu0 0
        %4575 = vmatpush1.bf16.msra.mxu0 0
        %4576 = vmatprep.subr.bf16.mxu0 0
        %4577 = vmatpush1.bf16.msra.mxu0 0
        %4578 = vmatprep.subr.bf16.mxu0 0
        %4579 = vmatpush1.bf16.msra.mxu0 0
        %4580 = vmatprep.subr.bf16.mxu0 0
        %4581 = vmatpush1.bf16.msra.mxu0 0
        %4582 = vmatprep.subr.bf16.mxu0 %v3052
        %4583 = vmatpush1.bf16.msra.mxu0 %v3051
        %4584 = vmatprep.subr.bf16.mxu0 %v2976
        %4585 = vmatpush1.bf16.msra.mxu0 %v2975
        %4586 = vmatprep.subr.bf16.mxu0 %v2900
        %4587 = vmatpush1.bf16.msra.mxu0 %v2899
        %4588 = vmatprep.subr.bf16.mxu0 %v2824
        %4589 = vmatpush1.bf16.msra.mxu0 %v2823
        %4590 = vmatprep.subr.bf16.mxu0 0
        %4591 = vmatpush2.bf16.msra.mxu0 0
        %4592 = vmatprep.subr.bf16.mxu0 0
        %4593 = vmatpush2.bf16.msra.mxu0 0
        %4594 = vmatprep.subr.bf16.mxu0 0
        %4595 = vmatpush2.bf16.msra.mxu0 0
        %4596 = vmatprep.subr.bf16.mxu0 0
        %4597 = vmatpush2.bf16.msra.mxu0 0
        %4598 = vmatprep.subr.bf16.mxu0 0
        %4599 = vmatpush2.bf16.msra.mxu0 0
        %4600 = vmatprep.subr.bf16.mxu0 0
        %4601 = vmatpush2.bf16.msra.mxu0 0
        %4602 = vmatprep.subr.bf16.mxu0 0
        %4603 = vmatpush2.bf16.msra.mxu0 0
        %4604 = vmatprep.subr.bf16.mxu0 0
        %4605 = vmatpush2.bf16.msra.mxu0 0
        %4606 = vmatprep.mubr.bf16.mxu0 0
        %4607 = vmatmul.mubr.bf16.gmra.mxu0 %v3055
        %v4608 = vpop.f32.mrf.mxu0
        %v4609 = vadd.f32 0.0, %v4608
        %v4610 = vpop.f32.mrf.mxu0
        %v4611 = vadd.f32 0.0, %v4610
        %v4612 = vpop.f32.mrf.mxu0
        %v4613 = vpop.f32.mrf.mxu0
        %4614 = vdwg.mxu0
        %4615 = vmatprep.subr.bf16.mxu0 0
        %4616 = vmatpush1.bf16.msra.mxu0 0
        %4617 = vmatprep.subr.bf16.mxu0 0
        %4618 = vmatpush1.bf16.msra.mxu0 0
        %4619 = vmatprep.subr.bf16.mxu0 0
        %4620 = vmatpush1.bf16.msra.mxu0 0
        %4621 = vmatprep.subr.bf16.mxu0 0
        %4622 = vmatpush1.bf16.msra.mxu0 0
        %4623 = vmatprep.subr.bf16.mxu0 %v1458
        %4624 = vmatpush1.bf16.msra.mxu0 %v1457
        %4625 = vmatprep.subr.bf16.mxu0 %v1382
        %4626 = vmatpush1.bf16.msra.mxu0 %v1381
        %4627 = vmatprep.subr.bf16.mxu0 %v1306
        %4628 = vmatpush1.bf16.msra.mxu0 %v1305
        %4629 = vmatprep.subr.bf16.mxu0 %v1230
        %4630 = vmatpush1.bf16.msra.mxu0 %v1229
        %4631 = vmatprep.subr.bf16.mxu0 0
        %4632 = vmatpush2.bf16.msra.mxu0 0
        %4633 = vmatprep.subr.bf16.mxu0 0
        %4634 = vmatpush2.bf16.msra.mxu0 0
        %4635 = vmatprep.subr.bf16.mxu0 0
        %4636 = vmatpush2.bf16.msra.mxu0 0
        %4637 = vmatprep.subr.bf16.mxu0 0
        %4638 = vmatpush2.bf16.msra.mxu0 0
        %4639 = vmatprep.subr.bf16.mxu0 0
        %4640 = vmatpush2.bf16.msra.mxu0 0
        %4641 = vmatprep.subr.bf16.mxu0 0
        %4642 = vmatpush2.bf16.msra.mxu0 0
        %4643 = vmatprep.subr.bf16.mxu0 0
        %4644 = vmatpush2.bf16.msra.mxu0 0
        %4645 = vmatprep.subr.bf16.mxu0 0
        %4646 = vmatpush2.bf16.msra.mxu0 0
        %4647 = vmatprep.mubr.bf16.mxu0 0
        %4648 = vmatmul.mubr.bf16.gmra.mxu0 %v3055
        %v4649 = vpop.f32.mrf.mxu0
        %v4650 = vadd.f32 %v3092, %v4649
        %v4651 = vpop.f32.mrf.mxu0
        %v4652 = vadd.f32 %v3094, %v4651
        %v4653 = vpop.f32.mrf.mxu0
        %v4654 = vpop.f32.mrf.mxu0
        %4655 = vdwg.mxu0
        %4656 = vmatprep.subr.bf16.mxu0 0
        %4657 = vmatpush1.bf16.msra.mxu0 0
        %4658 = vmatprep.subr.bf16.mxu0 0
        %4659 = vmatpush1.bf16.msra.mxu0 0
        %4660 = vmatprep.subr.bf16.mxu0 0
        %4661 = vmatpush1.bf16.msra.mxu0 0
        %4662 = vmatprep.subr.bf16.mxu0 0
        %4663 = vmatpush1.bf16.msra.mxu0 0
        %4664 = vmatprep.subr.bf16.mxu0 %v1460
        %4665 = vmatpush1.bf16.msra.mxu0 %v1459
        %4666 = vmatprep.subr.bf16.mxu0 %v1384
        %4667 = vmatpush1.bf16.msra.mxu0 %v1383
        %4668 = vmatprep.subr.bf16.mxu0 %v1308
        %4669 = vmatpush1.bf16.msra.mxu0 %v1307
        %4670 = vmatprep.subr.bf16.mxu0 %v1232
        %4671 = vmatpush1.bf16.msra.mxu0 %v1231
        %4672 = vmatprep.subr.bf16.mxu0 0
        %4673 = vmatpush2.bf16.msra.mxu0 0
        %4674 = vmatprep.subr.bf16.mxu0 0
        %4675 = vmatpush2.bf16.msra.mxu0 0
        %4676 = vmatprep.subr.bf16.mxu0 0
        %4677 = vmatpush2.bf16.msra.mxu0 0
        %4678 = vmatprep.subr.bf16.mxu0 0
        %4679 = vmatpush2.bf16.msra.mxu0 0
        %4680 = vmatprep.subr.bf16.mxu0 0
        %4681 = vmatpush2.bf16.msra.mxu0 0
        %4682 = vmatprep.subr.bf16.mxu0 0
        %4683 = vmatpush2.bf16.msra.mxu0 0
        %4684 = vmatprep.subr.bf16.mxu0 0
        %4685 = vmatpush2.bf16.msra.mxu0 0
        %4686 = vmatprep.subr.bf16.mxu0 0
        %4687 = vmatpush2.bf16.msra.mxu0 0
        %4688 = vmatprep.mubr.bf16.mxu0 0
        %4689 = vmatmul.mubr.bf16.gmra.mxu0 %v3055
        %v4690 = vpop.f32.mrf.mxu0
        %v4691 = vadd.f32 %v3133, %v4690
        %v4692 = vpop.f32.mrf.mxu0
        %v4693 = vadd.f32 %v3135, %v4692
        %v4694 = vpop.f32.mrf.mxu0
        %v4695 = vpop.f32.mrf.mxu0
        %4696 = vdwg.mxu0
        %4697 = vmatprep.subr.bf16.mxu0 0
        %4698 = vmatpush1.bf16.msra.mxu0 0
        %4699 = vmatprep.subr.bf16.mxu0 0
        %4700 = vmatpush1.bf16.msra.mxu0 0
        %4701 = vmatprep.subr.bf16.mxu0 0
        %4702 = vmatpush1.bf16.msra.mxu0 0
        %4703 = vmatprep.subr.bf16.mxu0 0
        %4704 = vmatpush1.bf16.msra.mxu0 0
        %4705 = vmatprep.subr.bf16.mxu0 %v1462
        %4706 = vmatpush1.bf16.msra.mxu0 %v1461
        %4707 = vmatprep.subr.bf16.mxu0 %v1386
        %4708 = vmatpush1.bf16.msra.mxu0 %v1385
        %4709 = vmatprep.subr.bf16.mxu0 %v1310
        %4710 = vmatpush1.bf16.msra.mxu0 %v1309
        %4711 = vmatprep.subr.bf16.mxu0 %v1234
        %4712 = vmatpush1.bf16.msra.mxu0 %v1233
        %4713 = vmatprep.subr.bf16.mxu0 0
        %4714 = vmatpush2.bf16.msra.mxu0 0
        %4715 = vmatprep.subr.bf16.mxu0 0
        %4716 = vmatpush2.bf16.msra.mxu0 0
        %4717 = vmatprep.subr.bf16.mxu0 0
        %4718 = vmatpush2.bf16.msra.mxu0 0
        %4719 = vmatprep.subr.bf16.mxu0 0
        %4720 = vmatpush2.bf16.msra.mxu0 0
        %4721 = vmatprep.subr.bf16.mxu0 0
        %4722 = vmatpush2.bf16.msra.mxu0 0
        %4723 = vmatprep.subr.bf16.mxu0 0
        %4724 = vmatpush2.bf16.msra.mxu0 0
        %4725 = vmatprep.subr.bf16.mxu0 0
        %4726 = vmatpush2.bf16.msra.mxu0 0
        %4727 = vmatprep.subr.bf16.mxu0 0
        %4728 = vmatpush2.bf16.msra.mxu0 0
        %4729 = vmatprep.mubr.bf16.mxu0 0
        %4730 = vmatmul.mubr.bf16.gmra.mxu0 %v3055
        %v4731 = vpop.f32.mrf.mxu0
        %v4732 = vadd.f32 %v3174, %v4731
        %v4733 = vpop.f32.mrf.mxu0
        %v4734 = vadd.f32 %v3176, %v4733
        %v4735 = vpop.f32.mrf.mxu0
        %v4736 = vpop.f32.mrf.mxu0
        %4737 = vdwg.mxu0
        %4738 = vmatprep.subr.bf16.mxu0 0
        %4739 = vmatpush1.bf16.msra.mxu0 0
        %4740 = vmatprep.subr.bf16.mxu0 0
        %4741 = vmatpush1.bf16.msra.mxu0 0
        %4742 = vmatprep.subr.bf16.mxu0 0
        %4743 = vmatpush1.bf16.msra.mxu0 0
        %4744 = vmatprep.subr.bf16.mxu0 0
        %4745 = vmatpush1.bf16.msra.mxu0 0
        %4746 = vmatprep.subr.bf16.mxu0 %v1464
        %4747 = vmatpush1.bf16.msra.mxu0 %v1463
        %4748 = vmatprep.subr.bf16.mxu0 %v1388
        %4749 = vmatpush1.bf16.msra.mxu0 %v1387
        %4750 = vmatprep.subr.bf16.mxu0 %v1312
        %4751 = vmatpush1.bf16.msra.mxu0 %v1311
        %4752 = vmatprep.subr.bf16.mxu0 %v1236
        %4753 = vmatpush1.bf16.msra.mxu0 %v1235
        %4754 = vmatprep.subr.bf16.mxu0 0
        %4755 = vmatpush2.bf16.msra.mxu0 0
        %4756 = vmatprep.subr.bf16.mxu0 0
        %4757 = vmatpush2.bf16.msra.mxu0 0
        %4758 = vmatprep.subr.bf16.mxu0 0
        %4759 = vmatpush2.bf16.msra.mxu0 0
        %4760 = vmatprep.subr.bf16.mxu0 0
        %4761 = vmatpush2.bf16.msra.mxu0 0
        %4762 = vmatprep.subr.bf16.mxu0 0
        %4763 = vmatpush2.bf16.msra.mxu0 0
        %4764 = vmatprep.subr.bf16.mxu0 0
        %4765 = vmatpush2.bf16.msra.mxu0 0
        %4766 = vmatprep.subr.bf16.mxu0 0
        %4767 = vmatpush2.bf16.msra.mxu0 0
        %4768 = vmatprep.subr.bf16.mxu0 0
        %4769 = vmatpush2.bf16.msra.mxu0 0
        %4770 = vmatprep.mubr.bf16.mxu0 0
        %4771 = vmatmul.mubr.bf16.gmra.mxu0 %v3055
        %v4772 = vpop.f32.mrf.mxu0
        %v4773 = vadd.f32 %v3215, %v4772
        %v4774 = vpop.f32.mrf.mxu0
        %v4775 = vadd.f32 %v3217, %v4774
        %v4776 = vpop.f32.mrf.mxu0
        %v4777 = vpop.f32.mrf.mxu0
        %4778 = vdwg.mxu0
        %4779 = vmatprep.subr.bf16.mxu0 0
        %4780 = vmatpush1.bf16.msra.mxu0 0
        %4781 = vmatprep.subr.bf16.mxu0 0
        %4782 = vmatpush1.bf16.msra.mxu0 0
        %4783 = vmatprep.subr.bf16.mxu0 0
        %4784 = vmatpush1.bf16.msra.mxu0 0
        %4785 = vmatprep.subr.bf16.mxu0 0
        %4786 = vmatpush1.bf16.msra.mxu0 0
        %4787 = vmatprep.subr.bf16.mxu0 %v1466
        %4788 = vmatpush1.bf16.msra.mxu0 %v1465
        %4789 = vmatprep.subr.bf16.mxu0 %v1390
        %4790 = vmatpush1.bf16.msra.mxu0 %v1389
        %4791 = vmatprep.subr.bf16.mxu0 %v1314
        %4792 = vmatpush1.bf16.msra.mxu0 %v1313
        %4793 = vmatprep.subr.bf16.mxu0 %v1238
        %4794 = vmatpush1.bf16.msra.mxu0 %v1237
        %4795 = vmatprep.subr.bf16.mxu0 0
        %4796 = vmatpush2.bf16.msra.mxu0 0
        %4797 = vmatprep.subr.bf16.mxu0 0
        %4798 = vmatpush2.bf16.msra.mxu0 0
        %4799 = vmatprep.subr.bf16.mxu0 0
        %4800 = vmatpush2.bf16.msra.mxu0 0
        %4801 = vmatprep.subr.bf16.mxu0 0
        %4802 = vmatpush2.bf16.msra.mxu0 0
        %4803 = vmatprep.subr.bf16.mxu0 0
        %4804 = vmatpush2.bf16.msra.mxu0 0
        %4805 = vmatprep.subr.bf16.mxu0 0
        %4806 = vmatpush2.bf16.msra.mxu0 0
        %4807 = vmatprep.subr.bf16.mxu0 0
        %4808 = vmatpush2.bf16.msra.mxu0 0
        %4809 = vmatprep.subr.bf16.mxu0 0
        %4810 = vmatpush2.bf16.msra.mxu0 0
        %4811 = vmatprep.mubr.bf16.mxu0 0
        %4812 = vmatmul.mubr.bf16.gmra.mxu0 %v3055
        %v4813 = vpop.f32.mrf.mxu0
        %v4814 = vadd.f32 %v3256, %v4813
        %v4815 = vpop.f32.mrf.mxu0
        %v4816 = vadd.f32 %v3258, %v4815
        %v4817 = vpop.f32.mrf.mxu0
        %v4818 = vpop.f32.mrf.mxu0
        %4819 = vdwg.mxu0
        %4820 = vmatprep.subr.bf16.mxu0 0
        %4821 = vmatpush1.bf16.msra.mxu0 0
        %4822 = vmatprep.subr.bf16.mxu0 0
        %4823 = vmatpush1.bf16.msra.mxu0 0
        %4824 = vmatprep.subr.bf16.mxu0 0
        %4825 = vmatpush1.bf16.msra.mxu0 0
        %4826 = vmatprep.subr.bf16.mxu0 0
        %4827 = vmatpush1.bf16.msra.mxu0 0
        %4828 = vmatprep.subr.bf16.mxu0 %v1468
        %4829 = vmatpush1.bf16.msra.mxu0 %v1467
        %4830 = vmatprep.subr.bf16.mxu0 %v1392
        %4831 = vmatpush1.bf16.msra.mxu0 %v1391
        %4832 = vmatprep.subr.bf16.mxu0 %v1316
        %4833 = vmatpush1.bf16.msra.mxu0 %v1315
        %4834 = vmatprep.subr.bf16.mxu0 %v1240
        %4835 = vmatpush1.bf16.msra.mxu0 %v1239
        %4836 = vmatprep.subr.bf16.mxu0 0
        %4837 = vmatpush2.bf16.msra.mxu0 0
        %4838 = vmatprep.subr.bf16.mxu0 0
        %4839 = vmatpush2.bf16.msra.mxu0 0
        %4840 = vmatprep.subr.bf16.mxu0 0
        %4841 = vmatpush2.bf16.msra.mxu0 0
        %4842 = vmatprep.subr.bf16.mxu0 0
        %4843 = vmatpush2.bf16.msra.mxu0 0
        %4844 = vmatprep.subr.bf16.mxu0 0
        %4845 = vmatpush2.bf16.msra.mxu0 0
        %4846 = vmatprep.subr.bf16.mxu0 0
        %4847 = vmatpush2.bf16.msra.mxu0 0
        %4848 = vmatprep.subr.bf16.mxu0 0
        %4849 = vmatpush2.bf16.msra.mxu0 0
        %4850 = vmatprep.subr.bf16.mxu0 0
        %4851 = vmatpush2.bf16.msra.mxu0 0
        %4852 = vmatprep.mubr.bf16.mxu0 0
        %4853 = vmatmul.mubr.bf16.gmra.mxu0 %v3055
        %v4854 = vpop.f32.mrf.mxu0
        %v4855 = vadd.f32 %v3297, %v4854
        %v4856 = vpop.f32.mrf.mxu0
        %v4857 = vadd.f32 %v3299, %v4856
        %v4858 = vpop.f32.mrf.mxu0
        %v4859 = vpop.f32.mrf.mxu0
        %4860 = vdwg.mxu0
        %4861 = vmatprep.subr.bf16.mxu0 0
        %4862 = vmatpush1.bf16.msra.mxu0 0
        %4863 = vmatprep.subr.bf16.mxu0 0
        %4864 = vmatpush1.bf16.msra.mxu0 0
        %4865 = vmatprep.subr.bf16.mxu0 0
        %4866 = vmatpush1.bf16.msra.mxu0 0
        %4867 = vmatprep.subr.bf16.mxu0 0
        %4868 = vmatpush1.bf16.msra.mxu0 0
        %4869 = vmatprep.subr.bf16.mxu0 %v1470
        %4870 = vmatpush1.bf16.msra.mxu0 %v1469
        %4871 = vmatprep.subr.bf16.mxu0 %v1394
        %4872 = vmatpush1.bf16.msra.mxu0 %v1393
        %4873 = vmatprep.subr.bf16.mxu0 %v1318
        %4874 = vmatpush1.bf16.msra.mxu0 %v1317
        %4875 = vmatprep.subr.bf16.mxu0 %v1242
        %4876 = vmatpush1.bf16.msra.mxu0 %v1241
        %4877 = vmatprep.subr.bf16.mxu0 0
        %4878 = vmatpush2.bf16.msra.mxu0 0
        %4879 = vmatprep.subr.bf16.mxu0 0
        %4880 = vmatpush2.bf16.msra.mxu0 0
        %4881 = vmatprep.subr.bf16.mxu0 0
        %4882 = vmatpush2.bf16.msra.mxu0 0
        %4883 = vmatprep.subr.bf16.mxu0 0
        %4884 = vmatpush2.bf16.msra.mxu0 0
        %4885 = vmatprep.subr.bf16.mxu0 0
        %4886 = vmatpush2.bf16.msra.mxu0 0
        %4887 = vmatprep.subr.bf16.mxu0 0
        %4888 = vmatpush2.bf16.msra.mxu0 0
        %4889 = vmatprep.subr.bf16.mxu0 0
        %4890 = vmatpush2.bf16.msra.mxu0 0
        %4891 = vmatprep.subr.bf16.mxu0 0
        %4892 = vmatpush2.bf16.msra.mxu0 0
        %4893 = vmatprep.mubr.bf16.mxu0 0
        %4894 = vmatmul.mubr.bf16.gmra.mxu0 %v3055
        %v4895 = vpop.f32.mrf.mxu0
        %v4896 = vadd.f32 %v3338, %v4895
        %v4897 = vpop.f32.mrf.mxu0
        %v4898 = vadd.f32 %v3340, %v4897
        %v4899 = vpop.f32.mrf.mxu0
        %v4900 = vpop.f32.mrf.mxu0
        %4901 = vdwg.mxu0
        %4902 = vmatprep.subr.bf16.mxu0 0
        %4903 = vmatpush1.bf16.msra.mxu0 0
        %4904 = vmatprep.subr.bf16.mxu0 0
        %4905 = vmatpush1.bf16.msra.mxu0 0
        %4906 = vmatprep.subr.bf16.mxu0 0
        %4907 = vmatpush1.bf16.msra.mxu0 0
        %4908 = vmatprep.subr.bf16.mxu0 0
        %4909 = vmatpush1.bf16.msra.mxu0 0
        %4910 = vmatprep.subr.bf16.mxu0 %v1472
        %4911 = vmatpush1.bf16.msra.mxu0 %v1471
        %4912 = vmatprep.subr.bf16.mxu0 %v1396
        %4913 = vmatpush1.bf16.msra.mxu0 %v1395
        %4914 = vmatprep.subr.bf16.mxu0 %v1320
        %4915 = vmatpush1.bf16.msra.mxu0 %v1319
        %4916 = vmatprep.subr.bf16.mxu0 %v1244
        %4917 = vmatpush1.bf16.msra.mxu0 %v1243
        %4918 = vmatprep.subr.bf16.mxu0 0
        %4919 = vmatpush2.bf16.msra.mxu0 0
        %4920 = vmatprep.subr.bf16.mxu0 0
        %4921 = vmatpush2.bf16.msra.mxu0 0
        %4922 = vmatprep.subr.bf16.mxu0 0
        %4923 = vmatpush2.bf16.msra.mxu0 0
        %4924 = vmatprep.subr.bf16.mxu0 0
        %4925 = vmatpush2.bf16.msra.mxu0 0
        %4926 = vmatprep.subr.bf16.mxu0 0
        %4927 = vmatpush2.bf16.msra.mxu0 0
        %4928 = vmatprep.subr.bf16.mxu0 0
        %4929 = vmatpush2.bf16.msra.mxu0 0
        %4930 = vmatprep.subr.bf16.mxu0 0
        %4931 = vmatpush2.bf16.msra.mxu0 0
        %4932 = vmatprep.subr.bf16.mxu0 0
        %4933 = vmatpush2.bf16.msra.mxu0 0
        %4934 = vmatprep.mubr.bf16.mxu0 0
        %4935 = vmatmul.mubr.bf16.gmra.mxu0 %v3055
        %v4936 = vpop.f32.mrf.mxu0
        %v4937 = vadd.f32 %v3379, %v4936
        %v4938 = vpop.f32.mrf.mxu0
        %v4939 = vadd.f32 %v3381, %v4938
        %v4940 = vpop.f32.mrf.mxu0
        %v4941 = vpop.f32.mrf.mxu0
        %4942 = vdwg.mxu0
        %4943 = vmatprep.subr.bf16.mxu0 0
        %4944 = vmatpush1.bf16.msra.mxu0 0
        %4945 = vmatprep.subr.bf16.mxu0 0
        %4946 = vmatpush1.bf16.msra.mxu0 0
        %4947 = vmatprep.subr.bf16.mxu0 0
        %4948 = vmatpush1.bf16.msra.mxu0 0
        %4949 = vmatprep.subr.bf16.mxu0 0
        %4950 = vmatpush1.bf16.msra.mxu0 0
        %4951 = vmatprep.subr.bf16.mxu0 %v1474
        %4952 = vmatpush1.bf16.msra.mxu0 %v1473
        %4953 = vmatprep.subr.bf16.mxu0 %v1398
        %4954 = vmatpush1.bf16.msra.mxu0 %v1397
        %4955 = vmatprep.subr.bf16.mxu0 %v1322
        %4956 = vmatpush1.bf16.msra.mxu0 %v1321
        %4957 = vmatprep.subr.bf16.mxu0 %v1246
        %4958 = vmatpush1.bf16.msra.mxu0 %v1245
        %4959 = vmatprep.subr.bf16.mxu0 0
        %4960 = vmatpush2.bf16.msra.mxu0 0
        %4961 = vmatprep.subr.bf16.mxu0 0
        %4962 = vmatpush2.bf16.msra.mxu0 0
        %4963 = vmatprep.subr.bf16.mxu0 0
        %4964 = vmatpush2.bf16.msra.mxu0 0
        %4965 = vmatprep.subr.bf16.mxu0 0
        %4966 = vmatpush2.bf16.msra.mxu0 0
        %4967 = vmatprep.subr.bf16.mxu0 0
        %4968 = vmatpush2.bf16.msra.mxu0 0
        %4969 = vmatprep.subr.bf16.mxu0 0
        %4970 = vmatpush2.bf16.msra.mxu0 0
        %4971 = vmatprep.subr.bf16.mxu0 0
        %4972 = vmatpush2.bf16.msra.mxu0 0
        %4973 = vmatprep.subr.bf16.mxu0 0
        %4974 = vmatpush2.bf16.msra.mxu0 0
        %4975 = vmatprep.mubr.bf16.mxu0 0
        %4976 = vmatmul.mubr.bf16.gmra.mxu0 %v3055
        %v4977 = vpop.f32.mrf.mxu0
        %v4978 = vadd.f32 %v3420, %v4977
        %v4979 = vpop.f32.mrf.mxu0
        %v4980 = vadd.f32 %v3422, %v4979
        %v4981 = vpop.f32.mrf.mxu0
        %v4982 = vpop.f32.mrf.mxu0
        %4983 = vdwg.mxu0
        %4984 = vmatprep.subr.bf16.mxu0 0
        %4985 = vmatpush1.bf16.msra.mxu0 0
        %4986 = vmatprep.subr.bf16.mxu0 0
        %4987 = vmatpush1.bf16.msra.mxu0 0
        %4988 = vmatprep.subr.bf16.mxu0 0
        %4989 = vmatpush1.bf16.msra.mxu0 0
        %4990 = vmatprep.subr.bf16.mxu0 0
        %4991 = vmatpush1.bf16.msra.mxu0 0
        %4992 = vmatprep.subr.bf16.mxu0 %v1476
        %4993 = vmatpush1.bf16.msra.mxu0 %v1475
        %4994 = vmatprep.subr.bf16.mxu0 %v1400
        %4995 = vmatpush1.bf16.msra.mxu0 %v1399
        %4996 = vmatprep.subr.bf16.mxu0 %v1324
        %4997 = vmatpush1.bf16.msra.mxu0 %v1323
        %4998 = vmatprep.subr.bf16.mxu0 %v1248
        %4999 = vmatpush1.bf16.msra.mxu0 %v1247
        %5000 = vmatprep.subr.bf16.mxu0 0
        %5001 = vmatpush2.bf16.msra.mxu0 0
        %5002 = vmatprep.subr.bf16.mxu0 0
        %5003 = vmatpush2.bf16.msra.mxu0 0
        %5004 = vmatprep.subr.bf16.mxu0 0
        %5005 = vmatpush2.bf16.msra.mxu0 0
        %5006 = vmatprep.subr.bf16.mxu0 0
        %5007 = vmatpush2.bf16.msra.mxu0 0
        %5008 = vmatprep.subr.bf16.mxu0 0
        %5009 = vmatpush2.bf16.msra.mxu0 0
        %5010 = vmatprep.subr.bf16.mxu0 0
        %5011 = vmatpush2.bf16.msra.mxu0 0
        %5012 = vmatprep.subr.bf16.mxu0 0
        %5013 = vmatpush2.bf16.msra.mxu0 0
        %5014 = vmatprep.subr.bf16.mxu0 0
        %5015 = vmatpush2.bf16.msra.mxu0 0
        %5016 = vmatprep.mubr.bf16.mxu0 0
        %5017 = vmatmul.mubr.bf16.gmra.mxu0 %v3055
        %v5018 = vpop.f32.mrf.mxu0
        %v5019 = vadd.f32 %v3461, %v5018
        %v5020 = vpop.f32.mrf.mxu0
        %v5021 = vadd.f32 %v3463, %v5020
        %v5022 = vpop.f32.mrf.mxu0
        %v5023 = vpop.f32.mrf.mxu0
        %5024 = vdwg.mxu0
        %5025 = vmatprep.subr.bf16.mxu0 0
        %5026 = vmatpush1.bf16.msra.mxu0 0
        %5027 = vmatprep.subr.bf16.mxu0 0
        %5028 = vmatpush1.bf16.msra.mxu0 0
        %5029 = vmatprep.subr.bf16.mxu0 0
        %5030 = vmatpush1.bf16.msra.mxu0 0
        %5031 = vmatprep.subr.bf16.mxu0 0
        %5032 = vmatpush1.bf16.msra.mxu0 0
        %5033 = vmatprep.subr.bf16.mxu0 %v1478
        %5034 = vmatpush1.bf16.msra.mxu0 %v1477
        %5035 = vmatprep.subr.bf16.mxu0 %v1402
        %5036 = vmatpush1.bf16.msra.mxu0 %v1401
        %5037 = vmatprep.subr.bf16.mxu0 %v1326
        %5038 = vmatpush1.bf16.msra.mxu0 %v1325
        %5039 = vmatprep.subr.bf16.mxu0 %v1250
        %5040 = vmatpush1.bf16.msra.mxu0 %v1249
        %5041 = vmatprep.subr.bf16.mxu0 0
        %5042 = vmatpush2.bf16.msra.mxu0 0
        %5043 = vmatprep.subr.bf16.mxu0 0
        %5044 = vmatpush2.bf16.msra.mxu0 0
        %5045 = vmatprep.subr.bf16.mxu0 0
        %5046 = vmatpush2.bf16.msra.mxu0 0
        %5047 = vmatprep.subr.bf16.mxu0 0
        %5048 = vmatpush2.bf16.msra.mxu0 0
        %5049 = vmatprep.subr.bf16.mxu0 0
        %5050 = vmatpush2.bf16.msra.mxu0 0
        %5051 = vmatprep.subr.bf16.mxu0 0
        %5052 = vmatpush2.bf16.msra.mxu0 0
        %5053 = vmatprep.subr.bf16.mxu0 0
        %5054 = vmatpush2.bf16.msra.mxu0 0
        %5055 = vmatprep.subr.bf16.mxu0 0
        %5056 = vmatpush2.bf16.msra.mxu0 0
        %5057 = vmatprep.mubr.bf16.mxu0 0
        %5058 = vmatmul.mubr.bf16.gmra.mxu0 %v3055
        %v5059 = vpop.f32.mrf.mxu0
        %v5060 = vadd.f32 %v3502, %v5059
        %v5061 = vpop.f32.mrf.mxu0
        %v5062 = vadd.f32 %v3504, %v5061
        %v5063 = vpop.f32.mrf.mxu0
        %v5064 = vpop.f32.mrf.mxu0
        %5065 = vdwg.mxu0
        %5066 = vmatprep.subr.bf16.mxu0 0
        %5067 = vmatpush1.bf16.msra.mxu0 0
        %5068 = vmatprep.subr.bf16.mxu0 0
        %5069 = vmatpush1.bf16.msra.mxu0 0
        %5070 = vmatprep.subr.bf16.mxu0 0
        %5071 = vmatpush1.bf16.msra.mxu0 0
        %5072 = vmatprep.subr.bf16.mxu0 0
        %5073 = vmatpush1.bf16.msra.mxu0 0
        %5074 = vmatprep.subr.bf16.mxu0 %v1480
        %5075 = vmatpush1.bf16.msra.mxu0 %v1479
        %5076 = vmatprep.subr.bf16.mxu0 %v1404
        %5077 = vmatpush1.bf16.msra.mxu0 %v1403
        %5078 = vmatprep.subr.bf16.mxu0 %v1328
        %5079 = vmatpush1.bf16.msra.mxu0 %v1327
        %5080 = vmatprep.subr.bf16.mxu0 %v1252
        %5081 = vmatpush1.bf16.msra.mxu0 %v1251
        %5082 = vmatprep.subr.bf16.mxu0 0
        %5083 = vmatpush2.bf16.msra.mxu0 0
        %5084 = vmatprep.subr.bf16.mxu0 0
        %5085 = vmatpush2.bf16.msra.mxu0 0
        %5086 = vmatprep.subr.bf16.mxu0 0
        %5087 = vmatpush2.bf16.msra.mxu0 0
        %5088 = vmatprep.subr.bf16.mxu0 0
        %5089 = vmatpush2.bf16.msra.mxu0 0
        %5090 = vmatprep.subr.bf16.mxu0 0
        %5091 = vmatpush2.bf16.msra.mxu0 0
        %5092 = vmatprep.subr.bf16.mxu0 0
        %5093 = vmatpush2.bf16.msra.mxu0 0
        %5094 = vmatprep.subr.bf16.mxu0 0
        %5095 = vmatpush2.bf16.msra.mxu0 0
        %5096 = vmatprep.subr.bf16.mxu0 0
        %5097 = vmatpush2.bf16.msra.mxu0 0
        %5098 = vmatprep.mubr.bf16.mxu0 0
        %5099 = vmatmul.mubr.bf16.gmra.mxu0 %v3055
        %v5100 = vpop.f32.mrf.mxu0
        %v5101 = vadd.f32 %v3543, %v5100
        %v5102 = vpop.f32.mrf.mxu0
        %v5103 = vadd.f32 %v3545, %v5102
        %v5104 = vpop.f32.mrf.mxu0
        %v5105 = vpop.f32.mrf.mxu0
        %5106 = vdwg.mxu0
        %5107 = vmatprep.subr.bf16.mxu0 0
        %5108 = vmatpush1.bf16.msra.mxu0 0
        %5109 = vmatprep.subr.bf16.mxu0 0
        %5110 = vmatpush1.bf16.msra.mxu0 0
        %5111 = vmatprep.subr.bf16.mxu0 0
        %5112 = vmatpush1.bf16.msra.mxu0 0
        %5113 = vmatprep.subr.bf16.mxu0 0
        %5114 = vmatpush1.bf16.msra.mxu0 0
        %5115 = vmatprep.subr.bf16.mxu0 %v1482
        %5116 = vmatpush1.bf16.msra.mxu0 %v1481
        %5117 = vmatprep.subr.bf16.mxu0 %v1406
        %5118 = vmatpush1.bf16.msra.mxu0 %v1405
        %5119 = vmatprep.subr.bf16.mxu0 %v1330
        %5120 = vmatpush1.bf16.msra.mxu0 %v1329
        %5121 = vmatprep.subr.bf16.mxu0 %v1254
        %5122 = vmatpush1.bf16.msra.mxu0 %v1253
        %5123 = vmatprep.subr.bf16.mxu0 0
        %5124 = vmatpush2.bf16.msra.mxu0 0
        %5125 = vmatprep.subr.bf16.mxu0 0
        %5126 = vmatpush2.bf16.msra.mxu0 0
        %5127 = vmatprep.subr.bf16.mxu0 0
        %5128 = vmatpush2.bf16.msra.mxu0 0
        %5129 = vmatprep.subr.bf16.mxu0 0
        %5130 = vmatpush2.bf16.msra.mxu0 0
        %5131 = vmatprep.subr.bf16.mxu0 0
        %5132 = vmatpush2.bf16.msra.mxu0 0
        %5133 = vmatprep.subr.bf16.mxu0 0
        %5134 = vmatpush2.bf16.msra.mxu0 0
        %5135 = vmatprep.subr.bf16.mxu0 0
        %5136 = vmatpush2.bf16.msra.mxu0 0
        %5137 = vmatprep.subr.bf16.mxu0 0
        %5138 = vmatpush2.bf16.msra.mxu0 0
        %5139 = vmatprep.mubr.bf16.mxu0 0
        %5140 = vmatmul.mubr.bf16.gmra.mxu0 %v3055
        %v5141 = vpop.f32.mrf.mxu0
        %v5142 = vadd.f32 %v3584, %v5141
        %v5143 = vpop.f32.mrf.mxu0
        %v5144 = vadd.f32 %v3586, %v5143
        %v5145 = vpop.f32.mrf.mxu0
        %v5146 = vpop.f32.mrf.mxu0
        %5147 = vdwg.mxu0
        %5148 = vmatprep.subr.bf16.mxu0 0
        %5149 = vmatpush1.bf16.msra.mxu0 0
        %5150 = vmatprep.subr.bf16.mxu0 0
        %5151 = vmatpush1.bf16.msra.mxu0 0
        %5152 = vmatprep.subr.bf16.mxu0 0
        %5153 = vmatpush1.bf16.msra.mxu0 0
        %5154 = vmatprep.subr.bf16.mxu0 0
        %5155 = vmatpush1.bf16.msra.mxu0 0
        %5156 = vmatprep.subr.bf16.mxu0 %v1484
        %5157 = vmatpush1.bf16.msra.mxu0 %v1483
        %5158 = vmatprep.subr.bf16.mxu0 %v1408
        %5159 = vmatpush1.bf16.msra.mxu0 %v1407
        %5160 = vmatprep.subr.bf16.mxu0 %v1332
        %5161 = vmatpush1.bf16.msra.mxu0 %v1331
        %5162 = vmatprep.subr.bf16.mxu0 %v1256
        %5163 = vmatpush1.bf16.msra.mxu0 %v1255
        %5164 = vmatprep.subr.bf16.mxu0 0
        %5165 = vmatpush2.bf16.msra.mxu0 0
        %5166 = vmatprep.subr.bf16.mxu0 0
        %5167 = vmatpush2.bf16.msra.mxu0 0
        %5168 = vmatprep.subr.bf16.mxu0 0
        %5169 = vmatpush2.bf16.msra.mxu0 0
        %5170 = vmatprep.subr.bf16.mxu0 0
        %5171 = vmatpush2.bf16.msra.mxu0 0
        %5172 = vmatprep.subr.bf16.mxu0 0
        %5173 = vmatpush2.bf16.msra.mxu0 0
        %5174 = vmatprep.subr.bf16.mxu0 0
        %5175 = vmatpush2.bf16.msra.mxu0 0
        %5176 = vmatprep.subr.bf16.mxu0 0
        %5177 = vmatpush2.bf16.msra.mxu0 0
        %5178 = vmatprep.subr.bf16.mxu0 0
        %5179 = vmatpush2.bf16.msra.mxu0 0
        %5180 = vmatprep.mubr.bf16.mxu0 0
        %5181 = vmatmul.mubr.bf16.gmra.mxu0 %v3055
        %v5182 = vpop.f32.mrf.mxu0
        %v5183 = vadd.f32 %v3625, %v5182
        %v5184 = vpop.f32.mrf.mxu0
        %v5185 = vadd.f32 %v3627, %v5184
        %v5186 = vpop.f32.mrf.mxu0
        %v5187 = vpop.f32.mrf.mxu0
        %5188 = vdwg.mxu0
        %5189 = vmatprep.subr.bf16.mxu0 0
        %5190 = vmatpush1.bf16.msra.mxu0 0
        %5191 = vmatprep.subr.bf16.mxu0 0
        %5192 = vmatpush1.bf16.msra.mxu0 0
        %5193 = vmatprep.subr.bf16.mxu0 0
        %5194 = vmatpush1.bf16.msra.mxu0 0
        %5195 = vmatprep.subr.bf16.mxu0 0
        %5196 = vmatpush1.bf16.msra.mxu0 0
        %5197 = vmatprep.subr.bf16.mxu0 %v1486
        %5198 = vmatpush1.bf16.msra.mxu0 %v1485
        %5199 = vmatprep.subr.bf16.mxu0 %v1410
        %5200 = vmatpush1.bf16.msra.mxu0 %v1409
        %5201 = vmatprep.subr.bf16.mxu0 %v1334
        %5202 = vmatpush1.bf16.msra.mxu0 %v1333
        %5203 = vmatprep.subr.bf16.mxu0 %v1258
        %5204 = vmatpush1.bf16.msra.mxu0 %v1257
        %5205 = vmatprep.subr.bf16.mxu0 0
        %5206 = vmatpush2.bf16.msra.mxu0 0
        %5207 = vmatprep.subr.bf16.mxu0 0
        %5208 = vmatpush2.bf16.msra.mxu0 0
        %5209 = vmatprep.subr.bf16.mxu0 0
        %5210 = vmatpush2.bf16.msra.mxu0 0
        %5211 = vmatprep.subr.bf16.mxu0 0
        %5212 = vmatpush2.bf16.msra.mxu0 0
        %5213 = vmatprep.subr.bf16.mxu0 0
        %5214 = vmatpush2.bf16.msra.mxu0 0
        %5215 = vmatprep.subr.bf16.mxu0 0
        %5216 = vmatpush2.bf16.msra.mxu0 0
        %5217 = vmatprep.subr.bf16.mxu0 0
        %5218 = vmatpush2.bf16.msra.mxu0 0
        %5219 = vmatprep.subr.bf16.mxu0 0
        %5220 = vmatpush2.bf16.msra.mxu0 0
        %5221 = vmatprep.mubr.bf16.mxu0 0
        %5222 = vmatmul.mubr.bf16.gmra.mxu0 %v3055
        %v5223 = vpop.f32.mrf.mxu0
        %v5224 = vadd.f32 %v3666, %v5223
        %v5225 = vpop.f32.mrf.mxu0
        %v5226 = vadd.f32 %v3668, %v5225
        %v5227 = vpop.f32.mrf.mxu0
        %v5228 = vpop.f32.mrf.mxu0
        %5229 = vdwg.mxu0
        %5230 = vmatprep.subr.bf16.mxu0 0
        %5231 = vmatpush1.bf16.msra.mxu0 0
        %5232 = vmatprep.subr.bf16.mxu0 0
        %5233 = vmatpush1.bf16.msra.mxu0 0
        %5234 = vmatprep.subr.bf16.mxu0 0
        %5235 = vmatpush1.bf16.msra.mxu0 0
        %5236 = vmatprep.subr.bf16.mxu0 0
        %5237 = vmatpush1.bf16.msra.mxu0 0
        %5238 = vmatprep.subr.bf16.mxu0 %v1488
        %5239 = vmatpush1.bf16.msra.mxu0 %v1487
        %5240 = vmatprep.subr.bf16.mxu0 %v1412
        %5241 = vmatpush1.bf16.msra.mxu0 %v1411
        %5242 = vmatprep.subr.bf16.mxu0 %v1336
        %5243 = vmatpush1.bf16.msra.mxu0 %v1335
        %5244 = vmatprep.subr.bf16.mxu0 %v1260
        %5245 = vmatpush1.bf16.msra.mxu0 %v1259
        %5246 = vmatprep.subr.bf16.mxu0 0
        %5247 = vmatpush2.bf16.msra.mxu0 0
        %5248 = vmatprep.subr.bf16.mxu0 0
        %5249 = vmatpush2.bf16.msra.mxu0 0
        %5250 = vmatprep.subr.bf16.mxu0 0
        %5251 = vmatpush2.bf16.msra.mxu0 0
        %5252 = vmatprep.subr.bf16.mxu0 0
        %5253 = vmatpush2.bf16.msra.mxu0 0
        %5254 = vmatprep.subr.bf16.mxu0 0
        %5255 = vmatpush2.bf16.msra.mxu0 0
        %5256 = vmatprep.subr.bf16.mxu0 0
        %5257 = vmatpush2.bf16.msra.mxu0 0
        %5258 = vmatprep.subr.bf16.mxu0 0
        %5259 = vmatpush2.bf16.msra.mxu0 0
        %5260 = vmatprep.subr.bf16.mxu0 0
        %5261 = vmatpush2.bf16.msra.mxu0 0
        %5262 = vmatprep.mubr.bf16.mxu0 0
        %5263 = vmatmul.mubr.bf16.gmra.mxu0 %v3055
        %v5264 = vpop.f32.mrf.mxu0
        %v5265 = vadd.f32 %v3707, %v5264
        %v5266 = vpop.f32.mrf.mxu0
        %v5267 = vadd.f32 %v3709, %v5266
        %v5268 = vpop.f32.mrf.mxu0
        %v5269 = vpop.f32.mrf.mxu0
        %5270 = vdwg.mxu0
        %5271 = vmatprep.subr.bf16.mxu0 0
        %5272 = vmatpush1.bf16.msra.mxu0 0
        %5273 = vmatprep.subr.bf16.mxu0 0
        %5274 = vmatpush1.bf16.msra.mxu0 0
        %5275 = vmatprep.subr.bf16.mxu0 0
        %5276 = vmatpush1.bf16.msra.mxu0 0
        %5277 = vmatprep.subr.bf16.mxu0 0
        %5278 = vmatpush1.bf16.msra.mxu0 0
        %5279 = vmatprep.subr.bf16.mxu0 %v1490
        %5280 = vmatpush1.bf16.msra.mxu0 %v1489
        %5281 = vmatprep.subr.bf16.mxu0 %v1414
        %5282 = vmatpush1.bf16.msra.mxu0 %v1413
        %5283 = vmatprep.subr.bf16.mxu0 %v1338
        %5284 = vmatpush1.bf16.msra.mxu0 %v1337
        %5285 = vmatprep.subr.bf16.mxu0 %v1262
        %5286 = vmatpush1.bf16.msra.mxu0 %v1261
        %5287 = vmatprep.subr.bf16.mxu0 0
        %5288 = vmatpush2.bf16.msra.mxu0 0
        %5289 = vmatprep.subr.bf16.mxu0 0
        %5290 = vmatpush2.bf16.msra.mxu0 0
        %5291 = vmatprep.subr.bf16.mxu0 0
        %5292 = vmatpush2.bf16.msra.mxu0 0
        %5293 = vmatprep.subr.bf16.mxu0 0
        %5294 = vmatpush2.bf16.msra.mxu0 0
        %5295 = vmatprep.subr.bf16.mxu0 0
        %5296 = vmatpush2.bf16.msra.mxu0 0
        %5297 = vmatprep.subr.bf16.mxu0 0
        %5298 = vmatpush2.bf16.msra.mxu0 0
        %5299 = vmatprep.subr.bf16.mxu0 0
        %5300 = vmatpush2.bf16.msra.mxu0 0
        %5301 = vmatprep.subr.bf16.mxu0 0
        %5302 = vmatpush2.bf16.msra.mxu0 0
        %5303 = vmatprep.mubr.bf16.mxu0 0
        %5304 = vmatmul.mubr.bf16.gmra.mxu0 %v3055
        %v5305 = vpop.f32.mrf.mxu0
        %v5306 = vadd.f32 %v3748, %v5305
        %v5307 = vpop.f32.mrf.mxu0
        %v5308 = vadd.f32 %v3750, %v5307
        %v5309 = vpop.f32.mrf.mxu0
        %v5310 = vpop.f32.mrf.mxu0
        %5311 = vdwg.mxu0
        %5312 = vmatprep.subr.bf16.mxu0 0
        %5313 = vmatpush1.bf16.msra.mxu0 0
        %5314 = vmatprep.subr.bf16.mxu0 0
        %5315 = vmatpush1.bf16.msra.mxu0 0
        %5316 = vmatprep.subr.bf16.mxu0 0
        %5317 = vmatpush1.bf16.msra.mxu0 0
        %5318 = vmatprep.subr.bf16.mxu0 0
        %5319 = vmatpush1.bf16.msra.mxu0 0
        %5320 = vmatprep.subr.bf16.mxu0 %v1492
        %5321 = vmatpush1.bf16.msra.mxu0 %v1491
        %5322 = vmatprep.subr.bf16.mxu0 %v1416
        %5323 = vmatpush1.bf16.msra.mxu0 %v1415
        %5324 = vmatprep.subr.bf16.mxu0 %v1340
        %5325 = vmatpush1.bf16.msra.mxu0 %v1339
        %5326 = vmatprep.subr.bf16.mxu0 %v1264
        %5327 = vmatpush1.bf16.msra.mxu0 %v1263
        %5328 = vmatprep.subr.bf16.mxu0 0
        %5329 = vmatpush2.bf16.msra.mxu0 0
        %5330 = vmatprep.subr.bf16.mxu0 0
        %5331 = vmatpush2.bf16.msra.mxu0 0
        %5332 = vmatprep.subr.bf16.mxu0 0
        %5333 = vmatpush2.bf16.msra.mxu0 0
        %5334 = vmatprep.subr.bf16.mxu0 0
        %5335 = vmatpush2.bf16.msra.mxu0 0
        %5336 = vmatprep.subr.bf16.mxu0 0
        %5337 = vmatpush2.bf16.msra.mxu0 0
        %5338 = vmatprep.subr.bf16.mxu0 0
        %5339 = vmatpush2.bf16.msra.mxu0 0
        %5340 = vmatprep.subr.bf16.mxu0 0
        %5341 = vmatpush2.bf16.msra.mxu0 0
        %5342 = vmatprep.subr.bf16.mxu0 0
        %5343 = vmatpush2.bf16.msra.mxu0 0
        %5344 = vmatprep.mubr.bf16.mxu0 0
        %5345 = vmatmul.mubr.bf16.gmra.mxu0 %v3055
        %v5346 = vpop.f32.mrf.mxu0
        %v5347 = vadd.f32 %v3789, %v5346
        %v5348 = vpop.f32.mrf.mxu0
        %v5349 = vadd.f32 %v3791, %v5348
        %v5350 = vpop.f32.mrf.mxu0
        %v5351 = vpop.f32.mrf.mxu0
        %5352 = vdwg.mxu0
        %5353 = vmatprep.subr.bf16.mxu0 0
        %5354 = vmatpush1.bf16.msra.mxu0 0
        %5355 = vmatprep.subr.bf16.mxu0 0
        %5356 = vmatpush1.bf16.msra.mxu0 0
        %5357 = vmatprep.subr.bf16.mxu0 0
        %5358 = vmatpush1.bf16.msra.mxu0 0
        %5359 = vmatprep.subr.bf16.mxu0 0
        %5360 = vmatpush1.bf16.msra.mxu0 0
        %5361 = vmatprep.subr.bf16.mxu0 %v1494
        %5362 = vmatpush1.bf16.msra.mxu0 %v1493
        %5363 = vmatprep.subr.bf16.mxu0 %v1418
        %5364 = vmatpush1.bf16.msra.mxu0 %v1417
        %5365 = vmatprep.subr.bf16.mxu0 %v1342
        %5366 = vmatpush1.bf16.msra.mxu0 %v1341
        %5367 = vmatprep.subr.bf16.mxu0 %v1266
        %5368 = vmatpush1.bf16.msra.mxu0 %v1265
        %5369 = vmatprep.subr.bf16.mxu0 0
        %5370 = vmatpush2.bf16.msra.mxu0 0
        %5371 = vmatprep.subr.bf16.mxu0 0
        %5372 = vmatpush2.bf16.msra.mxu0 0
        %5373 = vmatprep.subr.bf16.mxu0 0
        %5374 = vmatpush2.bf16.msra.mxu0 0
        %5375 = vmatprep.subr.bf16.mxu0 0
        %5376 = vmatpush2.bf16.msra.mxu0 0
        %5377 = vmatprep.subr.bf16.mxu0 0
        %5378 = vmatpush2.bf16.msra.mxu0 0
        %5379 = vmatprep.subr.bf16.mxu0 0
        %5380 = vmatpush2.bf16.msra.mxu0 0
        %5381 = vmatprep.subr.bf16.mxu0 0
        %5382 = vmatpush2.bf16.msra.mxu0 0
        %5383 = vmatprep.subr.bf16.mxu0 0
        %5384 = vmatpush2.bf16.msra.mxu0 0
        %5385 = vmatprep.mubr.bf16.mxu0 0
        %5386 = vmatmul.mubr.bf16.gmra.mxu0 %v3055
        %v5387 = vpop.f32.mrf.mxu0
        %v5388 = vadd.f32 %v3830, %v5387
        %v5389 = vpop.f32.mrf.mxu0
        %v5390 = vadd.f32 %v3832, %v5389
        %v5391 = vpop.f32.mrf.mxu0
        %v5392 = vpop.f32.mrf.mxu0
        %5393 = vdwg.mxu0
        %5394 = vmatprep.subr.bf16.mxu0 0
        %5395 = vmatpush1.bf16.msra.mxu0 0
        %5396 = vmatprep.subr.bf16.mxu0 0
        %5397 = vmatpush1.bf16.msra.mxu0 0
        %5398 = vmatprep.subr.bf16.mxu0 0
        %5399 = vmatpush1.bf16.msra.mxu0 0
        %5400 = vmatprep.subr.bf16.mxu0 0
        %5401 = vmatpush1.bf16.msra.mxu0 0
        %5402 = vmatprep.subr.bf16.mxu0 %v1496
        %5403 = vmatpush1.bf16.msra.mxu0 %v1495
        %5404 = vmatprep.subr.bf16.mxu0 %v1420
        %5405 = vmatpush1.bf16.msra.mxu0 %v1419
        %5406 = vmatprep.subr.bf16.mxu0 %v1344
        %5407 = vmatpush1.bf16.msra.mxu0 %v1343
        %5408 = vmatprep.subr.bf16.mxu0 %v1268
        %5409 = vmatpush1.bf16.msra.mxu0 %v1267
        %5410 = vmatprep.subr.bf16.mxu0 0
        %5411 = vmatpush2.bf16.msra.mxu0 0
        %5412 = vmatprep.subr.bf16.mxu0 0
        %5413 = vmatpush2.bf16.msra.mxu0 0
        %5414 = vmatprep.subr.bf16.mxu0 0
        %5415 = vmatpush2.bf16.msra.mxu0 0
        %5416 = vmatprep.subr.bf16.mxu0 0
        %5417 = vmatpush2.bf16.msra.mxu0 0
        %5418 = vmatprep.subr.bf16.mxu0 0
        %5419 = vmatpush2.bf16.msra.mxu0 0
        %5420 = vmatprep.subr.bf16.mxu0 0
        %5421 = vmatpush2.bf16.msra.mxu0 0
        %5422 = vmatprep.subr.bf16.mxu0 0
        %5423 = vmatpush2.bf16.msra.mxu0 0
        %5424 = vmatprep.subr.bf16.mxu0 0
        %5425 = vmatpush2.bf16.msra.mxu0 0
        %5426 = vmatprep.mubr.bf16.mxu0 0
        %5427 = vmatmul.mubr.bf16.gmra.mxu0 %v3055
        %v5428 = vpop.f32.mrf.mxu0
        %v5429 = vadd.f32 %v3871, %v5428
        %v5430 = vpop.f32.mrf.mxu0
        %v5431 = vadd.f32 %v3873, %v5430
        %v5432 = vpop.f32.mrf.mxu0
        %v5433 = vpop.f32.mrf.mxu0
        %5434 = vdwg.mxu0
        %5435 = vmatprep.subr.bf16.mxu0 0
        %5436 = vmatpush1.bf16.msra.mxu0 0
        %5437 = vmatprep.subr.bf16.mxu0 0
        %5438 = vmatpush1.bf16.msra.mxu0 0
        %5439 = vmatprep.subr.bf16.mxu0 0
        %5440 = vmatpush1.bf16.msra.mxu0 0
        %5441 = vmatprep.subr.bf16.mxu0 0
        %5442 = vmatpush1.bf16.msra.mxu0 0
        %5443 = vmatprep.subr.bf16.mxu0 %v1498
        %5444 = vmatpush1.bf16.msra.mxu0 %v1497
        %5445 = vmatprep.subr.bf16.mxu0 %v1422
        %5446 = vmatpush1.bf16.msra.mxu0 %v1421
        %5447 = vmatprep.subr.bf16.mxu0 %v1346
        %5448 = vmatpush1.bf16.msra.mxu0 %v1345
        %5449 = vmatprep.subr.bf16.mxu0 %v1270
        %5450 = vmatpush1.bf16.msra.mxu0 %v1269
        %5451 = vmatprep.subr.bf16.mxu0 0
        %5452 = vmatpush2.bf16.msra.mxu0 0
        %5453 = vmatprep.subr.bf16.mxu0 0
        %5454 = vmatpush2.bf16.msra.mxu0 0
        %5455 = vmatprep.subr.bf16.mxu0 0
        %5456 = vmatpush2.bf16.msra.mxu0 0
        %5457 = vmatprep.subr.bf16.mxu0 0
        %5458 = vmatpush2.bf16.msra.mxu0 0
        %5459 = vmatprep.subr.bf16.mxu0 0
        %5460 = vmatpush2.bf16.msra.mxu0 0
        %5461 = vmatprep.subr.bf16.mxu0 0
        %5462 = vmatpush2.bf16.msra.mxu0 0
        %5463 = vmatprep.subr.bf16.mxu0 0
        %5464 = vmatpush2.bf16.msra.mxu0 0
        %5465 = vmatprep.subr.bf16.mxu0 0
        %5466 = vmatpush2.bf16.msra.mxu0 0
        %5467 = vmatprep.mubr.bf16.mxu0 0
        %5468 = vmatmul.mubr.bf16.gmra.mxu0 %v3055
        %v5469 = vpop.f32.mrf.mxu0
        %v5470 = vadd.f32 %v3912, %v5469
        %v5471 = vpop.f32.mrf.mxu0
        %v5472 = vadd.f32 %v3914, %v5471
        %v5473 = vpop.f32.mrf.mxu0
        %v5474 = vpop.f32.mrf.mxu0
        %5475 = vdwg.mxu0
        %5476 = vmatprep.subr.bf16.mxu0 0
        %5477 = vmatpush1.bf16.msra.mxu0 0
        %5478 = vmatprep.subr.bf16.mxu0 0
        %5479 = vmatpush1.bf16.msra.mxu0 0
        %5480 = vmatprep.subr.bf16.mxu0 0
        %5481 = vmatpush1.bf16.msra.mxu0 0
        %5482 = vmatprep.subr.bf16.mxu0 0
        %5483 = vmatpush1.bf16.msra.mxu0 0
        %5484 = vmatprep.subr.bf16.mxu0 %v1500
        %5485 = vmatpush1.bf16.msra.mxu0 %v1499
        %5486 = vmatprep.subr.bf16.mxu0 %v1424
        %5487 = vmatpush1.bf16.msra.mxu0 %v1423
        %5488 = vmatprep.subr.bf16.mxu0 %v1348
        %5489 = vmatpush1.bf16.msra.mxu0 %v1347
        %5490 = vmatprep.subr.bf16.mxu0 %v1272
        %5491 = vmatpush1.bf16.msra.mxu0 %v1271
        %5492 = vmatprep.subr.bf16.mxu0 0
        %5493 = vmatpush2.bf16.msra.mxu0 0
        %5494 = vmatprep.subr.bf16.mxu0 0
        %5495 = vmatpush2.bf16.msra.mxu0 0
        %5496 = vmatprep.subr.bf16.mxu0 0
        %5497 = vmatpush2.bf16.msra.mxu0 0
        %5498 = vmatprep.subr.bf16.mxu0 0
        %5499 = vmatpush2.bf16.msra.mxu0 0
        %5500 = vmatprep.subr.bf16.mxu0 0
        %5501 = vmatpush2.bf16.msra.mxu0 0
        %5502 = vmatprep.subr.bf16.mxu0 0
        %5503 = vmatpush2.bf16.msra.mxu0 0
        %5504 = vmatprep.subr.bf16.mxu0 0
        %5505 = vmatpush2.bf16.msra.mxu0 0
        %5506 = vmatprep.subr.bf16.mxu0 0
        %5507 = vmatpush2.bf16.msra.mxu0 0
        %5508 = vmatprep.mubr.bf16.mxu0 0
        %5509 = vmatmul.mubr.bf16.gmra.mxu0 %v3055
        %v5510 = vpop.f32.mrf.mxu0
        %v5511 = vadd.f32 %v3953, %v5510
        %v5512 = vpop.f32.mrf.mxu0
        %v5513 = vadd.f32 %v3955, %v5512
        %v5514 = vpop.f32.mrf.mxu0
        %v5515 = vpop.f32.mrf.mxu0
        %5516 = vdwg.mxu0
        %5517 = vmatprep.subr.bf16.mxu0 0
        %5518 = vmatpush1.bf16.msra.mxu0 0
        %5519 = vmatprep.subr.bf16.mxu0 0
        %5520 = vmatpush1.bf16.msra.mxu0 0
        %5521 = vmatprep.subr.bf16.mxu0 0
        %5522 = vmatpush1.bf16.msra.mxu0 0
        %5523 = vmatprep.subr.bf16.mxu0 0
        %5524 = vmatpush1.bf16.msra.mxu0 0
        %5525 = vmatprep.subr.bf16.mxu0 %v1502
        %5526 = vmatpush1.bf16.msra.mxu0 %v1501
        %5527 = vmatprep.subr.bf16.mxu0 %v1426
        %5528 = vmatpush1.bf16.msra.mxu0 %v1425
        %5529 = vmatprep.subr.bf16.mxu0 %v1350
        %5530 = vmatpush1.bf16.msra.mxu0 %v1349
        %5531 = vmatprep.subr.bf16.mxu0 %v1274
        %5532 = vmatpush1.bf16.msra.mxu0 %v1273
        %5533 = vmatprep.subr.bf16.mxu0 0
        %5534 = vmatpush2.bf16.msra.mxu0 0
        %5535 = vmatprep.subr.bf16.mxu0 0
        %5536 = vmatpush2.bf16.msra.mxu0 0
        %5537 = vmatprep.subr.bf16.mxu0 0
        %5538 = vmatpush2.bf16.msra.mxu0 0
        %5539 = vmatprep.subr.bf16.mxu0 0
        %5540 = vmatpush2.bf16.msra.mxu0 0
        %5541 = vmatprep.subr.bf16.mxu0 0
        %5542 = vmatpush2.bf16.msra.mxu0 0
        %5543 = vmatprep.subr.bf16.mxu0 0
        %5544 = vmatpush2.bf16.msra.mxu0 0
        %5545 = vmatprep.subr.bf16.mxu0 0
        %5546 = vmatpush2.bf16.msra.mxu0 0
        %5547 = vmatprep.subr.bf16.mxu0 0
        %5548 = vmatpush2.bf16.msra.mxu0 0
        %5549 = vmatprep.mubr.bf16.mxu0 0
        %5550 = vmatmul.mubr.bf16.gmra.mxu0 %v3055
        %v5551 = vpop.f32.mrf.mxu0
        %v5552 = vadd.f32 %v3994, %v5551
        %v5553 = vpop.f32.mrf.mxu0
        %v5554 = vadd.f32 %v3996, %v5553
        %v5555 = vpop.f32.mrf.mxu0
        %v5556 = vpop.f32.mrf.mxu0
        %5557 = vdwg.mxu0
        %5558 = vmatprep.subr.bf16.mxu0 0
        %5559 = vmatpush1.bf16.msra.mxu0 0
        %5560 = vmatprep.subr.bf16.mxu0 0
        %5561 = vmatpush1.bf16.msra.mxu0 0
        %5562 = vmatprep.subr.bf16.mxu0 0
        %5563 = vmatpush1.bf16.msra.mxu0 0
        %5564 = vmatprep.subr.bf16.mxu0 0
        %5565 = vmatpush1.bf16.msra.mxu0 0
        %5566 = vmatprep.subr.bf16.mxu0 %v1504
        %5567 = vmatpush1.bf16.msra.mxu0 %v1503
        %5568 = vmatprep.subr.bf16.mxu0 %v1428
        %5569 = vmatpush1.bf16.msra.mxu0 %v1427
        %5570 = vmatprep.subr.bf16.mxu0 %v1352
        %5571 = vmatpush1.bf16.msra.mxu0 %v1351
        %5572 = vmatprep.subr.bf16.mxu0 %v1276
        %5573 = vmatpush1.bf16.msra.mxu0 %v1275
        %5574 = vmatprep.subr.bf16.mxu0 0
        %5575 = vmatpush2.bf16.msra.mxu0 0
        %5576 = vmatprep.subr.bf16.mxu0 0
        %5577 = vmatpush2.bf16.msra.mxu0 0
        %5578 = vmatprep.subr.bf16.mxu0 0
        %5579 = vmatpush2.bf16.msra.mxu0 0
        %5580 = vmatprep.subr.bf16.mxu0 0
        %5581 = vmatpush2.bf16.msra.mxu0 0
        %5582 = vmatprep.subr.bf16.mxu0 0
        %5583 = vmatpush2.bf16.msra.mxu0 0
        %5584 = vmatprep.subr.bf16.mxu0 0
        %5585 = vmatpush2.bf16.msra.mxu0 0
        %5586 = vmatprep.subr.bf16.mxu0 0
        %5587 = vmatpush2.bf16.msra.mxu0 0
        %5588 = vmatprep.subr.bf16.mxu0 0
        %5589 = vmatpush2.bf16.msra.mxu0 0
        %5590 = vmatprep.mubr.bf16.mxu0 0
        %5591 = vmatmul.mubr.bf16.gmra.mxu0 %v3055
        %v5592 = vpop.f32.mrf.mxu0
        %v5593 = vadd.f32 %v4035, %v5592
        %v5594 = vpop.f32.mrf.mxu0
        %v5595 = vadd.f32 %v4037, %v5594
        %v5596 = vpop.f32.mrf.mxu0
        %v5597 = vpop.f32.mrf.mxu0
        %5598 = vdwg.mxu0
        %5599 = vmatprep.subr.bf16.mxu0 0
        %5600 = vmatpush1.bf16.msra.mxu0 0
        %5601 = vmatprep.subr.bf16.mxu0 0
        %5602 = vmatpush1.bf16.msra.mxu0 0
        %5603 = vmatprep.subr.bf16.mxu0 0
        %5604 = vmatpush1.bf16.msra.mxu0 0
        %5605 = vmatprep.subr.bf16.mxu0 0
        %5606 = vmatpush1.bf16.msra.mxu0 0
        %5607 = vmatprep.subr.bf16.mxu0 %v1506
        %5608 = vmatpush1.bf16.msra.mxu0 %v1505
        %5609 = vmatprep.subr.bf16.mxu0 %v1430
        %5610 = vmatpush1.bf16.msra.mxu0 %v1429
        %5611 = vmatprep.subr.bf16.mxu0 %v1354
        %5612 = vmatpush1.bf16.msra.mxu0 %v1353
        %5613 = vmatprep.subr.bf16.mxu0 %v1278
        %5614 = vmatpush1.bf16.msra.mxu0 %v1277
        %5615 = vmatprep.subr.bf16.mxu0 0
        %5616 = vmatpush2.bf16.msra.mxu0 0
        %5617 = vmatprep.subr.bf16.mxu0 0
        %5618 = vmatpush2.bf16.msra.mxu0 0
        %5619 = vmatprep.subr.bf16.mxu0 0
        %5620 = vmatpush2.bf16.msra.mxu0 0
        %5621 = vmatprep.subr.bf16.mxu0 0
        %5622 = vmatpush2.bf16.msra.mxu0 0
        %5623 = vmatprep.subr.bf16.mxu0 0
        %5624 = vmatpush2.bf16.msra.mxu0 0
        %5625 = vmatprep.subr.bf16.mxu0 0
        %5626 = vmatpush2.bf16.msra.mxu0 0
        %5627 = vmatprep.subr.bf16.mxu0 0
        %5628 = vmatpush2.bf16.msra.mxu0 0
        %5629 = vmatprep.subr.bf16.mxu0 0
        %5630 = vmatpush2.bf16.msra.mxu0 0
        %5631 = vmatprep.mubr.bf16.mxu0 0
        %5632 = vmatmul.mubr.bf16.gmra.mxu0 %v3055
        %v5633 = vpop.f32.mrf.mxu0
        %v5634 = vadd.f32 %v4076, %v5633
        %v5635 = vpop.f32.mrf.mxu0
        %v5636 = vadd.f32 %v4078, %v5635
        %v5637 = vpop.f32.mrf.mxu0
        %v5638 = vpop.f32.mrf.mxu0
        %5639 = vdwg.mxu0
        %5640 = vmatprep.subr.bf16.mxu0 0
        %5641 = vmatpush1.bf16.msra.mxu0 0
        %5642 = vmatprep.subr.bf16.mxu0 0
        %5643 = vmatpush1.bf16.msra.mxu0 0
        %5644 = vmatprep.subr.bf16.mxu0 0
        %5645 = vmatpush1.bf16.msra.mxu0 0
        %5646 = vmatprep.subr.bf16.mxu0 0
        %5647 = vmatpush1.bf16.msra.mxu0 0
        %5648 = vmatprep.subr.bf16.mxu0 %v1508
        %5649 = vmatpush1.bf16.msra.mxu0 %v1507
        %5650 = vmatprep.subr.bf16.mxu0 %v1432
        %5651 = vmatpush1.bf16.msra.mxu0 %v1431
        %5652 = vmatprep.subr.bf16.mxu0 %v1356
        %5653 = vmatpush1.bf16.msra.mxu0 %v1355
        %5654 = vmatprep.subr.bf16.mxu0 %v1280
        %5655 = vmatpush1.bf16.msra.mxu0 %v1279
        %5656 = vmatprep.subr.bf16.mxu0 0
        %5657 = vmatpush2.bf16.msra.mxu0 0
        %5658 = vmatprep.subr.bf16.mxu0 0
        %5659 = vmatpush2.bf16.msra.mxu0 0
        %5660 = vmatprep.subr.bf16.mxu0 0
        %5661 = vmatpush2.bf16.msra.mxu0 0
        %5662 = vmatprep.subr.bf16.mxu0 0
        %5663 = vmatpush2.bf16.msra.mxu0 0
        %5664 = vmatprep.subr.bf16.mxu0 0
        %5665 = vmatpush2.bf16.msra.mxu0 0
        %5666 = vmatprep.subr.bf16.mxu0 0
        %5667 = vmatpush2.bf16.msra.mxu0 0
        %5668 = vmatprep.subr.bf16.mxu0 0
        %5669 = vmatpush2.bf16.msra.mxu0 0
        %5670 = vmatprep.subr.bf16.mxu0 0
        %5671 = vmatpush2.bf16.msra.mxu0 0
        %5672 = vmatprep.mubr.bf16.mxu0 0
        %5673 = vmatmul.mubr.bf16.gmra.mxu0 %v3055
        %v5674 = vpop.f32.mrf.mxu0
        %v5675 = vadd.f32 %v4117, %v5674
        %v5676 = vpop.f32.mrf.mxu0
        %v5677 = vadd.f32 %v4119, %v5676
        %v5678 = vpop.f32.mrf.mxu0
        %v5679 = vpop.f32.mrf.mxu0
        %5680 = vdwg.mxu0
        %5681 = vmatprep.subr.bf16.mxu0 0
        %5682 = vmatpush1.bf16.msra.mxu0 0
        %5683 = vmatprep.subr.bf16.mxu0 0
        %5684 = vmatpush1.bf16.msra.mxu0 0
        %5685 = vmatprep.subr.bf16.mxu0 0
        %5686 = vmatpush1.bf16.msra.mxu0 0
        %5687 = vmatprep.subr.bf16.mxu0 0
        %5688 = vmatpush1.bf16.msra.mxu0 0
        %5689 = vmatprep.subr.bf16.mxu0 %v1510
        %5690 = vmatpush1.bf16.msra.mxu0 %v1509
        %5691 = vmatprep.subr.bf16.mxu0 %v1434
        %5692 = vmatpush1.bf16.msra.mxu0 %v1433
        %5693 = vmatprep.subr.bf16.mxu0 %v1358
        %5694 = vmatpush1.bf16.msra.mxu0 %v1357
        %5695 = vmatprep.subr.bf16.mxu0 %v1282
        %5696 = vmatpush1.bf16.msra.mxu0 %v1281
        %5697 = vmatprep.subr.bf16.mxu0 0
        %5698 = vmatpush2.bf16.msra.mxu0 0
        %5699 = vmatprep.subr.bf16.mxu0 0
        %5700 = vmatpush2.bf16.msra.mxu0 0
        %5701 = vmatprep.subr.bf16.mxu0 0
        %5702 = vmatpush2.bf16.msra.mxu0 0
        %5703 = vmatprep.subr.bf16.mxu0 0
        %5704 = vmatpush2.bf16.msra.mxu0 0
        %5705 = vmatprep.subr.bf16.mxu0 0
        %5706 = vmatpush2.bf16.msra.mxu0 0
        %5707 = vmatprep.subr.bf16.mxu0 0
        %5708 = vmatpush2.bf16.msra.mxu0 0
        %5709 = vmatprep.subr.bf16.mxu0 0
        %5710 = vmatpush2.bf16.msra.mxu0 0
        %5711 = vmatprep.subr.bf16.mxu0 0
        %5712 = vmatpush2.bf16.msra.mxu0 0
        %5713 = vmatprep.mubr.bf16.mxu0 0
        %5714 = vmatmul.mubr.bf16.gmra.mxu0 %v3055
        %v5715 = vpop.f32.mrf.mxu0
        %v5716 = vadd.f32 %v4158, %v5715
        %v5717 = vpop.f32.mrf.mxu0
        %v5718 = vadd.f32 %v4160, %v5717
        %v5719 = vpop.f32.mrf.mxu0
        %v5720 = vpop.f32.mrf.mxu0
        %5721 = vdwg.mxu0
        %5722 = vmatprep.subr.bf16.mxu0 0
        %5723 = vmatpush1.bf16.msra.mxu0 0
        %5724 = vmatprep.subr.bf16.mxu0 0
        %5725 = vmatpush1.bf16.msra.mxu0 0
        %5726 = vmatprep.subr.bf16.mxu0 0
        %5727 = vmatpush1.bf16.msra.mxu0 0
        %5728 = vmatprep.subr.bf16.mxu0 0
        %5729 = vmatpush1.bf16.msra.mxu0 0
        %5730 = vmatprep.subr.bf16.mxu0 %v1512
        %5731 = vmatpush1.bf16.msra.mxu0 %v1511
        %5732 = vmatprep.subr.bf16.mxu0 %v1436
        %5733 = vmatpush1.bf16.msra.mxu0 %v1435
        %5734 = vmatprep.subr.bf16.mxu0 %v1360
        %5735 = vmatpush1.bf16.msra.mxu0 %v1359
        %5736 = vmatprep.subr.bf16.mxu0 %v1284
        %5737 = vmatpush1.bf16.msra.mxu0 %v1283
        %5738 = vmatprep.subr.bf16.mxu0 0
        %5739 = vmatpush2.bf16.msra.mxu0 0
        %5740 = vmatprep.subr.bf16.mxu0 0
        %5741 = vmatpush2.bf16.msra.mxu0 0
        %5742 = vmatprep.subr.bf16.mxu0 0
        %5743 = vmatpush2.bf16.msra.mxu0 0
        %5744 = vmatprep.subr.bf16.mxu0 0
        %5745 = vmatpush2.bf16.msra.mxu0 0
        %5746 = vmatprep.subr.bf16.mxu0 0
        %5747 = vmatpush2.bf16.msra.mxu0 0
        %5748 = vmatprep.subr.bf16.mxu0 0
        %5749 = vmatpush2.bf16.msra.mxu0 0
        %5750 = vmatprep.subr.bf16.mxu0 0
        %5751 = vmatpush2.bf16.msra.mxu0 0
        %5752 = vmatprep.subr.bf16.mxu0 0
        %5753 = vmatpush2.bf16.msra.mxu0 0
        %5754 = vmatprep.mubr.bf16.mxu0 0
        %5755 = vmatmul.mubr.bf16.gmra.mxu0 %v3055
        %v5756 = vpop.f32.mrf.mxu0
        %v5757 = vadd.f32 %v4199, %v5756
        %v5758 = vpop.f32.mrf.mxu0
        %v5759 = vadd.f32 %v4201, %v5758
        %v5760 = vpop.f32.mrf.mxu0
        %v5761 = vpop.f32.mrf.mxu0
        %5762 = vdwg.mxu0
        %5763 = vmatprep.subr.bf16.mxu0 0
        %5764 = vmatpush1.bf16.msra.mxu0 0
        %5765 = vmatprep.subr.bf16.mxu0 0
        %5766 = vmatpush1.bf16.msra.mxu0 0
        %5767 = vmatprep.subr.bf16.mxu0 0
        %5768 = vmatpush1.bf16.msra.mxu0 0
        %5769 = vmatprep.subr.bf16.mxu0 0
        %5770 = vmatpush1.bf16.msra.mxu0 0
        %5771 = vmatprep.subr.bf16.mxu0 %v1514
        %5772 = vmatpush1.bf16.msra.mxu0 %v1513
        %5773 = vmatprep.subr.bf16.mxu0 %v1438
        %5774 = vmatpush1.bf16.msra.mxu0 %v1437
        %5775 = vmatprep.subr.bf16.mxu0 %v1362
        %5776 = vmatpush1.bf16.msra.mxu0 %v1361
        %5777 = vmatprep.subr.bf16.mxu0 %v1286
        %5778 = vmatpush1.bf16.msra.mxu0 %v1285
        %5779 = vmatprep.subr.bf16.mxu0 0
        %5780 = vmatpush2.bf16.msra.mxu0 0
        %5781 = vmatprep.subr.bf16.mxu0 0
        %5782 = vmatpush2.bf16.msra.mxu0 0
        %5783 = vmatprep.subr.bf16.mxu0 0
        %5784 = vmatpush2.bf16.msra.mxu0 0
        %5785 = vmatprep.subr.bf16.mxu0 0
        %5786 = vmatpush2.bf16.msra.mxu0 0
        %5787 = vmatprep.subr.bf16.mxu0 0
        %5788 = vmatpush2.bf16.msra.mxu0 0
        %5789 = vmatprep.subr.bf16.mxu0 0
        %5790 = vmatpush2.bf16.msra.mxu0 0
        %5791 = vmatprep.subr.bf16.mxu0 0
        %5792 = vmatpush2.bf16.msra.mxu0 0
        %5793 = vmatprep.subr.bf16.mxu0 0
        %5794 = vmatpush2.bf16.msra.mxu0 0
        %5795 = vmatprep.mubr.bf16.mxu0 0
        %5796 = vmatmul.mubr.bf16.gmra.mxu0 %v3055
        %v5797 = vpop.f32.mrf.mxu0
        %v5798 = vadd.f32 %v4240, %v5797
        %v5799 = vpop.f32.mrf.mxu0
        %v5800 = vadd.f32 %v4242, %v5799
        %v5801 = vpop.f32.mrf.mxu0
        %v5802 = vpop.f32.mrf.mxu0
        %5803 = vdwg.mxu0
        %5804 = vmatprep.subr.bf16.mxu0 0
        %5805 = vmatpush1.bf16.msra.mxu0 0
        %5806 = vmatprep.subr.bf16.mxu0 0
        %5807 = vmatpush1.bf16.msra.mxu0 0
        %5808 = vmatprep.subr.bf16.mxu0 0
        %5809 = vmatpush1.bf16.msra.mxu0 0
        %5810 = vmatprep.subr.bf16.mxu0 0
        %5811 = vmatpush1.bf16.msra.mxu0 0
        %5812 = vmatprep.subr.bf16.mxu0 %v1516
        %5813 = vmatpush1.bf16.msra.mxu0 %v1515
        %5814 = vmatprep.subr.bf16.mxu0 %v1440
        %5815 = vmatpush1.bf16.msra.mxu0 %v1439
        %5816 = vmatprep.subr.bf16.mxu0 %v1364
        %5817 = vmatpush1.bf16.msra.mxu0 %v1363
        %5818 = vmatprep.subr.bf16.mxu0 %v1288
        %5819 = vmatpush1.bf16.msra.mxu0 %v1287
        %5820 = vmatprep.subr.bf16.mxu0 0
        %5821 = vmatpush2.bf16.msra.mxu0 0
        %5822 = vmatprep.subr.bf16.mxu0 0
        %5823 = vmatpush2.bf16.msra.mxu0 0
        %5824 = vmatprep.subr.bf16.mxu0 0
        %5825 = vmatpush2.bf16.msra.mxu0 0
        %5826 = vmatprep.subr.bf16.mxu0 0
        %5827 = vmatpush2.bf16.msra.mxu0 0
        %5828 = vmatprep.subr.bf16.mxu0 0
        %5829 = vmatpush2.bf16.msra.mxu0 0
        %5830 = vmatprep.subr.bf16.mxu0 0
        %5831 = vmatpush2.bf16.msra.mxu0 0
        %5832 = vmatprep.subr.bf16.mxu0 0
        %5833 = vmatpush2.bf16.msra.mxu0 0
        %5834 = vmatprep.subr.bf16.mxu0 0
        %5835 = vmatpush2.bf16.msra.mxu0 0
        %5836 = vmatprep.mubr.bf16.mxu0 0
        %5837 = vmatmul.mubr.bf16.gmra.mxu0 %v3055
        %v5838 = vpop.f32.mrf.mxu0
        %v5839 = vadd.f32 %v4281, %v5838
        %v5840 = vpop.f32.mrf.mxu0
        %v5841 = vadd.f32 %v4283, %v5840
        %v5842 = vpop.f32.mrf.mxu0
        %v5843 = vpop.f32.mrf.mxu0
        %5844 = vdwg.mxu0
        %5845 = vmatprep.subr.bf16.mxu0 0
        %5846 = vmatpush1.bf16.msra.mxu0 0
        %5847 = vmatprep.subr.bf16.mxu0 0
        %5848 = vmatpush1.bf16.msra.mxu0 0
        %5849 = vmatprep.subr.bf16.mxu0 0
        %5850 = vmatpush1.bf16.msra.mxu0 0
        %5851 = vmatprep.subr.bf16.mxu0 0
        %5852 = vmatpush1.bf16.msra.mxu0 0
        %5853 = vmatprep.subr.bf16.mxu0 %v1518
        %5854 = vmatpush1.bf16.msra.mxu0 %v1517
        %5855 = vmatprep.subr.bf16.mxu0 %v1442
        %5856 = vmatpush1.bf16.msra.mxu0 %v1441
        %5857 = vmatprep.subr.bf16.mxu0 %v1366
        %5858 = vmatpush1.bf16.msra.mxu0 %v1365
        %5859 = vmatprep.subr.bf16.mxu0 %v1290
        %5860 = vmatpush1.bf16.msra.mxu0 %v1289
        %5861 = vmatprep.subr.bf16.mxu0 0
        %5862 = vmatpush2.bf16.msra.mxu0 0
        %5863 = vmatprep.subr.bf16.mxu0 0
        %5864 = vmatpush2.bf16.msra.mxu0 0
        %5865 = vmatprep.subr.bf16.mxu0 0
        %5866 = vmatpush2.bf16.msra.mxu0 0
        %5867 = vmatprep.subr.bf16.mxu0 0
        %5868 = vmatpush2.bf16.msra.mxu0 0
        %5869 = vmatprep.subr.bf16.mxu0 0
        %5870 = vmatpush2.bf16.msra.mxu0 0
        %5871 = vmatprep.subr.bf16.mxu0 0
        %5872 = vmatpush2.bf16.msra.mxu0 0
        %5873 = vmatprep.subr.bf16.mxu0 0
        %5874 = vmatpush2.bf16.msra.mxu0 0
        %5875 = vmatprep.subr.bf16.mxu0 0
        %5876 = vmatpush2.bf16.msra.mxu0 0
        %5877 = vmatprep.mubr.bf16.mxu0 0
        %5878 = vmatmul.mubr.bf16.gmra.mxu0 %v3055
        %v5879 = vpop.f32.mrf.mxu0
        %v5880 = vadd.f32 %v4322, %v5879
        %v5881 = vpop.f32.mrf.mxu0
        %v5882 = vadd.f32 %v4324, %v5881
        %v5883 = vpop.f32.mrf.mxu0
        %v5884 = vpop.f32.mrf.mxu0
        %5885 = vdwg.mxu0
        %5886 = vmatprep.subr.bf16.mxu0 0
        %5887 = vmatpush1.bf16.msra.mxu0 0
        %5888 = vmatprep.subr.bf16.mxu0 0
        %5889 = vmatpush1.bf16.msra.mxu0 0
        %5890 = vmatprep.subr.bf16.mxu0 0
        %5891 = vmatpush1.bf16.msra.mxu0 0
        %5892 = vmatprep.subr.bf16.mxu0 0
        %5893 = vmatpush1.bf16.msra.mxu0 0
        %5894 = vmatprep.subr.bf16.mxu0 %v1520
        %5895 = vmatpush1.bf16.msra.mxu0 %v1519
        %5896 = vmatprep.subr.bf16.mxu0 %v1444
        %5897 = vmatpush1.bf16.msra.mxu0 %v1443
        %5898 = vmatprep.subr.bf16.mxu0 %v1368
        %5899 = vmatpush1.bf16.msra.mxu0 %v1367
        %5900 = vmatprep.subr.bf16.mxu0 %v1292
        %5901 = vmatpush1.bf16.msra.mxu0 %v1291
        %5902 = vmatprep.subr.bf16.mxu0 0
        %5903 = vmatpush2.bf16.msra.mxu0 0
        %5904 = vmatprep.subr.bf16.mxu0 0
        %5905 = vmatpush2.bf16.msra.mxu0 0
        %5906 = vmatprep.subr.bf16.mxu0 0
        %5907 = vmatpush2.bf16.msra.mxu0 0
        %5908 = vmatprep.subr.bf16.mxu0 0
        %5909 = vmatpush2.bf16.msra.mxu0 0
        %5910 = vmatprep.subr.bf16.mxu0 0
        %5911 = vmatpush2.bf16.msra.mxu0 0
        %5912 = vmatprep.subr.bf16.mxu0 0
        %5913 = vmatpush2.bf16.msra.mxu0 0
        %5914 = vmatprep.subr.bf16.mxu0 0
        %5915 = vmatpush2.bf16.msra.mxu0 0
        %5916 = vmatprep.subr.bf16.mxu0 0
        %5917 = vmatpush2.bf16.msra.mxu0 0
        %5918 = vmatprep.mubr.bf16.mxu0 0
        %5919 = vmatmul.mubr.bf16.gmra.mxu0 %v3055
        %v5920 = vpop.f32.mrf.mxu0
        %v5921 = vadd.f32 %v4363, %v5920
        %v5922 = vpop.f32.mrf.mxu0
        %v5923 = vadd.f32 %v4365, %v5922
        %v5924 = vpop.f32.mrf.mxu0
        %v5925 = vpop.f32.mrf.mxu0
        %5926 = vdwg.mxu0
        %5927 = vmatprep.subr.bf16.mxu0 0
        %5928 = vmatpush1.bf16.msra.mxu0 0
        %5929 = vmatprep.subr.bf16.mxu0 0
        %5930 = vmatpush1.bf16.msra.mxu0 0
        %5931 = vmatprep.subr.bf16.mxu0 0
        %5932 = vmatpush1.bf16.msra.mxu0 0
        %5933 = vmatprep.subr.bf16.mxu0 0
        %5934 = vmatpush1.bf16.msra.mxu0 0
        %5935 = vmatprep.subr.bf16.mxu0 %v1522
        %5936 = vmatpush1.bf16.msra.mxu0 %v1521
        %5937 = vmatprep.subr.bf16.mxu0 %v1446
        %5938 = vmatpush1.bf16.msra.mxu0 %v1445
        %5939 = vmatprep.subr.bf16.mxu0 %v1370
        %5940 = vmatpush1.bf16.msra.mxu0 %v1369
        %5941 = vmatprep.subr.bf16.mxu0 %v1294
        %5942 = vmatpush1.bf16.msra.mxu0 %v1293
        %5943 = vmatprep.subr.bf16.mxu0 0
        %5944 = vmatpush2.bf16.msra.mxu0 0
        %5945 = vmatprep.subr.bf16.mxu0 0
        %5946 = vmatpush2.bf16.msra.mxu0 0
        %5947 = vmatprep.subr.bf16.mxu0 0
        %5948 = vmatpush2.bf16.msra.mxu0 0
        %5949 = vmatprep.subr.bf16.mxu0 0
        %5950 = vmatpush2.bf16.msra.mxu0 0
        %5951 = vmatprep.subr.bf16.mxu0 0
        %5952 = vmatpush2.bf16.msra.mxu0 0
        %5953 = vmatprep.subr.bf16.mxu0 0
        %5954 = vmatpush2.bf16.msra.mxu0 0
        %5955 = vmatprep.subr.bf16.mxu0 0
        %5956 = vmatpush2.bf16.msra.mxu0 0
        %5957 = vmatprep.subr.bf16.mxu0 0
        %5958 = vmatpush2.bf16.msra.mxu0 0
        %5959 = vmatprep.mubr.bf16.mxu0 0
        %5960 = vmatmul.mubr.bf16.gmra.mxu0 %v3055
        %v5961 = vpop.f32.mrf.mxu0
        %v5962 = vadd.f32 %v4404, %v5961
        %v5963 = vpop.f32.mrf.mxu0
        %v5964 = vadd.f32 %v4406, %v5963
        %v5965 = vpop.f32.mrf.mxu0
        %v5966 = vpop.f32.mrf.mxu0
        %5967 = vdwg.mxu0
        %5968 = vmatprep.subr.bf16.mxu0 0
        %5969 = vmatpush1.bf16.msra.mxu0 0
        %5970 = vmatprep.subr.bf16.mxu0 0
        %5971 = vmatpush1.bf16.msra.mxu0 0
        %5972 = vmatprep.subr.bf16.mxu0 0
        %5973 = vmatpush1.bf16.msra.mxu0 0
        %5974 = vmatprep.subr.bf16.mxu0 0
        %5975 = vmatpush1.bf16.msra.mxu0 0
        %5976 = vmatprep.subr.bf16.mxu0 %v1524
        %5977 = vmatpush1.bf16.msra.mxu0 %v1523
        %5978 = vmatprep.subr.bf16.mxu0 %v1448
        %5979 = vmatpush1.bf16.msra.mxu0 %v1447
        %5980 = vmatprep.subr.bf16.mxu0 %v1372
        %5981 = vmatpush1.bf16.msra.mxu0 %v1371
        %5982 = vmatprep.subr.bf16.mxu0 %v1296
        %5983 = vmatpush1.bf16.msra.mxu0 %v1295
        %5984 = vmatprep.subr.bf16.mxu0 0
        %5985 = vmatpush2.bf16.msra.mxu0 0
        %5986 = vmatprep.subr.bf16.mxu0 0
        %5987 = vmatpush2.bf16.msra.mxu0 0
        %5988 = vmatprep.subr.bf16.mxu0 0
        %5989 = vmatpush2.bf16.msra.mxu0 0
        %5990 = vmatprep.subr.bf16.mxu0 0
        %5991 = vmatpush2.bf16.msra.mxu0 0
        %5992 = vmatprep.subr.bf16.mxu0 0
        %5993 = vmatpush2.bf16.msra.mxu0 0
        %5994 = vmatprep.subr.bf16.mxu0 0
        %5995 = vmatpush2.bf16.msra.mxu0 0
        %5996 = vmatprep.subr.bf16.mxu0 0
        %5997 = vmatpush2.bf16.msra.mxu0 0
        %5998 = vmatprep.subr.bf16.mxu0 0
        %5999 = vmatpush2.bf16.msra.mxu0 0
        %6000 = vmatprep.mubr.bf16.mxu0 0
        %6001 = vmatmul.mubr.bf16.gmra.mxu0 %v3055
        %v6002 = vpop.f32.mrf.mxu0
        %v6003 = vadd.f32 %v4445, %v6002
        %v6004 = vpop.f32.mrf.mxu0
        %v6005 = vadd.f32 %v4447, %v6004
        %v6006 = vpop.f32.mrf.mxu0
        %v6007 = vpop.f32.mrf.mxu0
        %6008 = vdwg.mxu0
        %6009 = vmatprep.subr.bf16.mxu0 0
        %6010 = vmatpush1.bf16.msra.mxu0 0
        %6011 = vmatprep.subr.bf16.mxu0 0
        %6012 = vmatpush1.bf16.msra.mxu0 0
        %6013 = vmatprep.subr.bf16.mxu0 0
        %6014 = vmatpush1.bf16.msra.mxu0 0
        %6015 = vmatprep.subr.bf16.mxu0 0
        %6016 = vmatpush1.bf16.msra.mxu0 0
        %6017 = vmatprep.subr.bf16.mxu0 %v1526
        %6018 = vmatpush1.bf16.msra.mxu0 %v1525
        %6019 = vmatprep.subr.bf16.mxu0 %v1450
        %6020 = vmatpush1.bf16.msra.mxu0 %v1449
        %6021 = vmatprep.subr.bf16.mxu0 %v1374
        %6022 = vmatpush1.bf16.msra.mxu0 %v1373
        %6023 = vmatprep.subr.bf16.mxu0 %v1298
        %6024 = vmatpush1.bf16.msra.mxu0 %v1297
        %6025 = vmatprep.subr.bf16.mxu0 0
        %6026 = vmatpush2.bf16.msra.mxu0 0
        %6027 = vmatprep.subr.bf16.mxu0 0
        %6028 = vmatpush2.bf16.msra.mxu0 0
        %6029 = vmatprep.subr.bf16.mxu0 0
        %6030 = vmatpush2.bf16.msra.mxu0 0
        %6031 = vmatprep.subr.bf16.mxu0 0
        %6032 = vmatpush2.bf16.msra.mxu0 0
        %6033 = vmatprep.subr.bf16.mxu0 0
        %6034 = vmatpush2.bf16.msra.mxu0 0
        %6035 = vmatprep.subr.bf16.mxu0 0
        %6036 = vmatpush2.bf16.msra.mxu0 0
        %6037 = vmatprep.subr.bf16.mxu0 0
        %6038 = vmatpush2.bf16.msra.mxu0 0
        %6039 = vmatprep.subr.bf16.mxu0 0
        %6040 = vmatpush2.bf16.msra.mxu0 0
        %6041 = vmatprep.mubr.bf16.mxu0 0
        %6042 = vmatmul.mubr.bf16.gmra.mxu0 %v3055
        %v6043 = vpop.f32.mrf.mxu0
        %v6044 = vadd.f32 %v4486, %v6043
        %v6045 = vpop.f32.mrf.mxu0
        %v6046 = vadd.f32 %v4488, %v6045
        %v6047 = vpop.f32.mrf.mxu0
        %v6048 = vpop.f32.mrf.mxu0
        %6049 = vdwg.mxu0
        %6050 = vmatprep.subr.bf16.mxu0 0
        %6051 = vmatpush1.bf16.msra.mxu0 0
        %6052 = vmatprep.subr.bf16.mxu0 0
        %6053 = vmatpush1.bf16.msra.mxu0 0
        %6054 = vmatprep.subr.bf16.mxu0 0
        %6055 = vmatpush1.bf16.msra.mxu0 0
        %6056 = vmatprep.subr.bf16.mxu0 0
        %6057 = vmatpush1.bf16.msra.mxu0 0
        %6058 = vmatprep.subr.bf16.mxu0 %v1528
        %6059 = vmatpush1.bf16.msra.mxu0 %v1527
        %6060 = vmatprep.subr.bf16.mxu0 %v1452
        %6061 = vmatpush1.bf16.msra.mxu0 %v1451
        %6062 = vmatprep.subr.bf16.mxu0 %v1376
        %6063 = vmatpush1.bf16.msra.mxu0 %v1375
        %6064 = vmatprep.subr.bf16.mxu0 %v1300
        %6065 = vmatpush1.bf16.msra.mxu0 %v1299
        %6066 = vmatprep.subr.bf16.mxu0 0
        %6067 = vmatpush2.bf16.msra.mxu0 0
        %6068 = vmatprep.subr.bf16.mxu0 0
        %6069 = vmatpush2.bf16.msra.mxu0 0
        %6070 = vmatprep.subr.bf16.mxu0 0
        %6071 = vmatpush2.bf16.msra.mxu0 0
        %6072 = vmatprep.subr.bf16.mxu0 0
        %6073 = vmatpush2.bf16.msra.mxu0 0
        %6074 = vmatprep.subr.bf16.mxu0 0
        %6075 = vmatpush2.bf16.msra.mxu0 0
        %6076 = vmatprep.subr.bf16.mxu0 0
        %6077 = vmatpush2.bf16.msra.mxu0 0
        %6078 = vmatprep.subr.bf16.mxu0 0
        %6079 = vmatpush2.bf16.msra.mxu0 0
        %6080 = vmatprep.subr.bf16.mxu0 0
        %6081 = vmatpush2.bf16.msra.mxu0 0
        %6082 = vmatprep.mubr.bf16.mxu0 0
        %6083 = vmatmul.mubr.bf16.gmra.mxu0 %v3055
        %v6084 = vpop.f32.mrf.mxu0
        %v6085 = vadd.f32 %v4527, %v6084
        %v6086 = vpop.f32.mrf.mxu0
        %v6087 = vadd.f32 %v4529, %v6086
        %v6088 = vpop.f32.mrf.mxu0
        %v6089 = vpop.f32.mrf.mxu0
        %6090 = vdwg.mxu0
        %6091 = vmatprep.subr.bf16.mxu0 0
        %6092 = vmatpush1.bf16.msra.mxu0 0
        %6093 = vmatprep.subr.bf16.mxu0 0
        %6094 = vmatpush1.bf16.msra.mxu0 0
        %6095 = vmatprep.subr.bf16.mxu0 0
        %6096 = vmatpush1.bf16.msra.mxu0 0
        %6097 = vmatprep.subr.bf16.mxu0 0
        %6098 = vmatpush1.bf16.msra.mxu0 0
        %6099 = vmatprep.subr.bf16.mxu0 %v1530
        %6100 = vmatpush1.bf16.msra.mxu0 %v1529
        %6101 = vmatprep.subr.bf16.mxu0 %v1454
        %6102 = vmatpush1.bf16.msra.mxu0 %v1453
        %6103 = vmatprep.subr.bf16.mxu0 %v1378
        %6104 = vmatpush1.bf16.msra.mxu0 %v1377
        %6105 = vmatprep.subr.bf16.mxu0 %v1302
        %6106 = vmatpush1.bf16.msra.mxu0 %v1301
        %6107 = vmatprep.subr.bf16.mxu0 0
        %6108 = vmatpush2.bf16.msra.mxu0 0
        %6109 = vmatprep.subr.bf16.mxu0 0
        %6110 = vmatpush2.bf16.msra.mxu0 0
        %6111 = vmatprep.subr.bf16.mxu0 0
        %6112 = vmatpush2.bf16.msra.mxu0 0
        %6113 = vmatprep.subr.bf16.mxu0 0
        %6114 = vmatpush2.bf16.msra.mxu0 0
        %6115 = vmatprep.subr.bf16.mxu0 0
        %6116 = vmatpush2.bf16.msra.mxu0 0
        %6117 = vmatprep.subr.bf16.mxu0 0
        %6118 = vmatpush2.bf16.msra.mxu0 0
        %6119 = vmatprep.subr.bf16.mxu0 0
        %6120 = vmatpush2.bf16.msra.mxu0 0
        %6121 = vmatprep.subr.bf16.mxu0 0
        %6122 = vmatpush2.bf16.msra.mxu0 0
        %6123 = vmatprep.mubr.bf16.mxu0 0
        %6124 = vmatmul.mubr.bf16.gmra.mxu0 %v3055
        %v6125 = vpop.f32.mrf.mxu0
        %v6126 = vadd.f32 %v4568, %v6125
        %v6127 = vpop.f32.mrf.mxu0
        %v6128 = vadd.f32 %v4570, %v6127
        %v6129 = vpop.f32.mrf.mxu0
        %v6130 = vpop.f32.mrf.mxu0
        %6131 = vdwg.mxu0
        %6132 = vmatprep.subr.bf16.mxu0 0
        %6133 = vmatpush1.bf16.msra.mxu0 0
        %6134 = vmatprep.subr.bf16.mxu0 0
        %6135 = vmatpush1.bf16.msra.mxu0 0
        %6136 = vmatprep.subr.bf16.mxu0 0
        %6137 = vmatpush1.bf16.msra.mxu0 0
        %6138 = vmatprep.subr.bf16.mxu0 0
        %6139 = vmatpush1.bf16.msra.mxu0 0
        %6140 = vmatprep.subr.bf16.mxu0 %v1532
        %6141 = vmatpush1.bf16.msra.mxu0 %v1531
        %6142 = vmatprep.subr.bf16.mxu0 %v1456
        %6143 = vmatpush1.bf16.msra.mxu0 %v1455
        %6144 = vmatprep.subr.bf16.mxu0 %v1380
        %6145 = vmatpush1.bf16.msra.mxu0 %v1379
        %6146 = vmatprep.subr.bf16.mxu0 %v1304
        %6147 = vmatpush1.bf16.msra.mxu0 %v1303
        %6148 = vmatprep.subr.bf16.mxu0 0
        %6149 = vmatpush2.bf16.msra.mxu0 0
        %6150 = vmatprep.subr.bf16.mxu0 0
        %6151 = vmatpush2.bf16.msra.mxu0 0
        %6152 = vmatprep.subr.bf16.mxu0 0
        %6153 = vmatpush2.bf16.msra.mxu0 0
        %6154 = vmatprep.subr.bf16.mxu0 0
        %6155 = vmatpush2.bf16.msra.mxu0 0
        %6156 = vmatprep.subr.bf16.mxu0 0
        %6157 = vmatpush2.bf16.msra.mxu0 0
        %6158 = vmatprep.subr.bf16.mxu0 0
        %6159 = vmatpush2.bf16.msra.mxu0 0
        %6160 = vmatprep.subr.bf16.mxu0 0
        %6161 = vmatpush2.bf16.msra.mxu0 0
        %6162 = vmatprep.subr.bf16.mxu0 0
        %6163 = vmatpush2.bf16.msra.mxu0 0
        %6164 = vmatprep.mubr.bf16.mxu0 0
        %6165 = vmatmul.mubr.bf16.gmra.mxu0 %v3055
        %v6166 = vpop.f32.mrf.mxu0
        %v6167 = vadd.f32 %v4609, %v6166
        %v6168 = vpop.f32.mrf.mxu0
        %v6169 = vadd.f32 %v4611, %v6168
        %v6170 = vpop.f32.mrf.mxu0
        %v6171 = vpop.f32.mrf.mxu0
        %6172 = vdwg.mxu0
        %v6174 = vsel %vm3053, %v1228, 0
        %6176 = vmatprep.subr.bf16.mxu0 0
        %6177 = vmatpush1.bf16.msra.mxu0 0
        %6178 = vmatprep.subr.bf16.mxu0 0
        %6179 = vmatpush1.bf16.msra.mxu0 0
        %6180 = vmatprep.subr.bf16.mxu0 0
        %6181 = vmatpush1.bf16.msra.mxu0 0
        %6182 = vmatprep.subr.bf16.mxu0 0
        %6183 = vmatpush1.bf16.msra.mxu0 0
        %6184 = vmatprep.subr.bf16.mxu0 %v1458
        %6185 = vmatpush1.bf16.msra.mxu0 %v1457
        %6186 = vmatprep.subr.bf16.mxu0 %v1382
        %6187 = vmatpush1.bf16.msra.mxu0 %v1381
        %6188 = vmatprep.subr.bf16.mxu0 %v1306
        %6189 = vmatpush1.bf16.msra.mxu0 %v1305
        %6190 = vmatprep.subr.bf16.mxu0 %v1230
        %6191 = vmatpush1.bf16.msra.mxu0 %v1229
        %6192 = vmatprep.subr.bf16.mxu0 0
        %6193 = vmatpush2.bf16.msra.mxu0 0
        %6194 = vmatprep.subr.bf16.mxu0 0
        %6195 = vmatpush2.bf16.msra.mxu0 0
        %6196 = vmatprep.subr.bf16.mxu0 0
        %6197 = vmatpush2.bf16.msra.mxu0 0
        %6198 = vmatprep.subr.bf16.mxu0 0
        %6199 = vmatpush2.bf16.msra.mxu0 0
        %6200 = vmatprep.subr.bf16.mxu0 0
        %6201 = vmatpush2.bf16.msra.mxu0 0
        %6202 = vmatprep.subr.bf16.mxu0 0
        %6203 = vmatpush2.bf16.msra.mxu0 0
        %6204 = vmatprep.subr.bf16.mxu0 0
        %6205 = vmatpush2.bf16.msra.mxu0 0
        %6206 = vmatprep.subr.bf16.mxu0 0
        %6207 = vmatpush2.bf16.msra.mxu0 0
        %6208 = vmatprep.mubr.bf16.mxu0 0
        %6209 = vmatmul.mubr.bf16.gmra.mxu0 %v6174
        %v6210 = vpop.f32.mrf.mxu0
        %v6211 = vadd.f32 0.0, %v6210
        %v6212 = vpop.f32.mrf.mxu0
        %v6213 = vadd.f32 0.0, %v6212
        %v6214 = vpop.f32.mrf.mxu0
        %v6215 = vpop.f32.mrf.mxu0
        %6216 = vdwg.mxu0
        %6217 = vmatprep.subr.bf16.mxu0 0
        %6218 = vmatpush1.bf16.msra.mxu0 0
        %6219 = vmatprep.subr.bf16.mxu0 0
        %6220 = vmatpush1.bf16.msra.mxu0 0
        %6221 = vmatprep.subr.bf16.mxu0 0
        %6222 = vmatpush1.bf16.msra.mxu0 0
        %6223 = vmatprep.subr.bf16.mxu0 0
        %6224 = vmatpush1.bf16.msra.mxu0 0
        %6225 = vmatprep.subr.bf16.mxu0 %v1460
        %6226 = vmatpush1.bf16.msra.mxu0 %v1459
        %6227 = vmatprep.subr.bf16.mxu0 %v1384
        %6228 = vmatpush1.bf16.msra.mxu0 %v1383
        %6229 = vmatprep.subr.bf16.mxu0 %v1308
        %6230 = vmatpush1.bf16.msra.mxu0 %v1307
        %6231 = vmatprep.subr.bf16.mxu0 %v1232
        %6232 = vmatpush1.bf16.msra.mxu0 %v1231
        %6233 = vmatprep.subr.bf16.mxu0 0
        %6234 = vmatpush2.bf16.msra.mxu0 0
        %6235 = vmatprep.subr.bf16.mxu0 0
        %6236 = vmatpush2.bf16.msra.mxu0 0
        %6237 = vmatprep.subr.bf16.mxu0 0
        %6238 = vmatpush2.bf16.msra.mxu0 0
        %6239 = vmatprep.subr.bf16.mxu0 0
        %6240 = vmatpush2.bf16.msra.mxu0 0
        %6241 = vmatprep.subr.bf16.mxu0 0
        %6242 = vmatpush2.bf16.msra.mxu0 0
        %6243 = vmatprep.subr.bf16.mxu0 0
        %6244 = vmatpush2.bf16.msra.mxu0 0
        %6245 = vmatprep.subr.bf16.mxu0 0
        %6246 = vmatpush2.bf16.msra.mxu0 0
        %6247 = vmatprep.subr.bf16.mxu0 0
        %6248 = vmatpush2.bf16.msra.mxu0 0
        %6249 = vmatprep.mubr.bf16.mxu0 0
        %6250 = vmatmul.mubr.bf16.gmra.mxu0 %v6174
        %v6251 = vpop.f32.mrf.mxu0
        %v6252 = vadd.f32 0.0, %v6251
        %v6253 = vpop.f32.mrf.mxu0
        %v6254 = vadd.f32 0.0, %v6253
        %v6255 = vpop.f32.mrf.mxu0
        %v6256 = vpop.f32.mrf.mxu0
        %6257 = vdwg.mxu0
        %6258 = vmatprep.subr.bf16.mxu0 0
        %6259 = vmatpush1.bf16.msra.mxu0 0
        %6260 = vmatprep.subr.bf16.mxu0 0
        %6261 = vmatpush1.bf16.msra.mxu0 0
        %6262 = vmatprep.subr.bf16.mxu0 0
        %6263 = vmatpush1.bf16.msra.mxu0 0
        %6264 = vmatprep.subr.bf16.mxu0 0
        %6265 = vmatpush1.bf16.msra.mxu0 0
        %6266 = vmatprep.subr.bf16.mxu0 %v1462
        %6267 = vmatpush1.bf16.msra.mxu0 %v1461
        %6268 = vmatprep.subr.bf16.mxu0 %v1386
        %6269 = vmatpush1.bf16.msra.mxu0 %v1385
        %6270 = vmatprep.subr.bf16.mxu0 %v1310
        %6271 = vmatpush1.bf16.msra.mxu0 %v1309
        %6272 = vmatprep.subr.bf16.mxu0 %v1234
        %6273 = vmatpush1.bf16.msra.mxu0 %v1233
        %6274 = vmatprep.subr.bf16.mxu0 0
        %6275 = vmatpush2.bf16.msra.mxu0 0
        %6276 = vmatprep.subr.bf16.mxu0 0
        %6277 = vmatpush2.bf16.msra.mxu0 0
        %6278 = vmatprep.subr.bf16.mxu0 0
        %6279 = vmatpush2.bf16.msra.mxu0 0
        %6280 = vmatprep.subr.bf16.mxu0 0
        %6281 = vmatpush2.bf16.msra.mxu0 0
        %6282 = vmatprep.subr.bf16.mxu0 0
        %6283 = vmatpush2.bf16.msra.mxu0 0
        %6284 = vmatprep.subr.bf16.mxu0 0
        %6285 = vmatpush2.bf16.msra.mxu0 0
        %6286 = vmatprep.subr.bf16.mxu0 0
        %6287 = vmatpush2.bf16.msra.mxu0 0
        %6288 = vmatprep.subr.bf16.mxu0 0
        %6289 = vmatpush2.bf16.msra.mxu0 0
        %6290 = vmatprep.mubr.bf16.mxu0 0
        %6291 = vmatmul.mubr.bf16.gmra.mxu0 %v6174
        %v6292 = vpop.f32.mrf.mxu0
        %v6293 = vadd.f32 0.0, %v6292
        %v6294 = vpop.f32.mrf.mxu0
        %v6295 = vadd.f32 0.0, %v6294
        %v6296 = vpop.f32.mrf.mxu0
        %v6297 = vpop.f32.mrf.mxu0
        %6298 = vdwg.mxu0
        %6299 = vmatprep.subr.bf16.mxu0 0
        %6300 = vmatpush1.bf16.msra.mxu0 0
        %6301 = vmatprep.subr.bf16.mxu0 0
        %6302 = vmatpush1.bf16.msra.mxu0 0
        %6303 = vmatprep.subr.bf16.mxu0 0
        %6304 = vmatpush1.bf16.msra.mxu0 0
        %6305 = vmatprep.subr.bf16.mxu0 0
        %6306 = vmatpush1.bf16.msra.mxu0 0
        %6307 = vmatprep.subr.bf16.mxu0 %v1464
        %6308 = vmatpush1.bf16.msra.mxu0 %v1463
        %6309 = vmatprep.subr.bf16.mxu0 %v1388
        %6310 = vmatpush1.bf16.msra.mxu0 %v1387
        %6311 = vmatprep.subr.bf16.mxu0 %v1312
        %6312 = vmatpush1.bf16.msra.mxu0 %v1311
        %6313 = vmatprep.subr.bf16.mxu0 %v1236
        %6314 = vmatpush1.bf16.msra.mxu0 %v1235
        %6315 = vmatprep.subr.bf16.mxu0 0
        %6316 = vmatpush2.bf16.msra.mxu0 0
        %6317 = vmatprep.subr.bf16.mxu0 0
        %6318 = vmatpush2.bf16.msra.mxu0 0
        %6319 = vmatprep.subr.bf16.mxu0 0
        %6320 = vmatpush2.bf16.msra.mxu0 0
        %6321 = vmatprep.subr.bf16.mxu0 0
        %6322 = vmatpush2.bf16.msra.mxu0 0
        %6323 = vmatprep.subr.bf16.mxu0 0
        %6324 = vmatpush2.bf16.msra.mxu0 0
        %6325 = vmatprep.subr.bf16.mxu0 0
        %6326 = vmatpush2.bf16.msra.mxu0 0
        %6327 = vmatprep.subr.bf16.mxu0 0
        %6328 = vmatpush2.bf16.msra.mxu0 0
        %6329 = vmatprep.subr.bf16.mxu0 0
        %6330 = vmatpush2.bf16.msra.mxu0 0
        %6331 = vmatprep.mubr.bf16.mxu0 0
        %6332 = vmatmul.mubr.bf16.gmra.mxu0 %v6174
        %v6333 = vpop.f32.mrf.mxu0
        %v6334 = vadd.f32 0.0, %v6333
        %v6335 = vpop.f32.mrf.mxu0
        %v6336 = vadd.f32 0.0, %v6335
        %v6337 = vpop.f32.mrf.mxu0
        %v6338 = vpop.f32.mrf.mxu0
        %6339 = vdwg.mxu0
        %6340 = vmatprep.subr.bf16.mxu0 0
        %6341 = vmatpush1.bf16.msra.mxu0 0
        %6342 = vmatprep.subr.bf16.mxu0 0
        %6343 = vmatpush1.bf16.msra.mxu0 0
        %6344 = vmatprep.subr.bf16.mxu0 0
        %6345 = vmatpush1.bf16.msra.mxu0 0
        %6346 = vmatprep.subr.bf16.mxu0 0
        %6347 = vmatpush1.bf16.msra.mxu0 0
        %6348 = vmatprep.subr.bf16.mxu0 %v1466
        %6349 = vmatpush1.bf16.msra.mxu0 %v1465
        %6350 = vmatprep.subr.bf16.mxu0 %v1390
        %6351 = vmatpush1.bf16.msra.mxu0 %v1389
        %6352 = vmatprep.subr.bf16.mxu0 %v1314
        %6353 = vmatpush1.bf16.msra.mxu0 %v1313
        %6354 = vmatprep.subr.bf16.mxu0 %v1238
        %6355 = vmatpush1.bf16.msra.mxu0 %v1237
        %6356 = vmatprep.subr.bf16.mxu0 0
        %6357 = vmatpush2.bf16.msra.mxu0 0
        %6358 = vmatprep.subr.bf16.mxu0 0
        %6359 = vmatpush2.bf16.msra.mxu0 0
        %6360 = vmatprep.subr.bf16.mxu0 0
        %6361 = vmatpush2.bf16.msra.mxu0 0
        %6362 = vmatprep.subr.bf16.mxu0 0
        %6363 = vmatpush2.bf16.msra.mxu0 0
        %6364 = vmatprep.subr.bf16.mxu0 0
        %6365 = vmatpush2.bf16.msra.mxu0 0
        %6366 = vmatprep.subr.bf16.mxu0 0
        %6367 = vmatpush2.bf16.msra.mxu0 0
        %6368 = vmatprep.subr.bf16.mxu0 0
        %6369 = vmatpush2.bf16.msra.mxu0 0
        %6370 = vmatprep.subr.bf16.mxu0 0
        %6371 = vmatpush2.bf16.msra.mxu0 0
        %6372 = vmatprep.mubr.bf16.mxu0 0
        %6373 = vmatmul.mubr.bf16.gmra.mxu0 %v6174
        %v6374 = vpop.f32.mrf.mxu0
        %v6375 = vadd.f32 0.0, %v6374
        %v6376 = vpop.f32.mrf.mxu0
        %v6377 = vadd.f32 0.0, %v6376
        %v6378 = vpop.f32.mrf.mxu0
        %v6379 = vpop.f32.mrf.mxu0
        %6380 = vdwg.mxu0
        %6381 = vmatprep.subr.bf16.mxu0 0
        %6382 = vmatpush1.bf16.msra.mxu0 0
        %6383 = vmatprep.subr.bf16.mxu0 0
        %6384 = vmatpush1.bf16.msra.mxu0 0
        %6385 = vmatprep.subr.bf16.mxu0 0
        %6386 = vmatpush1.bf16.msra.mxu0 0
        %6387 = vmatprep.subr.bf16.mxu0 0
        %6388 = vmatpush1.bf16.msra.mxu0 0
        %6389 = vmatprep.subr.bf16.mxu0 %v1468
        %6390 = vmatpush1.bf16.msra.mxu0 %v1467
        %6391 = vmatprep.subr.bf16.mxu0 %v1392
        %6392 = vmatpush1.bf16.msra.mxu0 %v1391
        %6393 = vmatprep.subr.bf16.mxu0 %v1316
        %6394 = vmatpush1.bf16.msra.mxu0 %v1315
        %6395 = vmatprep.subr.bf16.mxu0 %v1240
        %6396 = vmatpush1.bf16.msra.mxu0 %v1239
        %6397 = vmatprep.subr.bf16.mxu0 0
        %6398 = vmatpush2.bf16.msra.mxu0 0
        %6399 = vmatprep.subr.bf16.mxu0 0
        %6400 = vmatpush2.bf16.msra.mxu0 0
        %6401 = vmatprep.subr.bf16.mxu0 0
        %6402 = vmatpush2.bf16.msra.mxu0 0
        %6403 = vmatprep.subr.bf16.mxu0 0
        %6404 = vmatpush2.bf16.msra.mxu0 0
        %6405 = vmatprep.subr.bf16.mxu0 0
        %6406 = vmatpush2.bf16.msra.mxu0 0
        %6407 = vmatprep.subr.bf16.mxu0 0
        %6408 = vmatpush2.bf16.msra.mxu0 0
        %6409 = vmatprep.subr.bf16.mxu0 0
        %6410 = vmatpush2.bf16.msra.mxu0 0
        %6411 = vmatprep.subr.bf16.mxu0 0
        %6412 = vmatpush2.bf16.msra.mxu0 0
        %6413 = vmatprep.mubr.bf16.mxu0 0
        %6414 = vmatmul.mubr.bf16.gmra.mxu0 %v6174
        %v6415 = vpop.f32.mrf.mxu0
        %v6416 = vadd.f32 0.0, %v6415
        %v6417 = vpop.f32.mrf.mxu0
        %v6418 = vadd.f32 0.0, %v6417
        %v6419 = vpop.f32.mrf.mxu0
        %v6420 = vpop.f32.mrf.mxu0
        %6421 = vdwg.mxu0
        %6422 = vmatprep.subr.bf16.mxu0 0
        %6423 = vmatpush1.bf16.msra.mxu0 0
        %6424 = vmatprep.subr.bf16.mxu0 0
        %6425 = vmatpush1.bf16.msra.mxu0 0
        %6426 = vmatprep.subr.bf16.mxu0 0
        %6427 = vmatpush1.bf16.msra.mxu0 0
        %6428 = vmatprep.subr.bf16.mxu0 0
        %6429 = vmatpush1.bf16.msra.mxu0 0
        %6430 = vmatprep.subr.bf16.mxu0 %v1470
        %6431 = vmatpush1.bf16.msra.mxu0 %v1469
        %6432 = vmatprep.subr.bf16.mxu0 %v1394
        %6433 = vmatpush1.bf16.msra.mxu0 %v1393
        %6434 = vmatprep.subr.bf16.mxu0 %v1318
        %6435 = vmatpush1.bf16.msra.mxu0 %v1317
        %6436 = vmatprep.subr.bf16.mxu0 %v1242
        %6437 = vmatpush1.bf16.msra.mxu0 %v1241
        %6438 = vmatprep.subr.bf16.mxu0 0
        %6439 = vmatpush2.bf16.msra.mxu0 0
        %6440 = vmatprep.subr.bf16.mxu0 0
        %6441 = vmatpush2.bf16.msra.mxu0 0
        %6442 = vmatprep.subr.bf16.mxu0 0
        %6443 = vmatpush2.bf16.msra.mxu0 0
        %6444 = vmatprep.subr.bf16.mxu0 0
        %6445 = vmatpush2.bf16.msra.mxu0 0
        %6446 = vmatprep.subr.bf16.mxu0 0
        %6447 = vmatpush2.bf16.msra.mxu0 0
        %6448 = vmatprep.subr.bf16.mxu0 0
        %6449 = vmatpush2.bf16.msra.mxu0 0
        %6450 = vmatprep.subr.bf16.mxu0 0
        %6451 = vmatpush2.bf16.msra.mxu0 0
        %6452 = vmatprep.subr.bf16.mxu0 0
        %6453 = vmatpush2.bf16.msra.mxu0 0
        %6454 = vmatprep.mubr.bf16.mxu0 0
        %6455 = vmatmul.mubr.bf16.gmra.mxu0 %v6174
        %v6456 = vpop.f32.mrf.mxu0
        %v6457 = vadd.f32 0.0, %v6456
        %v6458 = vpop.f32.mrf.mxu0
        %v6459 = vadd.f32 0.0, %v6458
        %v6460 = vpop.f32.mrf.mxu0
        %v6461 = vpop.f32.mrf.mxu0
        %6462 = vdwg.mxu0
        %6463 = vmatprep.subr.bf16.mxu0 0
        %6464 = vmatpush1.bf16.msra.mxu0 0
        %6465 = vmatprep.subr.bf16.mxu0 0
        %6466 = vmatpush1.bf16.msra.mxu0 0
        %6467 = vmatprep.subr.bf16.mxu0 0
        %6468 = vmatpush1.bf16.msra.mxu0 0
        %6469 = vmatprep.subr.bf16.mxu0 0
        %6470 = vmatpush1.bf16.msra.mxu0 0
        %6471 = vmatprep.subr.bf16.mxu0 %v1472
        %6472 = vmatpush1.bf16.msra.mxu0 %v1471
        %6473 = vmatprep.subr.bf16.mxu0 %v1396
        %6474 = vmatpush1.bf16.msra.mxu0 %v1395
        %6475 = vmatprep.subr.bf16.mxu0 %v1320
        %6476 = vmatpush1.bf16.msra.mxu0 %v1319
        %6477 = vmatprep.subr.bf16.mxu0 %v1244
        %6478 = vmatpush1.bf16.msra.mxu0 %v1243
        %6479 = vmatprep.subr.bf16.mxu0 0
        %6480 = vmatpush2.bf16.msra.mxu0 0
        %6481 = vmatprep.subr.bf16.mxu0 0
        %6482 = vmatpush2.bf16.msra.mxu0 0
        %6483 = vmatprep.subr.bf16.mxu0 0
        %6484 = vmatpush2.bf16.msra.mxu0 0
        %6485 = vmatprep.subr.bf16.mxu0 0
        %6486 = vmatpush2.bf16.msra.mxu0 0
        %6487 = vmatprep.subr.bf16.mxu0 0
        %6488 = vmatpush2.bf16.msra.mxu0 0
        %6489 = vmatprep.subr.bf16.mxu0 0
        %6490 = vmatpush2.bf16.msra.mxu0 0
        %6491 = vmatprep.subr.bf16.mxu0 0
        %6492 = vmatpush2.bf16.msra.mxu0 0
        %6493 = vmatprep.subr.bf16.mxu0 0
        %6494 = vmatpush2.bf16.msra.mxu0 0
        %6495 = vmatprep.mubr.bf16.mxu0 0
        %6496 = vmatmul.mubr.bf16.gmra.mxu0 %v6174
        %v6497 = vpop.f32.mrf.mxu0
        %v6498 = vadd.f32 0.0, %v6497
        %v6499 = vpop.f32.mrf.mxu0
        %v6500 = vadd.f32 0.0, %v6499
        %v6501 = vpop.f32.mrf.mxu0
        %v6502 = vpop.f32.mrf.mxu0
        %6503 = vdwg.mxu0
        %6504 = vmatprep.subr.bf16.mxu0 0
        %6505 = vmatpush1.bf16.msra.mxu0 0
        %6506 = vmatprep.subr.bf16.mxu0 0
        %6507 = vmatpush1.bf16.msra.mxu0 0
        %6508 = vmatprep.subr.bf16.mxu0 0
        %6509 = vmatpush1.bf16.msra.mxu0 0
        %6510 = vmatprep.subr.bf16.mxu0 0
        %6511 = vmatpush1.bf16.msra.mxu0 0
        %6512 = vmatprep.subr.bf16.mxu0 %v1474
        %6513 = vmatpush1.bf16.msra.mxu0 %v1473
        %6514 = vmatprep.subr.bf16.mxu0 %v1398
        %6515 = vmatpush1.bf16.msra.mxu0 %v1397
        %6516 = vmatprep.subr.bf16.mxu0 %v1322
        %6517 = vmatpush1.bf16.msra.mxu0 %v1321
        %6518 = vmatprep.subr.bf16.mxu0 %v1246
        %6519 = vmatpush1.bf16.msra.mxu0 %v1245
        %6520 = vmatprep.subr.bf16.mxu0 0
        %6521 = vmatpush2.bf16.msra.mxu0 0
        %6522 = vmatprep.subr.bf16.mxu0 0
        %6523 = vmatpush2.bf16.msra.mxu0 0
        %6524 = vmatprep.subr.bf16.mxu0 0
        %6525 = vmatpush2.bf16.msra.mxu0 0
        %6526 = vmatprep.subr.bf16.mxu0 0
        %6527 = vmatpush2.bf16.msra.mxu0 0
        %6528 = vmatprep.subr.bf16.mxu0 0
        %6529 = vmatpush2.bf16.msra.mxu0 0
        %6530 = vmatprep.subr.bf16.mxu0 0
        %6531 = vmatpush2.bf16.msra.mxu0 0
        %6532 = vmatprep.subr.bf16.mxu0 0
        %6533 = vmatpush2.bf16.msra.mxu0 0
        %6534 = vmatprep.subr.bf16.mxu0 0
        %6535 = vmatpush2.bf16.msra.mxu0 0
        %6536 = vmatprep.mubr.bf16.mxu0 0
        %6537 = vmatmul.mubr.bf16.gmra.mxu0 %v6174
        %v6538 = vpop.f32.mrf.mxu0
        %v6539 = vadd.f32 0.0, %v6538
        %v6540 = vpop.f32.mrf.mxu0
        %v6541 = vadd.f32 0.0, %v6540
        %v6542 = vpop.f32.mrf.mxu0
        %v6543 = vpop.f32.mrf.mxu0
        %6544 = vdwg.mxu0
        %6545 = vmatprep.subr.bf16.mxu0 0
        %6546 = vmatpush1.bf16.msra.mxu0 0
        %6547 = vmatprep.subr.bf16.mxu0 0
        %6548 = vmatpush1.bf16.msra.mxu0 0
        %6549 = vmatprep.subr.bf16.mxu0 0
        %6550 = vmatpush1.bf16.msra.mxu0 0
        %6551 = vmatprep.subr.bf16.mxu0 0
        %6552 = vmatpush1.bf16.msra.mxu0 0
        %6553 = vmatprep.subr.bf16.mxu0 %v1476
        %6554 = vmatpush1.bf16.msra.mxu0 %v1475
        %6555 = vmatprep.subr.bf16.mxu0 %v1400
        %6556 = vmatpush1.bf16.msra.mxu0 %v1399
        %6557 = vmatprep.subr.bf16.mxu0 %v1324
        %6558 = vmatpush1.bf16.msra.mxu0 %v1323
        %6559 = vmatprep.subr.bf16.mxu0 %v1248
        %6560 = vmatpush1.bf16.msra.mxu0 %v1247
        %6561 = vmatprep.subr.bf16.mxu0 0
        %6562 = vmatpush2.bf16.msra.mxu0 0
        %6563 = vmatprep.subr.bf16.mxu0 0
        %6564 = vmatpush2.bf16.msra.mxu0 0
        %6565 = vmatprep.subr.bf16.mxu0 0
        %6566 = vmatpush2.bf16.msra.mxu0 0
        %6567 = vmatprep.subr.bf16.mxu0 0
        %6568 = vmatpush2.bf16.msra.mxu0 0
        %6569 = vmatprep.subr.bf16.mxu0 0
        %6570 = vmatpush2.bf16.msra.mxu0 0
        %6571 = vmatprep.subr.bf16.mxu0 0
        %6572 = vmatpush2.bf16.msra.mxu0 0
        %6573 = vmatprep.subr.bf16.mxu0 0
        %6574 = vmatpush2.bf16.msra.mxu0 0
        %6575 = vmatprep.subr.bf16.mxu0 0
        %6576 = vmatpush2.bf16.msra.mxu0 0
        %6577 = vmatprep.mubr.bf16.mxu0 0
        %6578 = vmatmul.mubr.bf16.gmra.mxu0 %v6174
        %v6579 = vpop.f32.mrf.mxu0
        %v6580 = vadd.f32 0.0, %v6579
        %v6581 = vpop.f32.mrf.mxu0
        %v6582 = vadd.f32 0.0, %v6581
        %v6583 = vpop.f32.mrf.mxu0
        %v6584 = vpop.f32.mrf.mxu0
        %6585 = vdwg.mxu0
        %6586 = vmatprep.subr.bf16.mxu0 0
        %6587 = vmatpush1.bf16.msra.mxu0 0
        %6588 = vmatprep.subr.bf16.mxu0 0
        %6589 = vmatpush1.bf16.msra.mxu0 0
        %6590 = vmatprep.subr.bf16.mxu0 0
        %6591 = vmatpush1.bf16.msra.mxu0 0
        %6592 = vmatprep.subr.bf16.mxu0 0
        %6593 = vmatpush1.bf16.msra.mxu0 0
        %6594 = vmatprep.subr.bf16.mxu0 %v1478
        %6595 = vmatpush1.bf16.msra.mxu0 %v1477
        %6596 = vmatprep.subr.bf16.mxu0 %v1402
        %6597 = vmatpush1.bf16.msra.mxu0 %v1401
        %6598 = vmatprep.subr.bf16.mxu0 %v1326
        %6599 = vmatpush1.bf16.msra.mxu0 %v1325
        %6600 = vmatprep.subr.bf16.mxu0 %v1250
        %6601 = vmatpush1.bf16.msra.mxu0 %v1249
        %6602 = vmatprep.subr.bf16.mxu0 0
        %6603 = vmatpush2.bf16.msra.mxu0 0
        %6604 = vmatprep.subr.bf16.mxu0 0
        %6605 = vmatpush2.bf16.msra.mxu0 0
        %6606 = vmatprep.subr.bf16.mxu0 0
        %6607 = vmatpush2.bf16.msra.mxu0 0
        %6608 = vmatprep.subr.bf16.mxu0 0
        %6609 = vmatpush2.bf16.msra.mxu0 0
        %6610 = vmatprep.subr.bf16.mxu0 0
        %6611 = vmatpush2.bf16.msra.mxu0 0
        %6612 = vmatprep.subr.bf16.mxu0 0
        %6613 = vmatpush2.bf16.msra.mxu0 0
        %6614 = vmatprep.subr.bf16.mxu0 0
        %6615 = vmatpush2.bf16.msra.mxu0 0
        %6616 = vmatprep.subr.bf16.mxu0 0
        %6617 = vmatpush2.bf16.msra.mxu0 0
        %6618 = vmatprep.mubr.bf16.mxu0 0
        %6619 = vmatmul.mubr.bf16.gmra.mxu0 %v6174
        %v6620 = vpop.f32.mrf.mxu0
        %v6621 = vadd.f32 0.0, %v6620
        %v6622 = vpop.f32.mrf.mxu0
        %v6623 = vadd.f32 0.0, %v6622
        %v6624 = vpop.f32.mrf.mxu0
        %v6625 = vpop.f32.mrf.mxu0
        %6626 = vdwg.mxu0
        %6627 = vmatprep.subr.bf16.mxu0 0
        %6628 = vmatpush1.bf16.msra.mxu0 0
        %6629 = vmatprep.subr.bf16.mxu0 0
        %6630 = vmatpush1.bf16.msra.mxu0 0
        %6631 = vmatprep.subr.bf16.mxu0 0
        %6632 = vmatpush1.bf16.msra.mxu0 0
        %6633 = vmatprep.subr.bf16.mxu0 0
        %6634 = vmatpush1.bf16.msra.mxu0 0
        %6635 = vmatprep.subr.bf16.mxu0 %v1480
        %6636 = vmatpush1.bf16.msra.mxu0 %v1479
        %6637 = vmatprep.subr.bf16.mxu0 %v1404
        %6638 = vmatpush1.bf16.msra.mxu0 %v1403
        %6639 = vmatprep.subr.bf16.mxu0 %v1328
        %6640 = vmatpush1.bf16.msra.mxu0 %v1327
        %6641 = vmatprep.subr.bf16.mxu0 %v1252
        %6642 = vmatpush1.bf16.msra.mxu0 %v1251
        %6643 = vmatprep.subr.bf16.mxu0 0
        %6644 = vmatpush2.bf16.msra.mxu0 0
        %6645 = vmatprep.subr.bf16.mxu0 0
        %6646 = vmatpush2.bf16.msra.mxu0 0
        %6647 = vmatprep.subr.bf16.mxu0 0
        %6648 = vmatpush2.bf16.msra.mxu0 0
        %6649 = vmatprep.subr.bf16.mxu0 0
        %6650 = vmatpush2.bf16.msra.mxu0 0
        %6651 = vmatprep.subr.bf16.mxu0 0
        %6652 = vmatpush2.bf16.msra.mxu0 0
        %6653 = vmatprep.subr.bf16.mxu0 0
        %6654 = vmatpush2.bf16.msra.mxu0 0
        %6655 = vmatprep.subr.bf16.mxu0 0
        %6656 = vmatpush2.bf16.msra.mxu0 0
        %6657 = vmatprep.subr.bf16.mxu0 0
        %6658 = vmatpush2.bf16.msra.mxu0 0
        %6659 = vmatprep.mubr.bf16.mxu0 0
        %6660 = vmatmul.mubr.bf16.gmra.mxu0 %v6174
        %v6661 = vpop.f32.mrf.mxu0
        %v6662 = vadd.f32 0.0, %v6661
        %v6663 = vpop.f32.mrf.mxu0
        %v6664 = vadd.f32 0.0, %v6663
        %v6665 = vpop.f32.mrf.mxu0
        %v6666 = vpop.f32.mrf.mxu0
        %6667 = vdwg.mxu0
        %6668 = vmatprep.subr.bf16.mxu0 0
        %6669 = vmatpush1.bf16.msra.mxu0 0
        %6670 = vmatprep.subr.bf16.mxu0 0
        %6671 = vmatpush1.bf16.msra.mxu0 0
        %6672 = vmatprep.subr.bf16.mxu0 0
        %6673 = vmatpush1.bf16.msra.mxu0 0
        %6674 = vmatprep.subr.bf16.mxu0 0
        %6675 = vmatpush1.bf16.msra.mxu0 0
        %6676 = vmatprep.subr.bf16.mxu0 %v1482
        %6677 = vmatpush1.bf16.msra.mxu0 %v1481
        %6678 = vmatprep.subr.bf16.mxu0 %v1406
        %6679 = vmatpush1.bf16.msra.mxu0 %v1405
        %6680 = vmatprep.subr.bf16.mxu0 %v1330
        %6681 = vmatpush1.bf16.msra.mxu0 %v1329
        %6682 = vmatprep.subr.bf16.mxu0 %v1254
        %6683 = vmatpush1.bf16.msra.mxu0 %v1253
        %6684 = vmatprep.subr.bf16.mxu0 0
        %6685 = vmatpush2.bf16.msra.mxu0 0
        %6686 = vmatprep.subr.bf16.mxu0 0
        %6687 = vmatpush2.bf16.msra.mxu0 0
        %6688 = vmatprep.subr.bf16.mxu0 0
        %6689 = vmatpush2.bf16.msra.mxu0 0
        %6690 = vmatprep.subr.bf16.mxu0 0
        %6691 = vmatpush2.bf16.msra.mxu0 0
        %6692 = vmatprep.subr.bf16.mxu0 0
        %6693 = vmatpush2.bf16.msra.mxu0 0
        %6694 = vmatprep.subr.bf16.mxu0 0
        %6695 = vmatpush2.bf16.msra.mxu0 0
        %6696 = vmatprep.subr.bf16.mxu0 0
        %6697 = vmatpush2.bf16.msra.mxu0 0
        %6698 = vmatprep.subr.bf16.mxu0 0
        %6699 = vmatpush2.bf16.msra.mxu0 0
        %6700 = vmatprep.mubr.bf16.mxu0 0
        %6701 = vmatmul.mubr.bf16.gmra.mxu0 %v6174
        %v6702 = vpop.f32.mrf.mxu0
        %v6703 = vadd.f32 0.0, %v6702
        %v6704 = vpop.f32.mrf.mxu0
        %v6705 = vadd.f32 0.0, %v6704
        %v6706 = vpop.f32.mrf.mxu0
        %v6707 = vpop.f32.mrf.mxu0
        %6708 = vdwg.mxu0
        %6709 = vmatprep.subr.bf16.mxu0 0
        %6710 = vmatpush1.bf16.msra.mxu0 0
        %6711 = vmatprep.subr.bf16.mxu0 0
        %6712 = vmatpush1.bf16.msra.mxu0 0
        %6713 = vmatprep.subr.bf16.mxu0 0
        %6714 = vmatpush1.bf16.msra.mxu0 0
        %6715 = vmatprep.subr.bf16.mxu0 0
        %6716 = vmatpush1.bf16.msra.mxu0 0
        %6717 = vmatprep.subr.bf16.mxu0 %v1484
        %6718 = vmatpush1.bf16.msra.mxu0 %v1483
        %6719 = vmatprep.subr.bf16.mxu0 %v1408
        %6720 = vmatpush1.bf16.msra.mxu0 %v1407
        %6721 = vmatprep.subr.bf16.mxu0 %v1332
        %6722 = vmatpush1.bf16.msra.mxu0 %v1331
        %6723 = vmatprep.subr.bf16.mxu0 %v1256
        %6724 = vmatpush1.bf16.msra.mxu0 %v1255
        %6725 = vmatprep.subr.bf16.mxu0 0
        %6726 = vmatpush2.bf16.msra.mxu0 0
        %6727 = vmatprep.subr.bf16.mxu0 0
        %6728 = vmatpush2.bf16.msra.mxu0 0
        %6729 = vmatprep.subr.bf16.mxu0 0
        %6730 = vmatpush2.bf16.msra.mxu0 0
        %6731 = vmatprep.subr.bf16.mxu0 0
        %6732 = vmatpush2.bf16.msra.mxu0 0
        %6733 = vmatprep.subr.bf16.mxu0 0
        %6734 = vmatpush2.bf16.msra.mxu0 0
        %6735 = vmatprep.subr.bf16.mxu0 0
        %6736 = vmatpush2.bf16.msra.mxu0 0
        %6737 = vmatprep.subr.bf16.mxu0 0
        %6738 = vmatpush2.bf16.msra.mxu0 0
        %6739 = vmatprep.subr.bf16.mxu0 0
        %6740 = vmatpush2.bf16.msra.mxu0 0
        %6741 = vmatprep.mubr.bf16.mxu0 0
        %6742 = vmatmul.mubr.bf16.gmra.mxu0 %v6174
        %v6743 = vpop.f32.mrf.mxu0
        %v6744 = vadd.f32 0.0, %v6743
        %v6745 = vpop.f32.mrf.mxu0
        %v6746 = vadd.f32 0.0, %v6745
        %v6747 = vpop.f32.mrf.mxu0
        %v6748 = vpop.f32.mrf.mxu0
        %6749 = vdwg.mxu0
        %6750 = vmatprep.subr.bf16.mxu0 0
        %6751 = vmatpush1.bf16.msra.mxu0 0
        %6752 = vmatprep.subr.bf16.mxu0 0
        %6753 = vmatpush1.bf16.msra.mxu0 0
        %6754 = vmatprep.subr.bf16.mxu0 0
        %6755 = vmatpush1.bf16.msra.mxu0 0
        %6756 = vmatprep.subr.bf16.mxu0 0
        %6757 = vmatpush1.bf16.msra.mxu0 0
        %6758 = vmatprep.subr.bf16.mxu0 %v1486
        %6759 = vmatpush1.bf16.msra.mxu0 %v1485
        %6760 = vmatprep.subr.bf16.mxu0 %v1410
        %6761 = vmatpush1.bf16.msra.mxu0 %v1409
        %6762 = vmatprep.subr.bf16.mxu0 %v1334
        %6763 = vmatpush1.bf16.msra.mxu0 %v1333
        %6764 = vmatprep.subr.bf16.mxu0 %v1258
        %6765 = vmatpush1.bf16.msra.mxu0 %v1257
        %6766 = vmatprep.subr.bf16.mxu0 0
        %6767 = vmatpush2.bf16.msra.mxu0 0
        %6768 = vmatprep.subr.bf16.mxu0 0
        %6769 = vmatpush2.bf16.msra.mxu0 0
        %6770 = vmatprep.subr.bf16.mxu0 0
        %6771 = vmatpush2.bf16.msra.mxu0 0
        %6772 = vmatprep.subr.bf16.mxu0 0
        %6773 = vmatpush2.bf16.msra.mxu0 0
        %6774 = vmatprep.subr.bf16.mxu0 0
        %6775 = vmatpush2.bf16.msra.mxu0 0
        %6776 = vmatprep.subr.bf16.mxu0 0
        %6777 = vmatpush2.bf16.msra.mxu0 0
        %6778 = vmatprep.subr.bf16.mxu0 0
        %6779 = vmatpush2.bf16.msra.mxu0 0
        %6780 = vmatprep.subr.bf16.mxu0 0
        %6781 = vmatpush2.bf16.msra.mxu0 0
        %6782 = vmatprep.mubr.bf16.mxu0 0
        %6783 = vmatmul.mubr.bf16.gmra.mxu0 %v6174
        %v6784 = vpop.f32.mrf.mxu0
        %v6785 = vadd.f32 0.0, %v6784
        %v6786 = vpop.f32.mrf.mxu0
        %v6787 = vadd.f32 0.0, %v6786
        %v6788 = vpop.f32.mrf.mxu0
        %v6789 = vpop.f32.mrf.mxu0
        %6790 = vdwg.mxu0
        %6791 = vmatprep.subr.bf16.mxu0 0
        %6792 = vmatpush1.bf16.msra.mxu0 0
        %6793 = vmatprep.subr.bf16.mxu0 0
        %6794 = vmatpush1.bf16.msra.mxu0 0
        %6795 = vmatprep.subr.bf16.mxu0 0
        %6796 = vmatpush1.bf16.msra.mxu0 0
        %6797 = vmatprep.subr.bf16.mxu0 0
        %6798 = vmatpush1.bf16.msra.mxu0 0
        %6799 = vmatprep.subr.bf16.mxu0 %v1488
        %6800 = vmatpush1.bf16.msra.mxu0 %v1487
        %6801 = vmatprep.subr.bf16.mxu0 %v1412
        %6802 = vmatpush1.bf16.msra.mxu0 %v1411
        %6803 = vmatprep.subr.bf16.mxu0 %v1336
        %6804 = vmatpush1.bf16.msra.mxu0 %v1335
        %6805 = vmatprep.subr.bf16.mxu0 %v1260
        %6806 = vmatpush1.bf16.msra.mxu0 %v1259
        %6807 = vmatprep.subr.bf16.mxu0 0
        %6808 = vmatpush2.bf16.msra.mxu0 0
        %6809 = vmatprep.subr.bf16.mxu0 0
        %6810 = vmatpush2.bf16.msra.mxu0 0
        %6811 = vmatprep.subr.bf16.mxu0 0
        %6812 = vmatpush2.bf16.msra.mxu0 0
        %6813 = vmatprep.subr.bf16.mxu0 0
        %6814 = vmatpush2.bf16.msra.mxu0 0
        %6815 = vmatprep.subr.bf16.mxu0 0
        %6816 = vmatpush2.bf16.msra.mxu0 0
        %6817 = vmatprep.subr.bf16.mxu0 0
        %6818 = vmatpush2.bf16.msra.mxu0 0
        %6819 = vmatprep.subr.bf16.mxu0 0
        %6820 = vmatpush2.bf16.msra.mxu0 0
        %6821 = vmatprep.subr.bf16.mxu0 0
        %6822 = vmatpush2.bf16.msra.mxu0 0
        %6823 = vmatprep.mubr.bf16.mxu0 0
        %6824 = vmatmul.mubr.bf16.gmra.mxu0 %v6174
        %v6825 = vpop.f32.mrf.mxu0
        %v6826 = vadd.f32 0.0, %v6825
        %v6827 = vpop.f32.mrf.mxu0
        %v6828 = vadd.f32 0.0, %v6827
        %v6829 = vpop.f32.mrf.mxu0
        %v6830 = vpop.f32.mrf.mxu0
        %6831 = vdwg.mxu0
        %6832 = vmatprep.subr.bf16.mxu0 0
        %6833 = vmatpush1.bf16.msra.mxu0 0
        %6834 = vmatprep.subr.bf16.mxu0 0
        %6835 = vmatpush1.bf16.msra.mxu0 0
        %6836 = vmatprep.subr.bf16.mxu0 0
        %6837 = vmatpush1.bf16.msra.mxu0 0
        %6838 = vmatprep.subr.bf16.mxu0 0
        %6839 = vmatpush1.bf16.msra.mxu0 0
        %6840 = vmatprep.subr.bf16.mxu0 %v1490
        %6841 = vmatpush1.bf16.msra.mxu0 %v1489
        %6842 = vmatprep.subr.bf16.mxu0 %v1414
        %6843 = vmatpush1.bf16.msra.mxu0 %v1413
        %6844 = vmatprep.subr.bf16.mxu0 %v1338
        %6845 = vmatpush1.bf16.msra.mxu0 %v1337
        %6846 = vmatprep.subr.bf16.mxu0 %v1262
        %6847 = vmatpush1.bf16.msra.mxu0 %v1261
        %6848 = vmatprep.subr.bf16.mxu0 0
        %6849 = vmatpush2.bf16.msra.mxu0 0
        %6850 = vmatprep.subr.bf16.mxu0 0
        %6851 = vmatpush2.bf16.msra.mxu0 0
        %6852 = vmatprep.subr.bf16.mxu0 0
        %6853 = vmatpush2.bf16.msra.mxu0 0
        %6854 = vmatprep.subr.bf16.mxu0 0
        %6855 = vmatpush2.bf16.msra.mxu0 0
        %6856 = vmatprep.subr.bf16.mxu0 0
        %6857 = vmatpush2.bf16.msra.mxu0 0
        %6858 = vmatprep.subr.bf16.mxu0 0
        %6859 = vmatpush2.bf16.msra.mxu0 0
        %6860 = vmatprep.subr.bf16.mxu0 0
        %6861 = vmatpush2.bf16.msra.mxu0 0
        %6862 = vmatprep.subr.bf16.mxu0 0
        %6863 = vmatpush2.bf16.msra.mxu0 0
        %6864 = vmatprep.mubr.bf16.mxu0 0
        %6865 = vmatmul.mubr.bf16.gmra.mxu0 %v6174
        %v6866 = vpop.f32.mrf.mxu0
        %v6867 = vadd.f32 0.0, %v6866
        %v6868 = vpop.f32.mrf.mxu0
        %v6869 = vadd.f32 0.0, %v6868
        %v6870 = vpop.f32.mrf.mxu0
        %v6871 = vpop.f32.mrf.mxu0
        %6872 = vdwg.mxu0
        %6873 = vmatprep.subr.bf16.mxu0 0
        %6874 = vmatpush1.bf16.msra.mxu0 0
        %6875 = vmatprep.subr.bf16.mxu0 0
        %6876 = vmatpush1.bf16.msra.mxu0 0
        %6877 = vmatprep.subr.bf16.mxu0 0
        %6878 = vmatpush1.bf16.msra.mxu0 0
        %6879 = vmatprep.subr.bf16.mxu0 0
        %6880 = vmatpush1.bf16.msra.mxu0 0
        %6881 = vmatprep.subr.bf16.mxu0 %v1492
        %6882 = vmatpush1.bf16.msra.mxu0 %v1491
        %6883 = vmatprep.subr.bf16.mxu0 %v1416
        %6884 = vmatpush1.bf16.msra.mxu0 %v1415
        %6885 = vmatprep.subr.bf16.mxu0 %v1340
        %6886 = vmatpush1.bf16.msra.mxu0 %v1339
        %6887 = vmatprep.subr.bf16.mxu0 %v1264
        %6888 = vmatpush1.bf16.msra.mxu0 %v1263
        %6889 = vmatprep.subr.bf16.mxu0 0
        %6890 = vmatpush2.bf16.msra.mxu0 0
        %6891 = vmatprep.subr.bf16.mxu0 0
        %6892 = vmatpush2.bf16.msra.mxu0 0
        %6893 = vmatprep.subr.bf16.mxu0 0
        %6894 = vmatpush2.bf16.msra.mxu0 0
        %6895 = vmatprep.subr.bf16.mxu0 0
        %6896 = vmatpush2.bf16.msra.mxu0 0
        %6897 = vmatprep.subr.bf16.mxu0 0
        %6898 = vmatpush2.bf16.msra.mxu0 0
        %6899 = vmatprep.subr.bf16.mxu0 0
        %6900 = vmatpush2.bf16.msra.mxu0 0
        %6901 = vmatprep.subr.bf16.mxu0 0
        %6902 = vmatpush2.bf16.msra.mxu0 0
        %6903 = vmatprep.subr.bf16.mxu0 0
        %6904 = vmatpush2.bf16.msra.mxu0 0
        %6905 = vmatprep.mubr.bf16.mxu0 0
        %6906 = vmatmul.mubr.bf16.gmra.mxu0 %v6174
        %v6907 = vpop.f32.mrf.mxu0
        %v6908 = vadd.f32 0.0, %v6907
        %v6909 = vpop.f32.mrf.mxu0
        %v6910 = vadd.f32 0.0, %v6909
        %v6911 = vpop.f32.mrf.mxu0
        %v6912 = vpop.f32.mrf.mxu0
        %6913 = vdwg.mxu0
        %6914 = vmatprep.subr.bf16.mxu0 0
        %6915 = vmatpush1.bf16.msra.mxu0 0
        %6916 = vmatprep.subr.bf16.mxu0 0
        %6917 = vmatpush1.bf16.msra.mxu0 0
        %6918 = vmatprep.subr.bf16.mxu0 0
        %6919 = vmatpush1.bf16.msra.mxu0 0
        %6920 = vmatprep.subr.bf16.mxu0 0
        %6921 = vmatpush1.bf16.msra.mxu0 0
        %6922 = vmatprep.subr.bf16.mxu0 %v1494
        %6923 = vmatpush1.bf16.msra.mxu0 %v1493
        %6924 = vmatprep.subr.bf16.mxu0 %v1418
        %6925 = vmatpush1.bf16.msra.mxu0 %v1417
        %6926 = vmatprep.subr.bf16.mxu0 %v1342
        %6927 = vmatpush1.bf16.msra.mxu0 %v1341
        %6928 = vmatprep.subr.bf16.mxu0 %v1266
        %6929 = vmatpush1.bf16.msra.mxu0 %v1265
        %6930 = vmatprep.subr.bf16.mxu0 0
        %6931 = vmatpush2.bf16.msra.mxu0 0
        %6932 = vmatprep.subr.bf16.mxu0 0
        %6933 = vmatpush2.bf16.msra.mxu0 0
        %6934 = vmatprep.subr.bf16.mxu0 0
        %6935 = vmatpush2.bf16.msra.mxu0 0
        %6936 = vmatprep.subr.bf16.mxu0 0
        %6937 = vmatpush2.bf16.msra.mxu0 0
        %6938 = vmatprep.subr.bf16.mxu0 0
        %6939 = vmatpush2.bf16.msra.mxu0 0
        %6940 = vmatprep.subr.bf16.mxu0 0
        %6941 = vmatpush2.bf16.msra.mxu0 0
        %6942 = vmatprep.subr.bf16.mxu0 0
        %6943 = vmatpush2.bf16.msra.mxu0 0
        %6944 = vmatprep.subr.bf16.mxu0 0
        %6945 = vmatpush2.bf16.msra.mxu0 0
        %6946 = vmatprep.mubr.bf16.mxu0 0
        %6947 = vmatmul.mubr.bf16.gmra.mxu0 %v6174
        %v6948 = vpop.f32.mrf.mxu0
        %v6949 = vadd.f32 0.0, %v6948
        %v6950 = vpop.f32.mrf.mxu0
        %v6951 = vadd.f32 0.0, %v6950
        %v6952 = vpop.f32.mrf.mxu0
        %v6953 = vpop.f32.mrf.mxu0
        %6954 = vdwg.mxu0
        %6955 = vmatprep.subr.bf16.mxu0 0
        %6956 = vmatpush1.bf16.msra.mxu0 0
        %6957 = vmatprep.subr.bf16.mxu0 0
        %6958 = vmatpush1.bf16.msra.mxu0 0
        %6959 = vmatprep.subr.bf16.mxu0 0
        %6960 = vmatpush1.bf16.msra.mxu0 0
        %6961 = vmatprep.subr.bf16.mxu0 0
        %6962 = vmatpush1.bf16.msra.mxu0 0
        %6963 = vmatprep.subr.bf16.mxu0 %v1496
        %6964 = vmatpush1.bf16.msra.mxu0 %v1495
        %6965 = vmatprep.subr.bf16.mxu0 %v1420
        %6966 = vmatpush1.bf16.msra.mxu0 %v1419
        %6967 = vmatprep.subr.bf16.mxu0 %v1344
        %6968 = vmatpush1.bf16.msra.mxu0 %v1343
        %6969 = vmatprep.subr.bf16.mxu0 %v1268
        %6970 = vmatpush1.bf16.msra.mxu0 %v1267
        %6971 = vmatprep.subr.bf16.mxu0 0
        %6972 = vmatpush2.bf16.msra.mxu0 0
        %6973 = vmatprep.subr.bf16.mxu0 0
        %6974 = vmatpush2.bf16.msra.mxu0 0
        %6975 = vmatprep.subr.bf16.mxu0 0
        %6976 = vmatpush2.bf16.msra.mxu0 0
        %6977 = vmatprep.subr.bf16.mxu0 0
        %6978 = vmatpush2.bf16.msra.mxu0 0
        %6979 = vmatprep.subr.bf16.mxu0 0
        %6980 = vmatpush2.bf16.msra.mxu0 0
        %6981 = vmatprep.subr.bf16.mxu0 0
        %6982 = vmatpush2.bf16.msra.mxu0 0
        %6983 = vmatprep.subr.bf16.mxu0 0
        %6984 = vmatpush2.bf16.msra.mxu0 0
        %6985 = vmatprep.subr.bf16.mxu0 0
        %6986 = vmatpush2.bf16.msra.mxu0 0
        %6987 = vmatprep.mubr.bf16.mxu0 0
        %6988 = vmatmul.mubr.bf16.gmra.mxu0 %v6174
        %v6989 = vpop.f32.mrf.mxu0
        %v6990 = vadd.f32 0.0, %v6989
        %v6991 = vpop.f32.mrf.mxu0
        %v6992 = vadd.f32 0.0, %v6991
        %v6993 = vpop.f32.mrf.mxu0
        %v6994 = vpop.f32.mrf.mxu0
        %6995 = vdwg.mxu0
        %6996 = vmatprep.subr.bf16.mxu0 0
        %6997 = vmatpush1.bf16.msra.mxu0 0
        %6998 = vmatprep.subr.bf16.mxu0 0
        %6999 = vmatpush1.bf16.msra.mxu0 0
        %7000 = vmatprep.subr.bf16.mxu0 0
        %7001 = vmatpush1.bf16.msra.mxu0 0
        %7002 = vmatprep.subr.bf16.mxu0 0
        %7003 = vmatpush1.bf16.msra.mxu0 0
        %7004 = vmatprep.subr.bf16.mxu0 %v1498
        %7005 = vmatpush1.bf16.msra.mxu0 %v1497
        %7006 = vmatprep.subr.bf16.mxu0 %v1422
        %7007 = vmatpush1.bf16.msra.mxu0 %v1421
        %7008 = vmatprep.subr.bf16.mxu0 %v1346
        %7009 = vmatpush1.bf16.msra.mxu0 %v1345
        %7010 = vmatprep.subr.bf16.mxu0 %v1270
        %7011 = vmatpush1.bf16.msra.mxu0 %v1269
        %7012 = vmatprep.subr.bf16.mxu0 0
        %7013 = vmatpush2.bf16.msra.mxu0 0
        %7014 = vmatprep.subr.bf16.mxu0 0
        %7015 = vmatpush2.bf16.msra.mxu0 0
        %7016 = vmatprep.subr.bf16.mxu0 0
        %7017 = vmatpush2.bf16.msra.mxu0 0
        %7018 = vmatprep.subr.bf16.mxu0 0
        %7019 = vmatpush2.bf16.msra.mxu0 0
        %7020 = vmatprep.subr.bf16.mxu0 0
        %7021 = vmatpush2.bf16.msra.mxu0 0
        %7022 = vmatprep.subr.bf16.mxu0 0
        %7023 = vmatpush2.bf16.msra.mxu0 0
        %7024 = vmatprep.subr.bf16.mxu0 0
        %7025 = vmatpush2.bf16.msra.mxu0 0
        %7026 = vmatprep.subr.bf16.mxu0 0
        %7027 = vmatpush2.bf16.msra.mxu0 0
        %7028 = vmatprep.mubr.bf16.mxu0 0
        %7029 = vmatmul.mubr.bf16.gmra.mxu0 %v6174
        %v7030 = vpop.f32.mrf.mxu0
        %v7031 = vadd.f32 0.0, %v7030
        %v7032 = vpop.f32.mrf.mxu0
        %v7033 = vadd.f32 0.0, %v7032
        %v7034 = vpop.f32.mrf.mxu0
        %v7035 = vpop.f32.mrf.mxu0
        %7036 = vdwg.mxu0
        %7037 = vmatprep.subr.bf16.mxu0 0
        %7038 = vmatpush1.bf16.msra.mxu0 0
        %7039 = vmatprep.subr.bf16.mxu0 0
        %7040 = vmatpush1.bf16.msra.mxu0 0
        %7041 = vmatprep.subr.bf16.mxu0 0
        %7042 = vmatpush1.bf16.msra.mxu0 0
        %7043 = vmatprep.subr.bf16.mxu0 0
        %7044 = vmatpush1.bf16.msra.mxu0 0
        %7045 = vmatprep.subr.bf16.mxu0 %v1500
        %7046 = vmatpush1.bf16.msra.mxu0 %v1499
        %7047 = vmatprep.subr.bf16.mxu0 %v1424
        %7048 = vmatpush1.bf16.msra.mxu0 %v1423
        %7049 = vmatprep.subr.bf16.mxu0 %v1348
        %7050 = vmatpush1.bf16.msra.mxu0 %v1347
        %7051 = vmatprep.subr.bf16.mxu0 %v1272
        %7052 = vmatpush1.bf16.msra.mxu0 %v1271
        %7053 = vmatprep.subr.bf16.mxu0 0
        %7054 = vmatpush2.bf16.msra.mxu0 0
        %7055 = vmatprep.subr.bf16.mxu0 0
        %7056 = vmatpush2.bf16.msra.mxu0 0
        %7057 = vmatprep.subr.bf16.mxu0 0
        %7058 = vmatpush2.bf16.msra.mxu0 0
        %7059 = vmatprep.subr.bf16.mxu0 0
        %7060 = vmatpush2.bf16.msra.mxu0 0
        %7061 = vmatprep.subr.bf16.mxu0 0
        %7062 = vmatpush2.bf16.msra.mxu0 0
        %7063 = vmatprep.subr.bf16.mxu0 0
        %7064 = vmatpush2.bf16.msra.mxu0 0
        %7065 = vmatprep.subr.bf16.mxu0 0
        %7066 = vmatpush2.bf16.msra.mxu0 0
        %7067 = vmatprep.subr.bf16.mxu0 0
        %7068 = vmatpush2.bf16.msra.mxu0 0
        %7069 = vmatprep.mubr.bf16.mxu0 0
        %7070 = vmatmul.mubr.bf16.gmra.mxu0 %v6174
        %v7071 = vpop.f32.mrf.mxu0
        %v7072 = vadd.f32 0.0, %v7071
        %v7073 = vpop.f32.mrf.mxu0
        %v7074 = vadd.f32 0.0, %v7073
        %v7075 = vpop.f32.mrf.mxu0
        %v7076 = vpop.f32.mrf.mxu0
        %7077 = vdwg.mxu0
        %7078 = vmatprep.subr.bf16.mxu0 0
        %7079 = vmatpush1.bf16.msra.mxu0 0
        %7080 = vmatprep.subr.bf16.mxu0 0
        %7081 = vmatpush1.bf16.msra.mxu0 0
        %7082 = vmatprep.subr.bf16.mxu0 0
        %7083 = vmatpush1.bf16.msra.mxu0 0
        %7084 = vmatprep.subr.bf16.mxu0 0
        %7085 = vmatpush1.bf16.msra.mxu0 0
        %7086 = vmatprep.subr.bf16.mxu0 %v1502
        %7087 = vmatpush1.bf16.msra.mxu0 %v1501
        %7088 = vmatprep.subr.bf16.mxu0 %v1426
        %7089 = vmatpush1.bf16.msra.mxu0 %v1425
        %7090 = vmatprep.subr.bf16.mxu0 %v1350
        %7091 = vmatpush1.bf16.msra.mxu0 %v1349
        %7092 = vmatprep.subr.bf16.mxu0 %v1274
        %7093 = vmatpush1.bf16.msra.mxu0 %v1273
        %7094 = vmatprep.subr.bf16.mxu0 0
        %7095 = vmatpush2.bf16.msra.mxu0 0
        %7096 = vmatprep.subr.bf16.mxu0 0
        %7097 = vmatpush2.bf16.msra.mxu0 0
        %7098 = vmatprep.subr.bf16.mxu0 0
        %7099 = vmatpush2.bf16.msra.mxu0 0
        %7100 = vmatprep.subr.bf16.mxu0 0
        %7101 = vmatpush2.bf16.msra.mxu0 0
        %7102 = vmatprep.subr.bf16.mxu0 0
        %7103 = vmatpush2.bf16.msra.mxu0 0
        %7104 = vmatprep.subr.bf16.mxu0 0
        %7105 = vmatpush2.bf16.msra.mxu0 0
        %7106 = vmatprep.subr.bf16.mxu0 0
        %7107 = vmatpush2.bf16.msra.mxu0 0
        %7108 = vmatprep.subr.bf16.mxu0 0
        %7109 = vmatpush2.bf16.msra.mxu0 0
        %7110 = vmatprep.mubr.bf16.mxu0 0
        %7111 = vmatmul.mubr.bf16.gmra.mxu0 %v6174
        %v7112 = vpop.f32.mrf.mxu0
        %v7113 = vadd.f32 0.0, %v7112
        %v7114 = vpop.f32.mrf.mxu0
        %v7115 = vadd.f32 0.0, %v7114
        %v7116 = vpop.f32.mrf.mxu0
        %v7117 = vpop.f32.mrf.mxu0
        %7118 = vdwg.mxu0
        %7119 = vmatprep.subr.bf16.mxu0 0
        %7120 = vmatpush1.bf16.msra.mxu0 0
        %7121 = vmatprep.subr.bf16.mxu0 0
        %7122 = vmatpush1.bf16.msra.mxu0 0
        %7123 = vmatprep.subr.bf16.mxu0 0
        %7124 = vmatpush1.bf16.msra.mxu0 0
        %7125 = vmatprep.subr.bf16.mxu0 0
        %7126 = vmatpush1.bf16.msra.mxu0 0
        %7127 = vmatprep.subr.bf16.mxu0 %v1504
        %7128 = vmatpush1.bf16.msra.mxu0 %v1503
        %7129 = vmatprep.subr.bf16.mxu0 %v1428
        %7130 = vmatpush1.bf16.msra.mxu0 %v1427
        %7131 = vmatprep.subr.bf16.mxu0 %v1352
        %7132 = vmatpush1.bf16.msra.mxu0 %v1351
        %7133 = vmatprep.subr.bf16.mxu0 %v1276
        %7134 = vmatpush1.bf16.msra.mxu0 %v1275
        %7135 = vmatprep.subr.bf16.mxu0 0
        %7136 = vmatpush2.bf16.msra.mxu0 0
        %7137 = vmatprep.subr.bf16.mxu0 0
        %7138 = vmatpush2.bf16.msra.mxu0 0
        %7139 = vmatprep.subr.bf16.mxu0 0
        %7140 = vmatpush2.bf16.msra.mxu0 0
        %7141 = vmatprep.subr.bf16.mxu0 0
        %7142 = vmatpush2.bf16.msra.mxu0 0
        %7143 = vmatprep.subr.bf16.mxu0 0
        %7144 = vmatpush2.bf16.msra.mxu0 0
        %7145 = vmatprep.subr.bf16.mxu0 0
        %7146 = vmatpush2.bf16.msra.mxu0 0
        %7147 = vmatprep.subr.bf16.mxu0 0
        %7148 = vmatpush2.bf16.msra.mxu0 0
        %7149 = vmatprep.subr.bf16.mxu0 0
        %7150 = vmatpush2.bf16.msra.mxu0 0
        %7151 = vmatprep.mubr.bf16.mxu0 0
        %7152 = vmatmul.mubr.bf16.gmra.mxu0 %v6174
        %v7153 = vpop.f32.mrf.mxu0
        %v7154 = vadd.f32 0.0, %v7153
        %v7155 = vpop.f32.mrf.mxu0
        %v7156 = vadd.f32 0.0, %v7155
        %v7157 = vpop.f32.mrf.mxu0
        %v7158 = vpop.f32.mrf.mxu0
        %7159 = vdwg.mxu0
        %7160 = vmatprep.subr.bf16.mxu0 0
        %7161 = vmatpush1.bf16.msra.mxu0 0
        %7162 = vmatprep.subr.bf16.mxu0 0
        %7163 = vmatpush1.bf16.msra.mxu0 0
        %7164 = vmatprep.subr.bf16.mxu0 0
        %7165 = vmatpush1.bf16.msra.mxu0 0
        %7166 = vmatprep.subr.bf16.mxu0 0
        %7167 = vmatpush1.bf16.msra.mxu0 0
        %7168 = vmatprep.subr.bf16.mxu0 %v1506
        %7169 = vmatpush1.bf16.msra.mxu0 %v1505
        %7170 = vmatprep.subr.bf16.mxu0 %v1430
        %7171 = vmatpush1.bf16.msra.mxu0 %v1429
        %7172 = vmatprep.subr.bf16.mxu0 %v1354
        %7173 = vmatpush1.bf16.msra.mxu0 %v1353
        %7174 = vmatprep.subr.bf16.mxu0 %v1278
        %7175 = vmatpush1.bf16.msra.mxu0 %v1277
        %7176 = vmatprep.subr.bf16.mxu0 0
        %7177 = vmatpush2.bf16.msra.mxu0 0
        %7178 = vmatprep.subr.bf16.mxu0 0
        %7179 = vmatpush2.bf16.msra.mxu0 0
        %7180 = vmatprep.subr.bf16.mxu0 0
        %7181 = vmatpush2.bf16.msra.mxu0 0
        %7182 = vmatprep.subr.bf16.mxu0 0
        %7183 = vmatpush2.bf16.msra.mxu0 0
        %7184 = vmatprep.subr.bf16.mxu0 0
        %7185 = vmatpush2.bf16.msra.mxu0 0
        %7186 = vmatprep.subr.bf16.mxu0 0
        %7187 = vmatpush2.bf16.msra.mxu0 0
        %7188 = vmatprep.subr.bf16.mxu0 0
        %7189 = vmatpush2.bf16.msra.mxu0 0
        %7190 = vmatprep.subr.bf16.mxu0 0
        %7191 = vmatpush2.bf16.msra.mxu0 0
        %7192 = vmatprep.mubr.bf16.mxu0 0
        %7193 = vmatmul.mubr.bf16.gmra.mxu0 %v6174
        %v7194 = vpop.f32.mrf.mxu0
        %v7195 = vadd.f32 0.0, %v7194
        %v7196 = vpop.f32.mrf.mxu0
        %v7197 = vadd.f32 0.0, %v7196
        %v7198 = vpop.f32.mrf.mxu0
        %v7199 = vpop.f32.mrf.mxu0
        %7200 = vdwg.mxu0
        %7201 = vmatprep.subr.bf16.mxu0 0
        %7202 = vmatpush1.bf16.msra.mxu0 0
        %7203 = vmatprep.subr.bf16.mxu0 0
        %7204 = vmatpush1.bf16.msra.mxu0 0
        %7205 = vmatprep.subr.bf16.mxu0 0
        %7206 = vmatpush1.bf16.msra.mxu0 0
        %7207 = vmatprep.subr.bf16.mxu0 0
        %7208 = vmatpush1.bf16.msra.mxu0 0
        %7209 = vmatprep.subr.bf16.mxu0 %v1508
        %7210 = vmatpush1.bf16.msra.mxu0 %v1507
        %7211 = vmatprep.subr.bf16.mxu0 %v1432
        %7212 = vmatpush1.bf16.msra.mxu0 %v1431
        %7213 = vmatprep.subr.bf16.mxu0 %v1356
        %7214 = vmatpush1.bf16.msra.mxu0 %v1355
        %7215 = vmatprep.subr.bf16.mxu0 %v1280
        %7216 = vmatpush1.bf16.msra.mxu0 %v1279
        %7217 = vmatprep.subr.bf16.mxu0 0
        %7218 = vmatpush2.bf16.msra.mxu0 0
        %7219 = vmatprep.subr.bf16.mxu0 0
        %7220 = vmatpush2.bf16.msra.mxu0 0
        %7221 = vmatprep.subr.bf16.mxu0 0
        %7222 = vmatpush2.bf16.msra.mxu0 0
        %7223 = vmatprep.subr.bf16.mxu0 0
        %7224 = vmatpush2.bf16.msra.mxu0 0
        %7225 = vmatprep.subr.bf16.mxu0 0
        %7226 = vmatpush2.bf16.msra.mxu0 0
        %7227 = vmatprep.subr.bf16.mxu0 0
        %7228 = vmatpush2.bf16.msra.mxu0 0
        %7229 = vmatprep.subr.bf16.mxu0 0
        %7230 = vmatpush2.bf16.msra.mxu0 0
        %7231 = vmatprep.subr.bf16.mxu0 0
        %7232 = vmatpush2.bf16.msra.mxu0 0
        %7233 = vmatprep.mubr.bf16.mxu0 0
        %7234 = vmatmul.mubr.bf16.gmra.mxu0 %v6174
        %v7235 = vpop.f32.mrf.mxu0
        %v7236 = vadd.f32 0.0, %v7235
        %v7237 = vpop.f32.mrf.mxu0
        %v7238 = vadd.f32 0.0, %v7237
        %v7239 = vpop.f32.mrf.mxu0
        %v7240 = vpop.f32.mrf.mxu0
        %7241 = vdwg.mxu0
        %7242 = vmatprep.subr.bf16.mxu0 0
        %7243 = vmatpush1.bf16.msra.mxu0 0
        %7244 = vmatprep.subr.bf16.mxu0 0
        %7245 = vmatpush1.bf16.msra.mxu0 0
        %7246 = vmatprep.subr.bf16.mxu0 0
        %7247 = vmatpush1.bf16.msra.mxu0 0
        %7248 = vmatprep.subr.bf16.mxu0 0
        %7249 = vmatpush1.bf16.msra.mxu0 0
        %7250 = vmatprep.subr.bf16.mxu0 %v1510
        %7251 = vmatpush1.bf16.msra.mxu0 %v1509
        %7252 = vmatprep.subr.bf16.mxu0 %v1434
        %7253 = vmatpush1.bf16.msra.mxu0 %v1433
        %7254 = vmatprep.subr.bf16.mxu0 %v1358
        %7255 = vmatpush1.bf16.msra.mxu0 %v1357
        %7256 = vmatprep.subr.bf16.mxu0 %v1282
        %7257 = vmatpush1.bf16.msra.mxu0 %v1281
        %7258 = vmatprep.subr.bf16.mxu0 0
        %7259 = vmatpush2.bf16.msra.mxu0 0
        %7260 = vmatprep.subr.bf16.mxu0 0
        %7261 = vmatpush2.bf16.msra.mxu0 0
        %7262 = vmatprep.subr.bf16.mxu0 0
        %7263 = vmatpush2.bf16.msra.mxu0 0
        %7264 = vmatprep.subr.bf16.mxu0 0
        %7265 = vmatpush2.bf16.msra.mxu0 0
        %7266 = vmatprep.subr.bf16.mxu0 0
        %7267 = vmatpush2.bf16.msra.mxu0 0
        %7268 = vmatprep.subr.bf16.mxu0 0
        %7269 = vmatpush2.bf16.msra.mxu0 0
        %7270 = vmatprep.subr.bf16.mxu0 0
        %7271 = vmatpush2.bf16.msra.mxu0 0
        %7272 = vmatprep.subr.bf16.mxu0 0
        %7273 = vmatpush2.bf16.msra.mxu0 0
        %7274 = vmatprep.mubr.bf16.mxu0 0
        %7275 = vmatmul.mubr.bf16.gmra.mxu0 %v6174
        %v7276 = vpop.f32.mrf.mxu0
        %v7277 = vadd.f32 0.0, %v7276
        %v7278 = vpop.f32.mrf.mxu0
        %v7279 = vadd.f32 0.0, %v7278
        %v7280 = vpop.f32.mrf.mxu0
        %v7281 = vpop.f32.mrf.mxu0
        %7282 = vdwg.mxu0
        %7283 = vmatprep.subr.bf16.mxu0 0
        %7284 = vmatpush1.bf16.msra.mxu0 0
        %7285 = vmatprep.subr.bf16.mxu0 0
        %7286 = vmatpush1.bf16.msra.mxu0 0
        %7287 = vmatprep.subr.bf16.mxu0 0
        %7288 = vmatpush1.bf16.msra.mxu0 0
        %7289 = vmatprep.subr.bf16.mxu0 0
        %7290 = vmatpush1.bf16.msra.mxu0 0
        %7291 = vmatprep.subr.bf16.mxu0 %v1512
        %7292 = vmatpush1.bf16.msra.mxu0 %v1511
        %7293 = vmatprep.subr.bf16.mxu0 %v1436
        %7294 = vmatpush1.bf16.msra.mxu0 %v1435
        %7295 = vmatprep.subr.bf16.mxu0 %v1360
        %7296 = vmatpush1.bf16.msra.mxu0 %v1359
        %7297 = vmatprep.subr.bf16.mxu0 %v1284
        %7298 = vmatpush1.bf16.msra.mxu0 %v1283
        %7299 = vmatprep.subr.bf16.mxu0 0
        %7300 = vmatpush2.bf16.msra.mxu0 0
        %7301 = vmatprep.subr.bf16.mxu0 0
        %7302 = vmatpush2.bf16.msra.mxu0 0
        %7303 = vmatprep.subr.bf16.mxu0 0
        %7304 = vmatpush2.bf16.msra.mxu0 0
        %7305 = vmatprep.subr.bf16.mxu0 0
        %7306 = vmatpush2.bf16.msra.mxu0 0
        %7307 = vmatprep.subr.bf16.mxu0 0
        %7308 = vmatpush2.bf16.msra.mxu0 0
        %7309 = vmatprep.subr.bf16.mxu0 0
        %7310 = vmatpush2.bf16.msra.mxu0 0
        %7311 = vmatprep.subr.bf16.mxu0 0
        %7312 = vmatpush2.bf16.msra.mxu0 0
        %7313 = vmatprep.subr.bf16.mxu0 0
        %7314 = vmatpush2.bf16.msra.mxu0 0
        %7315 = vmatprep.mubr.bf16.mxu0 0
        %7316 = vmatmul.mubr.bf16.gmra.mxu0 %v6174
        %v7317 = vpop.f32.mrf.mxu0
        %v7318 = vadd.f32 0.0, %v7317
        %v7319 = vpop.f32.mrf.mxu0
        %v7320 = vadd.f32 0.0, %v7319
        %v7321 = vpop.f32.mrf.mxu0
        %v7322 = vpop.f32.mrf.mxu0
        %7323 = vdwg.mxu0
        %7324 = vmatprep.subr.bf16.mxu0 0
        %7325 = vmatpush1.bf16.msra.mxu0 0
        %7326 = vmatprep.subr.bf16.mxu0 0
        %7327 = vmatpush1.bf16.msra.mxu0 0
        %7328 = vmatprep.subr.bf16.mxu0 0
        %7329 = vmatpush1.bf16.msra.mxu0 0
        %7330 = vmatprep.subr.bf16.mxu0 0
        %7331 = vmatpush1.bf16.msra.mxu0 0
        %7332 = vmatprep.subr.bf16.mxu0 %v1514
        %7333 = vmatpush1.bf16.msra.mxu0 %v1513
        %7334 = vmatprep.subr.bf16.mxu0 %v1438
        %7335 = vmatpush1.bf16.msra.mxu0 %v1437
        %7336 = vmatprep.subr.bf16.mxu0 %v1362
        %7337 = vmatpush1.bf16.msra.mxu0 %v1361
        %7338 = vmatprep.subr.bf16.mxu0 %v1286
        %7339 = vmatpush1.bf16.msra.mxu0 %v1285
        %7340 = vmatprep.subr.bf16.mxu0 0
        %7341 = vmatpush2.bf16.msra.mxu0 0
        %7342 = vmatprep.subr.bf16.mxu0 0
        %7343 = vmatpush2.bf16.msra.mxu0 0
        %7344 = vmatprep.subr.bf16.mxu0 0
        %7345 = vmatpush2.bf16.msra.mxu0 0
        %7346 = vmatprep.subr.bf16.mxu0 0
        %7347 = vmatpush2.bf16.msra.mxu0 0
        %7348 = vmatprep.subr.bf16.mxu0 0
        %7349 = vmatpush2.bf16.msra.mxu0 0
        %7350 = vmatprep.subr.bf16.mxu0 0
        %7351 = vmatpush2.bf16.msra.mxu0 0
        %7352 = vmatprep.subr.bf16.mxu0 0
        %7353 = vmatpush2.bf16.msra.mxu0 0
        %7354 = vmatprep.subr.bf16.mxu0 0
        %7355 = vmatpush2.bf16.msra.mxu0 0
        %7356 = vmatprep.mubr.bf16.mxu0 0
        %7357 = vmatmul.mubr.bf16.gmra.mxu0 %v6174
        %v7358 = vpop.f32.mrf.mxu0
        %v7359 = vadd.f32 0.0, %v7358
        %v7360 = vpop.f32.mrf.mxu0
        %v7361 = vadd.f32 0.0, %v7360
        %v7362 = vpop.f32.mrf.mxu0
        %v7363 = vpop.f32.mrf.mxu0
        %7364 = vdwg.mxu0
        %7365 = vmatprep.subr.bf16.mxu0 0
        %7366 = vmatpush1.bf16.msra.mxu0 0
        %7367 = vmatprep.subr.bf16.mxu0 0
        %7368 = vmatpush1.bf16.msra.mxu0 0
        %7369 = vmatprep.subr.bf16.mxu0 0
        %7370 = vmatpush1.bf16.msra.mxu0 0
        %7371 = vmatprep.subr.bf16.mxu0 0
        %7372 = vmatpush1.bf16.msra.mxu0 0
        %7373 = vmatprep.subr.bf16.mxu0 %v1516
        %7374 = vmatpush1.bf16.msra.mxu0 %v1515
        %7375 = vmatprep.subr.bf16.mxu0 %v1440
        %7376 = vmatpush1.bf16.msra.mxu0 %v1439
        %7377 = vmatprep.subr.bf16.mxu0 %v1364
        %7378 = vmatpush1.bf16.msra.mxu0 %v1363
        %7379 = vmatprep.subr.bf16.mxu0 %v1288
        %7380 = vmatpush1.bf16.msra.mxu0 %v1287
        %7381 = vmatprep.subr.bf16.mxu0 0
        %7382 = vmatpush2.bf16.msra.mxu0 0
        %7383 = vmatprep.subr.bf16.mxu0 0
        %7384 = vmatpush2.bf16.msra.mxu0 0
        %7385 = vmatprep.subr.bf16.mxu0 0
        %7386 = vmatpush2.bf16.msra.mxu0 0
        %7387 = vmatprep.subr.bf16.mxu0 0
        %7388 = vmatpush2.bf16.msra.mxu0 0
        %7389 = vmatprep.subr.bf16.mxu0 0
        %7390 = vmatpush2.bf16.msra.mxu0 0
        %7391 = vmatprep.subr.bf16.mxu0 0
        %7392 = vmatpush2.bf16.msra.mxu0 0
        %7393 = vmatprep.subr.bf16.mxu0 0
        %7394 = vmatpush2.bf16.msra.mxu0 0
        %7395 = vmatprep.subr.bf16.mxu0 0
        %7396 = vmatpush2.bf16.msra.mxu0 0
        %7397 = vmatprep.mubr.bf16.mxu0 0
        %7398 = vmatmul.mubr.bf16.gmra.mxu0 %v6174
        %v7399 = vpop.f32.mrf.mxu0
        %v7400 = vadd.f32 0.0, %v7399
        %v7401 = vpop.f32.mrf.mxu0
        %v7402 = vadd.f32 0.0, %v7401
        %v7403 = vpop.f32.mrf.mxu0
        %v7404 = vpop.f32.mrf.mxu0
        %7405 = vdwg.mxu0
        %7406 = vmatprep.subr.bf16.mxu0 0
        %7407 = vmatpush1.bf16.msra.mxu0 0
        %7408 = vmatprep.subr.bf16.mxu0 0
        %7409 = vmatpush1.bf16.msra.mxu0 0
        %7410 = vmatprep.subr.bf16.mxu0 0
        %7411 = vmatpush1.bf16.msra.mxu0 0
        %7412 = vmatprep.subr.bf16.mxu0 0
        %7413 = vmatpush1.bf16.msra.mxu0 0
        %7414 = vmatprep.subr.bf16.mxu0 %v1518
        %7415 = vmatpush1.bf16.msra.mxu0 %v1517
        %7416 = vmatprep.subr.bf16.mxu0 %v1442
        %7417 = vmatpush1.bf16.msra.mxu0 %v1441
        %7418 = vmatprep.subr.bf16.mxu0 %v1366
        %7419 = vmatpush1.bf16.msra.mxu0 %v1365
        %7420 = vmatprep.subr.bf16.mxu0 %v1290
        %7421 = vmatpush1.bf16.msra.mxu0 %v1289
        %7422 = vmatprep.subr.bf16.mxu0 0
        %7423 = vmatpush2.bf16.msra.mxu0 0
        %7424 = vmatprep.subr.bf16.mxu0 0
        %7425 = vmatpush2.bf16.msra.mxu0 0
        %7426 = vmatprep.subr.bf16.mxu0 0
        %7427 = vmatpush2.bf16.msra.mxu0 0
        %7428 = vmatprep.subr.bf16.mxu0 0
        %7429 = vmatpush2.bf16.msra.mxu0 0
        %7430 = vmatprep.subr.bf16.mxu0 0
        %7431 = vmatpush2.bf16.msra.mxu0 0
        %7432 = vmatprep.subr.bf16.mxu0 0
        %7433 = vmatpush2.bf16.msra.mxu0 0
        %7434 = vmatprep.subr.bf16.mxu0 0
        %7435 = vmatpush2.bf16.msra.mxu0 0
        %7436 = vmatprep.subr.bf16.mxu0 0
        %7437 = vmatpush2.bf16.msra.mxu0 0
        %7438 = vmatprep.mubr.bf16.mxu0 0
        %7439 = vmatmul.mubr.bf16.gmra.mxu0 %v6174
        %v7440 = vpop.f32.mrf.mxu0
        %v7441 = vadd.f32 0.0, %v7440
        %v7442 = vpop.f32.mrf.mxu0
        %v7443 = vadd.f32 0.0, %v7442
        %v7444 = vpop.f32.mrf.mxu0
        %v7445 = vpop.f32.mrf.mxu0
        %7446 = vdwg.mxu0
        %7447 = vmatprep.subr.bf16.mxu0 0
        %7448 = vmatpush1.bf16.msra.mxu0 0
        %7449 = vmatprep.subr.bf16.mxu0 0
        %7450 = vmatpush1.bf16.msra.mxu0 0
        %7451 = vmatprep.subr.bf16.mxu0 0
        %7452 = vmatpush1.bf16.msra.mxu0 0
        %7453 = vmatprep.subr.bf16.mxu0 0
        %7454 = vmatpush1.bf16.msra.mxu0 0
        %7455 = vmatprep.subr.bf16.mxu0 %v1520
        %7456 = vmatpush1.bf16.msra.mxu0 %v1519
        %7457 = vmatprep.subr.bf16.mxu0 %v1444
        %7458 = vmatpush1.bf16.msra.mxu0 %v1443
        %7459 = vmatprep.subr.bf16.mxu0 %v1368
        %7460 = vmatpush1.bf16.msra.mxu0 %v1367
        %7461 = vmatprep.subr.bf16.mxu0 %v1292
        %7462 = vmatpush1.bf16.msra.mxu0 %v1291
        %7463 = vmatprep.subr.bf16.mxu0 0
        %7464 = vmatpush2.bf16.msra.mxu0 0
        %7465 = vmatprep.subr.bf16.mxu0 0
        %7466 = vmatpush2.bf16.msra.mxu0 0
        %7467 = vmatprep.subr.bf16.mxu0 0
        %7468 = vmatpush2.bf16.msra.mxu0 0
        %7469 = vmatprep.subr.bf16.mxu0 0
        %7470 = vmatpush2.bf16.msra.mxu0 0
        %7471 = vmatprep.subr.bf16.mxu0 0
        %7472 = vmatpush2.bf16.msra.mxu0 0
        %7473 = vmatprep.subr.bf16.mxu0 0
        %7474 = vmatpush2.bf16.msra.mxu0 0
        %7475 = vmatprep.subr.bf16.mxu0 0
        %7476 = vmatpush2.bf16.msra.mxu0 0
        %7477 = vmatprep.subr.bf16.mxu0 0
        %7478 = vmatpush2.bf16.msra.mxu0 0
        %7479 = vmatprep.mubr.bf16.mxu0 0
        %7480 = vmatmul.mubr.bf16.gmra.mxu0 %v6174
        %v7481 = vpop.f32.mrf.mxu0
        %v7482 = vadd.f32 0.0, %v7481
        %v7483 = vpop.f32.mrf.mxu0
        %v7484 = vadd.f32 0.0, %v7483
        %v7485 = vpop.f32.mrf.mxu0
        %v7486 = vpop.f32.mrf.mxu0
        %7487 = vdwg.mxu0
        %7488 = vmatprep.subr.bf16.mxu0 0
        %7489 = vmatpush1.bf16.msra.mxu0 0
        %7490 = vmatprep.subr.bf16.mxu0 0
        %7491 = vmatpush1.bf16.msra.mxu0 0
        %7492 = vmatprep.subr.bf16.mxu0 0
        %7493 = vmatpush1.bf16.msra.mxu0 0
        %7494 = vmatprep.subr.bf16.mxu0 0
        %7495 = vmatpush1.bf16.msra.mxu0 0
        %7496 = vmatprep.subr.bf16.mxu0 %v1522
        %7497 = vmatpush1.bf16.msra.mxu0 %v1521
        %7498 = vmatprep.subr.bf16.mxu0 %v1446
        %7499 = vmatpush1.bf16.msra.mxu0 %v1445
        %7500 = vmatprep.subr.bf16.mxu0 %v1370
        %7501 = vmatpush1.bf16.msra.mxu0 %v1369
        %7502 = vmatprep.subr.bf16.mxu0 %v1294
        %7503 = vmatpush1.bf16.msra.mxu0 %v1293
        %7504 = vmatprep.subr.bf16.mxu0 0
        %7505 = vmatpush2.bf16.msra.mxu0 0
        %7506 = vmatprep.subr.bf16.mxu0 0
        %7507 = vmatpush2.bf16.msra.mxu0 0
        %7508 = vmatprep.subr.bf16.mxu0 0
        %7509 = vmatpush2.bf16.msra.mxu0 0
        %7510 = vmatprep.subr.bf16.mxu0 0
        %7511 = vmatpush2.bf16.msra.mxu0 0
        %7512 = vmatprep.subr.bf16.mxu0 0
        %7513 = vmatpush2.bf16.msra.mxu0 0
        %7514 = vmatprep.subr.bf16.mxu0 0
        %7515 = vmatpush2.bf16.msra.mxu0 0
        %7516 = vmatprep.subr.bf16.mxu0 0
        %7517 = vmatpush2.bf16.msra.mxu0 0
        %7518 = vmatprep.subr.bf16.mxu0 0
        %7519 = vmatpush2.bf16.msra.mxu0 0
        %7520 = vmatprep.mubr.bf16.mxu0 0
        %7521 = vmatmul.mubr.bf16.gmra.mxu0 %v6174
        %v7522 = vpop.f32.mrf.mxu0
        %v7523 = vadd.f32 0.0, %v7522
        %v7524 = vpop.f32.mrf.mxu0
        %v7525 = vadd.f32 0.0, %v7524
        %v7526 = vpop.f32.mrf.mxu0
        %v7527 = vpop.f32.mrf.mxu0
        %7528 = vdwg.mxu0
        %7529 = vmatprep.subr.bf16.mxu0 0
        %7530 = vmatpush1.bf16.msra.mxu0 0
        %7531 = vmatprep.subr.bf16.mxu0 0
        %7532 = vmatpush1.bf16.msra.mxu0 0
        %7533 = vmatprep.subr.bf16.mxu0 0
        %7534 = vmatpush1.bf16.msra.mxu0 0
        %7535 = vmatprep.subr.bf16.mxu0 0
        %7536 = vmatpush1.bf16.msra.mxu0 0
        %7537 = vmatprep.subr.bf16.mxu0 %v1524
        %7538 = vmatpush1.bf16.msra.mxu0 %v1523
        %7539 = vmatprep.subr.bf16.mxu0 %v1448
        %7540 = vmatpush1.bf16.msra.mxu0 %v1447
        %7541 = vmatprep.subr.bf16.mxu0 %v1372
        %7542 = vmatpush1.bf16.msra.mxu0 %v1371
        %7543 = vmatprep.subr.bf16.mxu0 %v1296
        %7544 = vmatpush1.bf16.msra.mxu0 %v1295
        %7545 = vmatprep.subr.bf16.mxu0 0
        %7546 = vmatpush2.bf16.msra.mxu0 0
        %7547 = vmatprep.subr.bf16.mxu0 0
        %7548 = vmatpush2.bf16.msra.mxu0 0
        %7549 = vmatprep.subr.bf16.mxu0 0
        %7550 = vmatpush2.bf16.msra.mxu0 0
        %7551 = vmatprep.subr.bf16.mxu0 0
        %7552 = vmatpush2.bf16.msra.mxu0 0
        %7553 = vmatprep.subr.bf16.mxu0 0
        %7554 = vmatpush2.bf16.msra.mxu0 0
        %7555 = vmatprep.subr.bf16.mxu0 0
        %7556 = vmatpush2.bf16.msra.mxu0 0
        %7557 = vmatprep.subr.bf16.mxu0 0
        %7558 = vmatpush2.bf16.msra.mxu0 0
        %7559 = vmatprep.subr.bf16.mxu0 0
        %7560 = vmatpush2.bf16.msra.mxu0 0
        %7561 = vmatprep.mubr.bf16.mxu0 0
        %7562 = vmatmul.mubr.bf16.gmra.mxu0 %v6174
        %v7563 = vpop.f32.mrf.mxu0
        %v7564 = vadd.f32 0.0, %v7563
        %v7565 = vpop.f32.mrf.mxu0
        %v7566 = vadd.f32 0.0, %v7565
        %v7567 = vpop.f32.mrf.mxu0
        %v7568 = vpop.f32.mrf.mxu0
        %7569 = vdwg.mxu0
        %7570 = vmatprep.subr.bf16.mxu0 0
        %7571 = vmatpush1.bf16.msra.mxu0 0
        %7572 = vmatprep.subr.bf16.mxu0 0
        %7573 = vmatpush1.bf16.msra.mxu0 0
        %7574 = vmatprep.subr.bf16.mxu0 0
        %7575 = vmatpush1.bf16.msra.mxu0 0
        %7576 = vmatprep.subr.bf16.mxu0 0
        %7577 = vmatpush1.bf16.msra.mxu0 0
        %7578 = vmatprep.subr.bf16.mxu0 %v1526
        %7579 = vmatpush1.bf16.msra.mxu0 %v1525
        %7580 = vmatprep.subr.bf16.mxu0 %v1450
        %7581 = vmatpush1.bf16.msra.mxu0 %v1449
        %7582 = vmatprep.subr.bf16.mxu0 %v1374
        %7583 = vmatpush1.bf16.msra.mxu0 %v1373
        %7584 = vmatprep.subr.bf16.mxu0 %v1298
        %7585 = vmatpush1.bf16.msra.mxu0 %v1297
        %7586 = vmatprep.subr.bf16.mxu0 0
        %7587 = vmatpush2.bf16.msra.mxu0 0
        %7588 = vmatprep.subr.bf16.mxu0 0
        %7589 = vmatpush2.bf16.msra.mxu0 0
        %7590 = vmatprep.subr.bf16.mxu0 0
        %7591 = vmatpush2.bf16.msra.mxu0 0
        %7592 = vmatprep.subr.bf16.mxu0 0
        %7593 = vmatpush2.bf16.msra.mxu0 0
        %7594 = vmatprep.subr.bf16.mxu0 0
        %7595 = vmatpush2.bf16.msra.mxu0 0
        %7596 = vmatprep.subr.bf16.mxu0 0
        %7597 = vmatpush2.bf16.msra.mxu0 0
        %7598 = vmatprep.subr.bf16.mxu0 0
        %7599 = vmatpush2.bf16.msra.mxu0 0
        %7600 = vmatprep.subr.bf16.mxu0 0
        %7601 = vmatpush2.bf16.msra.mxu0 0
        %7602 = vmatprep.mubr.bf16.mxu0 0
        %7603 = vmatmul.mubr.bf16.gmra.mxu0 %v6174
        %v7604 = vpop.f32.mrf.mxu0
        %v7605 = vadd.f32 0.0, %v7604
        %v7606 = vpop.f32.mrf.mxu0
        %v7607 = vadd.f32 0.0, %v7606
        %v7608 = vpop.f32.mrf.mxu0
        %v7609 = vpop.f32.mrf.mxu0
        %7610 = vdwg.mxu0
        %7611 = vmatprep.subr.bf16.mxu0 0
        %7612 = vmatpush1.bf16.msra.mxu0 0
        %7613 = vmatprep.subr.bf16.mxu0 0
        %7614 = vmatpush1.bf16.msra.mxu0 0
        %7615 = vmatprep.subr.bf16.mxu0 0
        %7616 = vmatpush1.bf16.msra.mxu0 0
        %7617 = vmatprep.subr.bf16.mxu0 0
        %7618 = vmatpush1.bf16.msra.mxu0 0
        %7619 = vmatprep.subr.bf16.mxu0 %v1528
        %7620 = vmatpush1.bf16.msra.mxu0 %v1527
        %7621 = vmatprep.subr.bf16.mxu0 %v1452
        %7622 = vmatpush1.bf16.msra.mxu0 %v1451
        %7623 = vmatprep.subr.bf16.mxu0 %v1376
        %7624 = vmatpush1.bf16.msra.mxu0 %v1375
        %7625 = vmatprep.subr.bf16.mxu0 %v1300
        %7626 = vmatpush1.bf16.msra.mxu0 %v1299
        %7627 = vmatprep.subr.bf16.mxu0 0
        %7628 = vmatpush2.bf16.msra.mxu0 0
        %7629 = vmatprep.subr.bf16.mxu0 0
        %7630 = vmatpush2.bf16.msra.mxu0 0
        %7631 = vmatprep.subr.bf16.mxu0 0
        %7632 = vmatpush2.bf16.msra.mxu0 0
        %7633 = vmatprep.subr.bf16.mxu0 0
        %7634 = vmatpush2.bf16.msra.mxu0 0
        %7635 = vmatprep.subr.bf16.mxu0 0
        %7636 = vmatpush2.bf16.msra.mxu0 0
        %7637 = vmatprep.subr.bf16.mxu0 0
        %7638 = vmatpush2.bf16.msra.mxu0 0
        %7639 = vmatprep.subr.bf16.mxu0 0
        %7640 = vmatpush2.bf16.msra.mxu0 0
        %7641 = vmatprep.subr.bf16.mxu0 0
        %7642 = vmatpush2.bf16.msra.mxu0 0
        %7643 = vmatprep.mubr.bf16.mxu0 0
        %7644 = vmatmul.mubr.bf16.gmra.mxu0 %v6174
        %v7645 = vpop.f32.mrf.mxu0
        %v7646 = vadd.f32 0.0, %v7645
        %v7647 = vpop.f32.mrf.mxu0
        %v7648 = vadd.f32 0.0, %v7647
        %v7649 = vpop.f32.mrf.mxu0
        %v7650 = vpop.f32.mrf.mxu0
        %7651 = vdwg.mxu0
        %7652 = vmatprep.subr.bf16.mxu0 0
        %7653 = vmatpush1.bf16.msra.mxu0 0
        %7654 = vmatprep.subr.bf16.mxu0 0
        %7655 = vmatpush1.bf16.msra.mxu0 0
        %7656 = vmatprep.subr.bf16.mxu0 0
        %7657 = vmatpush1.bf16.msra.mxu0 0
        %7658 = vmatprep.subr.bf16.mxu0 0
        %7659 = vmatpush1.bf16.msra.mxu0 0
        %7660 = vmatprep.subr.bf16.mxu0 %v1530
        %7661 = vmatpush1.bf16.msra.mxu0 %v1529
        %7662 = vmatprep.subr.bf16.mxu0 %v1454
        %7663 = vmatpush1.bf16.msra.mxu0 %v1453
        %7664 = vmatprep.subr.bf16.mxu0 %v1378
        %7665 = vmatpush1.bf16.msra.mxu0 %v1377
        %7666 = vmatprep.subr.bf16.mxu0 %v1302
        %7667 = vmatpush1.bf16.msra.mxu0 %v1301
        %7668 = vmatprep.subr.bf16.mxu0 0
        %7669 = vmatpush2.bf16.msra.mxu0 0
        %7670 = vmatprep.subr.bf16.mxu0 0
        %7671 = vmatpush2.bf16.msra.mxu0 0
        %7672 = vmatprep.subr.bf16.mxu0 0
        %7673 = vmatpush2.bf16.msra.mxu0 0
        %7674 = vmatprep.subr.bf16.mxu0 0
        %7675 = vmatpush2.bf16.msra.mxu0 0
        %7676 = vmatprep.subr.bf16.mxu0 0
        %7677 = vmatpush2.bf16.msra.mxu0 0
        %7678 = vmatprep.subr.bf16.mxu0 0
        %7679 = vmatpush2.bf16.msra.mxu0 0
        %7680 = vmatprep.subr.bf16.mxu0 0
        %7681 = vmatpush2.bf16.msra.mxu0 0
        %7682 = vmatprep.subr.bf16.mxu0 0
        %7683 = vmatpush2.bf16.msra.mxu0 0
        %7684 = vmatprep.mubr.bf16.mxu0 0
        %7685 = vmatmul.mubr.bf16.gmra.mxu0 %v6174
        %v7686 = vpop.f32.mrf.mxu0
        %v7687 = vadd.f32 0.0, %v7686
        %v7688 = vpop.f32.mrf.mxu0
        %v7689 = vadd.f32 0.0, %v7688
        %v7690 = vpop.f32.mrf.mxu0
        %v7691 = vpop.f32.mrf.mxu0
        %7692 = vdwg.mxu0
        %7693 = vmatprep.subr.bf16.mxu0 0
        %7694 = vmatpush1.bf16.msra.mxu0 0
        %7695 = vmatprep.subr.bf16.mxu0 0
        %7696 = vmatpush1.bf16.msra.mxu0 0
        %7697 = vmatprep.subr.bf16.mxu0 0
        %7698 = vmatpush1.bf16.msra.mxu0 0
        %7699 = vmatprep.subr.bf16.mxu0 0
        %7700 = vmatpush1.bf16.msra.mxu0 0
        %7701 = vmatprep.subr.bf16.mxu0 %v1532
        %7702 = vmatpush1.bf16.msra.mxu0 %v1531
        %7703 = vmatprep.subr.bf16.mxu0 %v1456
        %7704 = vmatpush1.bf16.msra.mxu0 %v1455
        %7705 = vmatprep.subr.bf16.mxu0 %v1380
        %7706 = vmatpush1.bf16.msra.mxu0 %v1379
        %7707 = vmatprep.subr.bf16.mxu0 %v1304
        %7708 = vmatpush1.bf16.msra.mxu0 %v1303
        %7709 = vmatprep.subr.bf16.mxu0 0
        %7710 = vmatpush2.bf16.msra.mxu0 0
        %7711 = vmatprep.subr.bf16.mxu0 0
        %7712 = vmatpush2.bf16.msra.mxu0 0
        %7713 = vmatprep.subr.bf16.mxu0 0
        %7714 = vmatpush2.bf16.msra.mxu0 0
        %7715 = vmatprep.subr.bf16.mxu0 0
        %7716 = vmatpush2.bf16.msra.mxu0 0
        %7717 = vmatprep.subr.bf16.mxu0 0
        %7718 = vmatpush2.bf16.msra.mxu0 0
        %7719 = vmatprep.subr.bf16.mxu0 0
        %7720 = vmatpush2.bf16.msra.mxu0 0
        %7721 = vmatprep.subr.bf16.mxu0 0
        %7722 = vmatpush2.bf16.msra.mxu0 0
        %7723 = vmatprep.subr.bf16.mxu0 0
        %7724 = vmatpush2.bf16.msra.mxu0 0
        %7725 = vmatprep.mubr.bf16.mxu0 0
        %7726 = vmatmul.mubr.bf16.gmra.mxu0 %v6174
        %v7727 = vpop.f32.mrf.mxu0
        %v7728 = vadd.f32 0.0, %v7727
        %v7729 = vpop.f32.mrf.mxu0
        %v7730 = vadd.f32 0.0, %v7729
        %v7731 = vpop.f32.mrf.mxu0
        %v7732 = vpop.f32.mrf.mxu0
        %7733 = vdwg.mxu0
        %v7734 = vadd.f32 %v4650, %v6211
        %v7735 = vadd.f32 %v4652, %v6213
        %v7736 = vadd.f32 %v4691, %v6252
        %v7737 = vadd.f32 %v4693, %v6254
        %v7738 = vadd.f32 %v4732, %v6293
        %v7739 = vadd.f32 %v4734, %v6295
        %v7740 = vadd.f32 %v4773, %v6334
        %v7741 = vadd.f32 %v4775, %v6336
        %v7742 = vadd.f32 %v4814, %v6375
        %v7743 = vadd.f32 %v4816, %v6377
        %v7744 = vadd.f32 %v4855, %v6416
        %v7745 = vadd.f32 %v4857, %v6418
        %v7746 = vadd.f32 %v4896, %v6457
        %v7747 = vadd.f32 %v4898, %v6459
        %v7748 = vadd.f32 %v4937, %v6498
        %v7749 = vadd.f32 %v4939, %v6500
        %v7750 = vadd.f32 %v4978, %v6539
        %v7751 = vadd.f32 %v4980, %v6541
        %v7752 = vadd.f32 %v5019, %v6580
        %v7753 = vadd.f32 %v5021, %v6582
        %v7754 = vadd.f32 %v5060, %v6621
        %v7755 = vadd.f32 %v5062, %v6623
        %v7756 = vadd.f32 %v5101, %v6662
        %v7757 = vadd.f32 %v5103, %v6664
        %v7758 = vadd.f32 %v5142, %v6703
        %v7759 = vadd.f32 %v5144, %v6705
        %v7760 = vadd.f32 %v5183, %v6744
        %v7761 = vadd.f32 %v5185, %v6746
        %v7762 = vadd.f32 %v5224, %v6785
        %v7763 = vadd.f32 %v5226, %v6787
        %v7764 = vadd.f32 %v5265, %v6826
        %v7765 = vadd.f32 %v5267, %v6828
        %v7766 = vadd.f32 %v5306, %v6867
        %v7767 = vadd.f32 %v5308, %v6869
        %v7768 = vadd.f32 %v5347, %v6908
        %v7769 = vadd.f32 %v5349, %v6910
        %v7770 = vadd.f32 %v5388, %v6949
        %v7771 = vadd.f32 %v5390, %v6951
        %v7772 = vadd.f32 %v5429, %v6990
        %v7773 = vadd.f32 %v5431, %v6992
        %v7774 = vadd.f32 %v5470, %v7031
        %v7775 = vadd.f32 %v5472, %v7033
        %v7776 = vadd.f32 %v5511, %v7072
        %v7777 = vadd.f32 %v5513, %v7074
        %v7778 = vadd.f32 %v5552, %v7113
        %v7779 = vadd.f32 %v5554, %v7115
        %v7780 = vadd.f32 %v5593, %v7154
        %v7781 = vadd.f32 %v5595, %v7156
        %v7782 = vadd.f32 %v5634, %v7195
        %v7783 = vadd.f32 %v5636, %v7197
        %v7784 = vadd.f32 %v5675, %v7236
        %v7785 = vadd.f32 %v5677, %v7238
        %v7786 = vadd.f32 %v5716, %v7277
        %v7787 = vadd.f32 %v5718, %v7279
        %v7788 = vadd.f32 %v5757, %v7318
        %v7789 = vadd.f32 %v5759, %v7320
        %v7790 = vadd.f32 %v5798, %v7359
        %v7791 = vadd.f32 %v5800, %v7361
        %v7792 = vadd.f32 %v5839, %v7400
        %v7793 = vadd.f32 %v5841, %v7402
        %v7794 = vadd.f32 %v5880, %v7441
        %v7795 = vadd.f32 %v5882, %v7443
        %v7796 = vadd.f32 %v5921, %v7482
        %v7797 = vadd.f32 %v5923, %v7484
        %v7798 = vadd.f32 %v5962, %v7523
        %v7799 = vadd.f32 %v5964, %v7525
        %v7800 = vadd.f32 %v6003, %v7564
        %v7801 = vadd.f32 %v6005, %v7566
        %v7802 = vadd.f32 %v6044, %v7605
        %v7803 = vadd.f32 %v6046, %v7607
        %v7804 = vadd.f32 %v6085, %v7646
        %v7805 = vadd.f32 %v6087, %v7648
        %v7806 = vadd.f32 %v6126, %v7687
        %v7807 = vadd.f32 %v6128, %v7689
        %v7808 = vadd.f32 %v6167, %v7728
        %v7809 = vadd.f32 %v6169, %v7730
        %7810 = vst [vmem:[%s604] sm:$0xff] %v7734
        %7811 = vst [vmem:[%s604 + $0x8] sm:$0xff] %v7735
        %7812 = vst [vmem:[%s604 + $0x10] sm:$0xff] %v7736
        %7813 = vst [vmem:[%s604 + $0x18] sm:$0xff] %v7737
        %7814 = vst [vmem:[%s604 + $0x20] sm:$0xff] %v7738
        %7815 = vst [vmem:[%s604 + $0x28] sm:$0xff] %v7739
        %7816 = vst [vmem:[%s604 + $0x30] sm:$0xff] %v7740
        %7817 = vst [vmem:[%s604 + $0x38] sm:$0xff] %v7741
        %7818 = vst [vmem:[%s604 + $0x40] sm:$0xff] %v7742
        %7819 = vst [vmem:[%s604 + $0x48] sm:$0xff] %v7743
        %7820 = vst [vmem:[%s604 + $0x50] sm:$0xff] %v7744
        %7821 = vst [vmem:[%s604 + $0x58] sm:$0xff] %v7745
        %7822 = vst [vmem:[%s604 + $0x60] sm:$0xff] %v7746
        %7823 = vst [vmem:[%s604 + $0x68] sm:$0xff] %v7747
        %7824 = vst [vmem:[%s604 + $0x70] sm:$0xff] %v7748
        %7825 = vst [vmem:[%s604 + $0x78] sm:$0xff] %v7749
        %7826 = vst [vmem:[%s604 + $0x80] sm:$0xff] %v7750
        %7827 = vst [vmem:[%s604 + $0x88] sm:$0xff] %v7751
        %7828 = vst [vmem:[%s604 + $0x90] sm:$0xff] %v7752
        %7829 = vst [vmem:[%s604 + $0x98] sm:$0xff] %v7753
        %7830 = vst [vmem:[%s604 + $0xa0] sm:$0xff] %v7754
        %7831 = vst [vmem:[%s604 + $0xa8] sm:$0xff] %v7755
        %7832 = vst [vmem:[%s604 + $0xb0] sm:$0xff] %v7756
        %7833 = vst [vmem:[%s604 + $0xb8] sm:$0xff] %v7757
        %7834 = vst [vmem:[%s604 + $0xc0] sm:$0xff] %v7758
        %7835 = vst [vmem:[%s604 + $0xc8] sm:$0xff] %v7759
        %7836 = vst [vmem:[%s604 + $0xd0] sm:$0xff] %v7760
        %7837 = vst [vmem:[%s604 + $0xd8] sm:$0xff] %v7761
        %7838 = vst [vmem:[%s604 + $0xe0] sm:$0xff] %v7762
        %7839 = vst [vmem:[%s604 + $0xe8] sm:$0xff] %v7763
        %7840 = vst [vmem:[%s604 + $0xf0] sm:$0xff] %v7764
        %7841 = vst [vmem:[%s604 + $0xf8] sm:$0xff] %v7765
        %7842 = vst [vmem:[%s604 + $0x100] sm:$0xff] %v7766
        %7843 = vst [vmem:[%s604 + $0x108] sm:$0xff] %v7767
        %7844 = vst [vmem:[%s604 + $0x110] sm:$0xff] %v7768
        %7845 = vst [vmem:[%s604 + $0x118] sm:$0xff] %v7769
        %7846 = vst [vmem:[%s604 + $0x120] sm:$0xff] %v7770
        %7847 = vst [vmem:[%s604 + $0x128] sm:$0xff] %v7771
        %7848 = vst [vmem:[%s604 + $0x130] sm:$0xff] %v7772
        %7849 = vst [vmem:[%s604 + $0x138] sm:$0xff] %v7773
        %7850 = vst [vmem:[%s604 + $0x140] sm:$0xff] %v7774
        %7851 = vst [vmem:[%s604 + $0x148] sm:$0xff] %v7775
        %7852 = vst [vmem:[%s604 + $0x150] sm:$0xff] %v7776
        %7853 = vst [vmem:[%s604 + $0x158] sm:$0xff] %v7777
        %7854 = vst [vmem:[%s604 + $0x160] sm:$0xff] %v7778
        %7855 = vst [vmem:[%s604 + $0x168] sm:$0xff] %v7779
        %7856 = vst [vmem:[%s604 + $0x170] sm:$0xff] %v7780
        %7857 = vst [vmem:[%s604 + $0x178] sm:$0xff] %v7781
        %7858 = vst [vmem:[%s604 + $0x180] sm:$0xff] %v7782
        %7859 = vst [vmem:[%s604 + $0x188] sm:$0xff] %v7783
        %7860 = vst [vmem:[%s604 + $0x190] sm:$0xff] %v7784
        %7861 = vst [vmem:[%s604 + $0x198] sm:$0xff] %v7785
        %7862 = vst [vmem:[%s604 + $0x1a0] sm:$0xff] %v7786
        %7863 = vst [vmem:[%s604 + $0x1a8] sm:$0xff] %v7787
        %7864 = vst [vmem:[%s604 + $0x1b0] sm:$0xff] %v7788
        %7865 = vst [vmem:[%s604 + $0x1b8] sm:$0xff] %v7789
        %7866 = vst [vmem:[%s604 + $0x1c0] sm:$0xff] %v7790
        %7867 = vst [vmem:[%s604 + $0x1c8] sm:$0xff] %v7791
        %7868 = vst [vmem:[%s604 + $0x1d0] sm:$0xff] %v7792
        %7869 = vst [vmem:[%s604 + $0x1d8] sm:$0xff] %v7793
        %7870 = vst [vmem:[%s604 + $0x1e0] sm:$0xff] %v7794
        %7871 = vst [vmem:[%s604 + $0x1e8] sm:$0xff] %v7795
        %7872 = vst [vmem:[%s604 + $0x1f0] sm:$0xff] %v7796
        %7873 = vst [vmem:[%s604 + $0x1f8] sm:$0xff] %v7797
        %7874 = vst [vmem:[%s604 + $0x200] sm:$0xff] %v7798
        %7875 = vst [vmem:[%s604 + $0x208] sm:$0xff] %v7799
        %7876 = vst [vmem:[%s604 + $0x210] sm:$0xff] %v7800
        %7877 = vst [vmem:[%s604 + $0x218] sm:$0xff] %v7801
        %7878 = vst [vmem:[%s604 + $0x220] sm:$0xff] %v7802
        %7879 = vst [vmem:[%s604 + $0x228] sm:$0xff] %v7803
        %7880 = vst [vmem:[%s604 + $0x230] sm:$0xff] %v7804
        %7881 = vst [vmem:[%s604 + $0x238] sm:$0xff] %v7805
        %7882 = vst [vmem:[%s604 + $0x240] sm:$0xff] %v7806
        %7883 = vst [vmem:[%s604 + $0x248] sm:$0xff] %v7807
        %7884 = vst [vmem:[%s604 + $0x250] sm:$0xff] %v7808
        %7885 = vst [vmem:[%s604 + $0x258] sm:$0xff] %v7809
        %s7886 = sand.u32 %s68, 1
        %s7887 = sand.u32 %s68, 1
        %s7888 = smul.addr %s7887, 608
        %s7889 = scalar_lea.vmem [#allocation3], %s7888
        // Predicated region
        $region95: #{model_forward.3} parent=89 // pred_check
          %p7890 = pneg %p78
        $region96: #{model_forward.3} parent=89 // pred_check_branch
          %7892 = sbr.rel (%p7890) target = $region98
        $region97: #{model_forward.3} parent=89 // pred_region
          %s7893 = smul.u32 76, %s13
          %s7894 = ssub.s32 301, %s7893
          %p7895 = scmp.lt.s32.totalorder %s7894, 76
          %s7896 = scalar_select %p7895, %s7894, 76
          %s7897 = smul.u32 128, %s7896
          %p7898 = scmp.ne.s32.totalorder 0, %s7897
          %s7899 = smul.addr %s7893, 8
          %s7900 = scalar_lea.vmem %s2, %s7899
          %s7901 = smul.u32 %s7896, 8
          // Predicated region
          $region99: #{model_forward.3} parent=97 // pred_check
            %p7902 = pneg %p7898
          $region100: #{model_forward.3} parent=97 // pred_check_branch
            %7904 = sbr.rel (%p7902) target = $region102
          $region101: #{model_forward.3} parent=97 // pred_region
            %p7905 = scmp.lt.u32.totalorder %s7901, 8
            %p7906 = pneg %p7905
            // Predicated region
            $region103: #{model_forward.3} parent=101 // pred_check
              _
            $region104: #{model_forward.3} parent=101 // pred_check_branch
              %7908 = sbr.rel (%p7905) target = $region106
            $region105: #{model_forward.3} parent=101 // pred_region
              %s7924 = sand.u32 %s7901, 7
              %p7925 = scmp.eq.s32.totalorder %s7924, 0
              // Predicated region
              $region118: #{model_forward.3} parent=105 // pred_check
                %p7926 = pneg %p7925
              $region119: #{model_forward.3} parent=105 // pred_check_branch
                %7928 = sbr.rel (%p7926) target = $region121
              $region120: #{model_forward.3} parent=105 // pred_region
                %s7929 = sshrl.u32 %s7901, 3
                %s7930 = sshrl.u32 %s7929, 6
                // While loop
                $region122: #{model_forward.3} parent=120 // loop_pre_header
                  _
                $region123: #{model_forward.3} parent=120 // loop_header
                  %s7934 = sphi 0, %s7936
                  %p7935 = scmp.ge.s32.totalorder %s7934, %s7930
                  %s7939 = sphi 0, %s8072
                  %s7940 = sphi %s7889, %s8075
                  %s7941 = sphi %s7900, %s8076
                $region124: #{model_forward.3} parent=120 // loop_header_branch
                  %7938 = sbr.rel (%p7935) target = $region128
                $region125: #{model_forward.3} parent=120 // loop_body
                  %v7942 = vld [vmem:[%s7940] sm:$0xff]
                  %7943 = vst [vmem:[%s7941] sm:$0xff] %v7942
                  %v7944 = vld [vmem:[%s7940 + $0x8] sm:$0xff]
                  %7945 = vst [vmem:[%s7941 + $0x8] sm:$0xff] %v7944
                  %v7946 = vld [vmem:[%s7940 + $0x10] sm:$0xff]
                  %7947 = vst [vmem:[%s7941 + $0x10] sm:$0xff] %v7946
                  %v7948 = vld [vmem:[%s7940 + $0x18] sm:$0xff]
                  %7949 = vst [vmem:[%s7941 + $0x18] sm:$0xff] %v7948
                  %v7950 = vld [vmem:[%s7940 + $0x20] sm:$0xff]
                  %7951 = vst [vmem:[%s7941 + $0x20] sm:$0xff] %v7950
                  %v7952 = vld [vmem:[%s7940 + $0x28] sm:$0xff]
                  %7953 = vst [vmem:[%s7941 + $0x28] sm:$0xff] %v7952
                  %v7954 = vld [vmem:[%s7940 + $0x30] sm:$0xff]
                  %7955 = vst [vmem:[%s7941 + $0x30] sm:$0xff] %v7954
                  %v7956 = vld [vmem:[%s7940 + $0x38] sm:$0xff]
                  %7957 = vst [vmem:[%s7941 + $0x38] sm:$0xff] %v7956
                  %v7958 = vld [vmem:[%s7940 + $0x40] sm:$0xff]
                  %7959 = vst [vmem:[%s7941 + $0x40] sm:$0xff] %v7958
                  %v7960 = vld [vmem:[%s7940 + $0x48] sm:$0xff]
                  %7961 = vst [vmem:[%s7941 + $0x48] sm:$0xff] %v7960
                  %v7962 = vld [vmem:[%s7940 + $0x50] sm:$0xff]
                  %7963 = vst [vmem:[%s7941 + $0x50] sm:$0xff] %v7962
                  %v7964 = vld [vmem:[%s7940 + $0x58] sm:$0xff]
                  %7965 = vst [vmem:[%s7941 + $0x58] sm:$0xff] %v7964
                  %v7966 = vld [vmem:[%s7940 + $0x60] sm:$0xff]
                  %7967 = vst [vmem:[%s7941 + $0x60] sm:$0xff] %v7966
                  %v7968 = vld [vmem:[%s7940 + $0x68] sm:$0xff]
                  %7969 = vst [vmem:[%s7941 + $0x68] sm:$0xff] %v7968
                  %v7970 = vld [vmem:[%s7940 + $0x70] sm:$0xff]
                  %7971 = vst [vmem:[%s7941 + $0x70] sm:$0xff] %v7970
                  %v7972 = vld [vmem:[%s7940 + $0x78] sm:$0xff]
                  %7973 = vst [vmem:[%s7941 + $0x78] sm:$0xff] %v7972
                  %v7974 = vld [vmem:[%s7940 + $0x80] sm:$0xff]
                  %7975 = vst [vmem:[%s7941 + $0x80] sm:$0xff] %v7974
                  %v7976 = vld [vmem:[%s7940 + $0x88] sm:$0xff]
                  %7977 = vst [vmem:[%s7941 + $0x88] sm:$0xff] %v7976
                  %v7978 = vld [vmem:[%s7940 + $0x90] sm:$0xff]
                  %7979 = vst [vmem:[%s7941 + $0x90] sm:$0xff] %v7978
                  %v7980 = vld [vmem:[%s7940 + $0x98] sm:$0xff]
                  %7981 = vst [vmem:[%s7941 + $0x98] sm:$0xff] %v7980
                  %v7982 = vld [vmem:[%s7940 + $0xa0] sm:$0xff]
                  %7983 = vst [vmem:[%s7941 + $0xa0] sm:$0xff] %v7982
                  %v7984 = vld [vmem:[%s7940 + $0xa8] sm:$0xff]
                  %7985 = vst [vmem:[%s7941 + $0xa8] sm:$0xff] %v7984
                  %v7986 = vld [vmem:[%s7940 + $0xb0] sm:$0xff]
                  %7987 = vst [vmem:[%s7941 + $0xb0] sm:$0xff] %v7986
                  %v7988 = vld [vmem:[%s7940 + $0xb8] sm:$0xff]
                  %7989 = vst [vmem:[%s7941 + $0xb8] sm:$0xff] %v7988
                  %v7990 = vld [vmem:[%s7940 + $0xc0] sm:$0xff]
                  %7991 = vst [vmem:[%s7941 + $0xc0] sm:$0xff] %v7990
                  %v7992 = vld [vmem:[%s7940 + $0xc8] sm:$0xff]
                  %7993 = vst [vmem:[%s7941 + $0xc8] sm:$0xff] %v7992
                  %v7994 = vld [vmem:[%s7940 + $0xd0] sm:$0xff]
                  %7995 = vst [vmem:[%s7941 + $0xd0] sm:$0xff] %v7994
                  %v7996 = vld [vmem:[%s7940 + $0xd8] sm:$0xff]
                  %7997 = vst [vmem:[%s7941 + $0xd8] sm:$0xff] %v7996
                  %v7998 = vld [vmem:[%s7940 + $0xe0] sm:$0xff]
                  %7999 = vst [vmem:[%s7941 + $0xe0] sm:$0xff] %v7998
                  %v8000 = vld [vmem:[%s7940 + $0xe8] sm:$0xff]
                  %8001 = vst [vmem:[%s7941 + $0xe8] sm:$0xff] %v8000
                  %v8002 = vld [vmem:[%s7940 + $0xf0] sm:$0xff]
                  %8003 = vst [vmem:[%s7941 + $0xf0] sm:$0xff] %v8002
                  %v8004 = vld [vmem:[%s7940 + $0xf8] sm:$0xff]
                  %8005 = vst [vmem:[%s7941 + $0xf8] sm:$0xff] %v8004
                  %v8006 = vld [vmem:[%s7940 + $0x100] sm:$0xff]
                  %8007 = vst [vmem:[%s7941 + $0x100] sm:$0xff] %v8006
                  %v8008 = vld [vmem:[%s7940 + $0x108] sm:$0xff]
                  %8009 = vst [vmem:[%s7941 + $0x108] sm:$0xff] %v8008
                  %v8010 = vld [vmem:[%s7940 + $0x110] sm:$0xff]
                  %8011 = vst [vmem:[%s7941 + $0x110] sm:$0xff] %v8010
                  %v8012 = vld [vmem:[%s7940 + $0x118] sm:$0xff]
                  %8013 = vst [vmem:[%s7941 + $0x118] sm:$0xff] %v8012
                  %v8014 = vld [vmem:[%s7940 + $0x120] sm:$0xff]
                  %8015 = vst [vmem:[%s7941 + $0x120] sm:$0xff] %v8014
                  %v8016 = vld [vmem:[%s7940 + $0x128] sm:$0xff]
                  %8017 = vst [vmem:[%s7941 + $0x128] sm:$0xff] %v8016
                  %v8018 = vld [vmem:[%s7940 + $0x130] sm:$0xff]
                  %8019 = vst [vmem:[%s7941 + $0x130] sm:$0xff] %v8018
                  %v8020 = vld [vmem:[%s7940 + $0x138] sm:$0xff]
                  %8021 = vst [vmem:[%s7941 + $0x138] sm:$0xff] %v8020
                  %v8022 = vld [vmem:[%s7940 + $0x140] sm:$0xff]
                  %8023 = vst [vmem:[%s7941 + $0x140] sm:$0xff] %v8022
                  %v8024 = vld [vmem:[%s7940 + $0x148] sm:$0xff]
                  %8025 = vst [vmem:[%s7941 + $0x148] sm:$0xff] %v8024
                  %v8026 = vld [vmem:[%s7940 + $0x150] sm:$0xff]
                  %8027 = vst [vmem:[%s7941 + $0x150] sm:$0xff] %v8026
                  %v8028 = vld [vmem:[%s7940 + $0x158] sm:$0xff]
                  %8029 = vst [vmem:[%s7941 + $0x158] sm:$0xff] %v8028
                  %v8030 = vld [vmem:[%s7940 + $0x160] sm:$0xff]
                  %8031 = vst [vmem:[%s7941 + $0x160] sm:$0xff] %v8030
                  %v8032 = vld [vmem:[%s7940 + $0x168] sm:$0xff]
                  %8033 = vst [vmem:[%s7941 + $0x168] sm:$0xff] %v8032
                  %v8034 = vld [vmem:[%s7940 + $0x170] sm:$0xff]
                  %8035 = vst [vmem:[%s7941 + $0x170] sm:$0xff] %v8034
                  %v8036 = vld [vmem:[%s7940 + $0x178] sm:$0xff]
                  %8037 = vst [vmem:[%s7941 + $0x178] sm:$0xff] %v8036
                  %v8038 = vld [vmem:[%s7940 + $0x180] sm:$0xff]
                  %8039 = vst [vmem:[%s7941 + $0x180] sm:$0xff] %v8038
                  %v8040 = vld [vmem:[%s7940 + $0x188] sm:$0xff]
                  %8041 = vst [vmem:[%s7941 + $0x188] sm:$0xff] %v8040
                  %v8042 = vld [vmem:[%s7940 + $0x190] sm:$0xff]
                  %8043 = vst [vmem:[%s7941 + $0x190] sm:$0xff] %v8042
                  %v8044 = vld [vmem:[%s7940 + $0x198] sm:$0xff]
                  %8045 = vst [vmem:[%s7941 + $0x198] sm:$0xff] %v8044
                  %v8046 = vld [vmem:[%s7940 + $0x1a0] sm:$0xff]
                  %8047 = vst [vmem:[%s7941 + $0x1a0] sm:$0xff] %v8046
                  %v8048 = vld [vmem:[%s7940 + $0x1a8] sm:$0xff]
                  %8049 = vst [vmem:[%s7941 + $0x1a8] sm:$0xff] %v8048
                  %v8050 = vld [vmem:[%s7940 + $0x1b0] sm:$0xff]
                  %8051 = vst [vmem:[%s7941 + $0x1b0] sm:$0xff] %v8050
                  %v8052 = vld [vmem:[%s7940 + $0x1b8] sm:$0xff]
                  %8053 = vst [vmem:[%s7941 + $0x1b8] sm:$0xff] %v8052
                  %v8054 = vld [vmem:[%s7940 + $0x1c0] sm:$0xff]
                  %8055 = vst [vmem:[%s7941 + $0x1c0] sm:$0xff] %v8054
                  %v8056 = vld [vmem:[%s7940 + $0x1c8] sm:$0xff]
                  %8057 = vst [vmem:[%s7941 + $0x1c8] sm:$0xff] %v8056
                  %v8058 = vld [vmem:[%s7940 + $0x1d0] sm:$0xff]
                  %8059 = vst [vmem:[%s7941 + $0x1d0] sm:$0xff] %v8058
                  %v8060 = vld [vmem:[%s7940 + $0x1d8] sm:$0xff]
                  %8061 = vst [vmem:[%s7941 + $0x1d8] sm:$0xff] %v8060
                  %v8062 = vld [vmem:[%s7940 + $0x1e0] sm:$0xff]
                  %8063 = vst [vmem:[%s7941 + $0x1e0] sm:$0xff] %v8062
                  %v8064 = vld [vmem:[%s7940 + $0x1e8] sm:$0xff]
                  %8065 = vst [vmem:[%s7941 + $0x1e8] sm:$0xff] %v8064
                  %v8066 = vld [vmem:[%s7940 + $0x1f0] sm:$0xff]
                  %8067 = vst [vmem:[%s7941 + $0x1f0] sm:$0xff] %v8066
                  %v8068 = vld [vmem:[%s7940 + $0x1f8] sm:$0xff]
                  %8069 = vst [vmem:[%s7941 + $0x1f8] sm:$0xff] %v8068
                  %s8070 = sadd.s32 1, %s7939
                  %p8071 = scmp.ge.s32.totalorder %s8070, %s7930
                  %s8072 = scalar_select %p8071, 0, %s8070
                  %s8073 = smul.u32 %s8072, 512
                  %s8074 = smul.u32 %s8072, 512
                  %s8075 = scalar_lea.vmem %s7889, %s8073 [#allocation3]
                  %s8076 = scalar_lea.vmem %s7900, %s8074
                $region126: #{model_forward.3} parent=120 // loop_footer
                  %s7936 = sadd.s32 %s7934, 1
                $region127: #{model_forward.3} parent=120 // loop_footer_branch
                  %7933 = sbr.rel target = $region123
                $region128: #{model_forward.3} parent=120 // loop_exit
                  _
                %s8077 = sshrl.u32 %s7929, 6
                %s8078 = sand.u32 %s7929, 63
                %s8079 = smul.u32 %s8077, 64
                %s8080 = smul.u32 128, %s8079
                %s8081 = sshra.s32 %s8080, 4
                %s8082 = scalar_lea.vmem %s7889, %s8081 [#allocation3]
                %s8083 = smul.u32 128, %s8079
                %s8084 = sshra.s32 %s8083, 4
                %s8085 = scalar_lea.vmem %s7900, %s8084
                // While loop
                $region129: #{model_forward.3} parent=120 // loop_pre_header
                  _
                $region130: #{model_forward.3} parent=120 // loop_header
                  %s8089 = sphi 0, %s8091
                  %p8090 = scmp.ge.s32.totalorder %s8089, %s8078
                  %s8094 = sphi 0, %s8101
                  %s8095 = sphi %s8082, %s8104
                  %s8096 = sphi %s8085, %s8105
                $region131: #{model_forward.3} parent=120 // loop_header_branch
                  %8093 = sbr.rel (%p8090) target = $region135
                $region132: #{model_forward.3} parent=120 // loop_body
                  %v8097 = vld [vmem:[%s8095] sm:$0xff]
                  %8098 = vst [vmem:[%s8096] sm:$0xff] %v8097
                  %s8099 = sadd.s32 1, %s8094
                  %p8100 = scmp.ge.s32.totalorder %s8099, %s8078
                  %s8101 = scalar_select %p8100, 0, %s8099
                  %s8102 = smul.u32 %s8101, 8
                  %s8103 = smul.u32 %s8101, 8
                  %s8104 = scalar_lea.vmem %s8082, %s8102 [#allocation3]
                  %s8105 = scalar_lea.vmem %s8085, %s8103
                $region133: #{model_forward.3} parent=120 // loop_footer
                  %s8091 = sadd.s32 %s8089, 1
                $region134: #{model_forward.3} parent=120 // loop_footer_branch
                  %8088 = sbr.rel target = $region130
                $region135: #{model_forward.3} parent=120 // loop_exit
                  _
              $region121: #{model_forward.3} parent=105 // pred_fallthru
                _
              %p8106 = pneg %p7925
              // Predicated region
              $region136: #{model_forward.3} parent=105 // pred_check
                _
              $region137: #{model_forward.3} parent=105 // pred_check_branch
                %8108 = sbr.rel (%p7925) target = $region139
              $region138: #{model_forward.3} parent=105 // pred_region
                %s8109 = sand.u32 %s7901, 7
                %s8110 = ssub.s32 %s7901, %s8109
                %s8111 = scalar_lea.vmem %s7889, %s8110 [#allocation3]
                %s8112 = ssub.s32 %s7901, %s8109
                %s8113 = scalar_lea.vmem %s7900, %s8112
                %s8114 = sshrl.u32 %s7901, 3
                %s8115 = sshrl.u32 %s8114, 6
                // While loop
                $region140: #{model_forward.3} parent=138 // loop_pre_header
                  _
                $region141: #{model_forward.3} parent=138 // loop_header
                  %s8119 = sphi 0, %s8121
                  %p8120 = scmp.ge.s32.totalorder %s8119, %s8115
                  %s8124 = sphi 0, %s8257
                  %s8125 = sphi %s7889, %s8260
                  %s8126 = sphi %s7900, %s8261
                $region142: #{model_forward.3} parent=138 // loop_header_branch
                  %8123 = sbr.rel (%p8120) target = $region146
                $region143: #{model_forward.3} parent=138 // loop_body
                  %v8127 = vld [vmem:[%s8125] sm:$0xff]
                  %8128 = vst [vmem:[%s8126] sm:$0xff] %v8127
                  %v8129 = vld [vmem:[%s8125 + $0x8] sm:$0xff]
                  %8130 = vst [vmem:[%s8126 + $0x8] sm:$0xff] %v8129
                  %v8131 = vld [vmem:[%s8125 + $0x10] sm:$0xff]
                  %8132 = vst [vmem:[%s8126 + $0x10] sm:$0xff] %v8131
                  %v8133 = vld [vmem:[%s8125 + $0x18] sm:$0xff]
                  %8134 = vst [vmem:[%s8126 + $0x18] sm:$0xff] %v8133
                  %v8135 = vld [vmem:[%s8125 + $0x20] sm:$0xff]
                  %8136 = vst [vmem:[%s8126 + $0x20] sm:$0xff] %v8135
                  %v8137 = vld [vmem:[%s8125 + $0x28] sm:$0xff]
                  %8138 = vst [vmem:[%s8126 + $0x28] sm:$0xff] %v8137
                  %v8139 = vld [vmem:[%s8125 + $0x30] sm:$0xff]
                  %8140 = vst [vmem:[%s8126 + $0x30] sm:$0xff] %v8139
                  %v8141 = vld [vmem:[%s8125 + $0x38] sm:$0xff]
                  %8142 = vst [vmem:[%s8126 + $0x38] sm:$0xff] %v8141
                  %v8143 = vld [vmem:[%s8125 + $0x40] sm:$0xff]
                  %8144 = vst [vmem:[%s8126 + $0x40] sm:$0xff] %v8143
                  %v8145 = vld [vmem:[%s8125 + $0x48] sm:$0xff]
                  %8146 = vst [vmem:[%s8126 + $0x48] sm:$0xff] %v8145
                  %v8147 = vld [vmem:[%s8125 + $0x50] sm:$0xff]
                  %8148 = vst [vmem:[%s8126 + $0x50] sm:$0xff] %v8147
                  %v8149 = vld [vmem:[%s8125 + $0x58] sm:$0xff]
                  %8150 = vst [vmem:[%s8126 + $0x58] sm:$0xff] %v8149
                  %v8151 = vld [vmem:[%s8125 + $0x60] sm:$0xff]
                  %8152 = vst [vmem:[%s8126 + $0x60] sm:$0xff] %v8151
                  %v8153 = vld [vmem:[%s8125 + $0x68] sm:$0xff]
                  %8154 = vst [vmem:[%s8126 + $0x68] sm:$0xff] %v8153
                  %v8155 = vld [vmem:[%s8125 + $0x70] sm:$0xff]
                  %8156 = vst [vmem:[%s8126 + $0x70] sm:$0xff] %v8155
                  %v8157 = vld [vmem:[%s8125 + $0x78] sm:$0xff]
                  %8158 = vst [vmem:[%s8126 + $0x78] sm:$0xff] %v8157
                  %v8159 = vld [vmem:[%s8125 + $0x80] sm:$0xff]
                  %8160 = vst [vmem:[%s8126 + $0x80] sm:$0xff] %v8159
                  %v8161 = vld [vmem:[%s8125 + $0x88] sm:$0xff]
                  %8162 = vst [vmem:[%s8126 + $0x88] sm:$0xff] %v8161
                  %v8163 = vld [vmem:[%s8125 + $0x90] sm:$0xff]
                  %8164 = vst [vmem:[%s8126 + $0x90] sm:$0xff] %v8163
                  %v8165 = vld [vmem:[%s8125 + $0x98] sm:$0xff]
                  %8166 = vst [vmem:[%s8126 + $0x98] sm:$0xff] %v8165
                  %v8167 = vld [vmem:[%s8125 + $0xa0] sm:$0xff]
                  %8168 = vst [vmem:[%s8126 + $0xa0] sm:$0xff] %v8167
                  %v8169 = vld [vmem:[%s8125 + $0xa8] sm:$0xff]
                  %8170 = vst [vmem:[%s8126 + $0xa8] sm:$0xff] %v8169
                  %v8171 = vld [vmem:[%s8125 + $0xb0] sm:$0xff]
                  %8172 = vst [vmem:[%s8126 + $0xb0] sm:$0xff] %v8171
                  %v8173 = vld [vmem:[%s8125 + $0xb8] sm:$0xff]
                  %8174 = vst [vmem:[%s8126 + $0xb8] sm:$0xff] %v8173
                  %v8175 = vld [vmem:[%s8125 + $0xc0] sm:$0xff]
                  %8176 = vst [vmem:[%s8126 + $0xc0] sm:$0xff] %v8175
                  %v8177 = vld [vmem:[%s8125 + $0xc8] sm:$0xff]
                  %8178 = vst [vmem:[%s8126 + $0xc8] sm:$0xff] %v8177
                  %v8179 = vld [vmem:[%s8125 + $0xd0] sm:$0xff]
                  %8180 = vst [vmem:[%s8126 + $0xd0] sm:$0xff] %v8179
                  %v8181 = vld [vmem:[%s8125 + $0xd8] sm:$0xff]
                  %8182 = vst [vmem:[%s8126 + $0xd8] sm:$0xff] %v8181
                  %v8183 = vld [vmem:[%s8125 + $0xe0] sm:$0xff]
                  %8184 = vst [vmem:[%s8126 + $0xe0] sm:$0xff] %v8183
                  %v8185 = vld [vmem:[%s8125 + $0xe8] sm:$0xff]
                  %8186 = vst [vmem:[%s8126 + $0xe8] sm:$0xff] %v8185
                  %v8187 = vld [vmem:[%s8125 + $0xf0] sm:$0xff]
                  %8188 = vst [vmem:[%s8126 + $0xf0] sm:$0xff] %v8187
                  %v8189 = vld [vmem:[%s8125 + $0xf8] sm:$0xff]
                  %8190 = vst [vmem:[%s8126 + $0xf8] sm:$0xff] %v8189
                  %v8191 = vld [vmem:[%s8125 + $0x100] sm:$0xff]
                  %8192 = vst [vmem:[%s8126 + $0x100] sm:$0xff] %v8191
                  %v8193 = vld [vmem:[%s8125 + $0x108] sm:$0xff]
                  %8194 = vst [vmem:[%s8126 + $0x108] sm:$0xff] %v8193
                  %v8195 = vld [vmem:[%s8125 + $0x110] sm:$0xff]
                  %8196 = vst [vmem:[%s8126 + $0x110] sm:$0xff] %v8195
                  %v8197 = vld [vmem:[%s8125 + $0x118] sm:$0xff]
                  %8198 = vst [vmem:[%s8126 + $0x118] sm:$0xff] %v8197
                  %v8199 = vld [vmem:[%s8125 + $0x120] sm:$0xff]
                  %8200 = vst [vmem:[%s8126 + $0x120] sm:$0xff] %v8199
                  %v8201 = vld [vmem:[%s8125 + $0x128] sm:$0xff]
                  %8202 = vst [vmem:[%s8126 + $0x128] sm:$0xff] %v8201
                  %v8203 = vld [vmem:[%s8125 + $0x130] sm:$0xff]
                  %8204 = vst [vmem:[%s8126 + $0x130] sm:$0xff] %v8203
                  %v8205 = vld [vmem:[%s8125 + $0x138] sm:$0xff]
                  %8206 = vst [vmem:[%s8126 + $0x138] sm:$0xff] %v8205
                  %v8207 = vld [vmem:[%s8125 + $0x140] sm:$0xff]
                  %8208 = vst [vmem:[%s8126 + $0x140] sm:$0xff] %v8207
                  %v8209 = vld [vmem:[%s8125 + $0x148] sm:$0xff]
                  %8210 = vst [vmem:[%s8126 + $0x148] sm:$0xff] %v8209
                  %v8211 = vld [vmem:[%s8125 + $0x150] sm:$0xff]
                  %8212 = vst [vmem:[%s8126 + $0x150] sm:$0xff] %v8211
                  %v8213 = vld [vmem:[%s8125 + $0x158] sm:$0xff]
                  %8214 = vst [vmem:[%s8126 + $0x158] sm:$0xff] %v8213
                  %v8215 = vld [vmem:[%s8125 + $0x160] sm:$0xff]
                  %8216 = vst [vmem:[%s8126 + $0x160] sm:$0xff] %v8215
                  %v8217 = vld [vmem:[%s8125 + $0x168] sm:$0xff]
                  %8218 = vst [vmem:[%s8126 + $0x168] sm:$0xff] %v8217
                  %v8219 = vld [vmem:[%s8125 + $0x170] sm:$0xff]
                  %8220 = vst [vmem:[%s8126 + $0x170] sm:$0xff] %v8219
                  %v8221 = vld [vmem:[%s8125 + $0x178] sm:$0xff]
                  %8222 = vst [vmem:[%s8126 + $0x178] sm:$0xff] %v8221
                  %v8223 = vld [vmem:[%s8125 + $0x180] sm:$0xff]
                  %8224 = vst [vmem:[%s8126 + $0x180] sm:$0xff] %v8223
                  %v8225 = vld [vmem:[%s8125 + $0x188] sm:$0xff]
                  %8226 = vst [vmem:[%s8126 + $0x188] sm:$0xff] %v8225
                  %v8227 = vld [vmem:[%s8125 + $0x190] sm:$0xff]
                  %8228 = vst [vmem:[%s8126 + $0x190] sm:$0xff] %v8227
                  %v8229 = vld [vmem:[%s8125 + $0x198] sm:$0xff]
                  %8230 = vst [vmem:[%s8126 + $0x198] sm:$0xff] %v8229
                  %v8231 = vld [vmem:[%s8125 + $0x1a0] sm:$0xff]
                  %8232 = vst [vmem:[%s8126 + $0x1a0] sm:$0xff] %v8231
                  %v8233 = vld [vmem:[%s8125 + $0x1a8] sm:$0xff]
                  %8234 = vst [vmem:[%s8126 + $0x1a8] sm:$0xff] %v8233
                  %v8235 = vld [vmem:[%s8125 + $0x1b0] sm:$0xff]
                  %8236 = vst [vmem:[%s8126 + $0x1b0] sm:$0xff] %v8235
                  %v8237 = vld [vmem:[%s8125 + $0x1b8] sm:$0xff]
                  %8238 = vst [vmem:[%s8126 + $0x1b8] sm:$0xff] %v8237
                  %v8239 = vld [vmem:[%s8125 + $0x1c0] sm:$0xff]
                  %8240 = vst [vmem:[%s8126 + $0x1c0] sm:$0xff] %v8239
                  %v8241 = vld [vmem:[%s8125 + $0x1c8] sm:$0xff]
                  %8242 = vst [vmem:[%s8126 + $0x1c8] sm:$0xff] %v8241
                  %v8243 = vld [vmem:[%s8125 + $0x1d0] sm:$0xff]
                  %8244 = vst [vmem:[%s8126 + $0x1d0] sm:$0xff] %v8243
                  %v8245 = vld [vmem:[%s8125 + $0x1d8] sm:$0xff]
                  %8246 = vst [vmem:[%s8126 + $0x1d8] sm:$0xff] %v8245
                  %v8247 = vld [vmem:[%s8125 + $0x1e0] sm:$0xff]
                  %8248 = vst [vmem:[%s8126 + $0x1e0] sm:$0xff] %v8247
                  %v8249 = vld [vmem:[%s8125 + $0x1e8] sm:$0xff]
                  %8250 = vst [vmem:[%s8126 + $0x1e8] sm:$0xff] %v8249
                  %v8251 = vld [vmem:[%s8125 + $0x1f0] sm:$0xff]
                  %8252 = vst [vmem:[%s8126 + $0x1f0] sm:$0xff] %v8251
                  %v8253 = vld [vmem:[%s8125 + $0x1f8] sm:$0xff]
                  %8254 = vst [vmem:[%s8126 + $0x1f8] sm:$0xff] %v8253
                  %s8255 = sadd.s32 1, %s8124
                  %p8256 = scmp.ge.s32.totalorder %s8255, %s8115
                  %s8257 = scalar_select %p8256, 0, %s8255
                  %s8258 = smul.u32 %s8257, 512
                  %s8259 = smul.u32 %s8257, 512
                  %s8260 = scalar_lea.vmem %s7889, %s8258 [#allocation3]
                  %s8261 = scalar_lea.vmem %s7900, %s8259
                $region144: #{model_forward.3} parent=138 // loop_footer
                  %s8121 = sadd.s32 %s8119, 1
                $region145: #{model_forward.3} parent=138 // loop_footer_branch
                  %8118 = sbr.rel target = $region141
                $region146: #{model_forward.3} parent=138 // loop_exit
                  _
                %s8262 = sshrl.u32 %s8114, 6
                %s8263 = sand.u32 %s8114, 63
                %s8264 = smul.u32 %s8262, 64
                %s8265 = smul.u32 128, %s8264
                %s8266 = sshra.s32 %s8265, 4
                %s8267 = scalar_lea.vmem %s7889, %s8266 [#allocation3]
                %s8268 = smul.u32 128, %s8264
                %s8269 = sshra.s32 %s8268, 4
                %s8270 = scalar_lea.vmem %s7900, %s8269
                // While loop
                $region147: #{model_forward.3} parent=138 // loop_pre_header
                  _
                $region148: #{model_forward.3} parent=138 // loop_header
                  %s8274 = sphi 0, %s8276
                  %p8275 = scmp.ge.s32.totalorder %s8274, %s8263
                  %s8279 = sphi 0, %s8286
                  %s8280 = sphi %s8267, %s8289
                  %s8281 = sphi %s8270, %s8290
                $region149: #{model_forward.3} parent=138 // loop_header_branch
                  %8278 = sbr.rel (%p8275) target = $region153
                $region150: #{model_forward.3} parent=138 // loop_body
                  %v8282 = vld [vmem:[%s8280] sm:$0xff]
                  %8283 = vst [vmem:[%s8281] sm:$0xff] %v8282
                  %s8284 = sadd.s32 1, %s8279
                  %p8285 = scmp.ge.s32.totalorder %s8284, %s8263
                  %s8286 = scalar_select %p8285, 0, %s8284
                  %s8287 = smul.u32 %s8286, 8
                  %s8288 = smul.u32 %s8286, 8
                  %s8289 = scalar_lea.vmem %s8267, %s8287 [#allocation3]
                  %s8290 = scalar_lea.vmem %s8270, %s8288
                $region151: #{model_forward.3} parent=138 // loop_footer
                  %s8276 = sadd.s32 %s8274, 1
                $region152: #{model_forward.3} parent=138 // loop_footer_branch
                  %8273 = sbr.rel target = $region148
                $region153: #{model_forward.3} parent=138 // loop_exit
                  _
                %s8291 = sshll.u32 1, %s8109
                %s8292 = ssub.s32 %s8291, 1
                loop: start=0, step=1, limit=1
                $region154: #{model_forward.3} parent=138 // loop_pre_header
                  _
                $region155: #{model_forward.3} parent=138 // loop_header
                  %s8294 = sphi 0, %s8298
                  %p8295 = scmp.ge.s32.totalorder %s8294, 1
                  %s8299 = sphi %s8111, %s8111
                  %s8300 = sphi %s8113, %s8113
                $region156: #{model_forward.3} parent=138 // loop_header_branch
                  %8297 = sbr.rel (%p8295) target = $region160
                $region157: #{model_forward.3} parent=138 // loop_body
                  %v8301 = vld [vmem:[%s8299] sm:%s8292]
                  %8302 = vst [vmem:[%s8300] sm:%s8292] %v8301
                $region158: #{model_forward.3} parent=138 // loop_footer
                  %s8298 = sadd.s32 1, %s8294
                $region159: #{model_forward.3} parent=138 // loop_footer_branch
                  %8293 = sbr.rel target = $region155
                $region160: #{model_forward.3} parent=138 // loop_exit
                  _
              $region139: #{model_forward.3} parent=105 // pred_fallthru
                _
            $region106: #{model_forward.3} parent=101 // pred_fallthru
              _
            // Predicated region
            $region107: #{model_forward.3} parent=101 // pred_check
              %p7909 = pneg %p7905
            $region108: #{model_forward.3} parent=101 // pred_check_branch
              %7911 = sbr.rel (%p7909) target = $region110
            $region109: #{model_forward.3} parent=101 // pred_region
              %s7912 = sshll.u32 1, %s7901
              %s7913 = ssub.s32 %s7912, 1
              loop: start=0, step=1, limit=1
              $region111: #{model_forward.3} parent=109 // loop_pre_header
                _
              $region112: #{model_forward.3} parent=109 // loop_header
                %s7915 = sphi 0, %s7919
                %p7916 = scmp.ge.s32.totalorder %s7915, 1
                %s7920 = sphi %s7889, %s7889
                %s7921 = sphi %s7900, %s7900
              $region113: #{model_forward.3} parent=109 // loop_header_branch
                %7918 = sbr.rel (%p7916) target = $region117
              $region114: #{model_forward.3} parent=109 // loop_body
                %v7922 = vld [vmem:[%s7920] sm:%s7913]
                %7923 = vst [vmem:[%s7921] sm:%s7913] %v7922
              $region115: #{model_forward.3} parent=109 // loop_footer
                %s7919 = sadd.s32 1, %s7915
              $region116: #{model_forward.3} parent=109 // loop_footer_branch
                %7914 = sbr.rel target = $region112
              $region117: #{model_forward.3} parent=109 // loop_exit
                _
            $region110: #{model_forward.3} parent=101 // pred_fallthru
              _
          $region102: #{model_forward.3} parent=97 // pred_fallthru
            _
          %8303 = vnop
        $region98: #{model_forward.3} parent=89 // pred_fallthru
          _
      $region90: #{model_forward.3} parent=5 // pred_fallthru
        _
      %p8304 = scmp.le.s32.totalorder 2, %s8
      // Predicated region
      $region161: #{model_forward.3} parent=5 // pred_check
        %p8305 = pneg %p8304
      $region162: #{model_forward.3} parent=5 // pred_check_branch
        %8307 = sbr.rel (%p8305) target = $region164
      $region163: #{model_forward.3} parent=5 // pred_region
        %s8308 = ssub.s32 %s8, 2
        // Predicated region
        $region165: #{model_forward.3} parent=163 // pred_check
          %p8309 = pneg %p84
        $region166: #{model_forward.3} parent=163 // pred_check_branch
          %8311 = sbr.rel (%p8309) target = $region168
        $region167: #{model_forward.3} parent=163 // pred_region
          %s8312 = sand.u32 %s69, 1
          %s8313 = sand.u32 %s69, 1
          %s8314 = smul.addr %s8313, 608
          %s8315 = scalar_lea.vmem [#allocation3], %s8314
        $region168: #{model_forward.3} parent=163 // pred_fallthru
          _
      $region164: #{model_forward.3} parent=5 // pred_fallthru
        _
    $region6: #{model_forward.3} parent=1 // loop_footer
      %s12 = sadd.s32 1, %s8
    $region7: #{model_forward.3} parent=1 // loop_footer_branch
      %7 = sbr.rel target = $region3
    $region8: #{model_forward.3} parent=1 // loop_exit
      _

</llo_original>
